<compile_context>
chip_gen: v7x
topology: tpu7x:2x2x1
jax: 0.10.0
libtpu: 0.0.40
codegen_flags: <defaults>
</compile_context>

<pallas_src>
import functools

import jax
import jax.numpy as jnp
from jax.experimental import pallas as pl
from jax.experimental.pallas import tpu as pltpu


def _round_up(x, m):
    return ((x + m - 1) // m) * m


@functools.lru_cache(maxsize=None)
def _vmem_limit_bytes():
    # Clamp to the chip: ~48 MiB on v7x (64 MiB physical), ~96 MiB on v5e/v6e.
    try:
        cap = int(pltpu.get_tpu_info().vmem_capacity_bytes)
    except Exception:
        cap = 64 << 20  # conservative fallback, safe on every generation
    return int(min(cap * 3 // 4, 96 << 20))


# ------------------------------- fused kernel --------------------------------

def _fused_conv_kernel(p_ref, w_ref, b_ref, o_ref, acc_ref, *,
                       do_norm, do_relu, eps=1e-5, slope=0.2):
    """One (batch, M-tile) block: accumulate over K-tiles, epilogue at k==last.

    p_ref: [TM, TK] bf16 im2col patches     w_ref: [TK, Cout_pad] bf16 weights
    b_ref: [1, Cout_pad] f32 bias           o_ref: [TM, Cout_pad] output
    acc_ref: [TM, Cout_pad] f32 accumulator scratch (resident across K axis)
    """
    k = pl.program_id(2)

    @pl.when(k == 0)
    def _init():
        acc_ref[...] = jnp.zeros_like(acc_ref)

    acc_ref[...] += jnp.dot(p_ref[...], w_ref[...],
                            preferred_element_type=jnp.float32)

    @pl.when(k == pl.num_programs(2) - 1)
    def _finalize():
        y = acc_ref[...] + b_ref[...]                       # [TM, Cout], f32
        if do_norm:
            # InstanceNorm2d: per-channel stats over the spatial (M) axis.
            mean = jnp.mean(y, axis=0, keepdims=True)
            var = jnp.mean(jnp.square(y - mean), axis=0, keepdims=True)
            y = (y - mean) * jax.lax.rsqrt(var + eps)
        if do_relu:
            y = jnp.maximum(y, slope * y)                   # LeakyReLU(0.2)
        o_ref[...] = y.astype(o_ref.dtype)


# ------------------------------ layer wrapper ---------------------------------

def _im2col_nhwc(x, k, stride, pad):
    # x: [N, H, W, C] -> patches [N, Ho*Wo, k*k*C], feature order (kh, kw, C).
    N, H, W, C = x.shape
    xp = jnp.pad(x, ((0, 0), (pad, pad), (pad, pad), (0, 0)))
    Ho = (H + 2 * pad - k) // stride + 1
    Wo = (W + 2 * pad - k) // stride + 1
    cols = []
    for i in range(k):
        for j in range(k):
            cols.append(xp[:, i:i + stride * Ho:stride,
                           j:j + stride * Wo:stride, :])
    p = jnp.stack(cols, axis=3)                      # [N, Ho, Wo, k*k, C]
    p = p.reshape(N, Ho * Wo, k * k * C)
    return p, Ho, Wo


def conv_layer(x, w, b, *, stride, pad, do_norm, do_relu,
               out_dtype=jnp.bfloat16):
    # x: [N, H, W, Cin] (NHWC);  w: [Cout, Cin, kh, kw] (PyTorch OIHW);  b: [Cout]
    N, H, W, Cin = x.shape
    Cout, _, kh, kw = w.shape
    patches, Ho, Wo = _im2col_nhwc(x, kh, stride, pad)       # [N, M, K]
    M, K = Ho * Wo, Cin * kh * kw

    # --- K padding / tiling (align to 128 lanes, cap the VMEM block size) ----
    K_pad = _round_up(K, 128)
    TK = K_pad if K_pad <= 1024 else 1024
    K_pad = _round_up(K_pad, TK)

    # --- Cout padding: lane-dense (unmasked) output stores for every layer ---
    Cout_pad = _round_up(Cout, 128)

    # --- M tiling: full-M block for InstanceNorm (exact single-pass stats);
    #     tile M for norm-free layers when spatial is large. ------------------
    if do_norm or M <= 512:
        TM, M_pad = M, M
    else:
        TM, M_pad = 512, _round_up(M, 512)

    # --- pad + cast operands (bf16 MXU inputs, f32 accumulation) -------------
    if M_pad != M or K_pad != K:
        patches = jnp.pad(patches, ((0, 0), (0, M_pad - M), (0, K_pad - K)))
    patches = patches.astype(jnp.bfloat16)

    w2 = jnp.transpose(w, (2, 3, 1, 0)).reshape(K, Cout)     # (kh,kw,Cin) x Cout
    if K_pad != K or Cout_pad != Cout:
        w2 = jnp.pad(w2, ((0, K_pad - K), (0, Cout_pad - Cout)))
    w2 = w2.astype(jnp.bfloat16)

    b2 = b.reshape(1, Cout).astype(jnp.float32)
    if Cout_pad != Cout:
        b2 = jnp.pad(b2, ((0, 0), (0, Cout_pad - Cout)))

    grid = (N, M_pad // TM, K_pad // TK)
    kernel = functools.partial(_fused_conv_kernel, do_norm=do_norm,
                               do_relu=do_relu)

    out = pl.pallas_call(
        kernel,
        out_shape=jax.ShapeDtypeStruct((N, M_pad, Cout_pad), out_dtype),
        grid_spec=pltpu.PrefetchScalarGridSpec(
            num_scalar_prefetch=0,
            grid=grid,
            in_specs=[
                pl.BlockSpec((None, TM, TK), lambda n, m, k: (n, m, k)),
                pl.BlockSpec((TK, Cout_pad), lambda n, m, k: (k, 0)),
                pl.BlockSpec((1, Cout_pad), lambda n, m, k: (0, 0)),
            ],
            out_specs=pl.BlockSpec((None, TM, Cout_pad),
                                   lambda n, m, k: (n, m, 0)),
            scratch_shapes=[pltpu.VMEM((TM, Cout_pad), jnp.float32)],
        ),
        compiler_params=pltpu.CompilerParams(
            dimension_semantics=("parallel", "parallel", "arbitrary"),
            vmem_limit_bytes=_vmem_limit_bytes(),
        ),
    )(patches, w2, b2)

    # Strip padding, back to NHWC for the next layer (no NCHW round trip).
    out = out[:, :M, :Cout].reshape(N, Ho, Wo, Cout)
    return out


# ----------------------------- model definition ------------------------------

_LAYER_CFG = [
    # (stride, pad, instance_norm, leaky_relu)
    (2, 1, False, True),   # Conv(input_nc, 64)  + LeakyReLU
    (2, 1, True, True),    # Conv(64, 128) + InstanceNorm + LeakyReLU
    (2, 1, True, True),    # Conv(128, 256) + InstanceNorm + LeakyReLU
    (1, 1, True, True),    # Conv(256, 512) + InstanceNorm + LeakyReLU
    (1, 1, False, False),  # Conv(512, 1)
]


def init_params(key, input_nc):
    channels = [(input_nc, 64), (64, 128), (128, 256), (256, 512), (512, 1)]
    params = []
    for cin, cout in channels:
        key, kw, kb = jax.random.split(key, 3)
        w = jax.random.normal(kw, (cout, cin, 4, 4), jnp.float32) * 0.05
        b = jax.random.normal(kb, (cout,), jnp.float32) * 0.05
        params.append((w, b))
    return params


def discriminator_forward(x_nchw, params):
    # Convert NCHW -> NHWC once; stay NHWC (bf16 intermediates) between layers;
    # convert back once.  Final layer stays f32.
    x = jnp.transpose(x_nchw, (0, 2, 3, 1))
    n_layers = len(params)
    for li, ((w, b), (s, p, norm, relu)) in enumerate(zip(params, _LAYER_CFG)):
        last = li == n_layers - 1
        x = conv_layer(x, w, b, stride=s, pad=p, do_norm=norm, do_relu=relu,
                       out_dtype=jnp.float32 if last else jnp.bfloat16)
    return jnp.transpose(x, (0, 3, 1, 2))


# ----------------------------- pure-JAX reference ----------------------------

def _ref_forward(x, params):
    def conv(x, w, b, stride):
        y = jax.lax.conv_general_dilated(
            x, w, window_strides=(stride, stride), padding=((1, 1), (1, 1)),
            dimension_numbers=("NCHW", "OIHW", "NCHW"))
        return y + b[None, :, None, None]

    def inorm(y, eps=1e-5):
        m = jnp.mean(y, axis=(2, 3), keepdims=True)
        v = jnp.mean(jnp.square(y - m), axis=(2, 3), keepdims=True)
        return (y - m) * jax.lax.rsqrt(v + eps)

    def lrelu(y):
        return jnp.where(y >= 0, y, 0.2 * y)

    (w1, b1), (w2, b2), (w3, b3), (w4, b4), (w5, b5) = params
    x = lrelu(conv(x, w1, b1, 2))
    x = lrelu(inorm(conv(x, w2, b2, 2)))
    x = lrelu(inorm(conv(x, w3, b3, 2)))
    x = lrelu(inorm(conv(x, w4, b4, 1)))
    x = conv(x, w5, b5, 1)
    return x


# ---------------------------------- main --------------------------------------

if __name__ == "__main__":
    key = jax.random.PRNGKey(0)
    key, kx = jax.random.split(key)

    input_nc = 3
    N, H, W = 2, 32, 32          # 32x32 so every conv has a valid output size
    x = jax.random.normal(kx, (N, input_nc, H, W), jnp.float32)

    params = init_params(key, input_nc)

    fwd = jax.jit(discriminator_forward)
    out = jax.block_until_ready(fwd(x, params))

    ref = jax.block_until_ready(_ref_forward(x, params))

    assert out.shape == ref.shape, (out.shape, ref.shape)
    max_err = float(jnp.max(jnp.abs(out - ref)))
    # bf16 MXU operands / bf16 intermediate activations vs. reference conv at
    # default precision -> allow a small bf16-level tolerance.
    assert jnp.allclose(out, ref, atol=3e-2, rtol=3e-2), max_err

    print("KERNEL_OK")
</pallas_src>

<mosaic_0001>
module attributes {stable_mosaic.version = 11 : i64} {
  func.func @_fused_conv_kernel(%arg0: i32, %arg1: i32, %arg2: i32, %arg3: memref<1x256x128xbf16, #tpu.memory_space<vmem>>, %arg4: memref<128x128xbf16, #tpu.memory_space<vmem>>, %arg5: memref<1x128xf32, #tpu.memory_space<vmem>>, %arg6: memref<1x256x128xbf16, #tpu.memory_space<vmem>>, %arg7: memref<256x128xf32, #tpu.memory_space<vmem>>) attributes {dimension_semantics = [#tpu.dimension_semantics<parallel>, #tpu.dimension_semantics<parallel>, #tpu.dimension_semantics<arbitrary>], iteration_bounds = array<i64: 2, 1, 1>, scalar_prefetch = 0 : i64, scratch_operands = 1 : i64, tpu.core_type = #tpu.core_type<tc>, window_params = [{transform_indices = @transform_0, window_bounds = array<i64: 1, 256, 128>}, {transform_indices = @transform_1, window_bounds = array<i64: 128, 128>}, {pipeline_mode = #tpu.pipeline_mode<synchronous>, transform_indices = @transform_2, window_bounds = array<i64: 1, 128>}, {transform_indices = @transform_3, window_bounds = array<i64: 1, 256, 128>}]} {
    %c0_i32 = arith.constant 0 : i32
    %0 = arith.cmpi eq, %arg2, %c0_i32 : i32
    %1 = arith.extui %0 : i1 to i32
    %c0_i32_0 = arith.constant 0 : i32
    %2 = arith.cmpi ne, %1, %c0_i32_0 : i32
    scf.if %2 {
      %cst_11 = arith.constant 0.000000e+00 : f32
      %13 = vector.broadcast %cst_11 : f32 to vector<256x128xf32>
      %c0_12 = arith.constant 0 : index
      %c0_13 = arith.constant 0 : index
      %14 = vector.load %arg7[%c0_12, %c0_13] : memref<256x128xf32, #tpu.memory_space<vmem>>, vector<256x128xf32>
      tpu.vector_store %arg7[%c0_12, %c0_13], %13 {strides = array<i32>} : memref<256x128xf32, #tpu.memory_space<vmem>>, vector<256x128xf32>,
    } else {
    }
    %c0 = arith.constant 0 : index
    %c0_1 = arith.constant 0 : index
    %3 = vector.load %arg7[%c0, %c0_1] : memref<256x128xf32, #tpu.memory_space<vmem>>, vector<256x128xf32>
    %c0_2 = arith.constant 0 : index
    %c0_3 = arith.constant 0 : index
    %c0_4 = arith.constant 0 : index
    %4 = vector.load %arg3[%c0_2, %c0_3, %c0_4] : memref<1x256x128xbf16, #tpu.memory_space<vmem>>, vector<1x256x128xbf16>
    %5 = vector.shape_cast %4 : vector<1x256x128xbf16> to vector<256x128xbf16>
    %c0_5 = arith.constant 0 : index
    %c0_6 = arith.constant 0 : index
    %6 = vector.load %arg4[%c0_5, %c0_6] : memref<128x128xbf16, #tpu.memory_space<vmem>>, vector<128x128xbf16>
    %cst = arith.constant dense<0.000000e+00> : vector<256x128xf32>
    %7 = tpu.matmul %5, %6, %cst {dimension_numbers = #tpu.dot_dimension_numbers<[1], [0], [0], [1], [0, 0, 1, 1], [], []>} : vector<256x128xbf16>, vector<128x128xbf16>, vector<256x128xf32> -> vector<256x128xf32>
    %8 = arith.addf %3, %7 : vector<256x128xf32>
    %c0_7 = arith.constant 0 : index
    %c0_8 = arith.constant 0 : index
    %9 = vector.load %arg7[%c0_7, %c0_8] : memref<256x128xf32, #tpu.memory_space<vmem>>, vector<256x128xf32>
    tpu.vector_store %arg7[%c0_7, %c0_8], %8 {strides = array<i32>} : memref<256x128xf32, #tpu.memory_space<vmem>>, vector<256x128xf32>,
    %c0_i32_9 = arith.constant 0 : i32
    %10 = arith.cmpi eq, %arg2, %c0_i32_9 : i32
    %11 = arith.extui %10 : i1 to i32
    %c0_i32_10 = arith.constant 0 : i32
    %12 = arith.cmpi ne, %11, %c0_i32_10 : i32
    scf.if %12 {
      %c0_11 = arith.constant 0 : index
      %c0_12 = arith.constant 0 : index
      %13 = vector.load %arg7[%c0_11, %c0_12] : memref<256x128xf32, #tpu.memory_space<vmem>>, vector<256x128xf32>
      %c0_13 = arith.constant 0 : index
      %c0_14 = arith.constant 0 : index
      %14 = vector.load %arg5[%c0_13, %c0_14] : memref<1x128xf32, #tpu.memory_space<vmem>>, vector<1x128xf32>
      %15 = vector.broadcast %14 : vector<1x128xf32> to vector<256x128xf32>
      %16 = arith.addf %13, %15 : vector<256x128xf32>
      %cst_15 = arith.constant 2.000000e-01 : f32
      %17 = vector.broadcast %cst_15 : f32 to vector<256x128xf32>
      %18 = arith.mulf %17, %16 : vector<256x128xf32>
      %19 = arith.maximumf %16, %18 : vector<256x128xf32>
      %20 = arith.truncf %19 : vector<256x128xf32> to vector<256x128xbf16>
      %c0_16 = arith.constant 0 : index
      %c0_17 = arith.constant 0 : index
      %c0_18 = arith.constant 0 : index
      %21 = vector.load %arg6[%c0_16, %c0_17, %c0_18] : memref<1x256x128xbf16, #tpu.memory_space<vmem>>, vector<1x256x128xbf16>
      %22 = vector.shape_cast %21 : vector<1x256x128xbf16> to vector<256x128xbf16>
      %23 = vector.shape_cast %20 : vector<256x128xbf16> to vector<1x256x128xbf16>
      tpu.vector_store %arg6[%c0_16, %c0_17, %c0_18], %23 {strides = array<i32>} : memref<1x256x128xbf16, #tpu.memory_space<vmem>>, vector<1x256x128xbf16>,
    } else {
    }
    return
  }
  func.func @transform_0(%arg0: i32, %arg1: i32, %arg2: i32) -> (i32, i32, i32) {
    %c0_i32 = arith.constant 0 : i32
    return %arg0, %arg1, %arg2 : i32, i32, i32
  }
  func.func @transform_1(%arg0: i32, %arg1: i32, %arg2: i32) -> (i32, i32) {
    %c0_i32 = arith.constant 0 : i32
    %c0_i32_0 = arith.constant 0 : i32
    return %arg2, %c0_i32 : i32, i32
  }
  func.func @transform_2(%arg0: i32, %arg1: i32, %arg2: i32) -> (i32, i32) {
    %c0_i32 = arith.constant 0 : i32
    %c0_i32_0 = arith.constant 0 : i32
    %c0_i32_1 = arith.constant 0 : i32
    return %c0_i32, %c0_i32_0 : i32, i32
  }
  func.func @transform_3(%arg0: i32, %arg1: i32, %arg2: i32) -> (i32, i32, i32) {
    %c0_i32 = arith.constant 0 : i32
    %c0_i32_0 = arith.constant 0 : i32
    return %arg0, %arg1, %c0_i32 : i32, i32, i32
  }
}

module attributes {stable_mosaic.version = 11 : i64} {
  func.func @_fused_conv_kernel(%arg0: i32, %arg1: i32, %arg2: i32, %arg3: memref<1x64x1024xbf16, #tpu.memory_space<vmem>>, %arg4: memref<1024x128xbf16, #tpu.memory_space<vmem>>, %arg5: memref<1x128xf32, #tpu.memory_space<vmem>>, %arg6: memref<1x64x128xbf16, #tpu.memory_space<vmem>>, %arg7: memref<64x128xf32, #tpu.memory_space<vmem>>) attributes {dimension_semantics = [#tpu.dimension_semantics<parallel>, #tpu.dimension_semantics<parallel>, #tpu.dimension_semantics<arbitrary>], iteration_bounds = array<i64: 2, 1, 1>, scalar_prefetch = 0 : i64, scratch_operands = 1 : i64, tpu.core_type = #tpu.core_type<tc>, window_params = [{transform_indices = @transform_0, window_bounds = array<i64: 1, 64, 1024>}, {transform_indices = @transform_1, window_bounds = array<i64: 1024, 128>}, {pipeline_mode = #tpu.pipeline_mode<synchronous>, transform_indices = @transform_2, window_bounds = array<i64: 1, 128>}, {transform_indices = @transform_3, window_bounds = array<i64: 1, 64, 128>}]} {
    %c0_i32 = arith.constant 0 : i32
    %0 = arith.cmpi eq, %arg2, %c0_i32 : i32
    %1 = arith.extui %0 : i1 to i32
    %c0_i32_0 = arith.constant 0 : i32
    %2 = arith.cmpi ne, %1, %c0_i32_0 : i32
    scf.if %2 {
      %cst_11 = arith.constant 0.000000e+00 : f32
      %13 = vector.broadcast %cst_11 : f32 to vector<64x128xf32>
      %c0_12 = arith.constant 0 : index
      %c0_13 = arith.constant 0 : index
      %14 = vector.load %arg7[%c0_12, %c0_13] : memref<64x128xf32, #tpu.memory_space<vmem>>, vector<64x128xf32>
      tpu.vector_store %arg7[%c0_12, %c0_13], %13 {strides = array<i32>} : memref<64x128xf32, #tpu.memory_space<vmem>>, vector<64x128xf32>,
    } else {
    }
    %c0 = arith.constant 0 : index
    %c0_1 = arith.constant 0 : index
    %3 = vector.load %arg7[%c0, %c0_1] : memref<64x128xf32, #tpu.memory_space<vmem>>, vector<64x128xf32>
    %c0_2 = arith.constant 0 : index
    %c0_3 = arith.constant 0 : index
    %c0_4 = arith.constant 0 : index
    %4 = vector.load %arg3[%c0_2, %c0_3, %c0_4] : memref<1x64x1024xbf16, #tpu.memory_space<vmem>>, vector<1x64x1024xbf16>
    %5 = vector.shape_cast %4 : vector<1x64x1024xbf16> to vector<64x1024xbf16>
    %c0_5 = arith.constant 0 : index
    %c0_6 = arith.constant 0 : index
    %6 = vector.load %arg4[%c0_5, %c0_6] : memref<1024x128xbf16, #tpu.memory_space<vmem>>, vector<1024x128xbf16>
    %cst = arith.constant dense<0.000000e+00> : vector<64x128xf32>
    %7 = tpu.matmul %5, %6, %cst {dimension_numbers = #tpu.dot_dimension_numbers<[1], [0], [0], [1], [0, 0, 1, 1], [], []>} : vector<64x1024xbf16>, vector<1024x128xbf16>, vector<64x128xf32> -> vector<64x128xf32>
    %8 = arith.addf %3, %7 : vector<64x128xf32>
    %c0_7 = arith.constant 0 : index
    %c0_8 = arith.constant 0 : index
    %9 = vector.load %arg7[%c0_7, %c0_8] : memref<64x128xf32, #tpu.memory_space<vmem>>, vector<64x128xf32>
    tpu.vector_store %arg7[%c0_7, %c0_8], %8 {strides = array<i32>} : memref<64x128xf32, #tpu.memory_space<vmem>>, vector<64x128xf32>,
    %c0_i32_9 = arith.constant 0 : i32
    %10 = arith.cmpi eq, %arg2, %c0_i32_9 : i32
    %11 = arith.extui %10 : i1 to i32
    %c0_i32_10 = arith.constant 0 : i32
    %12 = arith.cmpi ne, %11, %c0_i32_10 : i32
    scf.if %12 {
      %c0_11 = arith.constant 0 : index
      %c0_12 = arith.constant 0 : index
      %13 = vector.load %arg7[%c0_11, %c0_12] : memref<64x128xf32, #tpu.memory_space<vmem>>, vector<64x128xf32>
      %c0_13 = arith.constant 0 : index
      %c0_14 = arith.constant 0 : index
      %14 = vector.load %arg5[%c0_13, %c0_14] : memref<1x128xf32, #tpu.memory_space<vmem>>, vector<1x128xf32>
      %15 = vector.broadcast %14 : vector<1x128xf32> to vector<64x128xf32>
      %16 = arith.addf %13, %15 : vector<64x128xf32>
      %cst_15 = arith.constant dense<0.000000e+00> : vector<128xf32>
      %17 = vector.multi_reduction <add>, %16, %cst_15 [0] : vector<64x128xf32> to vector<128xf32>
      %18 = vector.shape_cast %17 : vector<128xf32> to vector<1x128xf32>
      %cst_16 = arith.constant 6.400000e+01 : f32
      %19 = vector.broadcast %cst_16 : f32 to vector<1x128xf32>
      %20 = arith.divf %18, %19 : vector<1x128xf32>
      %21 = vector.broadcast %20 : vector<1x128xf32> to vector<64x128xf32>
      %22 = arith.subf %16, %21 : vector<64x128xf32>
      %23 = arith.mulf %22, %22 : vector<64x128xf32>
      %cst_17 = arith.constant dense<0.000000e+00> : vector<128xf32>
      %24 = vector.multi_reduction <add>, %23, %cst_17 [0] : vector<64x128xf32> to vector<128xf32>
      %25 = vector.shape_cast %24 : vector<128xf32> to vector<1x128xf32>
      %cst_18 = arith.constant 6.400000e+01 : f32
      %26 = vector.broadcast %cst_18 : f32 to vector<1x128xf32>
      %27 = arith.divf %25, %26 : vector<1x128xf32>
      %28 = vector.broadcast %20 : vector<1x128xf32> to vector<64x128xf32>
      %29 = arith.subf %16, %28 : vector<64x128xf32>
      %cst_19 = arith.constant 9.99999974E-6 : f32
      %30 = vector.broadcast %cst_19 : f32 to vector<1x128xf32>
      %31 = arith.addf %27, %30 : vector<1x128xf32>
      %32 = math.rsqrt %31 : vector<1x128xf32>
      %33 = vector.broadcast %32 : vector<1x128xf32> to vector<64x128xf32>
      %34 = arith.mulf %29, %33 : vector<64x128xf32>
      %cst_20 = arith.constant 2.000000e-01 : f32
      %35 = vector.broadcast %cst_20 : f32 to vector<64x128xf32>
      %36 = arith.mulf %35, %34 : vector<64x128xf32>
      %37 = arith.maximumf %34, %36 : vector<64x128xf32>
      %38 = arith.truncf %37 : vector<64x128xf32> to vector<64x128xbf16>
      %c0_21 = arith.constant 0 : index
      %c0_22 = arith.constant 0 : index
      %c0_23 = arith.constant 0 : index
      %39 = vector.load %arg6[%c0_21, %c0_22, %c0_23] : memref<1x64x128xbf16, #tpu.memory_space<vmem>>, vector<1x64x128xbf16>
      %40 = vector.shape_cast %39 : vector<1x64x128xbf16> to vector<64x128xbf16>
      %41 = vector.shape_cast %38 : vector<64x128xbf16> to vector<1x64x128xbf16>
      tpu.vector_store %arg6[%c0_21, %c0_22, %c0_23], %41 {strides = array<i32>} : memref<1x64x128xbf16, #tpu.memory_space<vmem>>, vector<1x64x128xbf16>,
    } else {
    }
    return
  }
  func.func @transform_0(%arg0: i32, %arg1: i32, %arg2: i32) -> (i32, i32, i32) {
    %c0_i32 = arith.constant 0 : i32
    return %arg0, %arg1, %arg2 : i32, i32, i32
  }
  func.func @transform_1(%arg0: i32, %arg1: i32, %arg2: i32) -> (i32, i32) {
    %c0_i32 = arith.constant 0 : i32
    %c0_i32_0 = arith.constant 0 : i32
    return %arg2, %c0_i32 : i32, i32
  }
  func.func @transform_2(%arg0: i32, %arg1: i32, %arg2: i32) -> (i32, i32) {
    %c0_i32 = arith.constant 0 : i32
    %c0_i32_0 = arith.constant 0 : i32
    %c0_i32_1 = arith.constant 0 : i32
    return %c0_i32, %c0_i32_0 : i32, i32
  }
  func.func @transform_3(%arg0: i32, %arg1: i32, %arg2: i32) -> (i32, i32, i32) {
    %c0_i32 = arith.constant 0 : i32
    %c0_i32_0 = arith.constant 0 : i32
    return %arg0, %arg1, %c0_i32 : i32, i32, i32
  }
}

module attributes {stable_mosaic.version = 11 : i64} {
  func.func @_fused_conv_kernel(%arg0: i32, %arg1: i32, %arg2: i32, %arg3: memref<1x16x1024xbf16, #tpu.memory_space<vmem>>, %arg4: memref<1024x256xbf16, #tpu.memory_space<vmem>>, %arg5: memref<1x256xf32, #tpu.memory_space<vmem>>, %arg6: memref<1x16x256xbf16, #tpu.memory_space<vmem>>, %arg7: memref<16x256xf32, #tpu.memory_space<vmem>>) attributes {dimension_semantics = [#tpu.dimension_semantics<parallel>, #tpu.dimension_semantics<parallel>, #tpu.dimension_semantics<arbitrary>], iteration_bounds = array<i64: 2, 1, 2>, scalar_prefetch = 0 : i64, scratch_operands = 1 : i64, tpu.core_type = #tpu.core_type<tc>, window_params = [{transform_indices = @transform_0, window_bounds = array<i64: 1, 16, 1024>}, {transform_indices = @transform_1, window_bounds = array<i64: 1024, 256>}, {pipeline_mode = #tpu.pipeline_mode<synchronous>, transform_indices = @transform_2, window_bounds = array<i64: 1, 256>}, {transform_indices = @transform_3, window_bounds = array<i64: 1, 16, 256>}]} {
    %c0_i32 = arith.constant 0 : i32
    %0 = arith.cmpi eq, %arg2, %c0_i32 : i32
    %1 = arith.extui %0 : i1 to i32
    %c0_i32_0 = arith.constant 0 : i32
    %2 = arith.cmpi ne, %1, %c0_i32_0 : i32
    scf.if %2 {
      %cst_10 = arith.constant 0.000000e+00 : f32
      %13 = vector.broadcast %cst_10 : f32 to vector<16x256xf32>
      %c0_11 = arith.constant 0 : index
      %c0_12 = arith.constant 0 : index
      %14 = vector.load %arg7[%c0_11, %c0_12] : memref<16x256xf32, #tpu.memory_space<vmem>>, vector<16x256xf32>
      tpu.vector_store %arg7[%c0_11, %c0_12], %13 {strides = array<i32>} : memref<16x256xf32, #tpu.memory_space<vmem>>, vector<16x256xf32>,
    } else {
    }
    %c0 = arith.constant 0 : index
    %c0_1 = arith.constant 0 : index
    %3 = vector.load %arg7[%c0, %c0_1] : memref<16x256xf32, #tpu.memory_space<vmem>>, vector<16x256xf32>
    %c0_2 = arith.constant 0 : index
    %c0_3 = arith.constant 0 : index
    %c0_4 = arith.constant 0 : index
    %4 = vector.load %arg3[%c0_2, %c0_3, %c0_4] : memref<1x16x1024xbf16, #tpu.memory_space<vmem>>, vector<1x16x1024xbf16>
    %5 = vector.shape_cast %4 : vector<1x16x1024xbf16> to vector<16x1024xbf16>
    %c0_5 = arith.constant 0 : index
    %c0_6 = arith.constant 0 : index
    %6 = vector.load %arg4[%c0_5, %c0_6] : memref<1024x256xbf16, #tpu.memory_space<vmem>>, vector<1024x256xbf16>
    %cst = arith.constant dense<0.000000e+00> : vector<16x256xf32>
    %7 = tpu.matmul %5, %6, %cst {dimension_numbers = #tpu.dot_dimension_numbers<[1], [0], [0], [1], [0, 0, 1, 1], [], []>} : vector<16x1024xbf16>, vector<1024x256xbf16>, vector<16x256xf32> -> vector<16x256xf32>
    %8 = arith.addf %3, %7 : vector<16x256xf32>
    %c0_7 = arith.constant 0 : index
    %c0_8 = arith.constant 0 : index
    %9 = vector.load %arg7[%c0_7, %c0_8] : memref<16x256xf32, #tpu.memory_space<vmem>>, vector<16x256xf32>
    tpu.vector_store %arg7[%c0_7, %c0_8], %8 {strides = array<i32>} : memref<16x256xf32, #tpu.memory_space<vmem>>, vector<16x256xf32>,
    %c1_i32 = arith.constant 1 : i32
    %10 = arith.cmpi eq, %arg2, %c1_i32 : i32
    %11 = arith.extui %10 : i1 to i32
    %c0_i32_9 = arith.constant 0 : i32
    %12 = arith.cmpi ne, %11, %c0_i32_9 : i32
    scf.if %12 {
      %c0_10 = arith.constant 0 : index
      %c0_11 = arith.constant 0 : index
      %13 = vector.load %arg7[%c0_10, %c0_11] : memref<16x256xf32, #tpu.memory_space<vmem>>, vector<16x256xf32>
      %c0_12 = arith.constant 0 : index
      %c0_13 = arith.constant 0 : index
      %14 = vector.load %arg5[%c0_12, %c0_13] : memref<1x256xf32, #tpu.memory_space<vmem>>, vector<1x256xf32>
      %15 = vector.broadcast %14 : vector<1x256xf32> to vector<16x256xf32>
      %16 = arith.addf %13, %15 : vector<16x256xf32>
      %cst_14 = arith.constant dense<0.000000e+00> : vector<256xf32>
      %17 = vector.multi_reduction <add>, %16, %cst_14 [0] : vector<16x256xf32> to vector<256xf32>
      %18 = vector.shape_cast %17 : vector<256xf32> to vector<1x256xf32>
      %cst_15 = arith.constant 1.600000e+01 : f32
      %19 = vector.broadcast %cst_15 : f32 to vector<1x256xf32>
      %20 = arith.divf %18, %19 : vector<1x256xf32>
      %21 = vector.broadcast %20 : vector<1x256xf32> to vector<16x256xf32>
      %22 = arith.subf %16, %21 : vector<16x256xf32>
      %23 = arith.mulf %22, %22 : vector<16x256xf32>
      %cst_16 = arith.constant dense<0.000000e+00> : vector<256xf32>
      %24 = vector.multi_reduction <add>, %23, %cst_16 [0] : vector<16x256xf32> to vector<256xf32>
      %25 = vector.shape_cast %24 : vector<256xf32> to vector<1x256xf32>
      %cst_17 = arith.constant 1.600000e+01 : f32
      %26 = vector.broadcast %cst_17 : f32 to vector<1x256xf32>
      %27 = arith.divf %25, %26 : vector<1x256xf32>
      %28 = vector.broadcast %20 : vector<1x256xf32> to vector<16x256xf32>
      %29 = arith.subf %16, %28 : vector<16x256xf32>
      %cst_18 = arith.constant 9.99999974E-6 : f32
      %30 = vector.broadcast %cst_18 : f32 to vector<1x256xf32>
      %31 = arith.addf %27, %30 : vector<1x256xf32>
      %32 = math.rsqrt %31 : vector<1x256xf32>
      %33 = vector.broadcast %32 : vector<1x256xf32> to vector<16x256xf32>
      %34 = arith.mulf %29, %33 : vector<16x256xf32>
      %cst_19 = arith.constant 2.000000e-01 : f32
      %35 = vector.broadcast %cst_19 : f32 to vector<16x256xf32>
      %36 = arith.mulf %35, %34 : vector<16x256xf32>
      %37 = arith.maximumf %34, %36 : vector<16x256xf32>
      %38 = arith.truncf %37 : vector<16x256xf32> to vector<16x256xbf16>
      %c0_20 = arith.constant 0 : index
      %c0_21 = arith.constant 0 : index
      %c0_22 = arith.constant 0 : index
      %39 = vector.load %arg6[%c0_20, %c0_21, %c0_22] : memref<1x16x256xbf16, #tpu.memory_space<vmem>>, vector<1x16x256xbf16>
      %40 = vector.shape_cast %39 : vector<1x16x256xbf16> to vector<16x256xbf16>
      %41 = vector.shape_cast %38 : vector<16x256xbf16> to vector<1x16x256xbf16>
      tpu.vector_store %arg6[%c0_20, %c0_21, %c0_22], %41 {strides = array<i32>} : memref<1x16x256xbf16, #tpu.memory_space<vmem>>, vector<1x16x256xbf16>,
    } else {
    }
    return
  }
  func.func @transform_0(%arg0: i32, %arg1: i32, %arg2: i32) -> (i32, i32, i32) {
    %c0_i32 = arith.constant 0 : i32
    return %arg0, %arg1, %arg2 : i32, i32, i32
  }
  func.func @transform_1(%arg0: i32, %arg1: i32, %arg2: i32) -> (i32, i32) {
    %c0_i32 = arith.constant 0 : i32
    %c0_i32_0 = arith.constant 0 : i32
    return %arg2, %c0_i32 : i32, i32
  }
  func.func @transform_2(%arg0: i32, %arg1: i32, %arg2: i32) -> (i32, i32) {
    %c0_i32 = arith.constant 0 : i32
    %c0_i32_0 = arith.constant 0 : i32
    %c0_i32_1 = arith.constant 0 : i32
    return %c0_i32, %c0_i32_0 : i32, i32
  }
  func.func @transform_3(%arg0: i32, %arg1: i32, %arg2: i32) -> (i32, i32, i32) {
    %c0_i32 = arith.constant 0 : i32
    %c0_i32_0 = arith.constant 0 : i32
    return %arg0, %arg1, %c0_i32 : i32, i32, i32
  }
}

module attributes {stable_mosaic.version = 11 : i64} {
  func.func @_fused_conv_kernel(%arg0: i32, %arg1: i32, %arg2: i32, %arg3: memref<1x9x1024xbf16, #tpu.memory_space<vmem>>, %arg4: memref<1024x512xbf16, #tpu.memory_space<vmem>>, %arg5: memref<1x512xf32, #tpu.memory_space<vmem>>, %arg6: memref<1x9x512xbf16, #tpu.memory_space<vmem>>, %arg7: memref<9x512xf32, #tpu.memory_space<vmem>>) attributes {dimension_semantics = [#tpu.dimension_semantics<parallel>, #tpu.dimension_semantics<parallel>, #tpu.dimension_semantics<arbitrary>], iteration_bounds = array<i64: 2, 1, 4>, scalar_prefetch = 0 : i64, scratch_operands = 1 : i64, tpu.core_type = #tpu.core_type<tc>, window_params = [{transform_indices = @transform_0, window_bounds = array<i64: 1, 9, 1024>}, {transform_indices = @transform_1, window_bounds = array<i64: 1024, 512>}, {pipeline_mode = #tpu.pipeline_mode<synchronous>, transform_indices = @transform_2, window_bounds = array<i64: 1, 512>}, {transform_indices = @transform_3, window_bounds = array<i64: 1, 9, 512>}]} {
    %c0_i32 = arith.constant 0 : i32
    %0 = arith.cmpi eq, %arg2, %c0_i32 : i32
    %1 = arith.extui %0 : i1 to i32
    %c0_i32_0 = arith.constant 0 : i32
    %2 = arith.cmpi ne, %1, %c0_i32_0 : i32
    scf.if %2 {
      %cst_10 = arith.constant 0.000000e+00 : f32
      %13 = vector.broadcast %cst_10 : f32 to vector<9x512xf32>
      %c0_11 = arith.constant 0 : index
      %c0_12 = arith.constant 0 : index
      %14 = vector.load %arg7[%c0_11, %c0_12] : memref<9x512xf32, #tpu.memory_space<vmem>>, vector<9x512xf32>
      tpu.vector_store %arg7[%c0_11, %c0_12], %13 {strides = array<i32>} : memref<9x512xf32, #tpu.memory_space<vmem>>, vector<9x512xf32>,
    } else {
    }
    %c0 = arith.constant 0 : index
    %c0_1 = arith.constant 0 : index
    %3 = vector.load %arg7[%c0, %c0_1] : memref<9x512xf32, #tpu.memory_space<vmem>>, vector<9x512xf32>
    %c0_2 = arith.constant 0 : index
    %c0_3 = arith.constant 0 : index
    %c0_4 = arith.constant 0 : index
    %4 = vector.load %arg3[%c0_2, %c0_3, %c0_4] : memref<1x9x1024xbf16, #tpu.memory_space<vmem>>, vector<1x9x1024xbf16>
    %5 = vector.shape_cast %4 : vector<1x9x1024xbf16> to vector<9x1024xbf16>
    %c0_5 = arith.constant 0 : index
    %c0_6 = arith.constant 0 : index
    %6 = vector.load %arg4[%c0_5, %c0_6] : memref<1024x512xbf16, #tpu.memory_space<vmem>>, vector<1024x512xbf16>
    %cst = arith.constant dense<0.000000e+00> : vector<9x512xf32>
    %7 = tpu.matmul %5, %6, %cst {dimension_numbers = #tpu.dot_dimension_numbers<[1], [0], [0], [1], [0, 0, 1, 1], [], []>} : vector<9x1024xbf16>, vector<1024x512xbf16>, vector<9x512xf32> -> vector<9x512xf32>
    %8 = arith.addf %3, %7 : vector<9x512xf32>
    %c0_7 = arith.constant 0 : index
    %c0_8 = arith.constant 0 : index
    %9 = vector.load %arg7[%c0_7, %c0_8] : memref<9x512xf32, #tpu.memory_space<vmem>>, vector<9x512xf32>
    tpu.vector_store %arg7[%c0_7, %c0_8], %8 {strides = array<i32>} : memref<9x512xf32, #tpu.memory_space<vmem>>, vector<9x512xf32>,
    %c3_i32 = arith.constant 3 : i32
    %10 = arith.cmpi eq, %arg2, %c3_i32 : i32
    %11 = arith.extui %10 : i1 to i32
    %c0_i32_9 = arith.constant 0 : i32
    %12 = arith.cmpi ne, %11, %c0_i32_9 : i32
    scf.if %12 {
      %c0_10 = arith.constant 0 : index
      %c0_11 = arith.constant 0 : index
      %13 = vector.load %arg7[%c0_10, %c0_11] : memref<9x512xf32, #tpu.memory_space<vmem>>, vector<9x512xf32>
      %c0_12 = arith.constant 0 : index
      %c0_13 = arith.constant 0 : index
      %14 = vector.load %arg5[%c0_12, %c0_13] : memref<1x512xf32, #tpu.memory_space<vmem>>, vector<1x512xf32>
      %15 = vector.broadcast %14 : vector<1x512xf32> to vector<9x512xf32>
      %16 = arith.addf %13, %15 : vector<9x512xf32>
      %cst_14 = arith.constant dense<0.000000e+00> : vector<512xf32>
      %17 = vector.multi_reduction <add>, %16, %cst_14 [0] : vector<9x512xf32> to vector<512xf32>
      %18 = vector.shape_cast %17 : vector<512xf32> to vector<1x512xf32>
      %cst_15 = arith.constant 9.000000e+00 : f32
      %19 = vector.broadcast %cst_15 : f32 to vector<1x512xf32>
      %20 = arith.divf %18, %19 : vector<1x512xf32>
      %21 = vector.broadcast %20 : vector<1x512xf32> to vector<9x512xf32>
      %22 = arith.subf %16, %21 : vector<9x512xf32>
      %23 = arith.mulf %22, %22 : vector<9x512xf32>
      %cst_16 = arith.constant dense<0.000000e+00> : vector<512xf32>
      %24 = vector.multi_reduction <add>, %23, %cst_16 [0] : vector<9x512xf32> to vector<512xf32>
      %25 = vector.shape_cast %24 : vector<512xf32> to vector<1x512xf32>
      %cst_17 = arith.constant 9.000000e+00 : f32
      %26 = vector.broadcast %cst_17 : f32 to vector<1x512xf32>
      %27 = arith.divf %25, %26 : vector<1x512xf32>
      %28 = vector.broadcast %20 : vector<1x512xf32> to vector<9x512xf32>
      %29 = arith.subf %16, %28 : vector<9x512xf32>
      %cst_18 = arith.constant 9.99999974E-6 : f32
      %30 = vector.broadcast %cst_18 : f32 to vector<1x512xf32>
      %31 = arith.addf %27, %30 : vector<1x512xf32>
      %32 = math.rsqrt %31 : vector<1x512xf32>
      %33 = vector.broadcast %32 : vector<1x512xf32> to vector<9x512xf32>
      %34 = arith.mulf %29, %33 : vector<9x512xf32>
      %cst_19 = arith.constant 2.000000e-01 : f32
      %35 = vector.broadcast %cst_19 : f32 to vector<9x512xf32>
      %36 = arith.mulf %35, %34 : vector<9x512xf32>
      %37 = arith.maximumf %34, %36 : vector<9x512xf32>
      %38 = arith.truncf %37 : vector<9x512xf32> to vector<9x512xbf16>
      %c0_20 = arith.constant 0 : index
      %c0_21 = arith.constant 0 : index
      %c0_22 = arith.constant 0 : index
      %39 = vector.load %arg6[%c0_20, %c0_21, %c0_22] : memref<1x9x512xbf16, #tpu.memory_space<vmem>>, vector<1x9x512xbf16>
      %40 = vector.shape_cast %39 : vector<1x9x512xbf16> to vector<9x512xbf16>
      %41 = vector.shape_cast %38 : vector<9x512xbf16> to vector<1x9x512xbf16>
      tpu.vector_store %arg6[%c0_20, %c0_21, %c0_22], %41 {strides = array<i32>} : memref<1x9x512xbf16, #tpu.memory_space<vmem>>, vector<1x9x512xbf16>,
    } else {
    }
    return
  }
  func.func @transform_0(%arg0: i32, %arg1: i32, %arg2: i32) -> (i32, i32, i32) {
    %c0_i32 = arith.constant 0 : i32
    return %arg0, %arg1, %arg2 : i32, i32, i32
  }
  func.func @transform_1(%arg0: i32, %arg1: i32, %arg2: i32) -> (i32, i32) {
    %c0_i32 = arith.constant 0 : i32
    %c0_i32_0 = arith.constant 0 : i32
    return %arg2, %c0_i32 : i32, i32
  }
  func.func @transform_2(%arg0: i32, %arg1: i32, %arg2: i32) -> (i32, i32) {
    %c0_i32 = arith.constant 0 : i32
    %c0_i32_0 = arith.constant 0 : i32
    %c0_i32_1 = arith.constant 0 : i32
    return %c0_i32, %c0_i32_0 : i32, i32
  }
  func.func @transform_3(%arg0: i32, %arg1: i32, %arg2: i32) -> (i32, i32, i32) {
    %c0_i32 = arith.constant 0 : i32
    %c0_i32_0 = arith.constant 0 : i32
    return %arg0, %arg1, %c0_i32 : i32, i32, i32
  }
}

module attributes {stable_mosaic.version = 11 : i64} {
  func.func @_fused_conv_kernel(%arg0: i32, %arg1: i32, %arg2: i32, %arg3: memref<1x4x1024xbf16, #tpu.memory_space<vmem>>, %arg4: memref<1024x128xbf16, #tpu.memory_space<vmem>>, %arg5: memref<1x128xf32, #tpu.memory_space<vmem>>, %arg6: memref<1x4x128xf32, #tpu.memory_space<vmem>>, %arg7: memref<4x128xf32, #tpu.memory_space<vmem>>) attributes {dimension_semantics = [#tpu.dimension_semantics<parallel>, #tpu.dimension_semantics<parallel>, #tpu.dimension_semantics<arbitrary>], iteration_bounds = array<i64: 2, 1, 8>, scalar_prefetch = 0 : i64, scratch_operands = 1 : i64, tpu.core_type = #tpu.core_type<tc>, window_params = [{transform_indices = @transform_0, window_bounds = array<i64: 1, 4, 1024>}, {transform_indices = @transform_1, window_bounds = array<i64: 1024, 128>}, {pipeline_mode = #tpu.pipeline_mode<synchronous>, transform_indices = @transform_2, window_bounds = array<i64: 1, 128>}, {transform_indices = @transform_3, window_bounds = array<i64: 1, 4, 128>}]} {
    %c0_i32 = arith.constant 0 : i32
    %0 = arith.cmpi eq, %arg2, %c0_i32 : i32
    %1 = arith.extui %0 : i1 to i32
    %c0_i32_0 = arith.constant 0 : i32
    %2 = arith.cmpi ne, %1, %c0_i32_0 : i32
    scf.if %2 {
      %cst_10 = arith.constant 0.000000e+00 : f32
      %13 = vector.broadcast %cst_10 : f32 to vector<4x128xf32>
      %c0_11 = arith.constant 0 : index
      %c0_12 = arith.constant 0 : index
      %14 = vector.load %arg7[%c0_11, %c0_12] : memref<4x128xf32, #tpu.memory_space<vmem>>, vector<4x128xf32>
      tpu.vector_store %arg7[%c0_11, %c0_12], %13 {strides = array<i32>} : memref<4x128xf32, #tpu.memory_space<vmem>>, vector<4x128xf32>,
    } else {
    }
    %c0 = arith.constant 0 : index
    %c0_1 = arith.constant 0 : index
    %3 = vector.load %arg7[%c0, %c0_1] : memref<4x128xf32, #tpu.memory_space<vmem>>, vector<4x128xf32>
    %c0_2 = arith.constant 0 : index
    %c0_3 = arith.constant 0 : index
    %c0_4 = arith.constant 0 : index
    %4 = vector.load %arg3[%c0_2, %c0_3, %c0_4] : memref<1x4x1024xbf16, #tpu.memory_space<vmem>>, vector<1x4x1024xbf16>
    %5 = vector.shape_cast %4 : vector<1x4x1024xbf16> to vector<4x1024xbf16>
    %c0_5 = arith.constant 0 : index
    %c0_6 = arith.constant 0 : index
    %6 = vector.load %arg4[%c0_5, %c0_6] : memref<1024x128xbf16, #tpu.memory_space<vmem>>, vector<1024x128xbf16>
    %cst = arith.constant dense<0.000000e+00> : vector<4x128xf32>
    %7 = tpu.matmul %5, %6, %cst {dimension_numbers = #tpu.dot_dimension_numbers<[1], [0], [0], [1], [0, 0, 1, 1], [], []>} : vector<4x1024xbf16>, vector<1024x128xbf16>, vector<4x128xf32> -> vector<4x128xf32>
    %8 = arith.addf %3, %7 : vector<4x128xf32>
    %c0_7 = arith.constant 0 : index
    %c0_8 = arith.constant 0 : index
    %9 = vector.load %arg7[%c0_7, %c0_8] : memref<4x128xf32, #tpu.memory_space<vmem>>, vector<4x128xf32>
    tpu.vector_store %arg7[%c0_7, %c0_8], %8 {strides = array<i32>} : memref<4x128xf32, #tpu.memory_space<vmem>>, vector<4x128xf32>,
    %c7_i32 = arith.constant 7 : i32
    %10 = arith.cmpi eq, %arg2, %c7_i32 : i32
    %11 = arith.extui %10 : i1 to i32
    %c0_i32_9 = arith.constant 0 : i32
    %12 = arith.cmpi ne, %11, %c0_i32_9 : i32
    scf.if %12 {
      %c0_10 = arith.constant 0 : index
      %c0_11 = arith.constant 0 : index
      %13 = vector.load %arg7[%c0_10, %c0_11] : memref<4x128xf32, #tpu.memory_space<vmem>>, vector<4x128xf32>
      %c0_12 = arith.constant 0 : index
      %c0_13 = arith.constant 0 : index
      %14 = vector.load %arg5[%c0_12, %c0_13] : memref<1x128xf32, #tpu.memory_space<vmem>>, vector<1x128xf32>
      %15 = vector.broadcast %14 : vector<1x128xf32> to vector<4x128xf32>
      %16 = arith.addf %13, %15 : vector<4x128xf32>
      %c0_14 = arith.constant 0 : index
      %c0_15 = arith.constant 0 : index
      %c0_16 = arith.constant 0 : index
      %17 = vector.load %arg6[%c0_14, %c0_15, %c0_16] : memref<1x4x128xf32, #tpu.memory_space<vmem>>, vector<1x4x128xf32>
      %18 = vector.shape_cast %17 : vector<1x4x128xf32> to vector<4x128xf32>
      %19 = vector.shape_cast %16 : vector<4x128xf32> to vector<1x4x128xf32>
      tpu.vector_store %arg6[%c0_14, %c0_15, %c0_16], %19 {strides = array<i32>} : memref<1x4x128xf32, #tpu.memory_space<vmem>>, vector<1x4x128xf32>,
    } else {
    }
    return
  }
  func.func @transform_0(%arg0: i32, %arg1: i32, %arg2: i32) -> (i32, i32, i32) {
    %c0_i32 = arith.constant 0 : i32
    return %arg0, %arg1, %arg2 : i32, i32, i32
  }
  func.func @transform_1(%arg0: i32, %arg1: i32, %arg2: i32) -> (i32, i32) {
    %c0_i32 = arith.constant 0 : i32
    %c0_i32_0 = arith.constant 0 : i32
    return %arg2, %c0_i32 : i32, i32
  }
  func.func @transform_2(%arg0: i32, %arg1: i32, %arg2: i32) -> (i32, i32) {
    %c0_i32 = arith.constant 0 : i32
    %c0_i32_0 = arith.constant 0 : i32
    %c0_i32_1 = arith.constant 0 : i32
    return %c0_i32, %c0_i32_0 : i32, i32
  }
  func.func @transform_3(%arg0: i32, %arg1: i32, %arg2: i32) -> (i32, i32, i32) {
    %c0_i32 = arith.constant 0 : i32
    %c0_i32_0 = arith.constant 0 : i32
    return %arg0, %arg1, %c0_i32 : i32, i32, i32
  }
}

</mosaic_0001>

<llo_original>
// kernel: discriminator_forward.5
$region0: #{discriminator_forward.5}
  #allocation0 [shape = 'u32[]', space=smem, size = 0x4, offset = 0x4, fixed_abs, tag = 'smem constant byte address 0x4 - core index']
  #allocation1 [shape = 'u32[144,128]{1,0:T(1,128)}', space=vmem, size = 0x12000, scoped, tag = 'internal scratch']
  #allocation2 [shape = 'f32[256,128]{1,0:T(8,128)}', space=vmem, size = 0x20000, scoped, tag = 'scratch operand']
  %s0 = inlined_call_operand.vmem [shape: bf16[2,256,128], index: 0, kind: input, shape index: {}]
  %s1 = inlined_call_operand.vmem [shape: bf16[128,128], index: 1, kind: input, shape index: {}]
  %s2 = inlined_call_operand.vmem [shape: f32[1,128], index: 2, kind: input, shape index: {}]
  %s3 = inlined_call_operand.vmem [shape: bf16[2,256,128], index: 3, kind: output, shape index: {}]
  %s4 = sld [smem:[#allocation0]]
  $region53: #{discriminator_forward.5} parent=0
    _
  %s6 = ssub.s32 1, %s4
  %s7 = scalar_select 0, %s6, %s4
  loop: start=0, step=1, limit=4
  $region2: #{discriminator_forward.5} parent=0 // loop_pre_header
    _
  $region3: #{discriminator_forward.5} parent=0 // loop_header
    %s9 = sphi 0, %s13
    %p10 = scmp.ge.s32.totalorder %s9, 4
    %s16 = sphi 0, %s35
    %s17 = sphi 0, %s31
    %s18 = sphi 0, %s27
    %s19 = sphi 0, %s16
    %s20 = sphi 0, %s17
    %s21 = sphi 0, %s18
    %s22 = sphi 0, %s19
    %s23 = sphi 0, %s20
    %s24 = sphi 0, %s21
    %s42 = sphi 0, %s44
    %s45 = sphi 0, %s42
    %s46 = sphi 0, %s45
    %s62 = sphi 0, %s46
    %s68 = sphi 0, %s70
    %s71 = sphi 0, %s68
    %s72 = sphi 0, %s71
    %s88 = sphi 0, %s72
    %s92 = sphi 0, %s92
    %s94 = sphi 0, %s92
    %s95 = sphi 0, %s94
    %s109 = sphi 0, %s95
    %s117 = sphi 0, %s119
    %s120 = sphi 0, %s117
    %s121 = sphi 0, %s120
    %s137 = sphi 0, %s121
  $region4: #{discriminator_forward.5} parent=0 // loop_header_branch
    %12 = sbr.rel (%p10) target = $region8
  $region5: #{discriminator_forward.5} parent=0 // loop_body
    %s14 = ssub.s32 %s9, 1
    %s15 = ssub.s32 %s9, 2
    %s25 = sadd.s32 1, %s18
    %p26 = scmp.ge.s32.totalorder %s25, 1
    %s27 = scalar_select %p26, 0, %s25
    %s28 = sadd.s32 1, %s17
    %s29 = scalar_select %p26, %s28, %s17
    %p30 = scmp.ge.s32.totalorder %s29, 1
    %s31 = scalar_select %p30, 0, %s29
    %s32 = sadd.s32 1, %s16
    %s33 = scalar_select %p30, %s32, %s16
    %p34 = scmp.ge.s32.totalorder %s33, 2
    %s35 = scalar_select %p34, 0, %s33
    %s36 = ssub.s32 %s16, %s35
    %s37 = ssub.s32 %s17, %s31
    %s38 = sor.u32 %s36, %s37
    %s39 = ssub.s32 %s18, %s27
    %s40 = sor.u32 %s38, %s39
    %p41 = scmp.eq.s32.totalorder %s40, 0
    %s43 = sadd.s32 %s42, 1
    %s44 = scalar_select %p41, %s42, %s43
    %p47 = pneg %p41
    %p48 = scmp.eq.s32.totalorder %s9, 1
    %p49 = por %p47, %p48
    %p50 = scmp.ne.s32.totalorder %s42, %s45
    %p51 = scmp.eq.s32.totalorder %s9, 0
    %p52 = por %p50, %p51
    %p53 = scmp.ne.s32.totalorder %s42, %s45
    %p54 = scmp.eq.s32.totalorder %s14, 1
    %p55 = por %p53, %p54
    %p56 = scmp.ne.s32.totalorder %s45, %s46
    %p57 = scmp.eq.s32.totalorder %s14, 0
    %p58 = por %p56, %p57
    %p59 = scmp.ne.s32.totalorder %s45, %s46
    %p60 = scmp.eq.s32.totalorder %s15, 1
    %p61 = por %p59, %p60
    %p63 = scmp.ne.s32.totalorder %s46, %s62
    %p64 = scmp.eq.s32.totalorder %s15, 0
    %p65 = por %p63, %p64
    %s66 = ssub.s32 %s18, %s27
    %p67 = scmp.eq.s32.totalorder %s66, 0
    %s69 = sadd.s32 %s68, 1
    %s70 = scalar_select %p67, %s68, %s69
    %p73 = pneg %p67
    %p74 = scmp.eq.s32.totalorder %s9, 1
    %p75 = por %p73, %p74
    %p76 = scmp.ne.s32.totalorder %s68, %s71
    %p77 = scmp.eq.s32.totalorder %s9, 0
    %p78 = por %p76, %p77
    %p79 = scmp.ne.s32.totalorder %s68, %s71
    %p80 = scmp.eq.s32.totalorder %s14, 1
    %p81 = por %p79, %p80
    %p82 = scmp.ne.s32.totalorder %s71, %s72
    %p83 = scmp.eq.s32.totalorder %s14, 0
    %p84 = por %p82, %p83
    %p85 = scmp.ne.s32.totalorder %s71, %s72
    %p86 = scmp.eq.s32.totalorder %s15, 1
    %p87 = por %p85, %p86
    %p89 = scmp.ne.s32.totalorder %s72, %s88
    %p90 = scmp.eq.s32.totalorder %s15, 0
    %p91 = por %p89, %p90
    %s93 = sadd.s32 %s92, 1
    %p96 = scmp.eq.s32.totalorder %s9, 1
    %p97 = scmp.ne.s32.totalorder %s92, %s94
    %p98 = scmp.eq.s32.totalorder %s9, 0
    %p99 = por %p97, %p98
    %p100 = scmp.ne.s32.totalorder %s92, %s94
    %p101 = scmp.eq.s32.totalorder %s14, 1
    %p102 = por %p100, %p101
    %p103 = scmp.ne.s32.totalorder %s94, %s95
    %p104 = scmp.eq.s32.totalorder %s14, 0
    %p105 = por %p103, %p104
    %p106 = scmp.ne.s32.totalorder %s94, %s95
    %p107 = scmp.eq.s32.totalorder %s15, 1
    %p108 = por %p106, %p107
    %p110 = scmp.ne.s32.totalorder %s95, %s109
    %p111 = scmp.eq.s32.totalorder %s15, 0
    %p112 = por %p110, %p111
    %s113 = ssub.s32 %s16, %s35
    %s114 = ssub.s32 %s17, %s31
    %s115 = sor.u32 %s113, %s114
    %p116 = scmp.eq.s32.totalorder %s115, 0
    %s118 = sadd.s32 %s117, 1
    %s119 = scalar_select %p116, %s117, %s118
    %p122 = pneg %p116
    %p123 = scmp.eq.s32.totalorder %s9, 1
    %p124 = por %p122, %p123
    %p125 = scmp.ne.s32.totalorder %s117, %s120
    %p126 = scmp.eq.s32.totalorder %s9, 0
    %p127 = por %p125, %p126
    %p128 = scmp.ne.s32.totalorder %s117, %s120
    %p129 = scmp.eq.s32.totalorder %s14, 1
    %p130 = por %p128, %p129
    %p131 = scmp.ne.s32.totalorder %s120, %s121
    %p132 = scmp.eq.s32.totalorder %s14, 0
    %p133 = por %p131, %p132
    %p134 = scmp.ne.s32.totalorder %s120, %s121
    %p135 = scmp.eq.s32.totalorder %s15, 1
    %p136 = por %p134, %p135
    %p138 = scmp.ne.s32.totalorder %s121, %s137
    %p139 = scmp.eq.s32.totalorder %s15, 0
    %p140 = por %p138, %p139
    %p141 = scmp.le.s32.totalorder 1, %s9
    %p142 = scmp.lt.s32.totalorder %s9, 3
    %p143 = pnand %p141, %p142
    %p144 = pneg %p143
    // Predicated region
    $region9: #{discriminator_forward.5} parent=5 // pred_check
      _
    $region10: #{discriminator_forward.5} parent=5 // pred_check_branch
      %146 = sbr.rel (%p143) target = $region12
    $region11: #{discriminator_forward.5} parent=5 // pred_region
      %s147 = ssub.s32 %s9, 1
      // Predicated region
      $region13: #{discriminator_forward.5} parent=11 // pred_check
        %p148 = pneg %p84
      $region14: #{discriminator_forward.5} parent=11 // pred_check_branch
        %150 = sbr.rel (%p148) target = $region16
      $region15: #{discriminator_forward.5} parent=11 // pred_region
        %s151 = smul.u32 16, %s21
        %p152 = scmp.lt.s32.totalorder %s151, 15
        %s153 = scalar_select %p152, %s151, 15
        %s154 = smul.addr %s153, 4
        %s155 = scalar_lea.vmem %s1, %s154
        %s156 = smul.u32 16, %s21
      $region16: #{discriminator_forward.5} parent=11 // pred_fallthru
        _
      // Predicated region
      $region17: #{discriminator_forward.5} parent=11 // pred_check
        %p157 = pneg %p105
      $region18: #{discriminator_forward.5} parent=11 // pred_check_branch
        %159 = sbr.rel (%p157) target = $region20
      $region19: #{discriminator_forward.5} parent=11 // pred_region
        _
      $region20: #{discriminator_forward.5} parent=11 // pred_fallthru
        _
    $region12: #{discriminator_forward.5} parent=5 // pred_fallthru
      _
    %p160 = scmp.lt.s32.totalorder %s9, 2
    // Predicated region
    $region21: #{discriminator_forward.5} parent=5 // pred_check
      %p161 = pneg %p160
    $region22: #{discriminator_forward.5} parent=5 // pred_check_branch
      %163 = sbr.rel (%p161) target = $region24
    $region23: #{discriminator_forward.5} parent=5 // pred_region
      // Predicated region
      $region25: #{discriminator_forward.5} parent=23 // pred_check
        %p164 = pneg %p52
      $region26: #{discriminator_forward.5} parent=23 // pred_check_branch
        %166 = sbr.rel (%p164) target = $region28
      $region27: #{discriminator_forward.5} parent=23 // pred_region
        %s167 = smul.u32 32, %s17
        %p168 = scmp.lt.s32.totalorder %s16, 1
        %s169 = scalar_select %p168, %s16, 1
        %p170 = scmp.lt.s32.totalorder %s167, 31
        %s171 = scalar_select %p170, %s167, 31
        %p172 = scmp.lt.s32.totalorder %s18, 0
        %s173 = scalar_select %p172, %s18, 0
        %s174 = sadd.s32 %s173, %s171
        %s175 = smul.addr %s169, 32
        %s176 = sadd.s32 %s174, %s175
        %s177 = smul.addr %s176, 4
        %s178 = scalar_lea.vmem %s0, %s177
        %s179 = smul.u32 32, %s17
      $region28: #{discriminator_forward.5} parent=23 // pred_fallthru
        _
    $region24: #{discriminator_forward.5} parent=5 // pred_fallthru
      _
    %p180 = scmp.le.s32.totalorder 1, %s9
    %p181 = scmp.lt.s32.totalorder %s9, 3
    %p182 = pnand %p180, %p181
    %p183 = pneg %p182
    // Predicated region
    $region29: #{discriminator_forward.5} parent=5 // pred_check
      _
    $region30: #{discriminator_forward.5} parent=5 // pred_check_branch
      %185 = sbr.rel (%p182) target = $region32
    $region31: #{discriminator_forward.5} parent=5 // pred_region
      %s186 = ssub.s32 %s9, 1
      %s187 = smul.u32 32, %s20
      %p188 = scmp.lt.s32.totalorder %s19, 1
      %s189 = scalar_select %p188, %s19, 1
      %p190 = scmp.lt.s32.totalorder %s187, 31
      %s191 = scalar_select %p190, %s187, 31
      %p192 = scmp.lt.s32.totalorder %s21, 0
      %s193 = scalar_select %p192, %s21, 0
      %s194 = sadd.s32 %s193, %s191
      %s195 = smul.addr %s189, 32
      %s196 = sadd.s32 %s194, %s195
      %s197 = smul.addr %s196, 4
      %s198 = scalar_lea.vmem %s0, %s197
      %p199 = pneg %p58
      %p200 = pneg %p55
      %s201 = smul.u32 16, %s21
      %p202 = scmp.lt.s32.totalorder %s201, 15
      %s203 = scalar_select %p202, %s201, 15
      %s204 = smul.addr %s203, 4
      %s205 = scalar_lea.vmem %s1, %s204
      %p206 = pneg %p84
      %p207 = pneg %p81
      %p208 = pneg %p105
      %p209 = pneg %p102
      %p210 = pneg %p133
      %p211 = pneg %p130
      %s212 = smul.u32 32, %s20
      %p213 = scmp.lt.s32.totalorder %s19, 1
      %s214 = scalar_select %p213, %s19, 1
      %p215 = scmp.lt.s32.totalorder %s212, 31
      %s216 = scalar_select %p215, %s212, 31
      %s217 = smul.addr %s214, 32
      %s218 = sadd.s32 %s216, %s217
      %s219 = smul.addr %s218, 4
      %s220 = scalar_lea.vmem %s3, %s219
      %s221 = smul.u32 32, %s20
      %p222 = scmp.lt.s32.totalorder %s19, 1
      %s223 = scalar_select %p222, %s19, 1
      %p224 = scmp.lt.s32.totalorder %s221, 31
      %s225 = scalar_select %p224, %s221, 31
      %p226 = scmp.lt.s32.totalorder %s21, 0
      %s227 = scalar_select %p226, %s21, 0
      %s228 = sadd.s32 %s227, %s225
      %s229 = smul.addr %s223, 32
      %s230 = sadd.s32 %s228, %s229
      %s231 = smul.addr %s230, 4
      %s232 = scalar_lea.vmem %s0, %s231
      %s233 = smul.u32 32, %s20
      %s234 = smul.u32 16, %s21
      %p235 = scmp.lt.s32.totalorder %s234, 15
      %s236 = scalar_select %p235, %s234, 15
      %s237 = smul.addr %s236, 4
      %s238 = scalar_lea.vmem %s1, %s237
      %s239 = smul.u32 16, %s21
      %s240 = smul.u32 32, %s20
      %p241 = scmp.lt.s32.totalorder %s19, 1
      %s242 = scalar_select %p241, %s19, 1
      %p243 = scmp.lt.s32.totalorder %s240, 31
      %s244 = scalar_select %p243, %s240, 31
      %s245 = smul.addr %s242, 32
      %s246 = sadd.s32 %s244, %s245
      %s247 = smul.addr %s246, 4
      %s248 = scalar_lea.vmem %s3, %s247
      %s249 = smul.u32 32, %s20
      %p251 = scmp.eq.s32.totalorder %s21, 0
      // Predicated region
      $region33: #{discriminator_forward.5} parent=31 // pred_check
        %p252 = pneg %p251
      $region34: #{discriminator_forward.5} parent=31 // pred_check_branch
        %254 = sbr.rel (%p252) target = $region36
      $region35: #{discriminator_forward.5} parent=31 // pred_region
        %255 = vst [vmem:[#allocation2] sm:$0xff] 0.0
        %256 = vst [vmem:[#allocation2 + $0x8] sm:$0xff] 0.0
        %257 = vst [vmem:[#allocation2 + $0x10] sm:$0xff] 0.0
        %258 = vst [vmem:[#allocation2 + $0x18] sm:$0xff] 0.0
        %259 = vst [vmem:[#allocation2 + $0x20] sm:$0xff] 0.0
        %260 = vst [vmem:[#allocation2 + $0x28] sm:$0xff] 0.0
        %261 = vst [vmem:[#allocation2 + $0x30] sm:$0xff] 0.0
        %262 = vst [vmem:[#allocation2 + $0x38] sm:$0xff] 0.0
        %263 = vst [vmem:[#allocation2 + $0x40] sm:$0xff] 0.0
        %264 = vst [vmem:[#allocation2 + $0x48] sm:$0xff] 0.0
        %265 = vst [vmem:[#allocation2 + $0x50] sm:$0xff] 0.0
        %266 = vst [vmem:[#allocation2 + $0x58] sm:$0xff] 0.0
        %267 = vst [vmem:[#allocation2 + $0x60] sm:$0xff] 0.0
        %268 = vst [vmem:[#allocation2 + $0x68] sm:$0xff] 0.0
        %269 = vst [vmem:[#allocation2 + $0x70] sm:$0xff] 0.0
        %270 = vst [vmem:[#allocation2 + $0x78] sm:$0xff] 0.0
        %271 = vst [vmem:[#allocation2 + $0x80] sm:$0xff] 0.0
        %272 = vst [vmem:[#allocation2 + $0x88] sm:$0xff] 0.0
        %273 = vst [vmem:[#allocation2 + $0x90] sm:$0xff] 0.0
        %274 = vst [vmem:[#allocation2 + $0x98] sm:$0xff] 0.0
        %275 = vst [vmem:[#allocation2 + $0xa0] sm:$0xff] 0.0
        %276 = vst [vmem:[#allocation2 + $0xa8] sm:$0xff] 0.0
        %277 = vst [vmem:[#allocation2 + $0xb0] sm:$0xff] 0.0
        %278 = vst [vmem:[#allocation2 + $0xb8] sm:$0xff] 0.0
        %279 = vst [vmem:[#allocation2 + $0xc0] sm:$0xff] 0.0
        %280 = vst [vmem:[#allocation2 + $0xc8] sm:$0xff] 0.0
        %281 = vst [vmem:[#allocation2 + $0xd0] sm:$0xff] 0.0
        %282 = vst [vmem:[#allocation2 + $0xd8] sm:$0xff] 0.0
        %283 = vst [vmem:[#allocation2 + $0xe0] sm:$0xff] 0.0
        %284 = vst [vmem:[#allocation2 + $0xe8] sm:$0xff] 0.0
        %285 = vst [vmem:[#allocation2 + $0xf0] sm:$0xff] 0.0
        %286 = vst [vmem:[#allocation2 + $0xf8] sm:$0xff] 0.0
      $region36: #{discriminator_forward.5} parent=31 // pred_fallthru
        _
      %v287 = vld [vmem:[#allocation2] sm:$0xff]
      %v288 = vld [vmem:[#allocation2 + $0x8] sm:$0xff]
      %v289 = vld [vmem:[#allocation2 + $0x10] sm:$0xff]
      %v290 = vld [vmem:[#allocation2 + $0x18] sm:$0xff]
      %v291 = vld [vmem:[#allocation2 + $0x20] sm:$0xff]
      %v292 = vld [vmem:[#allocation2 + $0x28] sm:$0xff]
      %v293 = vld [vmem:[#allocation2 + $0x30] sm:$0xff]
      %v294 = vld [vmem:[#allocation2 + $0x38] sm:$0xff]
      %v295 = vld [vmem:[#allocation2 + $0x40] sm:$0xff]
      %v296 = vld [vmem:[#allocation2 + $0x48] sm:$0xff]
      %v297 = vld [vmem:[#allocation2 + $0x50] sm:$0xff]
      %v298 = vld [vmem:[#allocation2 + $0x58] sm:$0xff]
      %v299 = vld [vmem:[#allocation2 + $0x60] sm:$0xff]
      %v300 = vld [vmem:[#allocation2 + $0x68] sm:$0xff]
      %v301 = vld [vmem:[#allocation2 + $0x70] sm:$0xff]
      %v302 = vld [vmem:[#allocation2 + $0x78] sm:$0xff]
      %v303 = vld [vmem:[#allocation2 + $0x80] sm:$0xff]
      %v304 = vld [vmem:[#allocation2 + $0x88] sm:$0xff]
      %v305 = vld [vmem:[#allocation2 + $0x90] sm:$0xff]
      %v306 = vld [vmem:[#allocation2 + $0x98] sm:$0xff]
      %v307 = vld [vmem:[#allocation2 + $0xa0] sm:$0xff]
      %v308 = vld [vmem:[#allocation2 + $0xa8] sm:$0xff]
      %v309 = vld [vmem:[#allocation2 + $0xb0] sm:$0xff]
      %v310 = vld [vmem:[#allocation2 + $0xb8] sm:$0xff]
      %v311 = vld [vmem:[#allocation2 + $0xc0] sm:$0xff]
      %v312 = vld [vmem:[#allocation2 + $0xc8] sm:$0xff]
      %v313 = vld [vmem:[#allocation2 + $0xd0] sm:$0xff]
      %v314 = vld [vmem:[#allocation2 + $0xd8] sm:$0xff]
      %v315 = vld [vmem:[#allocation2 + $0xe0] sm:$0xff]
      %v316 = vld [vmem:[#allocation2 + $0xe8] sm:$0xff]
      %v317 = vld [vmem:[#allocation2 + $0xf0] sm:$0xff]
      %v318 = vld [vmem:[#allocation2 + $0xf8] sm:$0xff]
      %v319 = vld [vmem:[%s232] sm:$0xf]
      %v320 = vld [vmem:[%s232 + $0x4] sm:$0xf]
      %v321 = vld [vmem:[%s232 + $0x8] sm:$0xf]
      %v322 = vld [vmem:[%s232 + $0xc] sm:$0xf]
      %v323 = vld [vmem:[%s232 + $0x10] sm:$0xf]
      %v324 = vld [vmem:[%s232 + $0x14] sm:$0xf]
      %v325 = vld [vmem:[%s232 + $0x18] sm:$0xf]
      %v326 = vld [vmem:[%s232 + $0x1c] sm:$0xf]
      %v327 = vld [vmem:[%s232 + $0x20] sm:$0xf]
      %v328 = vld [vmem:[%s232 + $0x24] sm:$0xf]
      %v329 = vld [vmem:[%s232 + $0x28] sm:$0xf]
      %v330 = vld [vmem:[%s232 + $0x2c] sm:$0xf]
      %v331 = vld [vmem:[%s232 + $0x30] sm:$0xf]
      %v332 = vld [vmem:[%s232 + $0x34] sm:$0xf]
      %v333 = vld [vmem:[%s232 + $0x38] sm:$0xf]
      %v334 = vld [vmem:[%s232 + $0x3c] sm:$0xf]
      %v335 = vld [vmem:[%s232 + $0x40] sm:$0xf]
      %v336 = vld [vmem:[%s232 + $0x44] sm:$0xf]
      %v337 = vld [vmem:[%s232 + $0x48] sm:$0xf]
      %v338 = vld [vmem:[%s232 + $0x4c] sm:$0xf]
      %v339 = vld [vmem:[%s232 + $0x50] sm:$0xf]
      %v340 = vld [vmem:[%s232 + $0x54] sm:$0xf]
      %v341 = vld [vmem:[%s232 + $0x58] sm:$0xf]
      %v342 = vld [vmem:[%s232 + $0x5c] sm:$0xf]
      %v343 = vld [vmem:[%s232 + $0x60] sm:$0xf]
      %v344 = vld [vmem:[%s232 + $0x64] sm:$0xf]
      %v345 = vld [vmem:[%s232 + $0x68] sm:$0xf]
      %v346 = vld [vmem:[%s232 + $0x6c] sm:$0xf]
      %v347 = vld [vmem:[%s232 + $0x70] sm:$0xf]
      %v348 = vld [vmem:[%s232 + $0x74] sm:$0xf]
      %v349 = vld [vmem:[%s232 + $0x78] sm:$0xf]
      %v350 = vld [vmem:[%s232 + $0x7c] sm:$0xf]
      %v351 = vld [vmem:[%s238] sm:$0xf]
      %v352 = vld [vmem:[%s238 + $0x4] sm:$0xf]
      %v353 = vld [vmem:[%s238 + $0x8] sm:$0xf]
      %v354 = vld [vmem:[%s238 + $0xc] sm:$0xf]
      %v355 = vld [vmem:[%s238 + $0x10] sm:$0xf]
      %v356 = vld [vmem:[%s238 + $0x14] sm:$0xf]
      %v357 = vld [vmem:[%s238 + $0x18] sm:$0xf]
      %v358 = vld [vmem:[%s238 + $0x1c] sm:$0xf]
      %v359 = vld [vmem:[%s238 + $0x20] sm:$0xf]
      %v360 = vld [vmem:[%s238 + $0x24] sm:$0xf]
      %v361 = vld [vmem:[%s238 + $0x28] sm:$0xf]
      %v362 = vld [vmem:[%s238 + $0x2c] sm:$0xf]
      %v363 = vld [vmem:[%s238 + $0x30] sm:$0xf]
      %v364 = vld [vmem:[%s238 + $0x34] sm:$0xf]
      %v365 = vld [vmem:[%s238 + $0x38] sm:$0xf]
      %v366 = vld [vmem:[%s238 + $0x3c] sm:$0xf]
      %v399 = vunpack.c.l.b16 %v319
      %v400 = vunpack.c.l.b16 %v320
      %v401 = vunpack.c.l.b16 %v321
      %v402 = vunpack.c.l.b16 %v322
      %v403 = vunpack.c.l.b16 %v323
      %v404 = vunpack.c.l.b16 %v324
      %v405 = vunpack.c.l.b16 %v325
      %v406 = vunpack.c.l.b16 %v326
      %v407 = vunpack.c.l.b16 %v327
      %v408 = vunpack.c.l.b16 %v328
      %v409 = vunpack.c.l.b16 %v329
      %v410 = vunpack.c.l.b16 %v330
      %v411 = vunpack.c.l.b16 %v331
      %v412 = vunpack.c.l.b16 %v332
      %v413 = vunpack.c.l.b16 %v333
      %v414 = vunpack.c.l.b16 %v334
      %v415 = vunpack.c.l.b16 %v335
      %v416 = vunpack.c.l.b16 %v336
      %v417 = vunpack.c.l.b16 %v337
      %v418 = vunpack.c.l.b16 %v338
      %v419 = vunpack.c.l.b16 %v339
      %v420 = vunpack.c.l.b16 %v340
      %v421 = vunpack.c.l.b16 %v341
      %v422 = vunpack.c.l.b16 %v342
      %v423 = vunpack.c.l.b16 %v343
      %v424 = vunpack.c.l.b16 %v344
      %v425 = vunpack.c.l.b16 %v345
      %v426 = vunpack.c.l.b16 %v346
      %v427 = vunpack.c.l.b16 %v347
      %v428 = vunpack.c.l.b16 %v348
      %v429 = vunpack.c.l.b16 %v349
      %v430 = vunpack.c.l.b16 %v350
      %v431 = vpack.c.b16 %v400, %v399
      %v432 = vpack.c.b16 %v402, %v401
      %v433 = vpack.c.b16 %v404, %v403
      %v434 = vpack.c.b16 %v406, %v405
      %v435 = vpack.c.b16 %v408, %v407
      %v436 = vpack.c.b16 %v410, %v409
      %v437 = vpack.c.b16 %v412, %v411
      %v438 = vpack.c.b16 %v414, %v413
      %v439 = vpack.c.b16 %v416, %v415
      %v440 = vpack.c.b16 %v418, %v417
      %v441 = vpack.c.b16 %v420, %v419
      %v442 = vpack.c.b16 %v422, %v421
      %v443 = vpack.c.b16 %v424, %v423
      %v444 = vpack.c.b16 %v426, %v425
      %v445 = vpack.c.b16 %v428, %v427
      %v446 = vpack.c.b16 %v430, %v429
      %v479 = vunpack.c.l.b16 %v351
      %v480 = vunpack.c.l.b16 %v352
      %v481 = vunpack.c.l.b16 %v353
      %v482 = vunpack.c.l.b16 %v354
      %v483 = vunpack.c.l.b16 %v355
      %v484 = vunpack.c.l.b16 %v356
      %v485 = vunpack.c.l.b16 %v357
      %v486 = vunpack.c.l.b16 %v358
      %v487 = vunpack.c.l.b16 %v359
      %v488 = vunpack.c.l.b16 %v360
      %v489 = vunpack.c.l.b16 %v361
      %v490 = vunpack.c.l.b16 %v362
      %v491 = vunpack.c.l.b16 %v363
      %v492 = vunpack.c.l.b16 %v364
      %v493 = vunpack.c.l.b16 %v365
      %v494 = vunpack.c.l.b16 %v366
      %v495 = vpack.c.b16 %v480, %v479
      %v496 = vpack.c.b16 %v482, %v481
      %v497 = vpack.c.b16 %v484, %v483
      %v498 = vpack.c.b16 %v486, %v485
      %v499 = vpack.c.b16 %v488, %v487
      %v500 = vpack.c.b16 %v490, %v489
      %v501 = vpack.c.b16 %v492, %v491
      %v502 = vpack.c.b16 %v494, %v493
      %511 = vmatprep.subr.bf16.mxu0 0
      %512 = vmatpush1.bf16.msra.mxu0 %v495
      %513 = vmatprep.subr.bf16.mxu0 0
      %514 = vmatpush1.bf16.msra.mxu0 %v496
      %515 = vmatprep.subr.bf16.mxu0 0
      %516 = vmatpush1.bf16.msra.mxu0 %v497
      %517 = vmatprep.subr.bf16.mxu0 0
      %518 = vmatpush1.bf16.msra.mxu0 %v498
      %519 = vmatprep.subr.bf16.mxu0 0
      %520 = vmatpush1.bf16.msra.mxu0 %v499
      %521 = vmatprep.subr.bf16.mxu0 0
      %522 = vmatpush1.bf16.msra.mxu0 %v500
      %523 = vmatprep.subr.bf16.mxu0 0
      %524 = vmatpush1.bf16.msra.mxu0 %v501
      %525 = vmatprep.subr.bf16.mxu0 0
      %526 = vmatpush1.bf16.msra.mxu0 %v502
      %527 = vmatprep.subr.bf16.mxu0 0
      %528 = vmatpush1.bf16.msra.mxu0 0
      %529 = vmatprep.subr.bf16.mxu0 0
      %530 = vmatpush1.bf16.msra.mxu0 0
      %531 = vmatprep.subr.bf16.mxu0 0
      %532 = vmatpush1.bf16.msra.mxu0 0
      %533 = vmatprep.subr.bf16.mxu0 0
      %534 = vmatpush1.bf16.msra.mxu0 0
      %535 = vmatprep.subr.bf16.mxu0 0
      %536 = vmatpush1.bf16.msra.mxu0 0
      %537 = vmatprep.subr.bf16.mxu0 0
      %538 = vmatpush1.bf16.msra.mxu0 0
      %539 = vmatprep.subr.bf16.mxu0 0
      %540 = vmatpush1.bf16.msra.mxu0 0
      %541 = vmatprep.subr.bf16.mxu0 0
      %542 = vmatpush1.bf16.msra.mxu0 0
      %543 = vmatprep.mubr.bf16.mxu0 0
      %544 = vmatmul.mubr.bf16.gmra.mrb[0].mxu0 %v431
      %v545 = vpop.f32.mrb[0].mxu0
      %v546 = vadd.f32 0.0, %v545
      %v547 = vpop.f32.mrb[0].mxu0
      %v548 = vpop.f32.mrb[0].mxu0
      %v549 = vadd.f32 0.0, %v548
      %v550 = vpop.f32.mrb[0].mxu0
      %551 = vmatprep.mubr.bf16.mxu0 0
      %552 = vmatmul.mubr.bf16.gmra.mrb[0].mxu0 %v432
      %v553 = vpop.f32.mrb[0].mxu0
      %v554 = vadd.f32 0.0, %v553
      %v555 = vpop.f32.mrb[0].mxu0
      %v556 = vpop.f32.mrb[0].mxu0
      %v557 = vadd.f32 0.0, %v556
      %v558 = vpop.f32.mrb[0].mxu0
      %559 = vmatprep.mubr.bf16.mxu0 0
      %560 = vmatmul.mubr.bf16.gmra.mrb[0].mxu0 %v433
      %v561 = vpop.f32.mrb[0].mxu0
      %v562 = vadd.f32 0.0, %v561
      %v563 = vpop.f32.mrb[0].mxu0
      %v564 = vpop.f32.mrb[0].mxu0
      %v565 = vadd.f32 0.0, %v564
      %v566 = vpop.f32.mrb[0].mxu0
      %567 = vmatprep.mubr.bf16.mxu0 0
      %568 = vmatmul.mubr.bf16.gmra.mrb[0].mxu0 %v434
      %v569 = vpop.f32.mrb[0].mxu0
      %v570 = vadd.f32 0.0, %v569
      %v571 = vpop.f32.mrb[0].mxu0
      %v572 = vpop.f32.mrb[0].mxu0
      %v573 = vadd.f32 0.0, %v572
      %v574 = vpop.f32.mrb[0].mxu0
      %575 = vmatprep.mubr.bf16.mxu0 0
      %576 = vmatmul.mubr.bf16.gmra.mrb[0].mxu0 %v435
      %v577 = vpop.f32.mrb[0].mxu0
      %v578 = vadd.f32 0.0, %v577
      %v579 = vpop.f32.mrb[0].mxu0
      %v580 = vpop.f32.mrb[0].mxu0
      %v581 = vadd.f32 0.0, %v580
      %v582 = vpop.f32.mrb[0].mxu0
      %583 = vmatprep.mubr.bf16.mxu0 0
      %584 = vmatmul.mubr.bf16.gmra.mrb[0].mxu0 %v436
      %v585 = vpop.f32.mrb[0].mxu0
      %v586 = vadd.f32 0.0, %v585
      %v587 = vpop.f32.mrb[0].mxu0
      %v588 = vpop.f32.mrb[0].mxu0
      %v589 = vadd.f32 0.0, %v588
      %v590 = vpop.f32.mrb[0].mxu0
      %591 = vmatprep.mubr.bf16.mxu0 0
      %592 = vmatmul.mubr.bf16.gmra.mrb[0].mxu0 %v437
      %v593 = vpop.f32.mrb[0].mxu0
      %v594 = vadd.f32 0.0, %v593
      %v595 = vpop.f32.mrb[0].mxu0
      %v596 = vpop.f32.mrb[0].mxu0
      %v597 = vadd.f32 0.0, %v596
      %v598 = vpop.f32.mrb[0].mxu0
      %599 = vmatprep.mubr.bf16.mxu0 0
      %600 = vmatmul.mubr.bf16.gmra.mrb[0].mxu0 %v438
      %v601 = vpop.f32.mrb[0].mxu0
      %v602 = vadd.f32 0.0, %v601
      %v603 = vpop.f32.mrb[0].mxu0
      %v604 = vpop.f32.mrb[0].mxu0
      %v605 = vadd.f32 0.0, %v604
      %v606 = vpop.f32.mrb[0].mxu0
      %607 = vmatprep.mubr.bf16.mxu0 0
      %608 = vmatmul.mubr.bf16.gmra.mrb[0].mxu0 %v439
      %v609 = vpop.f32.mrb[0].mxu0
      %v610 = vadd.f32 0.0, %v609
      %v611 = vpop.f32.mrb[0].mxu0
      %v612 = vpop.f32.mrb[0].mxu0
      %v613 = vadd.f32 0.0, %v612
      %v614 = vpop.f32.mrb[0].mxu0
      %615 = vmatprep.mubr.bf16.mxu0 0
      %616 = vmatmul.mubr.bf16.gmra.mrb[0].mxu0 %v440
      %v617 = vpop.f32.mrb[0].mxu0
      %v618 = vadd.f32 0.0, %v617
      %v619 = vpop.f32.mrb[0].mxu0
      %v620 = vpop.f32.mrb[0].mxu0
      %v621 = vadd.f32 0.0, %v620
      %v622 = vpop.f32.mrb[0].mxu0
      %623 = vmatprep.mubr.bf16.mxu0 0
      %624 = vmatmul.mubr.bf16.gmra.mrb[0].mxu0 %v441
      %v625 = vpop.f32.mrb[0].mxu0
      %v626 = vadd.f32 0.0, %v625
      %v627 = vpop.f32.mrb[0].mxu0
      %v628 = vpop.f32.mrb[0].mxu0
      %v629 = vadd.f32 0.0, %v628
      %v630 = vpop.f32.mrb[0].mxu0
      %631 = vmatprep.mubr.bf16.mxu0 0
      %632 = vmatmul.mubr.bf16.gmra.mrb[0].mxu0 %v442
      %v633 = vpop.f32.mrb[0].mxu0
      %v634 = vadd.f32 0.0, %v633
      %v635 = vpop.f32.mrb[0].mxu0
      %v636 = vpop.f32.mrb[0].mxu0
      %v637 = vadd.f32 0.0, %v636
      %v638 = vpop.f32.mrb[0].mxu0
      %639 = vmatprep.mubr.bf16.mxu0 0
      %640 = vmatmul.mubr.bf16.gmra.mrb[0].mxu0 %v443
      %v641 = vpop.f32.mrb[0].mxu0
      %v642 = vadd.f32 0.0, %v641
      %v643 = vpop.f32.mrb[0].mxu0
      %v644 = vpop.f32.mrb[0].mxu0
      %v645 = vadd.f32 0.0, %v644
      %v646 = vpop.f32.mrb[0].mxu0
      %647 = vmatprep.mubr.bf16.mxu0 0
      %648 = vmatmul.mubr.bf16.gmra.mrb[0].mxu0 %v444
      %v649 = vpop.f32.mrb[0].mxu0
      %v650 = vadd.f32 0.0, %v649
      %v651 = vpop.f32.mrb[0].mxu0
      %v652 = vpop.f32.mrb[0].mxu0
      %v653 = vadd.f32 0.0, %v652
      %v654 = vpop.f32.mrb[0].mxu0
      %655 = vmatprep.mubr.bf16.mxu0 0
      %656 = vmatmul.mubr.bf16.gmra.mrb[0].mxu0 %v445
      %v657 = vpop.f32.mrb[0].mxu0
      %v658 = vadd.f32 0.0, %v657
      %v659 = vpop.f32.mrb[0].mxu0
      %v660 = vpop.f32.mrb[0].mxu0
      %v661 = vadd.f32 0.0, %v660
      %v662 = vpop.f32.mrb[0].mxu0
      %663 = vmatprep.mubr.bf16.mxu0 0
      %664 = vmatmul.mubr.bf16.gmra.mrb[0].mxu0 %v446
      %v665 = vpop.f32.mrb[0].mxu0
      %v666 = vadd.f32 0.0, %v665
      %v667 = vpop.f32.mrb[0].mxu0
      %v668 = vpop.f32.mrb[0].mxu0
      %v669 = vadd.f32 0.0, %v668
      %v670 = vpop.f32.mrb[0].mxu0
      %671 = vdwg.mxu0
      %v672 = vadd.f32 %v287, %v546
      %v673 = vadd.f32 %v288, %v549
      %v674 = vadd.f32 %v289, %v554
      %v675 = vadd.f32 %v290, %v557
      %v676 = vadd.f32 %v291, %v562
      %v677 = vadd.f32 %v292, %v565
      %v678 = vadd.f32 %v293, %v570
      %v679 = vadd.f32 %v294, %v573
      %v680 = vadd.f32 %v295, %v578
      %v681 = vadd.f32 %v296, %v581
      %v682 = vadd.f32 %v297, %v586
      %v683 = vadd.f32 %v298, %v589
      %v684 = vadd.f32 %v299, %v594
      %v685 = vadd.f32 %v300, %v597
      %v686 = vadd.f32 %v301, %v602
      %v687 = vadd.f32 %v302, %v605
      %v688 = vadd.f32 %v303, %v610
      %v689 = vadd.f32 %v304, %v613
      %v690 = vadd.f32 %v305, %v618
      %v691 = vadd.f32 %v306, %v621
      %v692 = vadd.f32 %v307, %v626
      %v693 = vadd.f32 %v308, %v629
      %v694 = vadd.f32 %v309, %v634
      %v695 = vadd.f32 %v310, %v637
      %v696 = vadd.f32 %v311, %v642
      %v697 = vadd.f32 %v312, %v645
      %v698 = vadd.f32 %v313, %v650
      %v699 = vadd.f32 %v314, %v653
      %v700 = vadd.f32 %v315, %v658
      %v701 = vadd.f32 %v316, %v661
      %v702 = vadd.f32 %v317, %v666
      %v703 = vadd.f32 %v318, %v669
      %704 = vst [vmem:[#allocation2] sm:$0xff] %v672
      %705 = vst [vmem:[#allocation2 + $0x8] sm:$0xff] %v673
      %706 = vst [vmem:[#allocation2 + $0x10] sm:$0xff] %v674
      %707 = vst [vmem:[#allocation2 + $0x18] sm:$0xff] %v675
      %708 = vst [vmem:[#allocation2 + $0x20] sm:$0xff] %v676
      %709 = vst [vmem:[#allocation2 + $0x28] sm:$0xff] %v677
      %710 = vst [vmem:[#allocation2 + $0x30] sm:$0xff] %v678
      %711 = vst [vmem:[#allocation2 + $0x38] sm:$0xff] %v679
      %712 = vst [vmem:[#allocation2 + $0x40] sm:$0xff] %v680
      %713 = vst [vmem:[#allocation2 + $0x48] sm:$0xff] %v681
      %714 = vst [vmem:[#allocation2 + $0x50] sm:$0xff] %v682
      %715 = vst [vmem:[#allocation2 + $0x58] sm:$0xff] %v683
      %716 = vst [vmem:[#allocation2 + $0x60] sm:$0xff] %v684
      %717 = vst [vmem:[#allocation2 + $0x68] sm:$0xff] %v685
      %718 = vst [vmem:[#allocation2 + $0x70] sm:$0xff] %v686
      %719 = vst [vmem:[#allocation2 + $0x78] sm:$0xff] %v687
      %720 = vst [vmem:[#allocation2 + $0x80] sm:$0xff] %v688
      %721 = vst [vmem:[#allocation2 + $0x88] sm:$0xff] %v689
      %722 = vst [vmem:[#allocation2 + $0x90] sm:$0xff] %v690
      %723 = vst [vmem:[#allocation2 + $0x98] sm:$0xff] %v691
      %724 = vst [vmem:[#allocation2 + $0xa0] sm:$0xff] %v692
      %725 = vst [vmem:[#allocation2 + $0xa8] sm:$0xff] %v693
      %726 = vst [vmem:[#allocation2 + $0xb0] sm:$0xff] %v694
      %727 = vst [vmem:[#allocation2 + $0xb8] sm:$0xff] %v695
      %728 = vst [vmem:[#allocation2 + $0xc0] sm:$0xff] %v696
      %729 = vst [vmem:[#allocation2 + $0xc8] sm:$0xff] %v697
      %730 = vst [vmem:[#allocation2 + $0xd0] sm:$0xff] %v698
      %731 = vst [vmem:[#allocation2 + $0xd8] sm:$0xff] %v699
      %732 = vst [vmem:[#allocation2 + $0xe0] sm:$0xff] %v700
      %733 = vst [vmem:[#allocation2 + $0xe8] sm:$0xff] %v701
      %734 = vst [vmem:[#allocation2 + $0xf0] sm:$0xff] %v702
      %735 = vst [vmem:[#allocation2 + $0xf8] sm:$0xff] %v703
      // Predicated region
      $region37: #{discriminator_forward.5} parent=31 // pred_check
        %p736 = pneg %p251
      $region38: #{discriminator_forward.5} parent=31 // pred_check_branch
        %738 = sbr.rel (%p736) target = $region40
      $region39: #{discriminator_forward.5} parent=31 // pred_region
        %v739 = vld [vmem:[#allocation2] sm:$0xff]
        %v740 = vld [vmem:[#allocation2 + $0x8] sm:$0xff]
        %v741 = vld [vmem:[#allocation2 + $0x10] sm:$0xff]
        %v742 = vld [vmem:[#allocation2 + $0x18] sm:$0xff]
        %v743 = vld [vmem:[#allocation2 + $0x20] sm:$0xff]
        %v744 = vld [vmem:[#allocation2 + $0x28] sm:$0xff]
        %v745 = vld [vmem:[#allocation2 + $0x30] sm:$0xff]
        %v746 = vld [vmem:[#allocation2 + $0x38] sm:$0xff]
        %v747 = vld [vmem:[#allocation2 + $0x40] sm:$0xff]
        %v748 = vld [vmem:[#allocation2 + $0x48] sm:$0xff]
        %v749 = vld [vmem:[#allocation2 + $0x50] sm:$0xff]
        %v750 = vld [vmem:[#allocation2 + $0x58] sm:$0xff]
        %v751 = vld [vmem:[#allocation2 + $0x60] sm:$0xff]
        %v752 = vld [vmem:[#allocation2 + $0x68] sm:$0xff]
        %v753 = vld [vmem:[#allocation2 + $0x70] sm:$0xff]
        %v754 = vld [vmem:[#allocation2 + $0x78] sm:$0xff]
        %v755 = vld [vmem:[#allocation2 + $0x80] sm:$0xff]
        %v756 = vld [vmem:[#allocation2 + $0x88] sm:$0xff]
        %v757 = vld [vmem:[#allocation2 + $0x90] sm:$0xff]
        %v758 = vld [vmem:[#allocation2 + $0x98] sm:$0xff]
        %v759 = vld [vmem:[#allocation2 + $0xa0] sm:$0xff]
        %v760 = vld [vmem:[#allocation2 + $0xa8] sm:$0xff]
        %v761 = vld [vmem:[#allocation2 + $0xb0] sm:$0xff]
        %v762 = vld [vmem:[#allocation2 + $0xb8] sm:$0xff]
        %v763 = vld [vmem:[#allocation2 + $0xc0] sm:$0xff]
        %v764 = vld [vmem:[#allocation2 + $0xc8] sm:$0xff]
        %v765 = vld [vmem:[#allocation2 + $0xd0] sm:$0xff]
        %v766 = vld [vmem:[#allocation2 + $0xd8] sm:$0xff]
        %v767 = vld [vmem:[#allocation2 + $0xe0] sm:$0xff]
        %v768 = vld [vmem:[#allocation2 + $0xe8] sm:$0xff]
        %v769 = vld [vmem:[#allocation2 + $0xf0] sm:$0xff]
        %v770 = vld [vmem:[#allocation2 + $0xf8] sm:$0xff]
        %v771 = vld [vmem:[%s2] sm:$0x1]
        %v773 = vlaneseq
        %v774 = vshrl.u32 %v773, 7
        %v775 = vsub.s32 0, %v774
        %v776 = vrot.slane %v771, %v775
        %v778 = vadd.f32 %v739, %v776
        %v779 = vadd.f32 %v740, %v776
        %v780 = vadd.f32 %v741, %v776
        %v781 = vadd.f32 %v742, %v776
        %v782 = vadd.f32 %v743, %v776
        %v783 = vadd.f32 %v744, %v776
        %v784 = vadd.f32 %v745, %v776
        %v785 = vadd.f32 %v746, %v776
        %v786 = vadd.f32 %v747, %v776
        %v787 = vadd.f32 %v748, %v776
        %v788 = vadd.f32 %v749, %v776
        %v789 = vadd.f32 %v750, %v776
        %v790 = vadd.f32 %v751, %v776
        %v791 = vadd.f32 %v752, %v776
        %v792 = vadd.f32 %v753, %v776
        %v793 = vadd.f32 %v754, %v776
        %v794 = vadd.f32 %v755, %v776
        %v795 = vadd.f32 %v756, %v776
        %v796 = vadd.f32 %v757, %v776
        %v797 = vadd.f32 %v758, %v776
        %v798 = vadd.f32 %v759, %v776
        %v799 = vadd.f32 %v760, %v776
        %v800 = vadd.f32 %v761, %v776
        %v801 = vadd.f32 %v762, %v776
        %v802 = vadd.f32 %v763, %v776
        %v803 = vadd.f32 %v764, %v776
        %v804 = vadd.f32 %v765, %v776
        %v805 = vadd.f32 %v766, %v776
        %v806 = vadd.f32 %v767, %v776
        %v807 = vadd.f32 %v768, %v776
        %v808 = vadd.f32 %v769, %v776
        %v809 = vadd.f32 %v770, %v776
        %v810 = vmul.f32 %v778, 0.2
        %v811 = vmul.f32 %v779, 0.2
        %v812 = vmul.f32 %v780, 0.2
        %v813 = vmul.f32 %v781, 0.2
        %v814 = vmul.f32 %v782, 0.2
        %v815 = vmul.f32 %v783, 0.2
        %v816 = vmul.f32 %v784, 0.2
        %v817 = vmul.f32 %v785, 0.2
        %v818 = vmul.f32 %v786, 0.2
        %v819 = vmul.f32 %v787, 0.2
        %v820 = vmul.f32 %v788, 0.2
        %v821 = vmul.f32 %v789, 0.2
        %v822 = vmul.f32 %v790, 0.2
        %v823 = vmul.f32 %v791, 0.2
        %v824 = vmul.f32 %v792, 0.2
        %v825 = vmul.f32 %v793, 0.2
        %v826 = vmul.f32 %v794, 0.2
        %v827 = vmul.f32 %v795, 0.2
        %v828 = vmul.f32 %v796, 0.2
        %v829 = vmul.f32 %v797, 0.2
        %v830 = vmul.f32 %v798, 0.2
        %v831 = vmul.f32 %v799, 0.2
        %v832 = vmul.f32 %v800, 0.2
        %v833 = vmul.f32 %v801, 0.2
        %v834 = vmul.f32 %v802, 0.2
        %v835 = vmul.f32 %v803, 0.2
        %v836 = vmul.f32 %v804, 0.2
        %v837 = vmul.f32 %v805, 0.2
        %v838 = vmul.f32 %v806, 0.2
        %v839 = vmul.f32 %v807, 0.2
        %v840 = vmul.f32 %v808, 0.2
        %v841 = vmul.f32 %v809, 0.2
        %v842 = vmax.f32 %v778, %v810
        %v843 = vmax.f32 %v779, %v811
        %v844 = vmax.f32 %v780, %v812
        %v845 = vmax.f32 %v781, %v813
        %v846 = vmax.f32 %v782, %v814
        %v847 = vmax.f32 %v783, %v815
        %v848 = vmax.f32 %v784, %v816
        %v849 = vmax.f32 %v785, %v817
        %v850 = vmax.f32 %v786, %v818
        %v851 = vmax.f32 %v787, %v819
        %v852 = vmax.f32 %v788, %v820
        %v853 = vmax.f32 %v789, %v821
        %v854 = vmax.f32 %v790, %v822
        %v855 = vmax.f32 %v791, %v823
        %v856 = vmax.f32 %v792, %v824
        %v857 = vmax.f32 %v793, %v825
        %v858 = vmax.f32 %v794, %v826
        %v859 = vmax.f32 %v795, %v827
        %v860 = vmax.f32 %v796, %v828
        %v861 = vmax.f32 %v797, %v829
        %v862 = vmax.f32 %v798, %v830
        %v863 = vmax.f32 %v799, %v831
        %v864 = vmax.f32 %v800, %v832
        %v865 = vmax.f32 %v801, %v833
        %v866 = vmax.f32 %v802, %v834
        %v867 = vmax.f32 %v803, %v835
        %v868 = vmax.f32 %v804, %v836
        %v869 = vmax.f32 %v805, %v837
        %v870 = vmax.f32 %v806, %v838
        %v871 = vmax.f32 %v807, %v839
        %v872 = vmax.f32 %v808, %v840
        %v873 = vmax.f32 %v809, %v841
        %v874 = vpack.c.bf16 %v843, %v842
        %v875 = vpack.c.bf16 %v845, %v844
        %v876 = vpack.c.bf16 %v847, %v846
        %v877 = vpack.c.bf16 %v849, %v848
        %v878 = vpack.c.bf16 %v851, %v850
        %v879 = vpack.c.bf16 %v853, %v852
        %v880 = vpack.c.bf16 %v855, %v854
        %v881 = vpack.c.bf16 %v857, %v856
        %v882 = vpack.c.bf16 %v859, %v858
        %v883 = vpack.c.bf16 %v861, %v860
        %v884 = vpack.c.bf16 %v863, %v862
        %v885 = vpack.c.bf16 %v865, %v864
        %v886 = vpack.c.bf16 %v867, %v866
        %v887 = vpack.c.bf16 %v869, %v868
        %v888 = vpack.c.bf16 %v871, %v870
        %v889 = vpack.c.bf16 %v873, %v872
        %v906 = vunpack.c.l.b16 %v874
        %v907 = vunpack.c.h.b16 %v874
        %v908 = vunpack.c.l.b16 %v875
        %v909 = vunpack.c.h.b16 %v875
        %v910 = vunpack.c.l.b16 %v876
        %v911 = vunpack.c.h.b16 %v876
        %v912 = vunpack.c.l.b16 %v877
        %v913 = vunpack.c.h.b16 %v877
        %v914 = vunpack.c.l.b16 %v878
        %v915 = vunpack.c.h.b16 %v878
        %v916 = vunpack.c.l.b16 %v879
        %v917 = vunpack.c.h.b16 %v879
        %v918 = vunpack.c.l.b16 %v880
        %v919 = vunpack.c.h.b16 %v880
        %v920 = vunpack.c.l.b16 %v881
        %v921 = vunpack.c.h.b16 %v881
        %v922 = vunpack.c.l.b16 %v882
        %v923 = vunpack.c.h.b16 %v882
        %v924 = vunpack.c.l.b16 %v883
        %v925 = vunpack.c.h.b16 %v883
        %v926 = vunpack.c.l.b16 %v884
        %v927 = vunpack.c.h.b16 %v884
        %v928 = vunpack.c.l.b16 %v885
        %v929 = vunpack.c.h.b16 %v885
        %v930 = vunpack.c.l.b16 %v886
        %v931 = vunpack.c.h.b16 %v886
        %v932 = vunpack.c.l.b16 %v887
        %v933 = vunpack.c.h.b16 %v887
        %v934 = vunpack.c.l.b16 %v888
        %v935 = vunpack.c.h.b16 %v888
        %v936 = vunpack.c.l.b16 %v889
        %v937 = vunpack.c.h.b16 %v889
        %v938 = vpack.c.b16 %v906, %v906
        %v939 = vpack.c.b16 %v907, %v907
        %v940 = vpack.c.b16 %v908, %v908
        %v941 = vpack.c.b16 %v909, %v909
        %v942 = vpack.c.b16 %v910, %v910
        %v943 = vpack.c.b16 %v911, %v911
        %v944 = vpack.c.b16 %v912, %v912
        %v945 = vpack.c.b16 %v913, %v913
        %v946 = vpack.c.b16 %v914, %v914
        %v947 = vpack.c.b16 %v915, %v915
        %v948 = vpack.c.b16 %v916, %v916
        %v949 = vpack.c.b16 %v917, %v917
        %v950 = vpack.c.b16 %v918, %v918
        %v951 = vpack.c.b16 %v919, %v919
        %v952 = vpack.c.b16 %v920, %v920
        %v953 = vpack.c.b16 %v921, %v921
        %v954 = vpack.c.b16 %v922, %v922
        %v955 = vpack.c.b16 %v923, %v923
        %v956 = vpack.c.b16 %v924, %v924
        %v957 = vpack.c.b16 %v925, %v925
        %v958 = vpack.c.b16 %v926, %v926
        %v959 = vpack.c.b16 %v927, %v927
        %v960 = vpack.c.b16 %v928, %v928
        %v961 = vpack.c.b16 %v929, %v929
        %v962 = vpack.c.b16 %v930, %v930
        %v963 = vpack.c.b16 %v931, %v931
        %v964 = vpack.c.b16 %v932, %v932
        %v965 = vpack.c.b16 %v933, %v933
        %v966 = vpack.c.b16 %v934, %v934
        %v967 = vpack.c.b16 %v935, %v935
        %v968 = vpack.c.b16 %v936, %v936
        %v969 = vpack.c.b16 %v937, %v937
        %1002 = vst [vmem:[%s248] sm:$0xf] %v938
        %1003 = vst [vmem:[%s248 + $0x4] sm:$0xf] %v939
        %1004 = vst [vmem:[%s248 + $0x8] sm:$0xf] %v940
        %1005 = vst [vmem:[%s248 + $0xc] sm:$0xf] %v941
        %1006 = vst [vmem:[%s248 + $0x10] sm:$0xf] %v942
        %1007 = vst [vmem:[%s248 + $0x14] sm:$0xf] %v943
        %1008 = vst [vmem:[%s248 + $0x18] sm:$0xf] %v944
        %1009 = vst [vmem:[%s248 + $0x1c] sm:$0xf] %v945
        %1010 = vst [vmem:[%s248 + $0x20] sm:$0xf] %v946
        %1011 = vst [vmem:[%s248 + $0x24] sm:$0xf] %v947
        %1012 = vst [vmem:[%s248 + $0x28] sm:$0xf] %v948
        %1013 = vst [vmem:[%s248 + $0x2c] sm:$0xf] %v949
        %1014 = vst [vmem:[%s248 + $0x30] sm:$0xf] %v950
        %1015 = vst [vmem:[%s248 + $0x34] sm:$0xf] %v951
        %1016 = vst [vmem:[%s248 + $0x38] sm:$0xf] %v952
        %1017 = vst [vmem:[%s248 + $0x3c] sm:$0xf] %v953
        %1018 = vst [vmem:[%s248 + $0x40] sm:$0xf] %v954
        %1019 = vst [vmem:[%s248 + $0x44] sm:$0xf] %v955
        %1020 = vst [vmem:[%s248 + $0x48] sm:$0xf] %v956
        %1021 = vst [vmem:[%s248 + $0x4c] sm:$0xf] %v957
        %1022 = vst [vmem:[%s248 + $0x50] sm:$0xf] %v958
        %1023 = vst [vmem:[%s248 + $0x54] sm:$0xf] %v959
        %1024 = vst [vmem:[%s248 + $0x58] sm:$0xf] %v960
        %1025 = vst [vmem:[%s248 + $0x5c] sm:$0xf] %v961
        %1026 = vst [vmem:[%s248 + $0x60] sm:$0xf] %v962
        %1027 = vst [vmem:[%s248 + $0x64] sm:$0xf] %v963
        %1028 = vst [vmem:[%s248 + $0x68] sm:$0xf] %v964
        %1029 = vst [vmem:[%s248 + $0x6c] sm:$0xf] %v965
        %1030 = vst [vmem:[%s248 + $0x70] sm:$0xf] %v966
        %1031 = vst [vmem:[%s248 + $0x74] sm:$0xf] %v967
        %1032 = vst [vmem:[%s248 + $0x78] sm:$0xf] %v968
        %1033 = vst [vmem:[%s248 + $0x7c] sm:$0xf] %v969
      $region40: #{discriminator_forward.5} parent=31 // pred_fallthru
        _
      %s1034 = smul.u32 32, %s20
      %p1035 = scmp.lt.s32.totalorder %s19, 1
      %s1036 = scalar_select %p1035, %s19, 1
      %p1037 = scmp.lt.s32.totalorder %s1034, 31
      %s1038 = scalar_select %p1037, %s1034, 31
      %s1039 = smul.addr %s1036, 32
      %s1040 = sadd.s32 %s1038, %s1039
      %s1041 = smul.addr %s1040, 4
      %s1042 = scalar_lea.vmem %s3, %s1041
      // Predicated region
      $region41: #{discriminator_forward.5} parent=31 // pred_check
        %p1043 = pneg %p130
      $region42: #{discriminator_forward.5} parent=31 // pred_check_branch
        %1045 = sbr.rel (%p1043) target = $region44
      $region43: #{discriminator_forward.5} parent=31 // pred_region
        %s1046 = smul.u32 32, %s20
      $region44: #{discriminator_forward.5} parent=31 // pred_fallthru
        _
    $region32: #{discriminator_forward.5} parent=5 // pred_fallthru
      _
    %p1047 = scmp.le.s32.totalorder 2, %s9
    // Predicated region
    $region45: #{discriminator_forward.5} parent=5 // pred_check
      %p1048 = pneg %p1047
    $region46: #{discriminator_forward.5} parent=5 // pred_check_branch
      %1050 = sbr.rel (%p1048) target = $region48
    $region47: #{discriminator_forward.5} parent=5 // pred_region
      %s1051 = ssub.s32 %s9, 2
      // Predicated region
      $region49: #{discriminator_forward.5} parent=47 // pred_check
        %p1052 = pneg %p136
      $region50: #{discriminator_forward.5} parent=47 // pred_check_branch
        %1054 = sbr.rel (%p1052) target = $region52
      $region51: #{discriminator_forward.5} parent=47 // pred_region
        %s1055 = smul.u32 32, %s23
        %p1056 = scmp.lt.s32.totalorder %s22, 1
        %s1057 = scalar_select %p1056, %s22, 1
        %p1058 = scmp.lt.s32.totalorder %s1055, 31
        %s1059 = scalar_select %p1058, %s1055, 31
        %s1060 = smul.addr %s1057, 32
        %s1061 = sadd.s32 %s1059, %s1060
        %s1062 = smul.addr %s1061, 4
        %s1063 = scalar_lea.vmem %s3, %s1062
      $region52: #{discriminator_forward.5} parent=47 // pred_fallthru
        _
    $region48: #{discriminator_forward.5} parent=5 // pred_fallthru
      _
  $region6: #{discriminator_forward.5} parent=0 // loop_footer
    %s13 = sadd.s32 1, %s9
  $region7: #{discriminator_forward.5} parent=0 // loop_footer_branch
    %8 = sbr.rel target = $region3
  $region8: #{discriminator_forward.5} parent=0 // loop_exit
    _

// kernel: discriminator_forward.6
$region0: #{discriminator_forward.6}
  #allocation0 [shape = 'u32[]', space=smem, size = 0x4, offset = 0x4, fixed_abs, tag = 'smem constant byte address 0x4 - core index']
  #allocation1 [shape = 'u32[144,128]{1,0:T(1,128)}', space=vmem, size = 0x12000, scoped, tag = 'internal scratch']
  #allocation2 [shape = 'f32[64,128]{1,0:T(8,128)}', space=vmem, size = 0x8000, scoped, tag = 'scratch operand']
  %s0 = inlined_call_operand.vmem [shape: bf16[2,64,1024], index: 0, kind: input, shape index: {}]
  %s1 = inlined_call_operand.vmem [shape: bf16[1024,128], index: 1, kind: input, shape index: {}]
  %s2 = inlined_call_operand.vmem [shape: f32[1,128], index: 2, kind: input, shape index: {}]
  %s3 = inlined_call_operand.vmem [shape: bf16[2,64,128], index: 3, kind: output, shape index: {}]
  %s4 = sld [smem:[#allocation0]]
  $region53: #{discriminator_forward.6} parent=0
    _
  %s6 = ssub.s32 1, %s4
  %s7 = scalar_select 0, %s6, %s4
  loop: start=0, step=1, limit=4
  $region2: #{discriminator_forward.6} parent=0 // loop_pre_header
    _
  $region3: #{discriminator_forward.6} parent=0 // loop_header
    %s9 = sphi 0, %s13
    %p10 = scmp.ge.s32.totalorder %s9, 4
    %s16 = sphi 0, %s35
    %s17 = sphi 0, %s31
    %s18 = sphi 0, %s27
    %s19 = sphi 0, %s16
    %s20 = sphi 0, %s17
    %s21 = sphi 0, %s18
    %s22 = sphi 0, %s19
    %s23 = sphi 0, %s20
    %s24 = sphi 0, %s21
    %s42 = sphi 0, %s44
    %s45 = sphi 0, %s42
    %s46 = sphi 0, %s45
    %s62 = sphi 0, %s46
    %s68 = sphi 0, %s70
    %s71 = sphi 0, %s68
    %s72 = sphi 0, %s71
    %s88 = sphi 0, %s72
    %s92 = sphi 0, %s92
    %s94 = sphi 0, %s92
    %s95 = sphi 0, %s94
    %s109 = sphi 0, %s95
    %s117 = sphi 0, %s119
    %s120 = sphi 0, %s117
    %s121 = sphi 0, %s120
    %s137 = sphi 0, %s121
  $region4: #{discriminator_forward.6} parent=0 // loop_header_branch
    %12 = sbr.rel (%p10) target = $region8
  $region5: #{discriminator_forward.6} parent=0 // loop_body
    %s14 = ssub.s32 %s9, 1
    %s15 = ssub.s32 %s9, 2
    %s25 = sadd.s32 1, %s18
    %p26 = scmp.ge.s32.totalorder %s25, 1
    %s27 = scalar_select %p26, 0, %s25
    %s28 = sadd.s32 1, %s17
    %s29 = scalar_select %p26, %s28, %s17
    %p30 = scmp.ge.s32.totalorder %s29, 1
    %s31 = scalar_select %p30, 0, %s29
    %s32 = sadd.s32 1, %s16
    %s33 = scalar_select %p30, %s32, %s16
    %p34 = scmp.ge.s32.totalorder %s33, 2
    %s35 = scalar_select %p34, 0, %s33
    %s36 = ssub.s32 %s16, %s35
    %s37 = ssub.s32 %s17, %s31
    %s38 = sor.u32 %s36, %s37
    %s39 = ssub.s32 %s18, %s27
    %s40 = sor.u32 %s38, %s39
    %p41 = scmp.eq.s32.totalorder %s40, 0
    %s43 = sadd.s32 %s42, 1
    %s44 = scalar_select %p41, %s42, %s43
    %p47 = pneg %p41
    %p48 = scmp.eq.s32.totalorder %s9, 1
    %p49 = por %p47, %p48
    %p50 = scmp.ne.s32.totalorder %s42, %s45
    %p51 = scmp.eq.s32.totalorder %s9, 0
    %p52 = por %p50, %p51
    %p53 = scmp.ne.s32.totalorder %s42, %s45
    %p54 = scmp.eq.s32.totalorder %s14, 1
    %p55 = por %p53, %p54
    %p56 = scmp.ne.s32.totalorder %s45, %s46
    %p57 = scmp.eq.s32.totalorder %s14, 0
    %p58 = por %p56, %p57
    %p59 = scmp.ne.s32.totalorder %s45, %s46
    %p60 = scmp.eq.s32.totalorder %s15, 1
    %p61 = por %p59, %p60
    %p63 = scmp.ne.s32.totalorder %s46, %s62
    %p64 = scmp.eq.s32.totalorder %s15, 0
    %p65 = por %p63, %p64
    %s66 = ssub.s32 %s18, %s27
    %p67 = scmp.eq.s32.totalorder %s66, 0
    %s69 = sadd.s32 %s68, 1
    %s70 = scalar_select %p67, %s68, %s69
    %p73 = pneg %p67
    %p74 = scmp.eq.s32.totalorder %s9, 1
    %p75 = por %p73, %p74
    %p76 = scmp.ne.s32.totalorder %s68, %s71
    %p77 = scmp.eq.s32.totalorder %s9, 0
    %p78 = por %p76, %p77
    %p79 = scmp.ne.s32.totalorder %s68, %s71
    %p80 = scmp.eq.s32.totalorder %s14, 1
    %p81 = por %p79, %p80
    %p82 = scmp.ne.s32.totalorder %s71, %s72
    %p83 = scmp.eq.s32.totalorder %s14, 0
    %p84 = por %p82, %p83
    %p85 = scmp.ne.s32.totalorder %s71, %s72
    %p86 = scmp.eq.s32.totalorder %s15, 1
    %p87 = por %p85, %p86
    %p89 = scmp.ne.s32.totalorder %s72, %s88
    %p90 = scmp.eq.s32.totalorder %s15, 0
    %p91 = por %p89, %p90
    %s93 = sadd.s32 %s92, 1
    %p96 = scmp.eq.s32.totalorder %s9, 1
    %p97 = scmp.ne.s32.totalorder %s92, %s94
    %p98 = scmp.eq.s32.totalorder %s9, 0
    %p99 = por %p97, %p98
    %p100 = scmp.ne.s32.totalorder %s92, %s94
    %p101 = scmp.eq.s32.totalorder %s14, 1
    %p102 = por %p100, %p101
    %p103 = scmp.ne.s32.totalorder %s94, %s95
    %p104 = scmp.eq.s32.totalorder %s14, 0
    %p105 = por %p103, %p104
    %p106 = scmp.ne.s32.totalorder %s94, %s95
    %p107 = scmp.eq.s32.totalorder %s15, 1
    %p108 = por %p106, %p107
    %p110 = scmp.ne.s32.totalorder %s95, %s109
    %p111 = scmp.eq.s32.totalorder %s15, 0
    %p112 = por %p110, %p111
    %s113 = ssub.s32 %s16, %s35
    %s114 = ssub.s32 %s17, %s31
    %s115 = sor.u32 %s113, %s114
    %p116 = scmp.eq.s32.totalorder %s115, 0
    %s118 = sadd.s32 %s117, 1
    %s119 = scalar_select %p116, %s117, %s118
    %p122 = pneg %p116
    %p123 = scmp.eq.s32.totalorder %s9, 1
    %p124 = por %p122, %p123
    %p125 = scmp.ne.s32.totalorder %s117, %s120
    %p126 = scmp.eq.s32.totalorder %s9, 0
    %p127 = por %p125, %p126
    %p128 = scmp.ne.s32.totalorder %s117, %s120
    %p129 = scmp.eq.s32.totalorder %s14, 1
    %p130 = por %p128, %p129
    %p131 = scmp.ne.s32.totalorder %s120, %s121
    %p132 = scmp.eq.s32.totalorder %s14, 0
    %p133 = por %p131, %p132
    %p134 = scmp.ne.s32.totalorder %s120, %s121
    %p135 = scmp.eq.s32.totalorder %s15, 1
    %p136 = por %p134, %p135
    %p138 = scmp.ne.s32.totalorder %s121, %s137
    %p139 = scmp.eq.s32.totalorder %s15, 0
    %p140 = por %p138, %p139
    %p141 = scmp.le.s32.totalorder 1, %s9
    %p142 = scmp.lt.s32.totalorder %s9, 3
    %p143 = pnand %p141, %p142
    %p144 = pneg %p143
    // Predicated region
    $region9: #{discriminator_forward.6} parent=5 // pred_check
      _
    $region10: #{discriminator_forward.6} parent=5 // pred_check_branch
      %146 = sbr.rel (%p143) target = $region12
    $region11: #{discriminator_forward.6} parent=5 // pred_region
      %s147 = ssub.s32 %s9, 1
      // Predicated region
      $region13: #{discriminator_forward.6} parent=11 // pred_check
        %p148 = pneg %p84
      $region14: #{discriminator_forward.6} parent=11 // pred_check_branch
        %150 = sbr.rel (%p148) target = $region16
      $region15: #{discriminator_forward.6} parent=11 // pred_region
        %s151 = smul.u32 128, %s21
        %p152 = scmp.lt.s32.totalorder %s151, 127
        %s153 = scalar_select %p152, %s151, 127
        %s154 = smul.addr %s153, 4
        %s155 = scalar_lea.vmem %s1, %s154
        %s156 = smul.u32 128, %s21
      $region16: #{discriminator_forward.6} parent=11 // pred_fallthru
        _
      // Predicated region
      $region17: #{discriminator_forward.6} parent=11 // pred_check
        %p157 = pneg %p105
      $region18: #{discriminator_forward.6} parent=11 // pred_check_branch
        %159 = sbr.rel (%p157) target = $region20
      $region19: #{discriminator_forward.6} parent=11 // pred_region
        _
      $region20: #{discriminator_forward.6} parent=11 // pred_fallthru
        _
    $region12: #{discriminator_forward.6} parent=5 // pred_fallthru
      _
    %p160 = scmp.lt.s32.totalorder %s9, 2
    // Predicated region
    $region21: #{discriminator_forward.6} parent=5 // pred_check
      %p161 = pneg %p160
    $region22: #{discriminator_forward.6} parent=5 // pred_check_branch
      %163 = sbr.rel (%p161) target = $region24
    $region23: #{discriminator_forward.6} parent=5 // pred_region
      // Predicated region
      $region25: #{discriminator_forward.6} parent=23 // pred_check
        %p164 = pneg %p52
      $region26: #{discriminator_forward.6} parent=23 // pred_check_branch
        %166 = sbr.rel (%p164) target = $region28
      $region27: #{discriminator_forward.6} parent=23 // pred_region
        %s167 = smul.u32 8, %s17
        %s168 = smul.u32 8, %s18
        %p169 = scmp.lt.s32.totalorder %s16, 1
        %s170 = scalar_select %p169, %s16, 1
        %p171 = scmp.lt.s32.totalorder %s167, 7
        %s172 = scalar_select %p171, %s167, 7
        %p173 = scmp.lt.s32.totalorder %s168, 7
        %s174 = scalar_select %p173, %s168, 7
        %s175 = smul.addr %s172, 8
        %s176 = sadd.s32 %s174, %s175
        %s177 = smul.addr %s170, 64
        %s178 = sadd.s32 %s176, %s177
        %s179 = smul.addr %s178, 4
        %s180 = scalar_lea.vmem %s0, %s179
        %s181 = smul.u32 8, %s17
        %s182 = smul.u32 8, %s18
      $region28: #{discriminator_forward.6} parent=23 // pred_fallthru
        _
    $region24: #{discriminator_forward.6} parent=5 // pred_fallthru
      _
    %p183 = scmp.le.s32.totalorder 1, %s9
    %p184 = scmp.lt.s32.totalorder %s9, 3
    %p185 = pnand %p183, %p184
    %p186 = pneg %p185
    // Predicated region
    $region29: #{discriminator_forward.6} parent=5 // pred_check
      _
    $region30: #{discriminator_forward.6} parent=5 // pred_check_branch
      %188 = sbr.rel (%p185) target = $region32
    $region31: #{discriminator_forward.6} parent=5 // pred_region
      %s189 = ssub.s32 %s9, 1
      %s190 = smul.u32 8, %s20
      %s191 = smul.u32 8, %s21
      %p192 = scmp.lt.s32.totalorder %s19, 1
      %s193 = scalar_select %p192, %s19, 1
      %p194 = scmp.lt.s32.totalorder %s190, 7
      %s195 = scalar_select %p194, %s190, 7
      %p196 = scmp.lt.s32.totalorder %s191, 7
      %s197 = scalar_select %p196, %s191, 7
      %s198 = smul.addr %s195, 8
      %s199 = sadd.s32 %s197, %s198
      %s200 = smul.addr %s193, 64
      %s201 = sadd.s32 %s199, %s200
      %s202 = smul.addr %s201, 4
      %s203 = scalar_lea.vmem %s0, %s202
      %p204 = pneg %p58
      %p205 = pneg %p55
      %s206 = smul.u32 128, %s21
      %p207 = scmp.lt.s32.totalorder %s206, 127
      %s208 = scalar_select %p207, %s206, 127
      %s209 = smul.addr %s208, 4
      %s210 = scalar_lea.vmem %s1, %s209
      %p211 = pneg %p84
      %p212 = pneg %p81
      %p213 = pneg %p105
      %p214 = pneg %p102
      %p215 = pneg %p133
      %p216 = pneg %p130
      %s217 = smul.u32 8, %s20
      %p218 = scmp.lt.s32.totalorder %s19, 1
      %s219 = scalar_select %p218, %s19, 1
      %p220 = scmp.lt.s32.totalorder %s217, 7
      %s221 = scalar_select %p220, %s217, 7
      %s222 = smul.addr %s219, 8
      %s223 = sadd.s32 %s221, %s222
      %s224 = smul.addr %s223, 4
      %s225 = scalar_lea.vmem %s3, %s224
      %s226 = smul.u32 8, %s20
      %s227 = smul.u32 8, %s21
      %p228 = scmp.lt.s32.totalorder %s19, 1
      %s229 = scalar_select %p228, %s19, 1
      %p230 = scmp.lt.s32.totalorder %s226, 7
      %s231 = scalar_select %p230, %s226, 7
      %p232 = scmp.lt.s32.totalorder %s227, 7
      %s233 = scalar_select %p232, %s227, 7
      %s234 = smul.addr %s231, 8
      %s235 = sadd.s32 %s233, %s234
      %s236 = smul.addr %s229, 64
      %s237 = sadd.s32 %s235, %s236
      %s238 = smul.addr %s237, 4
      %s239 = scalar_lea.vmem %s0, %s238
      %s240 = smul.u32 8, %s20
      %s241 = smul.u32 8, %s21
      %s242 = smul.u32 128, %s21
      %p243 = scmp.lt.s32.totalorder %s242, 127
      %s244 = scalar_select %p243, %s242, 127
      %s245 = smul.addr %s244, 4
      %s246 = scalar_lea.vmem %s1, %s245
      %s247 = smul.u32 128, %s21
      %s248 = smul.u32 8, %s20
      %p249 = scmp.lt.s32.totalorder %s19, 1
      %s250 = scalar_select %p249, %s19, 1
      %p251 = scmp.lt.s32.totalorder %s248, 7
      %s252 = scalar_select %p251, %s248, 7
      %s253 = smul.addr %s250, 8
      %s254 = sadd.s32 %s252, %s253
      %s255 = smul.addr %s254, 4
      %s256 = scalar_lea.vmem %s3, %s255
      %s257 = smul.u32 8, %s20
      %p259 = scmp.eq.s32.totalorder %s21, 0
      // Predicated region
      $region33: #{discriminator_forward.6} parent=31 // pred_check
        %p260 = pneg %p259
      $region34: #{discriminator_forward.6} parent=31 // pred_check_branch
        %262 = sbr.rel (%p260) target = $region36
      $region35: #{discriminator_forward.6} parent=31 // pred_region
        %263 = vst [vmem:[#allocation2] sm:$0xff] 0.0
        %264 = vst [vmem:[#allocation2 + $0x8] sm:$0xff] 0.0
        %265 = vst [vmem:[#allocation2 + $0x10] sm:$0xff] 0.0
        %266 = vst [vmem:[#allocation2 + $0x18] sm:$0xff] 0.0
        %267 = vst [vmem:[#allocation2 + $0x20] sm:$0xff] 0.0
        %268 = vst [vmem:[#allocation2 + $0x28] sm:$0xff] 0.0
        %269 = vst [vmem:[#allocation2 + $0x30] sm:$0xff] 0.0
        %270 = vst [vmem:[#allocation2 + $0x38] sm:$0xff] 0.0
      $region36: #{discriminator_forward.6} parent=31 // pred_fallthru
        _
      %v271 = vld [vmem:[#allocation2] sm:$0xff]
      %v272 = vld [vmem:[#allocation2 + $0x8] sm:$0xff]
      %v273 = vld [vmem:[#allocation2 + $0x10] sm:$0xff]
      %v274 = vld [vmem:[#allocation2 + $0x18] sm:$0xff]
      %v275 = vld [vmem:[#allocation2 + $0x20] sm:$0xff]
      %v276 = vld [vmem:[#allocation2 + $0x28] sm:$0xff]
      %v277 = vld [vmem:[#allocation2 + $0x30] sm:$0xff]
      %v278 = vld [vmem:[#allocation2 + $0x38] sm:$0xff]
      %v279 = vld [vmem:[%s239] sm:$0xff]
      %v280 = vld [vmem:[%s239 + $0x8] sm:$0xff]
      %v281 = vld [vmem:[%s239 + $0x10] sm:$0xff]
      %v282 = vld [vmem:[%s239 + $0x18] sm:$0xff]
      %v283 = vld [vmem:[%s239 + $0x20] sm:$0xff]
      %v284 = vld [vmem:[%s239 + $0x28] sm:$0xff]
      %v285 = vld [vmem:[%s239 + $0x30] sm:$0xff]
      %v286 = vld [vmem:[%s239 + $0x38] sm:$0xff]
      %v287 = vld [vmem:[%s239 + $0x40] sm:$0xff]
      %v288 = vld [vmem:[%s239 + $0x48] sm:$0xff]
      %v289 = vld [vmem:[%s239 + $0x50] sm:$0xff]
      %v290 = vld [vmem:[%s239 + $0x58] sm:$0xff]
      %v291 = vld [vmem:[%s239 + $0x60] sm:$0xff]
      %v292 = vld [vmem:[%s239 + $0x68] sm:$0xff]
      %v293 = vld [vmem:[%s239 + $0x70] sm:$0xff]
      %v294 = vld [vmem:[%s239 + $0x78] sm:$0xff]
      %v295 = vld [vmem:[%s239 + $0x80] sm:$0xff]
      %v296 = vld [vmem:[%s239 + $0x88] sm:$0xff]
      %v297 = vld [vmem:[%s239 + $0x90] sm:$0xff]
      %v298 = vld [vmem:[%s239 + $0x98] sm:$0xff]
      %v299 = vld [vmem:[%s239 + $0xa0] sm:$0xff]
      %v300 = vld [vmem:[%s239 + $0xa8] sm:$0xff]
      %v301 = vld [vmem:[%s239 + $0xb0] sm:$0xff]
      %v302 = vld [vmem:[%s239 + $0xb8] sm:$0xff]
      %v303 = vld [vmem:[%s239 + $0xc0] sm:$0xff]
      %v304 = vld [vmem:[%s239 + $0xc8] sm:$0xff]
      %v305 = vld [vmem:[%s239 + $0xd0] sm:$0xff]
      %v306 = vld [vmem:[%s239 + $0xd8] sm:$0xff]
      %v307 = vld [vmem:[%s239 + $0xe0] sm:$0xff]
      %v308 = vld [vmem:[%s239 + $0xe8] sm:$0xff]
      %v309 = vld [vmem:[%s239 + $0xf0] sm:$0xff]
      %v310 = vld [vmem:[%s239 + $0xf8] sm:$0xff]
      %v311 = vld [vmem:[%s246] sm:$0xf]
      %v312 = vld [vmem:[%s246 + $0x4] sm:$0xf]
      %v313 = vld [vmem:[%s246 + $0x8] sm:$0xf]
      %v314 = vld [vmem:[%s246 + $0xc] sm:$0xf]
      %v315 = vld [vmem:[%s246 + $0x10] sm:$0xf]
      %v316 = vld [vmem:[%s246 + $0x14] sm:$0xf]
      %v317 = vld [vmem:[%s246 + $0x18] sm:$0xf]
      %v318 = vld [vmem:[%s246 + $0x1c] sm:$0xf]
      %v319 = vld [vmem:[%s246 + $0x20] sm:$0xf]
      %v320 = vld [vmem:[%s246 + $0x24] sm:$0xf]
      %v321 = vld [vmem:[%s246 + $0x28] sm:$0xf]
      %v322 = vld [vmem:[%s246 + $0x2c] sm:$0xf]
      %v323 = vld [vmem:[%s246 + $0x30] sm:$0xf]
      %v324 = vld [vmem:[%s246 + $0x34] sm:$0xf]
      %v325 = vld [vmem:[%s246 + $0x38] sm:$0xf]
      %v326 = vld [vmem:[%s246 + $0x3c] sm:$0xf]
      %v327 = vld [vmem:[%s246 + $0x40] sm:$0xf]
      %v328 = vld [vmem:[%s246 + $0x44] sm:$0xf]
      %v329 = vld [vmem:[%s246 + $0x48] sm:$0xf]
      %v330 = vld [vmem:[%s246 + $0x4c] sm:$0xf]
      %v331 = vld [vmem:[%s246 + $0x50] sm:$0xf]
      %v332 = vld [vmem:[%s246 + $0x54] sm:$0xf]
      %v333 = vld [vmem:[%s246 + $0x58] sm:$0xf]
      %v334 = vld [vmem:[%s246 + $0x5c] sm:$0xf]
      %v335 = vld [vmem:[%s246 + $0x60] sm:$0xf]
      %v336 = vld [vmem:[%s246 + $0x64] sm:$0xf]
      %v337 = vld [vmem:[%s246 + $0x68] sm:$0xf]
      %v338 = vld [vmem:[%s246 + $0x6c] sm:$0xf]
      %v339 = vld [vmem:[%s246 + $0x70] sm:$0xf]
      %v340 = vld [vmem:[%s246 + $0x74] sm:$0xf]
      %v341 = vld [vmem:[%s246 + $0x78] sm:$0xf]
      %v342 = vld [vmem:[%s246 + $0x7c] sm:$0xf]
      %v343 = vld [vmem:[%s246 + $0x80] sm:$0xf]
      %v344 = vld [vmem:[%s246 + $0x84] sm:$0xf]
      %v345 = vld [vmem:[%s246 + $0x88] sm:$0xf]
      %v346 = vld [vmem:[%s246 + $0x8c] sm:$0xf]
      %v347 = vld [vmem:[%s246 + $0x90] sm:$0xf]
      %v348 = vld [vmem:[%s246 + $0x94] sm:$0xf]
      %v349 = vld [vmem:[%s246 + $0x98] sm:$0xf]
      %v350 = vld [vmem:[%s246 + $0x9c] sm:$0xf]
      %v351 = vld [vmem:[%s246 + $0xa0] sm:$0xf]
      %v352 = vld [vmem:[%s246 + $0xa4] sm:$0xf]
      %v353 = vld [vmem:[%s246 + $0xa8] sm:$0xf]
      %v354 = vld [vmem:[%s246 + $0xac] sm:$0xf]
      %v355 = vld [vmem:[%s246 + $0xb0] sm:$0xf]
      %v356 = vld [vmem:[%s246 + $0xb4] sm:$0xf]
      %v357 = vld [vmem:[%s246 + $0xb8] sm:$0xf]
      %v358 = vld [vmem:[%s246 + $0xbc] sm:$0xf]
      %v359 = vld [vmem:[%s246 + $0xc0] sm:$0xf]
      %v360 = vld [vmem:[%s246 + $0xc4] sm:$0xf]
      %v361 = vld [vmem:[%s246 + $0xc8] sm:$0xf]
      %v362 = vld [vmem:[%s246 + $0xcc] sm:$0xf]
      %v363 = vld [vmem:[%s246 + $0xd0] sm:$0xf]
      %v364 = vld [vmem:[%s246 + $0xd4] sm:$0xf]
      %v365 = vld [vmem:[%s246 + $0xd8] sm:$0xf]
      %v366 = vld [vmem:[%s246 + $0xdc] sm:$0xf]
      %v367 = vld [vmem:[%s246 + $0xe0] sm:$0xf]
      %v368 = vld [vmem:[%s246 + $0xe4] sm:$0xf]
      %v369 = vld [vmem:[%s246 + $0xe8] sm:$0xf]
      %v370 = vld [vmem:[%s246 + $0xec] sm:$0xf]
      %v371 = vld [vmem:[%s246 + $0xf0] sm:$0xf]
      %v372 = vld [vmem:[%s246 + $0xf4] sm:$0xf]
      %v373 = vld [vmem:[%s246 + $0xf8] sm:$0xf]
      %v374 = vld [vmem:[%s246 + $0xfc] sm:$0xf]
      %v375 = vld [vmem:[%s246 + $0x100] sm:$0xf]
      %v376 = vld [vmem:[%s246 + $0x104] sm:$0xf]
      %v377 = vld [vmem:[%s246 + $0x108] sm:$0xf]
      %v378 = vld [vmem:[%s246 + $0x10c] sm:$0xf]
      %v379 = vld [vmem:[%s246 + $0x110] sm:$0xf]
      %v380 = vld [vmem:[%s246 + $0x114] sm:$0xf]
      %v381 = vld [vmem:[%s246 + $0x118] sm:$0xf]
      %v382 = vld [vmem:[%s246 + $0x11c] sm:$0xf]
      %v383 = vld [vmem:[%s246 + $0x120] sm:$0xf]
      %v384 = vld [vmem:[%s246 + $0x124] sm:$0xf]
      %v385 = vld [vmem:[%s246 + $0x128] sm:$0xf]
      %v386 = vld [vmem:[%s246 + $0x12c] sm:$0xf]
      %v387 = vld [vmem:[%s246 + $0x130] sm:$0xf]
      %v388 = vld [vmem:[%s246 + $0x134] sm:$0xf]
      %v389 = vld [vmem:[%s246 + $0x138] sm:$0xf]
      %v390 = vld [vmem:[%s246 + $0x13c] sm:$0xf]
      %v391 = vld [vmem:[%s246 + $0x140] sm:$0xf]
      %v392 = vld [vmem:[%s246 + $0x144] sm:$0xf]
      %v393 = vld [vmem:[%s246 + $0x148] sm:$0xf]
      %v394 = vld [vmem:[%s246 + $0x14c] sm:$0xf]
      %v395 = vld [vmem:[%s246 + $0x150] sm:$0xf]
      %v396 = vld [vmem:[%s246 + $0x154] sm:$0xf]
      %v397 = vld [vmem:[%s246 + $0x158] sm:$0xf]
      %v398 = vld [vmem:[%s246 + $0x15c] sm:$0xf]
      %v399 = vld [vmem:[%s246 + $0x160] sm:$0xf]
      %v400 = vld [vmem:[%s246 + $0x164] sm:$0xf]
      %v401 = vld [vmem:[%s246 + $0x168] sm:$0xf]
      %v402 = vld [vmem:[%s246 + $0x16c] sm:$0xf]
      %v403 = vld [vmem:[%s246 + $0x170] sm:$0xf]
      %v404 = vld [vmem:[%s246 + $0x174] sm:$0xf]
      %v405 = vld [vmem:[%s246 + $0x178] sm:$0xf]
      %v406 = vld [vmem:[%s246 + $0x17c] sm:$0xf]
      %v407 = vld [vmem:[%s246 + $0x180] sm:$0xf]
      %v408 = vld [vmem:[%s246 + $0x184] sm:$0xf]
      %v409 = vld [vmem:[%s246 + $0x188] sm:$0xf]
      %v410 = vld [vmem:[%s246 + $0x18c] sm:$0xf]
      %v411 = vld [vmem:[%s246 + $0x190] sm:$0xf]
      %v412 = vld [vmem:[%s246 + $0x194] sm:$0xf]
      %v413 = vld [vmem:[%s246 + $0x198] sm:$0xf]
      %v414 = vld [vmem:[%s246 + $0x19c] sm:$0xf]
      %v415 = vld [vmem:[%s246 + $0x1a0] sm:$0xf]
      %v416 = vld [vmem:[%s246 + $0x1a4] sm:$0xf]
      %v417 = vld [vmem:[%s246 + $0x1a8] sm:$0xf]
      %v418 = vld [vmem:[%s246 + $0x1ac] sm:$0xf]
      %v419 = vld [vmem:[%s246 + $0x1b0] sm:$0xf]
      %v420 = vld [vmem:[%s246 + $0x1b4] sm:$0xf]
      %v421 = vld [vmem:[%s246 + $0x1b8] sm:$0xf]
      %v422 = vld [vmem:[%s246 + $0x1bc] sm:$0xf]
      %v423 = vld [vmem:[%s246 + $0x1c0] sm:$0xf]
      %v424 = vld [vmem:[%s246 + $0x1c4] sm:$0xf]
      %v425 = vld [vmem:[%s246 + $0x1c8] sm:$0xf]
      %v426 = vld [vmem:[%s246 + $0x1cc] sm:$0xf]
      %v427 = vld [vmem:[%s246 + $0x1d0] sm:$0xf]
      %v428 = vld [vmem:[%s246 + $0x1d4] sm:$0xf]
      %v429 = vld [vmem:[%s246 + $0x1d8] sm:$0xf]
      %v430 = vld [vmem:[%s246 + $0x1dc] sm:$0xf]
      %v431 = vld [vmem:[%s246 + $0x1e0] sm:$0xf]
      %v432 = vld [vmem:[%s246 + $0x1e4] sm:$0xf]
      %v433 = vld [vmem:[%s246 + $0x1e8] sm:$0xf]
      %v434 = vld [vmem:[%s246 + $0x1ec] sm:$0xf]
      %v435 = vld [vmem:[%s246 + $0x1f0] sm:$0xf]
      %v436 = vld [vmem:[%s246 + $0x1f4] sm:$0xf]
      %v437 = vld [vmem:[%s246 + $0x1f8] sm:$0xf]
      %v438 = vld [vmem:[%s246 + $0x1fc] sm:$0xf]
      %v471 = vunpack.c.l.b16 %v279
      %v472 = vunpack.c.h.b16 %v279
      %v473 = vunpack.c.l.b16 %v280
      %v474 = vunpack.c.h.b16 %v280
      %v475 = vunpack.c.l.b16 %v281
      %v476 = vunpack.c.h.b16 %v281
      %v477 = vunpack.c.l.b16 %v282
      %v478 = vunpack.c.h.b16 %v282
      %v479 = vunpack.c.l.b16 %v283
      %v480 = vunpack.c.h.b16 %v283
      %v481 = vunpack.c.l.b16 %v284
      %v482 = vunpack.c.h.b16 %v284
      %v483 = vunpack.c.l.b16 %v285
      %v484 = vunpack.c.h.b16 %v285
      %v485 = vunpack.c.l.b16 %v286
      %v486 = vunpack.c.h.b16 %v286
      %v487 = vunpack.c.l.b16 %v287
      %v488 = vunpack.c.h.b16 %v287
      %v489 = vunpack.c.l.b16 %v288
      %v490 = vunpack.c.h.b16 %v288
      %v491 = vunpack.c.l.b16 %v289
      %v492 = vunpack.c.h.b16 %v289
      %v493 = vunpack.c.l.b16 %v290
      %v494 = vunpack.c.h.b16 %v290
      %v495 = vunpack.c.l.b16 %v291
      %v496 = vunpack.c.h.b16 %v291
      %v497 = vunpack.c.l.b16 %v292
      %v498 = vunpack.c.h.b16 %v292
      %v499 = vunpack.c.l.b16 %v293
      %v500 = vunpack.c.h.b16 %v293
      %v501 = vunpack.c.l.b16 %v294
      %v502 = vunpack.c.h.b16 %v294
      %v503 = vunpack.c.l.b16 %v295
      %v504 = vunpack.c.h.b16 %v295
      %v505 = vunpack.c.l.b16 %v296
      %v506 = vunpack.c.h.b16 %v296
      %v507 = vunpack.c.l.b16 %v297
      %v508 = vunpack.c.h.b16 %v297
      %v509 = vunpack.c.l.b16 %v298
      %v510 = vunpack.c.h.b16 %v298
      %v511 = vunpack.c.l.b16 %v299
      %v512 = vunpack.c.h.b16 %v299
      %v513 = vunpack.c.l.b16 %v300
      %v514 = vunpack.c.h.b16 %v300
      %v515 = vunpack.c.l.b16 %v301
      %v516 = vunpack.c.h.b16 %v301
      %v517 = vunpack.c.l.b16 %v302
      %v518 = vunpack.c.h.b16 %v302
      %v519 = vunpack.c.l.b16 %v303
      %v520 = vunpack.c.h.b16 %v303
      %v521 = vunpack.c.l.b16 %v304
      %v522 = vunpack.c.h.b16 %v304
      %v523 = vunpack.c.l.b16 %v305
      %v524 = vunpack.c.h.b16 %v305
      %v525 = vunpack.c.l.b16 %v306
      %v526 = vunpack.c.h.b16 %v306
      %v527 = vunpack.c.l.b16 %v307
      %v528 = vunpack.c.h.b16 %v307
      %v529 = vunpack.c.l.b16 %v308
      %v530 = vunpack.c.h.b16 %v308
      %v531 = vunpack.c.l.b16 %v309
      %v532 = vunpack.c.h.b16 %v309
      %v533 = vunpack.c.l.b16 %v310
      %v534 = vunpack.c.h.b16 %v310
      %v535 = vpack.c.b16 %v479, %v471
      %v536 = vpack.c.b16 %v480, %v472
      %v537 = vpack.c.b16 %v481, %v473
      %v538 = vpack.c.b16 %v482, %v474
      %v539 = vpack.c.b16 %v483, %v475
      %v540 = vpack.c.b16 %v484, %v476
      %v541 = vpack.c.b16 %v485, %v477
      %v542 = vpack.c.b16 %v486, %v478
      %v543 = vpack.c.b16 %v495, %v487
      %v544 = vpack.c.b16 %v496, %v488
      %v545 = vpack.c.b16 %v497, %v489
      %v546 = vpack.c.b16 %v498, %v490
      %v547 = vpack.c.b16 %v499, %v491
      %v548 = vpack.c.b16 %v500, %v492
      %v549 = vpack.c.b16 %v501, %v493
      %v550 = vpack.c.b16 %v502, %v494
      %v551 = vpack.c.b16 %v511, %v503
      %v552 = vpack.c.b16 %v512, %v504
      %v553 = vpack.c.b16 %v513, %v505
      %v554 = vpack.c.b16 %v514, %v506
      %v555 = vpack.c.b16 %v515, %v507
      %v556 = vpack.c.b16 %v516, %v508
      %v557 = vpack.c.b16 %v517, %v509
      %v558 = vpack.c.b16 %v518, %v510
      %v559 = vpack.c.b16 %v527, %v519
      %v560 = vpack.c.b16 %v528, %v520
      %v561 = vpack.c.b16 %v529, %v521
      %v562 = vpack.c.b16 %v530, %v522
      %v563 = vpack.c.b16 %v531, %v523
      %v564 = vpack.c.b16 %v532, %v524
      %v565 = vpack.c.b16 %v533, %v525
      %v566 = vpack.c.b16 %v534, %v526
      %v727 = vunpack.c.l.b16 %v311
      %v728 = vunpack.c.l.b16 %v312
      %v729 = vunpack.c.l.b16 %v313
      %v730 = vunpack.c.l.b16 %v314
      %v731 = vunpack.c.l.b16 %v315
      %v732 = vunpack.c.l.b16 %v316
      %v733 = vunpack.c.l.b16 %v317
      %v734 = vunpack.c.l.b16 %v318
      %v735 = vunpack.c.l.b16 %v319
      %v736 = vunpack.c.l.b16 %v320
      %v737 = vunpack.c.l.b16 %v321
      %v738 = vunpack.c.l.b16 %v322
      %v739 = vunpack.c.l.b16 %v323
      %v740 = vunpack.c.l.b16 %v324
      %v741 = vunpack.c.l.b16 %v325
      %v742 = vunpack.c.l.b16 %v326
      %v743 = vunpack.c.l.b16 %v327
      %v744 = vunpack.c.l.b16 %v328
      %v745 = vunpack.c.l.b16 %v329
      %v746 = vunpack.c.l.b16 %v330
      %v747 = vunpack.c.l.b16 %v331
      %v748 = vunpack.c.l.b16 %v332
      %v749 = vunpack.c.l.b16 %v333
      %v750 = vunpack.c.l.b16 %v334
      %v751 = vunpack.c.l.b16 %v335
      %v752 = vunpack.c.l.b16 %v336
      %v753 = vunpack.c.l.b16 %v337
      %v754 = vunpack.c.l.b16 %v338
      %v755 = vunpack.c.l.b16 %v339
      %v756 = vunpack.c.l.b16 %v340
      %v757 = vunpack.c.l.b16 %v341
      %v758 = vunpack.c.l.b16 %v342
      %v759 = vunpack.c.l.b16 %v343
      %v760 = vunpack.c.l.b16 %v344
      %v761 = vunpack.c.l.b16 %v345
      %v762 = vunpack.c.l.b16 %v346
      %v763 = vunpack.c.l.b16 %v347
      %v764 = vunpack.c.l.b16 %v348
      %v765 = vunpack.c.l.b16 %v349
      %v766 = vunpack.c.l.b16 %v350
      %v767 = vunpack.c.l.b16 %v351
      %v768 = vunpack.c.l.b16 %v352
      %v769 = vunpack.c.l.b16 %v353
      %v770 = vunpack.c.l.b16 %v354
      %v771 = vunpack.c.l.b16 %v355
      %v772 = vunpack.c.l.b16 %v356
      %v773 = vunpack.c.l.b16 %v357
      %v774 = vunpack.c.l.b16 %v358
      %v775 = vunpack.c.l.b16 %v359
      %v776 = vunpack.c.l.b16 %v360
      %v777 = vunpack.c.l.b16 %v361
      %v778 = vunpack.c.l.b16 %v362
      %v779 = vunpack.c.l.b16 %v363
      %v780 = vunpack.c.l.b16 %v364
      %v781 = vunpack.c.l.b16 %v365
      %v782 = vunpack.c.l.b16 %v366
      %v783 = vunpack.c.l.b16 %v367
      %v784 = vunpack.c.l.b16 %v368
      %v785 = vunpack.c.l.b16 %v369
      %v786 = vunpack.c.l.b16 %v370
      %v787 = vunpack.c.l.b16 %v371
      %v788 = vunpack.c.l.b16 %v372
      %v789 = vunpack.c.l.b16 %v373
      %v790 = vunpack.c.l.b16 %v374
      %v791 = vunpack.c.l.b16 %v375
      %v792 = vunpack.c.l.b16 %v376
      %v793 = vunpack.c.l.b16 %v377
      %v794 = vunpack.c.l.b16 %v378
      %v795 = vunpack.c.l.b16 %v379
      %v796 = vunpack.c.l.b16 %v380
      %v797 = vunpack.c.l.b16 %v381
      %v798 = vunpack.c.l.b16 %v382
      %v799 = vunpack.c.l.b16 %v383
      %v800 = vunpack.c.l.b16 %v384
      %v801 = vunpack.c.l.b16 %v385
      %v802 = vunpack.c.l.b16 %v386
      %v803 = vunpack.c.l.b16 %v387
      %v804 = vunpack.c.l.b16 %v388
      %v805 = vunpack.c.l.b16 %v389
      %v806 = vunpack.c.l.b16 %v390
      %v807 = vunpack.c.l.b16 %v391
      %v808 = vunpack.c.l.b16 %v392
      %v809 = vunpack.c.l.b16 %v393
      %v810 = vunpack.c.l.b16 %v394
      %v811 = vunpack.c.l.b16 %v395
      %v812 = vunpack.c.l.b16 %v396
      %v813 = vunpack.c.l.b16 %v397
      %v814 = vunpack.c.l.b16 %v398
      %v815 = vunpack.c.l.b16 %v399
      %v816 = vunpack.c.l.b16 %v400
      %v817 = vunpack.c.l.b16 %v401
      %v818 = vunpack.c.l.b16 %v402
      %v819 = vunpack.c.l.b16 %v403
      %v820 = vunpack.c.l.b16 %v404
      %v821 = vunpack.c.l.b16 %v405
      %v822 = vunpack.c.l.b16 %v406
      %v823 = vunpack.c.l.b16 %v407
      %v824 = vunpack.c.l.b16 %v408
      %v825 = vunpack.c.l.b16 %v409
      %v826 = vunpack.c.l.b16 %v410
      %v827 = vunpack.c.l.b16 %v411
      %v828 = vunpack.c.l.b16 %v412
      %v829 = vunpack.c.l.b16 %v413
      %v830 = vunpack.c.l.b16 %v414
      %v831 = vunpack.c.l.b16 %v415
      %v832 = vunpack.c.l.b16 %v416
      %v833 = vunpack.c.l.b16 %v417
      %v834 = vunpack.c.l.b16 %v418
      %v835 = vunpack.c.l.b16 %v419
      %v836 = vunpack.c.l.b16 %v420
      %v837 = vunpack.c.l.b16 %v421
      %v838 = vunpack.c.l.b16 %v422
      %v839 = vunpack.c.l.b16 %v423
      %v840 = vunpack.c.l.b16 %v424
      %v841 = vunpack.c.l.b16 %v425
      %v842 = vunpack.c.l.b16 %v426
      %v843 = vunpack.c.l.b16 %v427
      %v844 = vunpack.c.l.b16 %v428
      %v845 = vunpack.c.l.b16 %v429
      %v846 = vunpack.c.l.b16 %v430
      %v847 = vunpack.c.l.b16 %v431
      %v848 = vunpack.c.l.b16 %v432
      %v849 = vunpack.c.l.b16 %v433
      %v850 = vunpack.c.l.b16 %v434
      %v851 = vunpack.c.l.b16 %v435
      %v852 = vunpack.c.l.b16 %v436
      %v853 = vunpack.c.l.b16 %v437
      %v854 = vunpack.c.l.b16 %v438
      %v855 = vpack.c.b16 %v728, %v727
      %v856 = vpack.c.b16 %v730, %v729
      %v857 = vpack.c.b16 %v732, %v731
      %v858 = vpack.c.b16 %v734, %v733
      %v859 = vpack.c.b16 %v736, %v735
      %v860 = vpack.c.b16 %v738, %v737
      %v861 = vpack.c.b16 %v740, %v739
      %v862 = vpack.c.b16 %v742, %v741
      %v863 = vpack.c.b16 %v744, %v743
      %v864 = vpack.c.b16 %v746, %v745
      %v865 = vpack.c.b16 %v748, %v747
      %v866 = vpack.c.b16 %v750, %v749
      %v867 = vpack.c.b16 %v752, %v751
      %v868 = vpack.c.b16 %v754, %v753
      %v869 = vpack.c.b16 %v756, %v755
      %v870 = vpack.c.b16 %v758, %v757
      %v871 = vpack.c.b16 %v760, %v759
      %v872 = vpack.c.b16 %v762, %v761
      %v873 = vpack.c.b16 %v764, %v763
      %v874 = vpack.c.b16 %v766, %v765
      %v875 = vpack.c.b16 %v768, %v767
      %v876 = vpack.c.b16 %v770, %v769
      %v877 = vpack.c.b16 %v772, %v771
      %v878 = vpack.c.b16 %v774, %v773
      %v879 = vpack.c.b16 %v776, %v775
      %v880 = vpack.c.b16 %v778, %v777
      %v881 = vpack.c.b16 %v780, %v779
      %v882 = vpack.c.b16 %v782, %v781
      %v883 = vpack.c.b16 %v784, %v783
      %v884 = vpack.c.b16 %v786, %v785
      %v885 = vpack.c.b16 %v788, %v787
      %v886 = vpack.c.b16 %v790, %v789
      %v887 = vpack.c.b16 %v792, %v791
      %v888 = vpack.c.b16 %v794, %v793
      %v889 = vpack.c.b16 %v796, %v795
      %v890 = vpack.c.b16 %v798, %v797
      %v891 = vpack.c.b16 %v800, %v799
      %v892 = vpack.c.b16 %v802, %v801
      %v893 = vpack.c.b16 %v804, %v803
      %v894 = vpack.c.b16 %v806, %v805
      %v895 = vpack.c.b16 %v808, %v807
      %v896 = vpack.c.b16 %v810, %v809
      %v897 = vpack.c.b16 %v812, %v811
      %v898 = vpack.c.b16 %v814, %v813
      %v899 = vpack.c.b16 %v816, %v815
      %v900 = vpack.c.b16 %v818, %v817
      %v901 = vpack.c.b16 %v820, %v819
      %v902 = vpack.c.b16 %v822, %v821
      %v903 = vpack.c.b16 %v824, %v823
      %v904 = vpack.c.b16 %v826, %v825
      %v905 = vpack.c.b16 %v828, %v827
      %v906 = vpack.c.b16 %v830, %v829
      %v907 = vpack.c.b16 %v832, %v831
      %v908 = vpack.c.b16 %v834, %v833
      %v909 = vpack.c.b16 %v836, %v835
      %v910 = vpack.c.b16 %v838, %v837
      %v911 = vpack.c.b16 %v840, %v839
      %v912 = vpack.c.b16 %v842, %v841
      %v913 = vpack.c.b16 %v844, %v843
      %v914 = vpack.c.b16 %v846, %v845
      %v915 = vpack.c.b16 %v848, %v847
      %v916 = vpack.c.b16 %v850, %v849
      %v917 = vpack.c.b16 %v852, %v851
      %v918 = vpack.c.b16 %v854, %v853
      %983 = vmatprep.subr.bf16.mxu0 0
      %984 = vmatpush1.bf16.msra.mxu0 %v855
      %985 = vmatprep.subr.bf16.mxu0 0
      %986 = vmatpush1.bf16.msra.mxu0 %v856
      %987 = vmatprep.subr.bf16.mxu0 0
      %988 = vmatpush1.bf16.msra.mxu0 %v857
      %989 = vmatprep.subr.bf16.mxu0 0
      %990 = vmatpush1.bf16.msra.mxu0 %v858
      %991 = vmatprep.subr.bf16.mxu0 0
      %992 = vmatpush1.bf16.msra.mxu0 %v859
      %993 = vmatprep.subr.bf16.mxu0 0
      %994 = vmatpush1.bf16.msra.mxu0 %v860
      %995 = vmatprep.subr.bf16.mxu0 0
      %996 = vmatpush1.bf16.msra.mxu0 %v861
      %997 = vmatprep.subr.bf16.mxu0 0
      %998 = vmatpush1.bf16.msra.mxu0 %v862
      %999 = vmatprep.subr.bf16.mxu0 0
      %1000 = vmatpush1.bf16.msra.mxu0 %v863
      %1001 = vmatprep.subr.bf16.mxu0 0
      %1002 = vmatpush1.bf16.msra.mxu0 %v864
      %1003 = vmatprep.subr.bf16.mxu0 0
      %1004 = vmatpush1.bf16.msra.mxu0 %v865
      %1005 = vmatprep.subr.bf16.mxu0 0
      %1006 = vmatpush1.bf16.msra.mxu0 %v866
      %1007 = vmatprep.subr.bf16.mxu0 0
      %1008 = vmatpush1.bf16.msra.mxu0 %v867
      %1009 = vmatprep.subr.bf16.mxu0 0
      %1010 = vmatpush1.bf16.msra.mxu0 %v868
      %1011 = vmatprep.subr.bf16.mxu0 0
      %1012 = vmatpush1.bf16.msra.mxu0 %v869
      %1013 = vmatprep.subr.bf16.mxu0 0
      %1014 = vmatpush1.bf16.msra.mxu0 %v870
      %1015 = vmatprep.mubr.bf16.mxu0 %v536
      %1016 = vmatmul.mubr.bf16.gmra.mrb[0].mxu0 %v535
      %v1017 = vpop.f32.mrb[0].mxu0
      %v1018 = vadd.f32 0.0, %v1017
      %v1019 = vpop.f32.mrb[0].mxu0
      %v1020 = vpop.f32.mrb[0].mxu0
      %v1021 = vadd.f32 0.0, %v1020
      %v1022 = vpop.f32.mrb[0].mxu0
      %1023 = vmatprep.mubr.bf16.mxu0 %v544
      %1024 = vmatmul.mubr.bf16.gmra.mrb[0].mxu0 %v543
      %v1025 = vpop.f32.mrb[0].mxu0
      %v1026 = vadd.f32 0.0, %v1025
      %v1027 = vpop.f32.mrb[0].mxu0
      %v1028 = vpop.f32.mrb[0].mxu0
      %v1029 = vadd.f32 0.0, %v1028
      %v1030 = vpop.f32.mrb[0].mxu0
      %1031 = vmatprep.mubr.bf16.mxu0 %v552
      %1032 = vmatmul.mubr.bf16.gmra.mrb[0].mxu0 %v551
      %v1033 = vpop.f32.mrb[0].mxu0
      %v1034 = vadd.f32 0.0, %v1033
      %v1035 = vpop.f32.mrb[0].mxu0
      %v1036 = vpop.f32.mrb[0].mxu0
      %v1037 = vadd.f32 0.0, %v1036
      %v1038 = vpop.f32.mrb[0].mxu0
      %1039 = vmatprep.mubr.bf16.mxu0 %v560
      %1040 = vmatmul.mubr.bf16.gmra.mrb[0].mxu0 %v559
      %v1041 = vpop.f32.mrb[0].mxu0
      %v1042 = vadd.f32 0.0, %v1041
      %v1043 = vpop.f32.mrb[0].mxu0
      %v1044 = vpop.f32.mrb[0].mxu0
      %v1045 = vadd.f32 0.0, %v1044
      %v1046 = vpop.f32.mrb[0].mxu0
      %1047 = vdwg.mxu0
      %1048 = vmatprep.subr.bf16.mxu0 0
      %1049 = vmatpush1.bf16.msra.mxu0 %v871
      %1050 = vmatprep.subr.bf16.mxu0 0
      %1051 = vmatpush1.bf16.msra.mxu0 %v872
      %1052 = vmatprep.subr.bf16.mxu0 0
      %1053 = vmatpush1.bf16.msra.mxu0 %v873
      %1054 = vmatprep.subr.bf16.mxu0 0
      %1055 = vmatpush1.bf16.msra.mxu0 %v874
      %1056 = vmatprep.subr.bf16.mxu0 0
      %1057 = vmatpush1.bf16.msra.mxu0 %v875
      %1058 = vmatprep.subr.bf16.mxu0 0
      %1059 = vmatpush1.bf16.msra.mxu0 %v876
      %1060 = vmatprep.subr.bf16.mxu0 0
      %1061 = vmatpush1.bf16.msra.mxu0 %v877
      %1062 = vmatprep.subr.bf16.mxu0 0
      %1063 = vmatpush1.bf16.msra.mxu0 %v878
      %1064 = vmatprep.subr.bf16.mxu0 0
      %1065 = vmatpush1.bf16.msra.mxu0 %v879
      %1066 = vmatprep.subr.bf16.mxu0 0
      %1067 = vmatpush1.bf16.msra.mxu0 %v880
      %1068 = vmatprep.subr.bf16.mxu0 0
      %1069 = vmatpush1.bf16.msra.mxu0 %v881
      %1070 = vmatprep.subr.bf16.mxu0 0
      %1071 = vmatpush1.bf16.msra.mxu0 %v882
      %1072 = vmatprep.subr.bf16.mxu0 0
      %1073 = vmatpush1.bf16.msra.mxu0 %v883
      %1074 = vmatprep.subr.bf16.mxu0 0
      %1075 = vmatpush1.bf16.msra.mxu0 %v884
      %1076 = vmatprep.subr.bf16.mxu0 0
      %1077 = vmatpush1.bf16.msra.mxu0 %v885
      %1078 = vmatprep.subr.bf16.mxu0 0
      %1079 = vmatpush1.bf16.msra.mxu0 %v886
      %1080 = vmatprep.mubr.bf16.mxu0 %v538
      %1081 = vmatmul.mubr.bf16.gmra.mrb[0].mxu0 %v537
      %v1082 = vpop.f32.mrb[0].mxu0
      %v1083 = vadd.f32 %v1018, %v1082
      %v1084 = vpop.f32.mrb[0].mxu0
      %v1085 = vpop.f32.mrb[0].mxu0
      %v1086 = vadd.f32 %v1021, %v1085
      %v1087 = vpop.f32.mrb[0].mxu0
      %1088 = vmatprep.mubr.bf16.mxu0 %v546
      %1089 = vmatmul.mubr.bf16.gmra.mrb[0].mxu0 %v545
      %v1090 = vpop.f32.mrb[0].mxu0
      %v1091 = vadd.f32 %v1026, %v1090
      %v1092 = vpop.f32.mrb[0].mxu0
      %v1093 = vpop.f32.mrb[0].mxu0
      %v1094 = vadd.f32 %v1029, %v1093
      %v1095 = vpop.f32.mrb[0].mxu0
      %1096 = vmatprep.mubr.bf16.mxu0 %v554
      %1097 = vmatmul.mubr.bf16.gmra.mrb[0].mxu0 %v553
      %v1098 = vpop.f32.mrb[0].mxu0
      %v1099 = vadd.f32 %v1034, %v1098
      %v1100 = vpop.f32.mrb[0].mxu0
      %v1101 = vpop.f32.mrb[0].mxu0
      %v1102 = vadd.f32 %v1037, %v1101
      %v1103 = vpop.f32.mrb[0].mxu0
      %1104 = vmatprep.mubr.bf16.mxu0 %v562
      %1105 = vmatmul.mubr.bf16.gmra.mrb[0].mxu0 %v561
      %v1106 = vpop.f32.mrb[0].mxu0
      %v1107 = vadd.f32 %v1042, %v1106
      %v1108 = vpop.f32.mrb[0].mxu0
      %v1109 = vpop.f32.mrb[0].mxu0
      %v1110 = vadd.f32 %v1045, %v1109
      %v1111 = vpop.f32.mrb[0].mxu0
      %1112 = vdwg.mxu0
      %1113 = vmatprep.subr.bf16.mxu0 0
      %1114 = vmatpush1.bf16.msra.mxu0 %v887
      %1115 = vmatprep.subr.bf16.mxu0 0
      %1116 = vmatpush1.bf16.msra.mxu0 %v888
      %1117 = vmatprep.subr.bf16.mxu0 0
      %1118 = vmatpush1.bf16.msra.mxu0 %v889
      %1119 = vmatprep.subr.bf16.mxu0 0
      %1120 = vmatpush1.bf16.msra.mxu0 %v890
      %1121 = vmatprep.subr.bf16.mxu0 0
      %1122 = vmatpush1.bf16.msra.mxu0 %v891
      %1123 = vmatprep.subr.bf16.mxu0 0
      %1124 = vmatpush1.bf16.msra.mxu0 %v892
      %1125 = vmatprep.subr.bf16.mxu0 0
      %1126 = vmatpush1.bf16.msra.mxu0 %v893
      %1127 = vmatprep.subr.bf16.mxu0 0
      %1128 = vmatpush1.bf16.msra.mxu0 %v894
      %1129 = vmatprep.subr.bf16.mxu0 0
      %1130 = vmatpush1.bf16.msra.mxu0 %v895
      %1131 = vmatprep.subr.bf16.mxu0 0
      %1132 = vmatpush1.bf16.msra.mxu0 %v896
      %1133 = vmatprep.subr.bf16.mxu0 0
      %1134 = vmatpush1.bf16.msra.mxu0 %v897
      %1135 = vmatprep.subr.bf16.mxu0 0
      %1136 = vmatpush1.bf16.msra.mxu0 %v898
      %1137 = vmatprep.subr.bf16.mxu0 0
      %1138 = vmatpush1.bf16.msra.mxu0 %v899
      %1139 = vmatprep.subr.bf16.mxu0 0
      %1140 = vmatpush1.bf16.msra.mxu0 %v900
      %1141 = vmatprep.subr.bf16.mxu0 0
      %1142 = vmatpush1.bf16.msra.mxu0 %v901
      %1143 = vmatprep.subr.bf16.mxu0 0
      %1144 = vmatpush1.bf16.msra.mxu0 %v902
      %1145 = vmatprep.mubr.bf16.mxu0 %v540
      %1146 = vmatmul.mubr.bf16.gmra.mrb[0].mxu0 %v539
      %v1147 = vpop.f32.mrb[0].mxu0
      %v1148 = vadd.f32 %v1083, %v1147
      %v1149 = vpop.f32.mrb[0].mxu0
      %v1150 = vpop.f32.mrb[0].mxu0
      %v1151 = vadd.f32 %v1086, %v1150
      %v1152 = vpop.f32.mrb[0].mxu0
      %1153 = vmatprep.mubr.bf16.mxu0 %v548
      %1154 = vmatmul.mubr.bf16.gmra.mrb[0].mxu0 %v547
      %v1155 = vpop.f32.mrb[0].mxu0
      %v1156 = vadd.f32 %v1091, %v1155
      %v1157 = vpop.f32.mrb[0].mxu0
      %v1158 = vpop.f32.mrb[0].mxu0
      %v1159 = vadd.f32 %v1094, %v1158
      %v1160 = vpop.f32.mrb[0].mxu0
      %1161 = vmatprep.mubr.bf16.mxu0 %v556
      %1162 = vmatmul.mubr.bf16.gmra.mrb[0].mxu0 %v555
      %v1163 = vpop.f32.mrb[0].mxu0
      %v1164 = vadd.f32 %v1099, %v1163
      %v1165 = vpop.f32.mrb[0].mxu0
      %v1166 = vpop.f32.mrb[0].mxu0
      %v1167 = vadd.f32 %v1102, %v1166
      %v1168 = vpop.f32.mrb[0].mxu0
      %1169 = vmatprep.mubr.bf16.mxu0 %v564
      %1170 = vmatmul.mubr.bf16.gmra.mrb[0].mxu0 %v563
      %v1171 = vpop.f32.mrb[0].mxu0
      %v1172 = vadd.f32 %v1107, %v1171
      %v1173 = vpop.f32.mrb[0].mxu0
      %v1174 = vpop.f32.mrb[0].mxu0
      %v1175 = vadd.f32 %v1110, %v1174
      %v1176 = vpop.f32.mrb[0].mxu0
      %1177 = vdwg.mxu0
      %1178 = vmatprep.subr.bf16.mxu0 0
      %1179 = vmatpush1.bf16.msra.mxu0 %v903
      %1180 = vmatprep.subr.bf16.mxu0 0
      %1181 = vmatpush1.bf16.msra.mxu0 %v904
      %1182 = vmatprep.subr.bf16.mxu0 0
      %1183 = vmatpush1.bf16.msra.mxu0 %v905
      %1184 = vmatprep.subr.bf16.mxu0 0
      %1185 = vmatpush1.bf16.msra.mxu0 %v906
      %1186 = vmatprep.subr.bf16.mxu0 0
      %1187 = vmatpush1.bf16.msra.mxu0 %v907
      %1188 = vmatprep.subr.bf16.mxu0 0
      %1189 = vmatpush1.bf16.msra.mxu0 %v908
      %1190 = vmatprep.subr.bf16.mxu0 0
      %1191 = vmatpush1.bf16.msra.mxu0 %v909
      %1192 = vmatprep.subr.bf16.mxu0 0
      %1193 = vmatpush1.bf16.msra.mxu0 %v910
      %1194 = vmatprep.subr.bf16.mxu0 0
      %1195 = vmatpush1.bf16.msra.mxu0 %v911
      %1196 = vmatprep.subr.bf16.mxu0 0
      %1197 = vmatpush1.bf16.msra.mxu0 %v912
      %1198 = vmatprep.subr.bf16.mxu0 0
      %1199 = vmatpush1.bf16.msra.mxu0 %v913
      %1200 = vmatprep.subr.bf16.mxu0 0
      %1201 = vmatpush1.bf16.msra.mxu0 %v914
      %1202 = vmatprep.subr.bf16.mxu0 0
      %1203 = vmatpush1.bf16.msra.mxu0 %v915
      %1204 = vmatprep.subr.bf16.mxu0 0
      %1205 = vmatpush1.bf16.msra.mxu0 %v916
      %1206 = vmatprep.subr.bf16.mxu0 0
      %1207 = vmatpush1.bf16.msra.mxu0 %v917
      %1208 = vmatprep.subr.bf16.mxu0 0
      %1209 = vmatpush1.bf16.msra.mxu0 %v918
      %1210 = vmatprep.mubr.bf16.mxu0 %v542
      %1211 = vmatmul.mubr.bf16.gmra.mrb[0].mxu0 %v541
      %v1212 = vpop.f32.mrb[0].mxu0
      %v1213 = vadd.f32 %v1148, %v1212
      %v1214 = vpop.f32.mrb[0].mxu0
      %v1215 = vpop.f32.mrb[0].mxu0
      %v1216 = vadd.f32 %v1151, %v1215
      %v1217 = vpop.f32.mrb[0].mxu0
      %1218 = vmatprep.mubr.bf16.mxu0 %v550
      %1219 = vmatmul.mubr.bf16.gmra.mrb[0].mxu0 %v549
      %v1220 = vpop.f32.mrb[0].mxu0
      %v1221 = vadd.f32 %v1156, %v1220
      %v1222 = vpop.f32.mrb[0].mxu0
      %v1223 = vpop.f32.mrb[0].mxu0
      %v1224 = vadd.f32 %v1159, %v1223
      %v1225 = vpop.f32.mrb[0].mxu0
      %1226 = vmatprep.mubr.bf16.mxu0 %v558
      %1227 = vmatmul.mubr.bf16.gmra.mrb[0].mxu0 %v557
      %v1228 = vpop.f32.mrb[0].mxu0
      %v1229 = vadd.f32 %v1164, %v1228
      %v1230 = vpop.f32.mrb[0].mxu0
      %v1231 = vpop.f32.mrb[0].mxu0
      %v1232 = vadd.f32 %v1167, %v1231
      %v1233 = vpop.f32.mrb[0].mxu0
      %1234 = vmatprep.mubr.bf16.mxu0 %v566
      %1235 = vmatmul.mubr.bf16.gmra.mrb[0].mxu0 %v565
      %v1236 = vpop.f32.mrb[0].mxu0
      %v1237 = vadd.f32 %v1172, %v1236
      %v1238 = vpop.f32.mrb[0].mxu0
      %v1239 = vpop.f32.mrb[0].mxu0
      %v1240 = vadd.f32 %v1175, %v1239
      %v1241 = vpop.f32.mrb[0].mxu0
      %1242 = vdwg.mxu0
      %v1243 = vadd.f32 %v271, %v1213
      %v1244 = vadd.f32 %v272, %v1216
      %v1245 = vadd.f32 %v273, %v1221
      %v1246 = vadd.f32 %v274, %v1224
      %v1247 = vadd.f32 %v275, %v1229
      %v1248 = vadd.f32 %v276, %v1232
      %v1249 = vadd.f32 %v277, %v1237
      %v1250 = vadd.f32 %v278, %v1240
      %1251 = vst [vmem:[#allocation2] sm:$0xff] %v1243
      %1252 = vst [vmem:[#allocation2 + $0x8] sm:$0xff] %v1244
      %1253 = vst [vmem:[#allocation2 + $0x10] sm:$0xff] %v1245
      %1254 = vst [vmem:[#allocation2 + $0x18] sm:$0xff] %v1246
      %1255 = vst [vmem:[#allocation2 + $0x20] sm:$0xff] %v1247
      %1256 = vst [vmem:[#allocation2 + $0x28] sm:$0xff] %v1248
      %1257 = vst [vmem:[#allocation2 + $0x30] sm:$0xff] %v1249
      %1258 = vst [vmem:[#allocation2 + $0x38] sm:$0xff] %v1250
      // Predicated region
      $region37: #{discriminator_forward.6} parent=31 // pred_check
        %p1259 = pneg %p259
      $region38: #{discriminator_forward.6} parent=31 // pred_check_branch
        %1261 = sbr.rel (%p1259) target = $region40
      $region39: #{discriminator_forward.6} parent=31 // pred_region
        %v1262 = vld [vmem:[#allocation2] sm:$0xff]
        %v1263 = vld [vmem:[#allocation2 + $0x8] sm:$0xff]
        %v1264 = vld [vmem:[#allocation2 + $0x10] sm:$0xff]
        %v1265 = vld [vmem:[#allocation2 + $0x18] sm:$0xff]
        %v1266 = vld [vmem:[#allocation2 + $0x20] sm:$0xff]
        %v1267 = vld [vmem:[#allocation2 + $0x28] sm:$0xff]
        %v1268 = vld [vmem:[#allocation2 + $0x30] sm:$0xff]
        %v1269 = vld [vmem:[#allocation2 + $0x38] sm:$0xff]
        %v1270 = vld [vmem:[%s2] sm:$0x1]
        %v1272 = vlaneseq
        %v1273 = vshrl.u32 %v1272, 7
        %v1274 = vsub.s32 0, %v1273
        %v1275 = vrot.slane %v1270, %v1274
        %v1277 = vadd.f32 %v1262, %v1275
        %v1278 = vadd.f32 %v1263, %v1275
        %v1279 = vadd.f32 %v1264, %v1275
        %v1280 = vadd.f32 %v1265, %v1275
        %v1281 = vadd.f32 %v1266, %v1275
        %v1282 = vadd.f32 %v1267, %v1275
        %v1283 = vadd.f32 %v1268, %v1275
        %v1284 = vadd.f32 %v1269, %v1275
        %v1285 = vadd.f32 %v1277, %v1278
        %v1286 = vadd.f32 %v1285, %v1279
        %v1287 = vadd.f32 %v1286, %v1280
        %v1288 = vadd.f32 %v1287, %v1281
        %v1289 = vadd.f32 %v1288, %v1282
        %v1290 = vadd.f32 %v1289, %v1283
        %v1291 = vadd.f32 %v1290, %v1284
        %v1292 = vrot.slane %v1291, 4
        %v1293 = vadd.f32 %v1291, %v1292
        %v1294 = vrot.slane %v1293, 2
        %v1295 = vadd.f32 %v1293, %v1294
        %v1296 = vrot.slane %v1295, 1
        %v1297 = vadd.f32 %v1295, %v1296
        %v1298 = vrcp.pop 64.0
        %v1299 = vmul.f32 %v1297, %v1298
        %v1300 = vsub.f32 %v1277, %v1299
        %v1301 = vsub.f32 %v1278, %v1299
        %v1302 = vsub.f32 %v1279, %v1299
        %v1303 = vsub.f32 %v1280, %v1299
        %v1304 = vsub.f32 %v1281, %v1299
        %v1305 = vsub.f32 %v1282, %v1299
        %v1306 = vsub.f32 %v1283, %v1299
        %v1307 = vsub.f32 %v1284, %v1299
        %v1308 = vmul.f32 %v1300, %v1300
        %v1309 = vmul.f32 %v1301, %v1301
        %v1310 = vmul.f32 %v1302, %v1302
        %v1311 = vmul.f32 %v1303, %v1303
        %v1312 = vmul.f32 %v1304, %v1304
        %v1313 = vmul.f32 %v1305, %v1305
        %v1314 = vmul.f32 %v1306, %v1306
        %v1315 = vmul.f32 %v1307, %v1307
        %v1316 = vadd.f32 %v1308, %v1309
        %v1317 = vadd.f32 %v1316, %v1310
        %v1318 = vadd.f32 %v1317, %v1311
        %v1319 = vadd.f32 %v1318, %v1312
        %v1320 = vadd.f32 %v1319, %v1313
        %v1321 = vadd.f32 %v1320, %v1314
        %v1322 = vadd.f32 %v1321, %v1315
        %v1323 = vrot.slane %v1322, 4
        %v1324 = vadd.f32 %v1322, %v1323
        %v1325 = vrot.slane %v1324, 2
        %v1326 = vadd.f32 %v1324, %v1325
        %v1327 = vrot.slane %v1326, 1
        %v1328 = vadd.f32 %v1326, %v1327
        %v1329 = vmul.f32 %v1328, %v1298
        %v1330 = vadd.f32 %v1329, 1e-05
        %v1331 = vrsqrt.pop %v1330
        %v1332 = vmul.f32 %v1300, %v1331
        %v1333 = vmul.f32 %v1301, %v1331
        %v1334 = vmul.f32 %v1302, %v1331
        %v1335 = vmul.f32 %v1303, %v1331
        %v1336 = vmul.f32 %v1304, %v1331
        %v1337 = vmul.f32 %v1305, %v1331
        %v1338 = vmul.f32 %v1306, %v1331
        %v1339 = vmul.f32 %v1307, %v1331
        %v1340 = vmul.f32 %v1332, 0.2
        %v1341 = vmul.f32 %v1333, 0.2
        %v1342 = vmul.f32 %v1334, 0.2
        %v1343 = vmul.f32 %v1335, 0.2
        %v1344 = vmul.f32 %v1336, 0.2
        %v1345 = vmul.f32 %v1337, 0.2
        %v1346 = vmul.f32 %v1338, 0.2
        %v1347 = vmul.f32 %v1339, 0.2
        %v1348 = vmax.f32 %v1332, %v1340
        %v1349 = vmax.f32 %v1333, %v1341
        %v1350 = vmax.f32 %v1334, %v1342
        %v1351 = vmax.f32 %v1335, %v1343
        %v1352 = vmax.f32 %v1336, %v1344
        %v1353 = vmax.f32 %v1337, %v1345
        %v1354 = vmax.f32 %v1338, %v1346
        %v1355 = vmax.f32 %v1339, %v1347
        %v1356 = vpack.c.bf16 %v1349, %v1348
        %v1357 = vpack.c.bf16 %v1351, %v1350
        %v1358 = vpack.c.bf16 %v1353, %v1352
        %v1359 = vpack.c.bf16 %v1355, %v1354
        %v1364 = vunpack.c.l.b16 %v1356
        %v1365 = vunpack.c.h.b16 %v1356
        %v1366 = vunpack.c.l.b16 %v1357
        %v1367 = vunpack.c.h.b16 %v1357
        %v1368 = vunpack.c.l.b16 %v1358
        %v1369 = vunpack.c.h.b16 %v1358
        %v1370 = vunpack.c.l.b16 %v1359
        %v1371 = vunpack.c.h.b16 %v1359
        %v1372 = vpack.c.b16 %v1364, %v1364
        %v1373 = vpack.c.b16 %v1365, %v1365
        %v1374 = vpack.c.b16 %v1366, %v1366
        %v1375 = vpack.c.b16 %v1367, %v1367
        %v1376 = vpack.c.b16 %v1368, %v1368
        %v1377 = vpack.c.b16 %v1369, %v1369
        %v1378 = vpack.c.b16 %v1370, %v1370
        %v1379 = vpack.c.b16 %v1371, %v1371
        %1388 = vst [vmem:[%s256] sm:$0xf] %v1372
        %1389 = vst [vmem:[%s256 + $0x4] sm:$0xf] %v1373
        %1390 = vst [vmem:[%s256 + $0x8] sm:$0xf] %v1374
        %1391 = vst [vmem:[%s256 + $0xc] sm:$0xf] %v1375
        %1392 = vst [vmem:[%s256 + $0x10] sm:$0xf] %v1376
        %1393 = vst [vmem:[%s256 + $0x14] sm:$0xf] %v1377
        %1394 = vst [vmem:[%s256 + $0x18] sm:$0xf] %v1378
        %1395 = vst [vmem:[%s256 + $0x1c] sm:$0xf] %v1379
      $region40: #{discriminator_forward.6} parent=31 // pred_fallthru
        _
      %s1396 = smul.u32 8, %s20
      %p1397 = scmp.lt.s32.totalorder %s19, 1
      %s1398 = scalar_select %p1397, %s19, 1
      %p1399 = scmp.lt.s32.totalorder %s1396, 7
      %s1400 = scalar_select %p1399, %s1396, 7
      %s1401 = smul.addr %s1398, 8
      %s1402 = sadd.s32 %s1400, %s1401
      %s1403 = smul.addr %s1402, 4
      %s1404 = scalar_lea.vmem %s3, %s1403
      // Predicated region
      $region41: #{discriminator_forward.6} parent=31 // pred_check
        %p1405 = pneg %p130
      $region42: #{discriminator_forward.6} parent=31 // pred_check_branch
        %1407 = sbr.rel (%p1405) target = $region44
      $region43: #{discriminator_forward.6} parent=31 // pred_region
        %s1408 = smul.u32 8, %s20
      $region44: #{discriminator_forward.6} parent=31 // pred_fallthru
        _
    $region32: #{discriminator_forward.6} parent=5 // pred_fallthru
      _
    %p1409 = scmp.le.s32.totalorder 2, %s9
    // Predicated region
    $region45: #{discriminator_forward.6} parent=5 // pred_check
      %p1410 = pneg %p1409
    $region46: #{discriminator_forward.6} parent=5 // pred_check_branch
      %1412 = sbr.rel (%p1410) target = $region48
    $region47: #{discriminator_forward.6} parent=5 // pred_region
      %s1413 = ssub.s32 %s9, 2
      // Predicated region
      $region49: #{discriminator_forward.6} parent=47 // pred_check
        %p1414 = pneg %p136
      $region50: #{discriminator_forward.6} parent=47 // pred_check_branch
        %1416 = sbr.rel (%p1414) target = $region52
      $region51: #{discriminator_forward.6} parent=47 // pred_region
        %s1417 = smul.u32 8, %s23
        %p1418 = scmp.lt.s32.totalorder %s22, 1
        %s1419 = scalar_select %p1418, %s22, 1
        %p1420 = scmp.lt.s32.totalorder %s1417, 7
        %s1421 = scalar_select %p1420, %s1417, 7
        %s1422 = smul.addr %s1419, 8
        %s1423 = sadd.s32 %s1421, %s1422
        %s1424 = smul.addr %s1423, 4
        %s1425 = scalar_lea.vmem %s3, %s1424
      $region52: #{discriminator_forward.6} parent=47 // pred_fallthru
        _
    $region48: #{discriminator_forward.6} parent=5 // pred_fallthru
      _
  $region6: #{discriminator_forward.6} parent=0 // loop_footer
    %s13 = sadd.s32 1, %s9
  $region7: #{discriminator_forward.6} parent=0 // loop_footer_branch
    %8 = sbr.rel target = $region3
  $region8: #{discriminator_forward.6} parent=0 // loop_exit
    _

// kernel: discriminator_forward.7
$region0: #{discriminator_forward.7}
  #allocation0 [shape = 'u32[]', space=smem, size = 0x4, offset = 0x4, fixed_abs, tag = 'smem constant byte address 0x4 - core index']
  #allocation1 [shape = 'u32[144,128]{1,0:T(1,128)}', space=vmem, size = 0x12000, scoped, tag = 'internal scratch']
  #allocation2 [shape = 'f32[16,256]{1,0:T(8,128)}', space=vmem, size = 0x4000, scoped, tag = 'scratch operand']
  %s0 = inlined_call_operand.vmem [shape: bf16[2,16,2048], index: 0, kind: input, shape index: {}]
  %s1 = inlined_call_operand.vmem [shape: bf16[2048,256], index: 1, kind: input, shape index: {}]
  %s2 = inlined_call_operand.vmem [shape: f32[1,256], index: 2, kind: input, shape index: {}]
  %s3 = inlined_call_operand.vmem [shape: bf16[2,16,256], index: 3, kind: output, shape index: {}]
  %s4 = sld [smem:[#allocation0]]
  $region76: #{discriminator_forward.7} parent=0
    _
  %s6 = ssub.s32 1, %s4
  %s7 = scalar_select 0, %s6, %s4
  $region1: #{discriminator_forward.7} parent=0
    #allocation3 [shape = 'u8[65536]{0}', space=vmem, size = 0x10000, scoped, tag = 'input window, operand 0']
    loop: start=0, step=1, limit=6
    $region2: #{discriminator_forward.7} parent=1 // loop_pre_header
      _
    $region3: #{discriminator_forward.7} parent=1 // loop_header
      %s9 = sphi 0, %s13
      %p10 = scmp.ge.s32.totalorder %s9, 6
      %s16 = sphi 0, %s35
      %s17 = sphi 0, %s31
      %s18 = sphi 0, %s27
      %s19 = sphi 0, %s16
      %s20 = sphi 0, %s17
      %s21 = sphi 0, %s18
      %s22 = sphi 0, %s19
      %s23 = sphi 0, %s20
      %s24 = sphi 0, %s21
      %s42 = sphi 0, %s44
      %s45 = sphi 0, %s42
      %s46 = sphi 0, %s45
      %s62 = sphi 0, %s46
      %s68 = sphi 0, %s70
      %s71 = sphi 0, %s68
      %s72 = sphi 0, %s71
      %s88 = sphi 0, %s72
      %s92 = sphi 0, %s92
      %s94 = sphi 0, %s92
      %s95 = sphi 0, %s94
      %s109 = sphi 0, %s95
      %s117 = sphi 0, %s119
      %s120 = sphi 0, %s117
      %s121 = sphi 0, %s120
      %s137 = sphi 0, %s121
    $region4: #{discriminator_forward.7} parent=1 // loop_header_branch
      %12 = sbr.rel (%p10) target = $region8
    $region5: #{discriminator_forward.7} parent=1 // loop_body
      %s14 = ssub.s32 %s9, 1
      %s15 = ssub.s32 %s9, 2
      %s25 = sadd.s32 1, %s18
      %p26 = scmp.ge.s32.totalorder %s25, 2
      %s27 = scalar_select %p26, 0, %s25
      %s28 = sadd.s32 1, %s17
      %s29 = scalar_select %p26, %s28, %s17
      %p30 = scmp.ge.s32.totalorder %s29, 1
      %s31 = scalar_select %p30, 0, %s29
      %s32 = sadd.s32 1, %s16
      %s33 = scalar_select %p30, %s32, %s16
      %p34 = scmp.ge.s32.totalorder %s33, 2
      %s35 = scalar_select %p34, 0, %s33
      %s36 = ssub.s32 %s16, %s35
      %s37 = ssub.s32 %s17, %s31
      %s38 = sor.u32 %s36, %s37
      %s39 = ssub.s32 %s18, %s27
      %s40 = sor.u32 %s38, %s39
      %p41 = scmp.eq.s32.totalorder %s40, 0
      %s43 = sadd.s32 %s42, 1
      %s44 = scalar_select %p41, %s42, %s43
      %p47 = pneg %p41
      %p48 = scmp.eq.s32.totalorder %s9, 3
      %p49 = por %p47, %p48
      %p50 = scmp.ne.s32.totalorder %s42, %s45
      %p51 = scmp.eq.s32.totalorder %s9, 0
      %p52 = por %p50, %p51
      %p53 = scmp.ne.s32.totalorder %s42, %s45
      %p54 = scmp.eq.s32.totalorder %s14, 3
      %p55 = por %p53, %p54
      %p56 = scmp.ne.s32.totalorder %s45, %s46
      %p57 = scmp.eq.s32.totalorder %s14, 0
      %p58 = por %p56, %p57
      %p59 = scmp.ne.s32.totalorder %s45, %s46
      %p60 = scmp.eq.s32.totalorder %s15, 3
      %p61 = por %p59, %p60
      %p63 = scmp.ne.s32.totalorder %s46, %s62
      %p64 = scmp.eq.s32.totalorder %s15, 0
      %p65 = por %p63, %p64
      %s66 = ssub.s32 %s18, %s27
      %p67 = scmp.eq.s32.totalorder %s66, 0
      %s69 = sadd.s32 %s68, 1
      %s70 = scalar_select %p67, %s68, %s69
      %p73 = pneg %p67
      %p74 = scmp.eq.s32.totalorder %s9, 3
      %p75 = por %p73, %p74
      %p76 = scmp.ne.s32.totalorder %s68, %s71
      %p77 = scmp.eq.s32.totalorder %s9, 0
      %p78 = por %p76, %p77
      %p79 = scmp.ne.s32.totalorder %s68, %s71
      %p80 = scmp.eq.s32.totalorder %s14, 3
      %p81 = por %p79, %p80
      %p82 = scmp.ne.s32.totalorder %s71, %s72
      %p83 = scmp.eq.s32.totalorder %s14, 0
      %p84 = por %p82, %p83
      %p85 = scmp.ne.s32.totalorder %s71, %s72
      %p86 = scmp.eq.s32.totalorder %s15, 3
      %p87 = por %p85, %p86
      %p89 = scmp.ne.s32.totalorder %s72, %s88
      %p90 = scmp.eq.s32.totalorder %s15, 0
      %p91 = por %p89, %p90
      %s93 = sadd.s32 %s92, 1
      %p96 = scmp.eq.s32.totalorder %s9, 3
      %p97 = scmp.ne.s32.totalorder %s92, %s94
      %p98 = scmp.eq.s32.totalorder %s9, 0
      %p99 = por %p97, %p98
      %p100 = scmp.ne.s32.totalorder %s92, %s94
      %p101 = scmp.eq.s32.totalorder %s14, 3
      %p102 = por %p100, %p101
      %p103 = scmp.ne.s32.totalorder %s94, %s95
      %p104 = scmp.eq.s32.totalorder %s14, 0
      %p105 = por %p103, %p104
      %p106 = scmp.ne.s32.totalorder %s94, %s95
      %p107 = scmp.eq.s32.totalorder %s15, 3
      %p108 = por %p106, %p107
      %p110 = scmp.ne.s32.totalorder %s95, %s109
      %p111 = scmp.eq.s32.totalorder %s15, 0
      %p112 = por %p110, %p111
      %s113 = ssub.s32 %s16, %s35
      %s114 = ssub.s32 %s17, %s31
      %s115 = sor.u32 %s113, %s114
      %p116 = scmp.eq.s32.totalorder %s115, 0
      %s118 = sadd.s32 %s117, 1
      %s119 = scalar_select %p116, %s117, %s118
      %p122 = pneg %p116
      %p123 = scmp.eq.s32.totalorder %s9, 3
      %p124 = por %p122, %p123
      %p125 = scmp.ne.s32.totalorder %s117, %s120
      %p126 = scmp.eq.s32.totalorder %s9, 0
      %p127 = por %p125, %p126
      %p128 = scmp.ne.s32.totalorder %s117, %s120
      %p129 = scmp.eq.s32.totalorder %s14, 3
      %p130 = por %p128, %p129
      %p131 = scmp.ne.s32.totalorder %s120, %s121
      %p132 = scmp.eq.s32.totalorder %s14, 0
      %p133 = por %p131, %p132
      %p134 = scmp.ne.s32.totalorder %s120, %s121
      %p135 = scmp.eq.s32.totalorder %s15, 3
      %p136 = por %p134, %p135
      %p138 = scmp.ne.s32.totalorder %s121, %s137
      %p139 = scmp.eq.s32.totalorder %s15, 0
      %p140 = por %p138, %p139
      %p141 = scmp.le.s32.totalorder 1, %s9
      %p142 = scmp.lt.s32.totalorder %s9, 5
      %p143 = pnand %p141, %p142
      %p144 = pneg %p143
      // Predicated region
      $region9: #{discriminator_forward.7} parent=5 // pred_check
        _
      $region10: #{discriminator_forward.7} parent=5 // pred_check_branch
        %146 = sbr.rel (%p143) target = $region12
      $region11: #{discriminator_forward.7} parent=5 // pred_region
        %s147 = ssub.s32 %s9, 1
        // Predicated region
        $region13: #{discriminator_forward.7} parent=11 // pred_check
          %p148 = pneg %p105
        $region14: #{discriminator_forward.7} parent=11 // pred_check_branch
          %150 = sbr.rel (%p148) target = $region16
        $region15: #{discriminator_forward.7} parent=11 // pred_region
          _
        $region16: #{discriminator_forward.7} parent=11 // pred_fallthru
          _
      $region12: #{discriminator_forward.7} parent=5 // pred_fallthru
        _
      %p151 = scmp.lt.s32.totalorder %s9, 4
      // Predicated region
      $region17: #{discriminator_forward.7} parent=5 // pred_check
        %p152 = pneg %p151
      $region18: #{discriminator_forward.7} parent=5 // pred_check_branch
        %154 = sbr.rel (%p152) target = $region20
      $region19: #{discriminator_forward.7} parent=5 // pred_region
        // Predicated region
        $region21: #{discriminator_forward.7} parent=19 // pred_check
          %p155 = pneg %p52
        $region22: #{discriminator_forward.7} parent=19 // pred_check_branch
          %157 = sbr.rel (%p155) target = $region24
        $region23: #{discriminator_forward.7} parent=19 // pred_region
          %s158 = sand.u32 %s42, 1
          %s159 = sand.u32 %s42, 1
          %s160 = smul.addr %s159, 64
          %s161 = scalar_lea.vmem [#allocation3], %s160
          %s162 = smul.u32 2, %s17
          %s163 = smul.u32 8, %s18
          %s164 = smul.addr %s162, 16
          %s165 = sadd.s32 %s163, %s164
          %s166 = smul.addr %s16, 32
          %s167 = sadd.s32 %s165, %s166
          %s168 = smul.addr %s167, 4
          %s169 = scalar_lea.vmem %s0, %s168
          // Predicated region
          $region25: #{discriminator_forward.7} parent=23 // pred_check
            _
          $region26: #{discriminator_forward.7} parent=23 // pred_check_branch
            %171 = sbr.rel (0) target = $region28
          $region27: #{discriminator_forward.7} parent=23 // pred_region
            // Predicated region
            $region29: #{discriminator_forward.7} parent=27 // pred_check
              _
            $region30: #{discriminator_forward.7} parent=27 // pred_check_branch
              %173 = sbr.rel (0) target = $region32
            $region31: #{discriminator_forward.7} parent=27 // pred_region
              loop: start=0, step=1, limit=1
              $region33: #{discriminator_forward.7} parent=31 // loop_pre_header
                _
              $region34: #{discriminator_forward.7} parent=31 // loop_header
                %s175 = sphi 0, %s179
                %p176 = scmp.ge.s32.totalorder %s175, 1
                %s180 = sphi %s169, %s169
                %s181 = sphi %s161, %s161
              $region35: #{discriminator_forward.7} parent=31 // loop_header_branch
                %178 = sbr.rel (%p176) target = $region39
              $region36: #{discriminator_forward.7} parent=31 // loop_body
                %v182 = vld [vmem:[%s180] sm:$0xff]
                %183 = vst [vmem:[%s181] sm:$0xff] %v182
                %v184 = vld [vmem:[%s180 + $0x8] sm:$0xff]
                %185 = vst [vmem:[%s181 + $0x8] sm:$0xff] %v184
                %v186 = vld [vmem:[%s180 + $0x10] sm:$0xff]
                %187 = vst [vmem:[%s181 + $0x10] sm:$0xff] %v186
                %v188 = vld [vmem:[%s180 + $0x18] sm:$0xff]
                %189 = vst [vmem:[%s181 + $0x18] sm:$0xff] %v188
                %v190 = vld [vmem:[%s180 + $0x40] sm:$0xff]
                %191 = vst [vmem:[%s181 + $0x20] sm:$0xff] %v190
                %v192 = vld [vmem:[%s180 + $0x48] sm:$0xff]
                %193 = vst [vmem:[%s181 + $0x28] sm:$0xff] %v192
                %v194 = vld [vmem:[%s180 + $0x50] sm:$0xff]
                %195 = vst [vmem:[%s181 + $0x30] sm:$0xff] %v194
                %v196 = vld [vmem:[%s180 + $0x58] sm:$0xff]
                %197 = vst [vmem:[%s181 + $0x38] sm:$0xff] %v196
              $region37: #{discriminator_forward.7} parent=31 // loop_footer
                %s179 = sadd.s32 1, %s175
              $region38: #{discriminator_forward.7} parent=31 // loop_footer_branch
                %174 = sbr.rel target = $region34
              $region39: #{discriminator_forward.7} parent=31 // loop_exit
                _
            $region32: #{discriminator_forward.7} parent=27 // pred_fallthru
              _
            // Predicated region
            $region40: #{discriminator_forward.7} parent=27 // pred_check
              _
            $region41: #{discriminator_forward.7} parent=27 // pred_check_branch
              %199 = sbr.rel target = $region43
            $region42: #{discriminator_forward.7} parent=27 // pred_region
              _
            $region43: #{discriminator_forward.7} parent=27 // pred_fallthru
              _
          $region28: #{discriminator_forward.7} parent=23 // pred_fallthru
            _
          %200 = vnop
        $region24: #{discriminator_forward.7} parent=19 // pred_fallthru
          _
        // Predicated region
        $region44: #{discriminator_forward.7} parent=19 // pred_check
          %p201 = pneg %p78
        $region45: #{discriminator_forward.7} parent=19 // pred_check_branch
          %203 = sbr.rel (%p201) target = $region47
        $region46: #{discriminator_forward.7} parent=19 // pred_region
          %s204 = smul.u32 128, %s18
          %p205 = scmp.lt.s32.totalorder %s204, 255
          %s206 = scalar_select %p205, %s204, 255
          %s207 = smul.addr %s206, 2
          %s208 = smul.addr %s207, 4
          %s209 = scalar_lea.vmem %s1, %s208
          %s210 = smul.u32 128, %s18
        $region47: #{discriminator_forward.7} parent=19 // pred_fallthru
          _
      $region20: #{discriminator_forward.7} parent=5 // pred_fallthru
        _
      %p211 = scmp.le.s32.totalorder 1, %s9
      %p212 = scmp.lt.s32.totalorder %s9, 5
      %p213 = pnand %p211, %p212
      %p214 = pneg %p213
      // Predicated region
      $region48: #{discriminator_forward.7} parent=5 // pred_check
        _
      $region49: #{discriminator_forward.7} parent=5 // pred_check_branch
        %216 = sbr.rel (%p213) target = $region51
      $region50: #{discriminator_forward.7} parent=5 // pred_region
        %s217 = ssub.s32 %s9, 1
        %s218 = sand.u32 %s45, 1
        %s219 = sand.u32 %s45, 1
        %s220 = smul.addr %s219, 64
        %s221 = scalar_lea.vmem [#allocation3], %s220
        // Predicated region
        $region52: #{discriminator_forward.7} parent=50 // pred_check
          %p222 = pneg %p58
        $region53: #{discriminator_forward.7} parent=50 // pred_check_branch
          %224 = sbr.rel (%p222) target = $region55
        $region54: #{discriminator_forward.7} parent=50 // pred_region
          _
        $region55: #{discriminator_forward.7} parent=50 // pred_fallthru
          _
        %s225 = sand.u32 %s45, 1
        %s226 = sand.u32 %s45, 1
        %s227 = smul.addr %s226, 64
        %s228 = scalar_lea.vmem [#allocation3], %s227
        %p229 = pneg %p58
        %p230 = pneg %p55
        %s231 = smul.u32 128, %s21
        %p232 = scmp.lt.s32.totalorder %s231, 255
        %s233 = scalar_select %p232, %s231, 255
        %s234 = smul.addr %s233, 2
        %s235 = smul.addr %s234, 4
        %s236 = scalar_lea.vmem %s1, %s235
        %p237 = pneg %p84
        %p238 = pneg %p81
        %p239 = pneg %p105
        %p240 = pneg %p102
        %p241 = pneg %p133
        %p242 = pneg %p130
        %s243 = smul.u32 2, %s20
        %p244 = scmp.lt.s32.totalorder %s19, 1
        %s245 = scalar_select %p244, %s19, 1
        %p246 = scmp.lt.s32.totalorder %s243, 1
        %s247 = scalar_select %p246, %s243, 1
        %s248 = smul.addr %s247, 2
        %s249 = smul.addr %s245, 4
        %s250 = sadd.s32 %s248, %s249
        %s251 = smul.addr %s250, 4
        %s252 = scalar_lea.vmem %s3, %s251
        %s253 = smul.u32 2, %s20
        %s254 = smul.u32 8, %s21
        %s255 = smul.u32 128, %s21
        %p256 = scmp.lt.s32.totalorder %s255, 255
        %s257 = scalar_select %p256, %s255, 255
        %s258 = smul.addr %s257, 2
        %s259 = smul.addr %s258, 4
        %s260 = scalar_lea.vmem %s1, %s259
        %s261 = smul.u32 128, %s21
        %s262 = smul.u32 2, %s20
        %p263 = scmp.lt.s32.totalorder %s19, 1
        %s264 = scalar_select %p263, %s19, 1
        %p265 = scmp.lt.s32.totalorder %s262, 1
        %s266 = scalar_select %p265, %s262, 1
        %s267 = smul.addr %s266, 2
        %s268 = smul.addr %s264, 4
        %s269 = sadd.s32 %s267, %s268
        %s270 = smul.addr %s269, 4
        %s271 = scalar_lea.vmem %s3, %s270
        %s272 = smul.u32 2, %s20
        %p273 = scmp.eq.s32.totalorder %s21, 0
        // Predicated region
        $region56: #{discriminator_forward.7} parent=50 // pred_check
          %p274 = pneg %p273
        $region57: #{discriminator_forward.7} parent=50 // pred_check_branch
          %276 = sbr.rel (%p274) target = $region59
        $region58: #{discriminator_forward.7} parent=50 // pred_region
          %277 = vst [vmem:[#allocation2] sm:$0xff] 0.0
          %278 = vst [vmem:[#allocation2 + $0x8] sm:$0xff] 0.0
          %279 = vst [vmem:[#allocation2 + $0x10] sm:$0xff] 0.0
          %280 = vst [vmem:[#allocation2 + $0x18] sm:$0xff] 0.0
        $region59: #{discriminator_forward.7} parent=50 // pred_fallthru
          _
        %v281 = vld [vmem:[#allocation2] sm:$0xff]
        %v282 = vld [vmem:[#allocation2 + $0x8] sm:$0xff]
        %v283 = vld [vmem:[#allocation2 + $0x10] sm:$0xff]
        %v284 = vld [vmem:[#allocation2 + $0x18] sm:$0xff]
        %v285 = vld [vmem:[%s221] sm:$0xff]
        %v286 = vld [vmem:[%s221 + $0x8] sm:$0xff]
        %v287 = vld [vmem:[%s221 + $0x10] sm:$0xff]
        %v288 = vld [vmem:[%s221 + $0x18] sm:$0xff]
        %v289 = vld [vmem:[%s221 + $0x20] sm:$0xff]
        %v290 = vld [vmem:[%s221 + $0x28] sm:$0xff]
        %v291 = vld [vmem:[%s221 + $0x30] sm:$0xff]
        %v292 = vld [vmem:[%s221 + $0x38] sm:$0xff]
        %v293 = vld [vmem:[%s260] sm:$0xff]
        %v294 = vld [vmem:[%s260 + $0x8] sm:$0xff]
        %v295 = vld [vmem:[%s260 + $0x10] sm:$0xff]
        %v296 = vld [vmem:[%s260 + $0x18] sm:$0xff]
        %v297 = vld [vmem:[%s260 + $0x20] sm:$0xff]
        %v298 = vld [vmem:[%s260 + $0x28] sm:$0xff]
        %v299 = vld [vmem:[%s260 + $0x30] sm:$0xff]
        %v300 = vld [vmem:[%s260 + $0x38] sm:$0xff]
        %v301 = vld [vmem:[%s260 + $0x40] sm:$0xff]
        %v302 = vld [vmem:[%s260 + $0x48] sm:$0xff]
        %v303 = vld [vmem:[%s260 + $0x50] sm:$0xff]
        %v304 = vld [vmem:[%s260 + $0x58] sm:$0xff]
        %v305 = vld [vmem:[%s260 + $0x60] sm:$0xff]
        %v306 = vld [vmem:[%s260 + $0x68] sm:$0xff]
        %v307 = vld [vmem:[%s260 + $0x70] sm:$0xff]
        %v308 = vld [vmem:[%s260 + $0x78] sm:$0xff]
        %v309 = vld [vmem:[%s260 + $0x80] sm:$0xff]
        %v310 = vld [vmem:[%s260 + $0x88] sm:$0xff]
        %v311 = vld [vmem:[%s260 + $0x90] sm:$0xff]
        %v312 = vld [vmem:[%s260 + $0x98] sm:$0xff]
        %v313 = vld [vmem:[%s260 + $0xa0] sm:$0xff]
        %v314 = vld [vmem:[%s260 + $0xa8] sm:$0xff]
        %v315 = vld [vmem:[%s260 + $0xb0] sm:$0xff]
        %v316 = vld [vmem:[%s260 + $0xb8] sm:$0xff]
        %v317 = vld [vmem:[%s260 + $0xc0] sm:$0xff]
        %v318 = vld [vmem:[%s260 + $0xc8] sm:$0xff]
        %v319 = vld [vmem:[%s260 + $0xd0] sm:$0xff]
        %v320 = vld [vmem:[%s260 + $0xd8] sm:$0xff]
        %v321 = vld [vmem:[%s260 + $0xe0] sm:$0xff]
        %v322 = vld [vmem:[%s260 + $0xe8] sm:$0xff]
        %v323 = vld [vmem:[%s260 + $0xf0] sm:$0xff]
        %v324 = vld [vmem:[%s260 + $0xf8] sm:$0xff]
        %v325 = vld [vmem:[%s260 + $0x100] sm:$0xff]
        %v326 = vld [vmem:[%s260 + $0x108] sm:$0xff]
        %v327 = vld [vmem:[%s260 + $0x110] sm:$0xff]
        %v328 = vld [vmem:[%s260 + $0x118] sm:$0xff]
        %v329 = vld [vmem:[%s260 + $0x120] sm:$0xff]
        %v330 = vld [vmem:[%s260 + $0x128] sm:$0xff]
        %v331 = vld [vmem:[%s260 + $0x130] sm:$0xff]
        %v332 = vld [vmem:[%s260 + $0x138] sm:$0xff]
        %v333 = vld [vmem:[%s260 + $0x140] sm:$0xff]
        %v334 = vld [vmem:[%s260 + $0x148] sm:$0xff]
        %v335 = vld [vmem:[%s260 + $0x150] sm:$0xff]
        %v336 = vld [vmem:[%s260 + $0x158] sm:$0xff]
        %v337 = vld [vmem:[%s260 + $0x160] sm:$0xff]
        %v338 = vld [vmem:[%s260 + $0x168] sm:$0xff]
        %v339 = vld [vmem:[%s260 + $0x170] sm:$0xff]
        %v340 = vld [vmem:[%s260 + $0x178] sm:$0xff]
        %v341 = vld [vmem:[%s260 + $0x180] sm:$0xff]
        %v342 = vld [vmem:[%s260 + $0x188] sm:$0xff]
        %v343 = vld [vmem:[%s260 + $0x190] sm:$0xff]
        %v344 = vld [vmem:[%s260 + $0x198] sm:$0xff]
        %v345 = vld [vmem:[%s260 + $0x1a0] sm:$0xff]
        %v346 = vld [vmem:[%s260 + $0x1a8] sm:$0xff]
        %v347 = vld [vmem:[%s260 + $0x1b0] sm:$0xff]
        %v348 = vld [vmem:[%s260 + $0x1b8] sm:$0xff]
        %v349 = vld [vmem:[%s260 + $0x1c0] sm:$0xff]
        %v350 = vld [vmem:[%s260 + $0x1c8] sm:$0xff]
        %v351 = vld [vmem:[%s260 + $0x1d0] sm:$0xff]
        %v352 = vld [vmem:[%s260 + $0x1d8] sm:$0xff]
        %v353 = vld [vmem:[%s260 + $0x1e0] sm:$0xff]
        %v354 = vld [vmem:[%s260 + $0x1e8] sm:$0xff]
        %v355 = vld [vmem:[%s260 + $0x1f0] sm:$0xff]
        %v356 = vld [vmem:[%s260 + $0x1f8] sm:$0xff]
        %v357 = vld [vmem:[%s260 + $0x200] sm:$0xff]
        %v358 = vld [vmem:[%s260 + $0x208] sm:$0xff]
        %v359 = vld [vmem:[%s260 + $0x210] sm:$0xff]
        %v360 = vld [vmem:[%s260 + $0x218] sm:$0xff]
        %v361 = vld [vmem:[%s260 + $0x220] sm:$0xff]
        %v362 = vld [vmem:[%s260 + $0x228] sm:$0xff]
        %v363 = vld [vmem:[%s260 + $0x230] sm:$0xff]
        %v364 = vld [vmem:[%s260 + $0x238] sm:$0xff]
        %v365 = vld [vmem:[%s260 + $0x240] sm:$0xff]
        %v366 = vld [vmem:[%s260 + $0x248] sm:$0xff]
        %v367 = vld [vmem:[%s260 + $0x250] sm:$0xff]
        %v368 = vld [vmem:[%s260 + $0x258] sm:$0xff]
        %v369 = vld [vmem:[%s260 + $0x260] sm:$0xff]
        %v370 = vld [vmem:[%s260 + $0x268] sm:$0xff]
        %v371 = vld [vmem:[%s260 + $0x270] sm:$0xff]
        %v372 = vld [vmem:[%s260 + $0x278] sm:$0xff]
        %v373 = vld [vmem:[%s260 + $0x280] sm:$0xff]
        %v374 = vld [vmem:[%s260 + $0x288] sm:$0xff]
        %v375 = vld [vmem:[%s260 + $0x290] sm:$0xff]
        %v376 = vld [vmem:[%s260 + $0x298] sm:$0xff]
        %v377 = vld [vmem:[%s260 + $0x2a0] sm:$0xff]
        %v378 = vld [vmem:[%s260 + $0x2a8] sm:$0xff]
        %v379 = vld [vmem:[%s260 + $0x2b0] sm:$0xff]
        %v380 = vld [vmem:[%s260 + $0x2b8] sm:$0xff]
        %v381 = vld [vmem:[%s260 + $0x2c0] sm:$0xff]
        %v382 = vld [vmem:[%s260 + $0x2c8] sm:$0xff]
        %v383 = vld [vmem:[%s260 + $0x2d0] sm:$0xff]
        %v384 = vld [vmem:[%s260 + $0x2d8] sm:$0xff]
        %v385 = vld [vmem:[%s260 + $0x2e0] sm:$0xff]
        %v386 = vld [vmem:[%s260 + $0x2e8] sm:$0xff]
        %v387 = vld [vmem:[%s260 + $0x2f0] sm:$0xff]
        %v388 = vld [vmem:[%s260 + $0x2f8] sm:$0xff]
        %v389 = vld [vmem:[%s260 + $0x300] sm:$0xff]
        %v390 = vld [vmem:[%s260 + $0x308] sm:$0xff]
        %v391 = vld [vmem:[%s260 + $0x310] sm:$0xff]
        %v392 = vld [vmem:[%s260 + $0x318] sm:$0xff]
        %v393 = vld [vmem:[%s260 + $0x320] sm:$0xff]
        %v394 = vld [vmem:[%s260 + $0x328] sm:$0xff]
        %v395 = vld [vmem:[%s260 + $0x330] sm:$0xff]
        %v396 = vld [vmem:[%s260 + $0x338] sm:$0xff]
        %v397 = vld [vmem:[%s260 + $0x340] sm:$0xff]
        %v398 = vld [vmem:[%s260 + $0x348] sm:$0xff]
        %v399 = vld [vmem:[%s260 + $0x350] sm:$0xff]
        %v400 = vld [vmem:[%s260 + $0x358] sm:$0xff]
        %v401 = vld [vmem:[%s260 + $0x360] sm:$0xff]
        %v402 = vld [vmem:[%s260 + $0x368] sm:$0xff]
        %v403 = vld [vmem:[%s260 + $0x370] sm:$0xff]
        %v404 = vld [vmem:[%s260 + $0x378] sm:$0xff]
        %v405 = vld [vmem:[%s260 + $0x380] sm:$0xff]
        %v406 = vld [vmem:[%s260 + $0x388] sm:$0xff]
        %v407 = vld [vmem:[%s260 + $0x390] sm:$0xff]
        %v408 = vld [vmem:[%s260 + $0x398] sm:$0xff]
        %v409 = vld [vmem:[%s260 + $0x3a0] sm:$0xff]
        %v410 = vld [vmem:[%s260 + $0x3a8] sm:$0xff]
        %v411 = vld [vmem:[%s260 + $0x3b0] sm:$0xff]
        %v412 = vld [vmem:[%s260 + $0x3b8] sm:$0xff]
        %v413 = vld [vmem:[%s260 + $0x3c0] sm:$0xff]
        %v414 = vld [vmem:[%s260 + $0x3c8] sm:$0xff]
        %v415 = vld [vmem:[%s260 + $0x3d0] sm:$0xff]
        %v416 = vld [vmem:[%s260 + $0x3d8] sm:$0xff]
        %v417 = vld [vmem:[%s260 + $0x3e0] sm:$0xff]
        %v418 = vld [vmem:[%s260 + $0x3e8] sm:$0xff]
        %v419 = vld [vmem:[%s260 + $0x3f0] sm:$0xff]
        %v420 = vld [vmem:[%s260 + $0x3f8] sm:$0xff]
        %v429 = vunpack.c.l.b16 %v285
        %v430 = vunpack.c.h.b16 %v285
        %v431 = vunpack.c.l.b16 %v286
        %v432 = vunpack.c.h.b16 %v286
        %v433 = vunpack.c.l.b16 %v287
        %v434 = vunpack.c.h.b16 %v287
        %v435 = vunpack.c.l.b16 %v288
        %v436 = vunpack.c.h.b16 %v288
        %v437 = vunpack.c.l.b16 %v289
        %v438 = vunpack.c.h.b16 %v289
        %v439 = vunpack.c.l.b16 %v290
        %v440 = vunpack.c.h.b16 %v290
        %v441 = vunpack.c.l.b16 %v291
        %v442 = vunpack.c.h.b16 %v291
        %v443 = vunpack.c.l.b16 %v292
        %v444 = vunpack.c.h.b16 %v292
        %v445 = vpack.c.b16 %v437, %v429
        %v446 = vpack.c.b16 %v438, %v430
        %v447 = vpack.c.b16 %v439, %v431
        %v448 = vpack.c.b16 %v440, %v432
        %v449 = vpack.c.b16 %v441, %v433
        %v450 = vpack.c.b16 %v442, %v434
        %v451 = vpack.c.b16 %v443, %v435
        %v452 = vpack.c.b16 %v444, %v436
        %v589 = vunpack.c.l.b16 %v293
        %v590 = vunpack.c.h.b16 %v293
        %v591 = vunpack.c.l.b16 %v294
        %v592 = vunpack.c.h.b16 %v294
        %v593 = vunpack.c.l.b16 %v295
        %v594 = vunpack.c.h.b16 %v295
        %v595 = vunpack.c.l.b16 %v296
        %v596 = vunpack.c.h.b16 %v296
        %v597 = vunpack.c.l.b16 %v297
        %v598 = vunpack.c.h.b16 %v297
        %v599 = vunpack.c.l.b16 %v298
        %v600 = vunpack.c.h.b16 %v298
        %v601 = vunpack.c.l.b16 %v299
        %v602 = vunpack.c.h.b16 %v299
        %v603 = vunpack.c.l.b16 %v300
        %v604 = vunpack.c.h.b16 %v300
        %v605 = vunpack.c.l.b16 %v301
        %v606 = vunpack.c.h.b16 %v301
        %v607 = vunpack.c.l.b16 %v302
        %v608 = vunpack.c.h.b16 %v302
        %v609 = vunpack.c.l.b16 %v303
        %v610 = vunpack.c.h.b16 %v303
        %v611 = vunpack.c.l.b16 %v304
        %v612 = vunpack.c.h.b16 %v304
        %v613 = vunpack.c.l.b16 %v305
        %v614 = vunpack.c.h.b16 %v305
        %v615 = vunpack.c.l.b16 %v306
        %v616 = vunpack.c.h.b16 %v306
        %v617 = vunpack.c.l.b16 %v307
        %v618 = vunpack.c.h.b16 %v307
        %v619 = vunpack.c.l.b16 %v308
        %v620 = vunpack.c.h.b16 %v308
        %v621 = vunpack.c.l.b16 %v309
        %v622 = vunpack.c.h.b16 %v309
        %v623 = vunpack.c.l.b16 %v310
        %v624 = vunpack.c.h.b16 %v310
        %v625 = vunpack.c.l.b16 %v311
        %v626 = vunpack.c.h.b16 %v311
        %v627 = vunpack.c.l.b16 %v312
        %v628 = vunpack.c.h.b16 %v312
        %v629 = vunpack.c.l.b16 %v313
        %v630 = vunpack.c.h.b16 %v313
        %v631 = vunpack.c.l.b16 %v314
        %v632 = vunpack.c.h.b16 %v314
        %v633 = vunpack.c.l.b16 %v315
        %v634 = vunpack.c.h.b16 %v315
        %v635 = vunpack.c.l.b16 %v316
        %v636 = vunpack.c.h.b16 %v316
        %v637 = vunpack.c.l.b16 %v317
        %v638 = vunpack.c.h.b16 %v317
        %v639 = vunpack.c.l.b16 %v318
        %v640 = vunpack.c.h.b16 %v318
        %v641 = vunpack.c.l.b16 %v319
        %v642 = vunpack.c.h.b16 %v319
        %v643 = vunpack.c.l.b16 %v320
        %v644 = vunpack.c.h.b16 %v320
        %v645 = vunpack.c.l.b16 %v321
        %v646 = vunpack.c.h.b16 %v321
        %v647 = vunpack.c.l.b16 %v322
        %v648 = vunpack.c.h.b16 %v322
        %v649 = vunpack.c.l.b16 %v323
        %v650 = vunpack.c.h.b16 %v323
        %v651 = vunpack.c.l.b16 %v324
        %v652 = vunpack.c.h.b16 %v324
        %v653 = vunpack.c.l.b16 %v325
        %v654 = vunpack.c.h.b16 %v325
        %v655 = vunpack.c.l.b16 %v326
        %v656 = vunpack.c.h.b16 %v326
        %v657 = vunpack.c.l.b16 %v327
        %v658 = vunpack.c.h.b16 %v327
        %v659 = vunpack.c.l.b16 %v328
        %v660 = vunpack.c.h.b16 %v328
        %v661 = vunpack.c.l.b16 %v329
        %v662 = vunpack.c.h.b16 %v329
        %v663 = vunpack.c.l.b16 %v330
        %v664 = vunpack.c.h.b16 %v330
        %v665 = vunpack.c.l.b16 %v331
        %v666 = vunpack.c.h.b16 %v331
        %v667 = vunpack.c.l.b16 %v332
        %v668 = vunpack.c.h.b16 %v332
        %v669 = vunpack.c.l.b16 %v333
        %v670 = vunpack.c.h.b16 %v333
        %v671 = vunpack.c.l.b16 %v334
        %v672 = vunpack.c.h.b16 %v334
        %v673 = vunpack.c.l.b16 %v335
        %v674 = vunpack.c.h.b16 %v335
        %v675 = vunpack.c.l.b16 %v336
        %v676 = vunpack.c.h.b16 %v336
        %v677 = vunpack.c.l.b16 %v337
        %v678 = vunpack.c.h.b16 %v337
        %v679 = vunpack.c.l.b16 %v338
        %v680 = vunpack.c.h.b16 %v338
        %v681 = vunpack.c.l.b16 %v339
        %v682 = vunpack.c.h.b16 %v339
        %v683 = vunpack.c.l.b16 %v340
        %v684 = vunpack.c.h.b16 %v340
        %v685 = vunpack.c.l.b16 %v341
        %v686 = vunpack.c.h.b16 %v341
        %v687 = vunpack.c.l.b16 %v342
        %v688 = vunpack.c.h.b16 %v342
        %v689 = vunpack.c.l.b16 %v343
        %v690 = vunpack.c.h.b16 %v343
        %v691 = vunpack.c.l.b16 %v344
        %v692 = vunpack.c.h.b16 %v344
        %v693 = vunpack.c.l.b16 %v345
        %v694 = vunpack.c.h.b16 %v345
        %v695 = vunpack.c.l.b16 %v346
        %v696 = vunpack.c.h.b16 %v346
        %v697 = vunpack.c.l.b16 %v347
        %v698 = vunpack.c.h.b16 %v347
        %v699 = vunpack.c.l.b16 %v348
        %v700 = vunpack.c.h.b16 %v348
        %v701 = vunpack.c.l.b16 %v349
        %v702 = vunpack.c.h.b16 %v349
        %v703 = vunpack.c.l.b16 %v350
        %v704 = vunpack.c.h.b16 %v350
        %v705 = vunpack.c.l.b16 %v351
        %v706 = vunpack.c.h.b16 %v351
        %v707 = vunpack.c.l.b16 %v352
        %v708 = vunpack.c.h.b16 %v352
        %v709 = vunpack.c.l.b16 %v353
        %v710 = vunpack.c.h.b16 %v353
        %v711 = vunpack.c.l.b16 %v354
        %v712 = vunpack.c.h.b16 %v354
        %v713 = vunpack.c.l.b16 %v355
        %v714 = vunpack.c.h.b16 %v355
        %v715 = vunpack.c.l.b16 %v356
        %v716 = vunpack.c.h.b16 %v356
        %v717 = vunpack.c.l.b16 %v357
        %v718 = vunpack.c.h.b16 %v357
        %v719 = vunpack.c.l.b16 %v358
        %v720 = vunpack.c.h.b16 %v358
        %v721 = vunpack.c.l.b16 %v359
        %v722 = vunpack.c.h.b16 %v359
        %v723 = vunpack.c.l.b16 %v360
        %v724 = vunpack.c.h.b16 %v360
        %v725 = vunpack.c.l.b16 %v361
        %v726 = vunpack.c.h.b16 %v361
        %v727 = vunpack.c.l.b16 %v362
        %v728 = vunpack.c.h.b16 %v362
        %v729 = vunpack.c.l.b16 %v363
        %v730 = vunpack.c.h.b16 %v363
        %v731 = vunpack.c.l.b16 %v364
        %v732 = vunpack.c.h.b16 %v364
        %v733 = vunpack.c.l.b16 %v365
        %v734 = vunpack.c.h.b16 %v365
        %v735 = vunpack.c.l.b16 %v366
        %v736 = vunpack.c.h.b16 %v366
        %v737 = vunpack.c.l.b16 %v367
        %v738 = vunpack.c.h.b16 %v367
        %v739 = vunpack.c.l.b16 %v368
        %v740 = vunpack.c.h.b16 %v368
        %v741 = vunpack.c.l.b16 %v369
        %v742 = vunpack.c.h.b16 %v369
        %v743 = vunpack.c.l.b16 %v370
        %v744 = vunpack.c.h.b16 %v370
        %v745 = vunpack.c.l.b16 %v371
        %v746 = vunpack.c.h.b16 %v371
        %v747 = vunpack.c.l.b16 %v372
        %v748 = vunpack.c.h.b16 %v372
        %v749 = vunpack.c.l.b16 %v373
        %v750 = vunpack.c.h.b16 %v373
        %v751 = vunpack.c.l.b16 %v374
        %v752 = vunpack.c.h.b16 %v374
        %v753 = vunpack.c.l.b16 %v375
        %v754 = vunpack.c.h.b16 %v375
        %v755 = vunpack.c.l.b16 %v376
        %v756 = vunpack.c.h.b16 %v376
        %v757 = vunpack.c.l.b16 %v377
        %v758 = vunpack.c.h.b16 %v377
        %v759 = vunpack.c.l.b16 %v378
        %v760 = vunpack.c.h.b16 %v378
        %v761 = vunpack.c.l.b16 %v379
        %v762 = vunpack.c.h.b16 %v379
        %v763 = vunpack.c.l.b16 %v380
        %v764 = vunpack.c.h.b16 %v380
        %v765 = vunpack.c.l.b16 %v381
        %v766 = vunpack.c.h.b16 %v381
        %v767 = vunpack.c.l.b16 %v382
        %v768 = vunpack.c.h.b16 %v382
        %v769 = vunpack.c.l.b16 %v383
        %v770 = vunpack.c.h.b16 %v383
        %v771 = vunpack.c.l.b16 %v384
        %v772 = vunpack.c.h.b16 %v384
        %v773 = vunpack.c.l.b16 %v385
        %v774 = vunpack.c.h.b16 %v385
        %v775 = vunpack.c.l.b16 %v386
        %v776 = vunpack.c.h.b16 %v386
        %v777 = vunpack.c.l.b16 %v387
        %v778 = vunpack.c.h.b16 %v387
        %v779 = vunpack.c.l.b16 %v388
        %v780 = vunpack.c.h.b16 %v388
        %v781 = vunpack.c.l.b16 %v389
        %v782 = vunpack.c.h.b16 %v389
        %v783 = vunpack.c.l.b16 %v390
        %v784 = vunpack.c.h.b16 %v390
        %v785 = vunpack.c.l.b16 %v391
        %v786 = vunpack.c.h.b16 %v391
        %v787 = vunpack.c.l.b16 %v392
        %v788 = vunpack.c.h.b16 %v392
        %v789 = vunpack.c.l.b16 %v393
        %v790 = vunpack.c.h.b16 %v393
        %v791 = vunpack.c.l.b16 %v394
        %v792 = vunpack.c.h.b16 %v394
        %v793 = vunpack.c.l.b16 %v395
        %v794 = vunpack.c.h.b16 %v395
        %v795 = vunpack.c.l.b16 %v396
        %v796 = vunpack.c.h.b16 %v396
        %v797 = vunpack.c.l.b16 %v397
        %v798 = vunpack.c.h.b16 %v397
        %v799 = vunpack.c.l.b16 %v398
        %v800 = vunpack.c.h.b16 %v398
        %v801 = vunpack.c.l.b16 %v399
        %v802 = vunpack.c.h.b16 %v399
        %v803 = vunpack.c.l.b16 %v400
        %v804 = vunpack.c.h.b16 %v400
        %v805 = vunpack.c.l.b16 %v401
        %v806 = vunpack.c.h.b16 %v401
        %v807 = vunpack.c.l.b16 %v402
        %v808 = vunpack.c.h.b16 %v402
        %v809 = vunpack.c.l.b16 %v403
        %v810 = vunpack.c.h.b16 %v403
        %v811 = vunpack.c.l.b16 %v404
        %v812 = vunpack.c.h.b16 %v404
        %v813 = vunpack.c.l.b16 %v405
        %v814 = vunpack.c.h.b16 %v405
        %v815 = vunpack.c.l.b16 %v406
        %v816 = vunpack.c.h.b16 %v406
        %v817 = vunpack.c.l.b16 %v407
        %v818 = vunpack.c.h.b16 %v407
        %v819 = vunpack.c.l.b16 %v408
        %v820 = vunpack.c.h.b16 %v408
        %v821 = vunpack.c.l.b16 %v409
        %v822 = vunpack.c.h.b16 %v409
        %v823 = vunpack.c.l.b16 %v410
        %v824 = vunpack.c.h.b16 %v410
        %v825 = vunpack.c.l.b16 %v411
        %v826 = vunpack.c.h.b16 %v411
        %v827 = vunpack.c.l.b16 %v412
        %v828 = vunpack.c.h.b16 %v412
        %v829 = vunpack.c.l.b16 %v413
        %v830 = vunpack.c.h.b16 %v413
        %v831 = vunpack.c.l.b16 %v414
        %v832 = vunpack.c.h.b16 %v414
        %v833 = vunpack.c.l.b16 %v415
        %v834 = vunpack.c.h.b16 %v415
        %v835 = vunpack.c.l.b16 %v416
        %v836 = vunpack.c.h.b16 %v416
        %v837 = vunpack.c.l.b16 %v417
        %v838 = vunpack.c.h.b16 %v417
        %v839 = vunpack.c.l.b16 %v418
        %v840 = vunpack.c.h.b16 %v418
        %v841 = vunpack.c.l.b16 %v419
        %v842 = vunpack.c.h.b16 %v419
        %v843 = vunpack.c.l.b16 %v420
        %v844 = vunpack.c.h.b16 %v420
        %v845 = vpack.c.b16 %v591, %v589
        %v846 = vpack.c.b16 %v592, %v590
        %v847 = vpack.c.b16 %v595, %v593
        %v848 = vpack.c.b16 %v596, %v594
        %v849 = vpack.c.b16 %v599, %v597
        %v850 = vpack.c.b16 %v600, %v598
        %v851 = vpack.c.b16 %v603, %v601
        %v852 = vpack.c.b16 %v604, %v602
        %v853 = vpack.c.b16 %v607, %v605
        %v854 = vpack.c.b16 %v608, %v606
        %v855 = vpack.c.b16 %v611, %v609
        %v856 = vpack.c.b16 %v612, %v610
        %v857 = vpack.c.b16 %v615, %v613
        %v858 = vpack.c.b16 %v616, %v614
        %v859 = vpack.c.b16 %v619, %v617
        %v860 = vpack.c.b16 %v620, %v618
        %v861 = vpack.c.b16 %v623, %v621
        %v862 = vpack.c.b16 %v624, %v622
        %v863 = vpack.c.b16 %v627, %v625
        %v864 = vpack.c.b16 %v628, %v626
        %v865 = vpack.c.b16 %v631, %v629
        %v866 = vpack.c.b16 %v632, %v630
        %v867 = vpack.c.b16 %v635, %v633
        %v868 = vpack.c.b16 %v636, %v634
        %v869 = vpack.c.b16 %v639, %v637
        %v870 = vpack.c.b16 %v640, %v638
        %v871 = vpack.c.b16 %v643, %v641
        %v872 = vpack.c.b16 %v644, %v642
        %v873 = vpack.c.b16 %v647, %v645
        %v874 = vpack.c.b16 %v648, %v646
        %v875 = vpack.c.b16 %v651, %v649
        %v876 = vpack.c.b16 %v652, %v650
        %v877 = vpack.c.b16 %v655, %v653
        %v878 = vpack.c.b16 %v656, %v654
        %v879 = vpack.c.b16 %v659, %v657
        %v880 = vpack.c.b16 %v660, %v658
        %v881 = vpack.c.b16 %v663, %v661
        %v882 = vpack.c.b16 %v664, %v662
        %v883 = vpack.c.b16 %v667, %v665
        %v884 = vpack.c.b16 %v668, %v666
        %v885 = vpack.c.b16 %v671, %v669
        %v886 = vpack.c.b16 %v672, %v670
        %v887 = vpack.c.b16 %v675, %v673
        %v888 = vpack.c.b16 %v676, %v674
        %v889 = vpack.c.b16 %v679, %v677
        %v890 = vpack.c.b16 %v680, %v678
        %v891 = vpack.c.b16 %v683, %v681
        %v892 = vpack.c.b16 %v684, %v682
        %v893 = vpack.c.b16 %v687, %v685
        %v894 = vpack.c.b16 %v688, %v686
        %v895 = vpack.c.b16 %v691, %v689
        %v896 = vpack.c.b16 %v692, %v690
        %v897 = vpack.c.b16 %v695, %v693
        %v898 = vpack.c.b16 %v696, %v694
        %v899 = vpack.c.b16 %v699, %v697
        %v900 = vpack.c.b16 %v700, %v698
        %v901 = vpack.c.b16 %v703, %v701
        %v902 = vpack.c.b16 %v704, %v702
        %v903 = vpack.c.b16 %v707, %v705
        %v904 = vpack.c.b16 %v708, %v706
        %v905 = vpack.c.b16 %v711, %v709
        %v906 = vpack.c.b16 %v712, %v710
        %v907 = vpack.c.b16 %v715, %v713
        %v908 = vpack.c.b16 %v716, %v714
        %v909 = vpack.c.b16 %v719, %v717
        %v910 = vpack.c.b16 %v720, %v718
        %v911 = vpack.c.b16 %v723, %v721
        %v912 = vpack.c.b16 %v724, %v722
        %v913 = vpack.c.b16 %v727, %v725
        %v914 = vpack.c.b16 %v728, %v726
        %v915 = vpack.c.b16 %v731, %v729
        %v916 = vpack.c.b16 %v732, %v730
        %v917 = vpack.c.b16 %v735, %v733
        %v918 = vpack.c.b16 %v736, %v734
        %v919 = vpack.c.b16 %v739, %v737
        %v920 = vpack.c.b16 %v740, %v738
        %v921 = vpack.c.b16 %v743, %v741
        %v922 = vpack.c.b16 %v744, %v742
        %v923 = vpack.c.b16 %v747, %v745
        %v924 = vpack.c.b16 %v748, %v746
        %v925 = vpack.c.b16 %v751, %v749
        %v926 = vpack.c.b16 %v752, %v750
        %v927 = vpack.c.b16 %v755, %v753
        %v928 = vpack.c.b16 %v756, %v754
        %v929 = vpack.c.b16 %v759, %v757
        %v930 = vpack.c.b16 %v760, %v758
        %v931 = vpack.c.b16 %v763, %v761
        %v932 = vpack.c.b16 %v764, %v762
        %v933 = vpack.c.b16 %v767, %v765
        %v934 = vpack.c.b16 %v768, %v766
        %v935 = vpack.c.b16 %v771, %v769
        %v936 = vpack.c.b16 %v772, %v770
        %v937 = vpack.c.b16 %v775, %v773
        %v938 = vpack.c.b16 %v776, %v774
        %v939 = vpack.c.b16 %v779, %v777
        %v940 = vpack.c.b16 %v780, %v778
        %v941 = vpack.c.b16 %v783, %v781
        %v942 = vpack.c.b16 %v784, %v782
        %v943 = vpack.c.b16 %v787, %v785
        %v944 = vpack.c.b16 %v788, %v786
        %v945 = vpack.c.b16 %v791, %v789
        %v946 = vpack.c.b16 %v792, %v790
        %v947 = vpack.c.b16 %v795, %v793
        %v948 = vpack.c.b16 %v796, %v794
        %v949 = vpack.c.b16 %v799, %v797
        %v950 = vpack.c.b16 %v800, %v798
        %v951 = vpack.c.b16 %v803, %v801
        %v952 = vpack.c.b16 %v804, %v802
        %v953 = vpack.c.b16 %v807, %v805
        %v954 = vpack.c.b16 %v808, %v806
        %v955 = vpack.c.b16 %v811, %v809
        %v956 = vpack.c.b16 %v812, %v810
        %v957 = vpack.c.b16 %v815, %v813
        %v958 = vpack.c.b16 %v816, %v814
        %v959 = vpack.c.b16 %v819, %v817
        %v960 = vpack.c.b16 %v820, %v818
        %v961 = vpack.c.b16 %v823, %v821
        %v962 = vpack.c.b16 %v824, %v822
        %v963 = vpack.c.b16 %v827, %v825
        %v964 = vpack.c.b16 %v828, %v826
        %v965 = vpack.c.b16 %v831, %v829
        %v966 = vpack.c.b16 %v832, %v830
        %v967 = vpack.c.b16 %v835, %v833
        %v968 = vpack.c.b16 %v836, %v834
        %v969 = vpack.c.b16 %v839, %v837
        %v970 = vpack.c.b16 %v840, %v838
        %v971 = vpack.c.b16 %v843, %v841
        %v972 = vpack.c.b16 %v844, %v842
        %1101 = vmatprep.subr.bf16.mxu0 %v846
        %1102 = vmatpush1.bf16.msra.mxu0 %v845
        %1103 = vmatprep.subr.bf16.mxu0 %v848
        %1104 = vmatpush1.bf16.msra.mxu0 %v847
        %1105 = vmatprep.subr.bf16.mxu0 %v850
        %1106 = vmatpush1.bf16.msra.mxu0 %v849
        %1107 = vmatprep.subr.bf16.mxu0 %v852
        %1108 = vmatpush1.bf16.msra.mxu0 %v851
        %1109 = vmatprep.subr.bf16.mxu0 %v854
        %1110 = vmatpush1.bf16.msra.mxu0 %v853
        %1111 = vmatprep.subr.bf16.mxu0 %v856
        %1112 = vmatpush1.bf16.msra.mxu0 %v855
        %1113 = vmatprep.subr.bf16.mxu0 %v858
        %1114 = vmatpush1.bf16.msra.mxu0 %v857
        %1115 = vmatprep.subr.bf16.mxu0 %v860
        %1116 = vmatpush1.bf16.msra.mxu0 %v859
        %1117 = vmatprep.subr.bf16.mxu0 %v862
        %1118 = vmatpush1.bf16.msra.mxu0 %v861
        %1119 = vmatprep.subr.bf16.mxu0 %v864
        %1120 = vmatpush1.bf16.msra.mxu0 %v863
        %1121 = vmatprep.subr.bf16.mxu0 %v866
        %1122 = vmatpush1.bf16.msra.mxu0 %v865
        %1123 = vmatprep.subr.bf16.mxu0 %v868
        %1124 = vmatpush1.bf16.msra.mxu0 %v867
        %1125 = vmatprep.subr.bf16.mxu0 %v870
        %1126 = vmatpush1.bf16.msra.mxu0 %v869
        %1127 = vmatprep.subr.bf16.mxu0 %v872
        %1128 = vmatpush1.bf16.msra.mxu0 %v871
        %1129 = vmatprep.subr.bf16.mxu0 %v874
        %1130 = vmatpush1.bf16.msra.mxu0 %v873
        %1131 = vmatprep.subr.bf16.mxu0 %v876
        %1132 = vmatpush1.bf16.msra.mxu0 %v875
        %1133 = vmatprep.mubr.bf16.mxu0 %v446
        %1134 = vmatmul.mubr.bf16.gmra.mrb[0].mxu0 %v445
        %v1135 = vpop.f32.mrb[0].mxu0
        %v1136 = vadd.f32 0.0, %v1135
        %v1137 = vpop.f32.mrb[0].mxu0
        %v1138 = vadd.f32 0.0, %v1137
        %v1139 = vpop.f32.mrb[0].mxu0
        %v1140 = vadd.f32 0.0, %v1139
        %v1141 = vpop.f32.mrb[0].mxu0
        %v1142 = vadd.f32 0.0, %v1141
        %1143 = vdwg.mxu0
        %1144 = vmatprep.subr.bf16.mxu0 %v878
        %1145 = vmatpush1.bf16.msra.mxu0 %v877
        %1146 = vmatprep.subr.bf16.mxu0 %v880
        %1147 = vmatpush1.bf16.msra.mxu0 %v879
        %1148 = vmatprep.subr.bf16.mxu0 %v882
        %1149 = vmatpush1.bf16.msra.mxu0 %v881
        %1150 = vmatprep.subr.bf16.mxu0 %v884
        %1151 = vmatpush1.bf16.msra.mxu0 %v883
        %1152 = vmatprep.subr.bf16.mxu0 %v886
        %1153 = vmatpush1.bf16.msra.mxu0 %v885
        %1154 = vmatprep.subr.bf16.mxu0 %v888
        %1155 = vmatpush1.bf16.msra.mxu0 %v887
        %1156 = vmatprep.subr.bf16.mxu0 %v890
        %1157 = vmatpush1.bf16.msra.mxu0 %v889
        %1158 = vmatprep.subr.bf16.mxu0 %v892
        %1159 = vmatpush1.bf16.msra.mxu0 %v891
        %1160 = vmatprep.subr.bf16.mxu0 %v894
        %1161 = vmatpush1.bf16.msra.mxu0 %v893
        %1162 = vmatprep.subr.bf16.mxu0 %v896
        %1163 = vmatpush1.bf16.msra.mxu0 %v895
        %1164 = vmatprep.subr.bf16.mxu0 %v898
        %1165 = vmatpush1.bf16.msra.mxu0 %v897
        %1166 = vmatprep.subr.bf16.mxu0 %v900
        %1167 = vmatpush1.bf16.msra.mxu0 %v899
        %1168 = vmatprep.subr.bf16.mxu0 %v902
        %1169 = vmatpush1.bf16.msra.mxu0 %v901
        %1170 = vmatprep.subr.bf16.mxu0 %v904
        %1171 = vmatpush1.bf16.msra.mxu0 %v903
        %1172 = vmatprep.subr.bf16.mxu0 %v906
        %1173 = vmatpush1.bf16.msra.mxu0 %v905
        %1174 = vmatprep.subr.bf16.mxu0 %v908
        %1175 = vmatpush1.bf16.msra.mxu0 %v907
        %1176 = vmatprep.mubr.bf16.mxu0 %v448
        %1177 = vmatmul.mubr.bf16.gmra.mrb[0].mxu0 %v447
        %v1178 = vpop.f32.mrb[0].mxu0
        %v1179 = vadd.f32 %v1136, %v1178
        %v1180 = vpop.f32.mrb[0].mxu0
        %v1181 = vadd.f32 %v1138, %v1180
        %v1182 = vpop.f32.mrb[0].mxu0
        %v1183 = vadd.f32 %v1140, %v1182
        %v1184 = vpop.f32.mrb[0].mxu0
        %v1185 = vadd.f32 %v1142, %v1184
        %1186 = vdwg.mxu0
        %1187 = vmatprep.subr.bf16.mxu0 %v910
        %1188 = vmatpush1.bf16.msra.mxu0 %v909
        %1189 = vmatprep.subr.bf16.mxu0 %v912
        %1190 = vmatpush1.bf16.msra.mxu0 %v911
        %1191 = vmatprep.subr.bf16.mxu0 %v914
        %1192 = vmatpush1.bf16.msra.mxu0 %v913
        %1193 = vmatprep.subr.bf16.mxu0 %v916
        %1194 = vmatpush1.bf16.msra.mxu0 %v915
        %1195 = vmatprep.subr.bf16.mxu0 %v918
        %1196 = vmatpush1.bf16.msra.mxu0 %v917
        %1197 = vmatprep.subr.bf16.mxu0 %v920
        %1198 = vmatpush1.bf16.msra.mxu0 %v919
        %1199 = vmatprep.subr.bf16.mxu0 %v922
        %1200 = vmatpush1.bf16.msra.mxu0 %v921
        %1201 = vmatprep.subr.bf16.mxu0 %v924
        %1202 = vmatpush1.bf16.msra.mxu0 %v923
        %1203 = vmatprep.subr.bf16.mxu0 %v926
        %1204 = vmatpush1.bf16.msra.mxu0 %v925
        %1205 = vmatprep.subr.bf16.mxu0 %v928
        %1206 = vmatpush1.bf16.msra.mxu0 %v927
        %1207 = vmatprep.subr.bf16.mxu0 %v930
        %1208 = vmatpush1.bf16.msra.mxu0 %v929
        %1209 = vmatprep.subr.bf16.mxu0 %v932
        %1210 = vmatpush1.bf16.msra.mxu0 %v931
        %1211 = vmatprep.subr.bf16.mxu0 %v934
        %1212 = vmatpush1.bf16.msra.mxu0 %v933
        %1213 = vmatprep.subr.bf16.mxu0 %v936
        %1214 = vmatpush1.bf16.msra.mxu0 %v935
        %1215 = vmatprep.subr.bf16.mxu0 %v938
        %1216 = vmatpush1.bf16.msra.mxu0 %v937
        %1217 = vmatprep.subr.bf16.mxu0 %v940
        %1218 = vmatpush1.bf16.msra.mxu0 %v939
        %1219 = vmatprep.mubr.bf16.mxu0 %v450
        %1220 = vmatmul.mubr.bf16.gmra.mrb[0].mxu0 %v449
        %v1221 = vpop.f32.mrb[0].mxu0
        %v1222 = vadd.f32 %v1179, %v1221
        %v1223 = vpop.f32.mrb[0].mxu0
        %v1224 = vadd.f32 %v1181, %v1223
        %v1225 = vpop.f32.mrb[0].mxu0
        %v1226 = vadd.f32 %v1183, %v1225
        %v1227 = vpop.f32.mrb[0].mxu0
        %v1228 = vadd.f32 %v1185, %v1227
        %1229 = vdwg.mxu0
        %1230 = vmatprep.subr.bf16.mxu0 %v942
        %1231 = vmatpush1.bf16.msra.mxu0 %v941
        %1232 = vmatprep.subr.bf16.mxu0 %v944
        %1233 = vmatpush1.bf16.msra.mxu0 %v943
        %1234 = vmatprep.subr.bf16.mxu0 %v946
        %1235 = vmatpush1.bf16.msra.mxu0 %v945
        %1236 = vmatprep.subr.bf16.mxu0 %v948
        %1237 = vmatpush1.bf16.msra.mxu0 %v947
        %1238 = vmatprep.subr.bf16.mxu0 %v950
        %1239 = vmatpush1.bf16.msra.mxu0 %v949
        %1240 = vmatprep.subr.bf16.mxu0 %v952
        %1241 = vmatpush1.bf16.msra.mxu0 %v951
        %1242 = vmatprep.subr.bf16.mxu0 %v954
        %1243 = vmatpush1.bf16.msra.mxu0 %v953
        %1244 = vmatprep.subr.bf16.mxu0 %v956
        %1245 = vmatpush1.bf16.msra.mxu0 %v955
        %1246 = vmatprep.subr.bf16.mxu0 %v958
        %1247 = vmatpush1.bf16.msra.mxu0 %v957
        %1248 = vmatprep.subr.bf16.mxu0 %v960
        %1249 = vmatpush1.bf16.msra.mxu0 %v959
        %1250 = vmatprep.subr.bf16.mxu0 %v962
        %1251 = vmatpush1.bf16.msra.mxu0 %v961
        %1252 = vmatprep.subr.bf16.mxu0 %v964
        %1253 = vmatpush1.bf16.msra.mxu0 %v963
        %1254 = vmatprep.subr.bf16.mxu0 %v966
        %1255 = vmatpush1.bf16.msra.mxu0 %v965
        %1256 = vmatprep.subr.bf16.mxu0 %v968
        %1257 = vmatpush1.bf16.msra.mxu0 %v967
        %1258 = vmatprep.subr.bf16.mxu0 %v970
        %1259 = vmatpush1.bf16.msra.mxu0 %v969
        %1260 = vmatprep.subr.bf16.mxu0 %v972
        %1261 = vmatpush1.bf16.msra.mxu0 %v971
        %1262 = vmatprep.mubr.bf16.mxu0 %v452
        %1263 = vmatmul.mubr.bf16.gmra.mrb[0].mxu0 %v451
        %v1264 = vpop.f32.mrb[0].mxu0
        %v1265 = vadd.f32 %v1222, %v1264
        %v1266 = vpop.f32.mrb[0].mxu0
        %v1267 = vadd.f32 %v1224, %v1266
        %v1268 = vpop.f32.mrb[0].mxu0
        %v1269 = vadd.f32 %v1226, %v1268
        %v1270 = vpop.f32.mrb[0].mxu0
        %v1271 = vadd.f32 %v1228, %v1270
        %1272 = vdwg.mxu0
        %v1273 = vadd.f32 %v281, %v1265
        %v1274 = vadd.f32 %v282, %v1267
        %v1275 = vadd.f32 %v283, %v1269
        %v1276 = vadd.f32 %v284, %v1271
        %1277 = vst [vmem:[#allocation2] sm:$0xff] %v1273
        %1278 = vst [vmem:[#allocation2 + $0x8] sm:$0xff] %v1274
        %1279 = vst [vmem:[#allocation2 + $0x10] sm:$0xff] %v1275
        %1280 = vst [vmem:[#allocation2 + $0x18] sm:$0xff] %v1276
        %p1281 = scmp.eq.s32.totalorder %s21, 1
        // Predicated region
        $region60: #{discriminator_forward.7} parent=50 // pred_check
          %p1282 = pneg %p1281
        $region61: #{discriminator_forward.7} parent=50 // pred_check_branch
          %1284 = sbr.rel (%p1282) target = $region63
        $region62: #{discriminator_forward.7} parent=50 // pred_region
          %v1285 = vld [vmem:[#allocation2] sm:$0xff]
          %v1286 = vld [vmem:[#allocation2 + $0x8] sm:$0xff]
          %v1287 = vld [vmem:[#allocation2 + $0x10] sm:$0xff]
          %v1288 = vld [vmem:[#allocation2 + $0x18] sm:$0xff]
          %v1289 = vld [vmem:[%s2] sm:$0x3]
          %v1291 = vlaneseq
          %v1292 = vshrl.u32 %v1291, 7
          %v1293 = vsub.s32 0, %v1292
          %v1294 = vrot.slane %v1289, %v1293
          %v1295 = vlaneseq
          %v1296 = vshrl.u32 %v1295, 7
          %v1297 = vsub.s32 1, %v1296
          %v1298 = vrot.slane %v1289, %v1297
          %v1301 = vadd.f32 %v1285, %v1294
          %v1302 = vadd.f32 %v1286, %v1298
          %v1303 = vadd.f32 %v1287, %v1294
          %v1304 = vadd.f32 %v1288, %v1298
          %v1305 = vadd.f32 %v1301, %v1303
          %v1306 = vrot.slane %v1305, 4
          %v1307 = vadd.f32 %v1305, %v1306
          %v1308 = vrot.slane %v1307, 2
          %v1309 = vadd.f32 %v1307, %v1308
          %v1310 = vrot.slane %v1309, 1
          %v1311 = vadd.f32 %v1309, %v1310
          %v1312 = vadd.f32 %v1302, %v1304
          %v1313 = vrot.slane %v1312, 4
          %v1314 = vadd.f32 %v1312, %v1313
          %v1315 = vrot.slane %v1314, 2
          %v1316 = vadd.f32 %v1314, %v1315
          %v1317 = vrot.slane %v1316, 1
          %v1318 = vadd.f32 %v1316, %v1317
          %v1319 = vrcp.pop 16.0
          %v1320 = vmul.f32 %v1311, %v1319
          %v1321 = vmul.f32 %v1318, %v1319
          %v1322 = vsub.f32 %v1301, %v1320
          %v1323 = vsub.f32 %v1302, %v1321
          %v1324 = vsub.f32 %v1303, %v1320
          %v1325 = vsub.f32 %v1304, %v1321
          %v1326 = vmul.f32 %v1322, %v1322
          %v1327 = vmul.f32 %v1323, %v1323
          %v1328 = vmul.f32 %v1324, %v1324
          %v1329 = vmul.f32 %v1325, %v1325
          %v1330 = vadd.f32 %v1326, %v1328
          %v1331 = vrot.slane %v1330, 4
          %v1332 = vadd.f32 %v1330, %v1331
          %v1333 = vrot.slane %v1332, 2
          %v1334 = vadd.f32 %v1332, %v1333
          %v1335 = vrot.slane %v1334, 1
          %v1336 = vadd.f32 %v1334, %v1335
          %v1337 = vadd.f32 %v1327, %v1329
          %v1338 = vrot.slane %v1337, 4
          %v1339 = vadd.f32 %v1337, %v1338
          %v1340 = vrot.slane %v1339, 2
          %v1341 = vadd.f32 %v1339, %v1340
          %v1342 = vrot.slane %v1341, 1
          %v1343 = vadd.f32 %v1341, %v1342
          %v1344 = vmul.f32 %v1336, %v1319
          %v1345 = vmul.f32 %v1343, %v1319
          %v1346 = vadd.f32 %v1344, 1e-05
          %v1347 = vadd.f32 %v1345, 1e-05
          %v1348 = vrsqrt.pop %v1346
          %v1349 = vrsqrt.pop %v1347
          %v1350 = vmul.f32 %v1322, %v1348
          %v1351 = vmul.f32 %v1323, %v1349
          %v1352 = vmul.f32 %v1324, %v1348
          %v1353 = vmul.f32 %v1325, %v1349
          %v1354 = vmul.f32 %v1350, 0.2
          %v1355 = vmul.f32 %v1351, 0.2
          %v1356 = vmul.f32 %v1352, 0.2
          %v1357 = vmul.f32 %v1353, 0.2
          %v1358 = vmax.f32 %v1350, %v1354
          %v1359 = vmax.f32 %v1351, %v1355
          %v1360 = vmax.f32 %v1352, %v1356
          %v1361 = vmax.f32 %v1353, %v1357
          %v1362 = vpack.c.bf16 %v1360, %v1358
          %v1363 = vpack.c.bf16 %v1361, %v1359
          %v1366 = vunpack.c.l.b16 %v1362
          %v1367 = vunpack.c.l.b16 %v1363
          %v1368 = vunpack.c.h.b16 %v1362
          %v1369 = vunpack.c.h.b16 %v1363
          %v1370 = vpack.c.b16 %v1367, %v1366
          %v1371 = vpack.c.b16 %v1369, %v1368
          %1374 = vst [vmem:[%s271] sm:$0xff] %v1370
          %1375 = vst [vmem:[%s271 + $0x8] sm:$0xff] %v1371
        $region63: #{discriminator_forward.7} parent=50 // pred_fallthru
          _
        %s1376 = smul.u32 2, %s20
        %p1377 = scmp.lt.s32.totalorder %s19, 1
        %s1378 = scalar_select %p1377, %s19, 1
        %p1379 = scmp.lt.s32.totalorder %s1376, 1
        %s1380 = scalar_select %p1379, %s1376, 1
        %s1381 = smul.addr %s1380, 2
        %s1382 = smul.addr %s1378, 4
        %s1383 = sadd.s32 %s1381, %s1382
        %s1384 = smul.addr %s1383, 4
        %s1385 = scalar_lea.vmem %s3, %s1384
        // Predicated region
        $region64: #{discriminator_forward.7} parent=50 // pred_check
          %p1386 = pneg %p130
        $region65: #{discriminator_forward.7} parent=50 // pred_check_branch
          %1388 = sbr.rel (%p1386) target = $region67
        $region66: #{discriminator_forward.7} parent=50 // pred_region
          %s1389 = smul.u32 2, %s20
        $region67: #{discriminator_forward.7} parent=50 // pred_fallthru
          _
      $region51: #{discriminator_forward.7} parent=5 // pred_fallthru
        _
      %p1390 = scmp.le.s32.totalorder 2, %s9
      // Predicated region
      $region68: #{discriminator_forward.7} parent=5 // pred_check
        %p1391 = pneg %p1390
      $region69: #{discriminator_forward.7} parent=5 // pred_check_branch
        %1393 = sbr.rel (%p1391) target = $region71
      $region70: #{discriminator_forward.7} parent=5 // pred_region
        %s1394 = ssub.s32 %s9, 2
        // Predicated region
        $region72: #{discriminator_forward.7} parent=70 // pred_check
          %p1395 = pneg %p136
        $region73: #{discriminator_forward.7} parent=70 // pred_check_branch
          %1397 = sbr.rel (%p1395) target = $region75
        $region74: #{discriminator_forward.7} parent=70 // pred_region
          %s1398 = smul.u32 2, %s23
          %p1399 = scmp.lt.s32.totalorder %s22, 1
          %s1400 = scalar_select %p1399, %s22, 1
          %p1401 = scmp.lt.s32.totalorder %s1398, 1
          %s1402 = scalar_select %p1401, %s1398, 1
          %s1403 = smul.addr %s1402, 2
          %s1404 = smul.addr %s1400, 4
          %s1405 = sadd.s32 %s1403, %s1404
          %s1406 = smul.addr %s1405, 4
          %s1407 = scalar_lea.vmem %s3, %s1406
        $region75: #{discriminator_forward.7} parent=70 // pred_fallthru
          _
      $region71: #{discriminator_forward.7} parent=5 // pred_fallthru
        _
    $region6: #{discriminator_forward.7} parent=1 // loop_footer
      %s13 = sadd.s32 1, %s9
    $region7: #{discriminator_forward.7} parent=1 // loop_footer_branch
      %8 = sbr.rel target = $region3
    $region8: #{discriminator_forward.7} parent=1 // loop_exit
      _

// kernel: discriminator_forward.8
$region0: #{discriminator_forward.8}
  #allocation0 [shape = 'u32[]', space=smem, size = 0x4, offset = 0x4, fixed_abs, tag = 'smem constant byte address 0x4 - core index']
  #allocation1 [shape = 'u32[144,128]{1,0:T(1,128)}', space=vmem, size = 0x12000, scoped, tag = 'internal scratch']
  #allocation2 [shape = 'f32[9,512]{1,0:T(8,128)}', space=vmem, size = 0x8000, scoped, tag = 'scratch operand']
  %s0 = inlined_call_operand.vmem [shape: bf16[2,9,4096], index: 0, kind: input, shape index: {}]
  %s1 = inlined_call_operand.vmem [shape: bf16[4096,512], index: 1, kind: input, shape index: {}]
  %s2 = inlined_call_operand.vmem [shape: f32[1,512], index: 2, kind: input, shape index: {}]
  %s3 = inlined_call_operand.vmem [shape: bf16[2,9,512], index: 3, kind: output, shape index: {}]
  %s4 = sld [smem:[#allocation0]]
  $region76: #{discriminator_forward.8} parent=0
    _
  %s6 = ssub.s32 1, %s4
  %s7 = scalar_select 0, %s6, %s4
  $region1: #{discriminator_forward.8} parent=0
    #allocation3 [shape = 'u8[65536]{0}', space=vmem, size = 0x10000, scoped, tag = 'input window, operand 0']
    loop: start=0, step=1, limit=10
    $region2: #{discriminator_forward.8} parent=1 // loop_pre_header
      _
    $region3: #{discriminator_forward.8} parent=1 // loop_header
      %s9 = sphi 0, %s13
      %p10 = scmp.ge.s32.totalorder %s9, 10
      %s16 = sphi 0, %s35
      %s17 = sphi 0, %s31
      %s18 = sphi 0, %s27
      %s19 = sphi 0, %s16
      %s20 = sphi 0, %s17
      %s21 = sphi 0, %s18
      %s22 = sphi 0, %s19
      %s23 = sphi 0, %s20
      %s24 = sphi 0, %s21
      %s42 = sphi 0, %s44
      %s45 = sphi 0, %s42
      %s46 = sphi 0, %s45
      %s62 = sphi 0, %s46
      %s68 = sphi 0, %s70
      %s71 = sphi 0, %s68
      %s72 = sphi 0, %s71
      %s88 = sphi 0, %s72
      %s92 = sphi 0, %s92
      %s94 = sphi 0, %s92
      %s95 = sphi 0, %s94
      %s109 = sphi 0, %s95
      %s117 = sphi 0, %s119
      %s120 = sphi 0, %s117
      %s121 = sphi 0, %s120
      %s137 = sphi 0, %s121
    $region4: #{discriminator_forward.8} parent=1 // loop_header_branch
      %12 = sbr.rel (%p10) target = $region8
    $region5: #{discriminator_forward.8} parent=1 // loop_body
      %s14 = ssub.s32 %s9, 1
      %s15 = ssub.s32 %s9, 2
      %s25 = sadd.s32 1, %s18
      %p26 = scmp.ge.s32.totalorder %s25, 4
      %s27 = scalar_select %p26, 0, %s25
      %s28 = sadd.s32 1, %s17
      %s29 = scalar_select %p26, %s28, %s17
      %p30 = scmp.ge.s32.totalorder %s29, 1
      %s31 = scalar_select %p30, 0, %s29
      %s32 = sadd.s32 1, %s16
      %s33 = scalar_select %p30, %s32, %s16
      %p34 = scmp.ge.s32.totalorder %s33, 2
      %s35 = scalar_select %p34, 0, %s33
      %s36 = ssub.s32 %s16, %s35
      %s37 = ssub.s32 %s17, %s31
      %s38 = sor.u32 %s36, %s37
      %s39 = ssub.s32 %s18, %s27
      %s40 = sor.u32 %s38, %s39
      %p41 = scmp.eq.s32.totalorder %s40, 0
      %s43 = sadd.s32 %s42, 1
      %s44 = scalar_select %p41, %s42, %s43
      %p47 = pneg %p41
      %p48 = scmp.eq.s32.totalorder %s9, 7
      %p49 = por %p47, %p48
      %p50 = scmp.ne.s32.totalorder %s42, %s45
      %p51 = scmp.eq.s32.totalorder %s9, 0
      %p52 = por %p50, %p51
      %p53 = scmp.ne.s32.totalorder %s42, %s45
      %p54 = scmp.eq.s32.totalorder %s14, 7
      %p55 = por %p53, %p54
      %p56 = scmp.ne.s32.totalorder %s45, %s46
      %p57 = scmp.eq.s32.totalorder %s14, 0
      %p58 = por %p56, %p57
      %p59 = scmp.ne.s32.totalorder %s45, %s46
      %p60 = scmp.eq.s32.totalorder %s15, 7
      %p61 = por %p59, %p60
      %p63 = scmp.ne.s32.totalorder %s46, %s62
      %p64 = scmp.eq.s32.totalorder %s15, 0
      %p65 = por %p63, %p64
      %s66 = ssub.s32 %s18, %s27
      %p67 = scmp.eq.s32.totalorder %s66, 0
      %s69 = sadd.s32 %s68, 1
      %s70 = scalar_select %p67, %s68, %s69
      %p73 = pneg %p67
      %p74 = scmp.eq.s32.totalorder %s9, 7
      %p75 = por %p73, %p74
      %p76 = scmp.ne.s32.totalorder %s68, %s71
      %p77 = scmp.eq.s32.totalorder %s9, 0
      %p78 = por %p76, %p77
      %p79 = scmp.ne.s32.totalorder %s68, %s71
      %p80 = scmp.eq.s32.totalorder %s14, 7
      %p81 = por %p79, %p80
      %p82 = scmp.ne.s32.totalorder %s71, %s72
      %p83 = scmp.eq.s32.totalorder %s14, 0
      %p84 = por %p82, %p83
      %p85 = scmp.ne.s32.totalorder %s71, %s72
      %p86 = scmp.eq.s32.totalorder %s15, 7
      %p87 = por %p85, %p86
      %p89 = scmp.ne.s32.totalorder %s72, %s88
      %p90 = scmp.eq.s32.totalorder %s15, 0
      %p91 = por %p89, %p90
      %s93 = sadd.s32 %s92, 1
      %p96 = scmp.eq.s32.totalorder %s9, 7
      %p97 = scmp.ne.s32.totalorder %s92, %s94
      %p98 = scmp.eq.s32.totalorder %s9, 0
      %p99 = por %p97, %p98
      %p100 = scmp.ne.s32.totalorder %s92, %s94
      %p101 = scmp.eq.s32.totalorder %s14, 7
      %p102 = por %p100, %p101
      %p103 = scmp.ne.s32.totalorder %s94, %s95
      %p104 = scmp.eq.s32.totalorder %s14, 0
      %p105 = por %p103, %p104
      %p106 = scmp.ne.s32.totalorder %s94, %s95
      %p107 = scmp.eq.s32.totalorder %s15, 7
      %p108 = por %p106, %p107
      %p110 = scmp.ne.s32.totalorder %s95, %s109
      %p111 = scmp.eq.s32.totalorder %s15, 0
      %p112 = por %p110, %p111
      %s113 = ssub.s32 %s16, %s35
      %s114 = ssub.s32 %s17, %s31
      %s115 = sor.u32 %s113, %s114
      %p116 = scmp.eq.s32.totalorder %s115, 0
      %s118 = sadd.s32 %s117, 1
      %s119 = scalar_select %p116, %s117, %s118
      %p122 = pneg %p116
      %p123 = scmp.eq.s32.totalorder %s9, 7
      %p124 = por %p122, %p123
      %p125 = scmp.ne.s32.totalorder %s117, %s120
      %p126 = scmp.eq.s32.totalorder %s9, 0
      %p127 = por %p125, %p126
      %p128 = scmp.ne.s32.totalorder %s117, %s120
      %p129 = scmp.eq.s32.totalorder %s14, 7
      %p130 = por %p128, %p129
      %p131 = scmp.ne.s32.totalorder %s120, %s121
      %p132 = scmp.eq.s32.totalorder %s14, 0
      %p133 = por %p131, %p132
      %p134 = scmp.ne.s32.totalorder %s120, %s121
      %p135 = scmp.eq.s32.totalorder %s15, 7
      %p136 = por %p134, %p135
      %p138 = scmp.ne.s32.totalorder %s121, %s137
      %p139 = scmp.eq.s32.totalorder %s15, 0
      %p140 = por %p138, %p139
      %p141 = scmp.le.s32.totalorder 1, %s9
      %p142 = scmp.lt.s32.totalorder %s9, 9
      %p143 = pnand %p141, %p142
      %p144 = pneg %p143
      // Predicated region
      $region9: #{discriminator_forward.8} parent=5 // pred_check
        _
      $region10: #{discriminator_forward.8} parent=5 // pred_check_branch
        %146 = sbr.rel (%p143) target = $region12
      $region11: #{discriminator_forward.8} parent=5 // pred_region
        %s147 = ssub.s32 %s9, 1
        // Predicated region
        $region13: #{discriminator_forward.8} parent=11 // pred_check
          %p148 = pneg %p105
        $region14: #{discriminator_forward.8} parent=11 // pred_check_branch
          %150 = sbr.rel (%p148) target = $region16
        $region15: #{discriminator_forward.8} parent=11 // pred_region
          _
        $region16: #{discriminator_forward.8} parent=11 // pred_fallthru
          _
      $region12: #{discriminator_forward.8} parent=5 // pred_fallthru
        _
      %p151 = scmp.lt.s32.totalorder %s9, 8
      // Predicated region
      $region17: #{discriminator_forward.8} parent=5 // pred_check
        %p152 = pneg %p151
      $region18: #{discriminator_forward.8} parent=5 // pred_check_branch
        %154 = sbr.rel (%p152) target = $region20
      $region19: #{discriminator_forward.8} parent=5 // pred_region
        // Predicated region
        $region21: #{discriminator_forward.8} parent=19 // pred_check
          %p155 = pneg %p52
        $region22: #{discriminator_forward.8} parent=19 // pred_check_branch
          %157 = sbr.rel (%p155) target = $region24
        $region23: #{discriminator_forward.8} parent=19 // pred_region
          %s158 = sand.u32 %s42, 1
          %s159 = sand.u32 %s42, 1
          %s160 = smul.addr %s159, 64
          %s161 = scalar_lea.vmem [#allocation3], %s160
          %s162 = smul.u32 2, %s17
          %s163 = smul.u32 8, %s18
          %s164 = smul.addr %s162, 32
          %s165 = sadd.s32 %s163, %s164
          %s166 = smul.addr %s16, 64
          %s167 = sadd.s32 %s165, %s166
          %s168 = smul.addr %s167, 4
          %s169 = scalar_lea.vmem %s0, %s168
          // Predicated region
          $region25: #{discriminator_forward.8} parent=23 // pred_check
            _
          $region26: #{discriminator_forward.8} parent=23 // pred_check_branch
            %171 = sbr.rel (0) target = $region28
          $region27: #{discriminator_forward.8} parent=23 // pred_region
            // Predicated region
            $region29: #{discriminator_forward.8} parent=27 // pred_check
              _
            $region30: #{discriminator_forward.8} parent=27 // pred_check_branch
              %173 = sbr.rel (0) target = $region32
            $region31: #{discriminator_forward.8} parent=27 // pred_region
              loop: start=0, step=1, limit=1
              $region33: #{discriminator_forward.8} parent=31 // loop_pre_header
                _
              $region34: #{discriminator_forward.8} parent=31 // loop_header
                %s175 = sphi 0, %s179
                %p176 = scmp.ge.s32.totalorder %s175, 1
                %s180 = sphi %s169, %s169
                %s181 = sphi %s161, %s161
              $region35: #{discriminator_forward.8} parent=31 // loop_header_branch
                %178 = sbr.rel (%p176) target = $region39
              $region36: #{discriminator_forward.8} parent=31 // loop_body
                %v182 = vld [vmem:[%s180] sm:$0xff]
                %183 = vst [vmem:[%s181] sm:$0xff] %v182
                %v184 = vld [vmem:[%s180 + $0x8] sm:$0xff]
                %185 = vst [vmem:[%s181 + $0x8] sm:$0xff] %v184
                %v186 = vld [vmem:[%s180 + $0x10] sm:$0xff]
                %187 = vst [vmem:[%s181 + $0x10] sm:$0xff] %v186
                %v188 = vld [vmem:[%s180 + $0x18] sm:$0xff]
                %189 = vst [vmem:[%s181 + $0x18] sm:$0xff] %v188
                %v190 = vld [vmem:[%s180 + $0x80] sm:$0xff]
                %191 = vst [vmem:[%s181 + $0x20] sm:$0xff] %v190
                %v192 = vld [vmem:[%s180 + $0x88] sm:$0xff]
                %193 = vst [vmem:[%s181 + $0x28] sm:$0xff] %v192
                %v194 = vld [vmem:[%s180 + $0x90] sm:$0xff]
                %195 = vst [vmem:[%s181 + $0x30] sm:$0xff] %v194
                %v196 = vld [vmem:[%s180 + $0x98] sm:$0xff]
                %197 = vst [vmem:[%s181 + $0x38] sm:$0xff] %v196
              $region37: #{discriminator_forward.8} parent=31 // loop_footer
                %s179 = sadd.s32 1, %s175
              $region38: #{discriminator_forward.8} parent=31 // loop_footer_branch
                %174 = sbr.rel target = $region34
              $region39: #{discriminator_forward.8} parent=31 // loop_exit
                _
            $region32: #{discriminator_forward.8} parent=27 // pred_fallthru
              _
            // Predicated region
            $region40: #{discriminator_forward.8} parent=27 // pred_check
              _
            $region41: #{discriminator_forward.8} parent=27 // pred_check_branch
              %199 = sbr.rel target = $region43
            $region42: #{discriminator_forward.8} parent=27 // pred_region
              _
            $region43: #{discriminator_forward.8} parent=27 // pred_fallthru
              _
          $region28: #{discriminator_forward.8} parent=23 // pred_fallthru
            _
          %200 = vnop
        $region24: #{discriminator_forward.8} parent=19 // pred_fallthru
          _
        // Predicated region
        $region44: #{discriminator_forward.8} parent=19 // pred_check
          %p201 = pneg %p78
        $region45: #{discriminator_forward.8} parent=19 // pred_check_branch
          %203 = sbr.rel (%p201) target = $region47
        $region46: #{discriminator_forward.8} parent=19 // pred_region
          %s204 = smul.u32 128, %s18
          %p205 = scmp.lt.s32.totalorder %s204, 511
          %s206 = scalar_select %p205, %s204, 511
          %s207 = smul.addr %s206, 4
          %s208 = smul.addr %s207, 4
          %s209 = scalar_lea.vmem %s1, %s208
          %s210 = smul.u32 128, %s18
        $region47: #{discriminator_forward.8} parent=19 // pred_fallthru
          _
      $region20: #{discriminator_forward.8} parent=5 // pred_fallthru
        _
      %p211 = scmp.le.s32.totalorder 1, %s9
      %p212 = scmp.lt.s32.totalorder %s9, 9
      %p213 = pnand %p211, %p212
      %p214 = pneg %p213
      // Predicated region
      $region48: #{discriminator_forward.8} parent=5 // pred_check
        _
      $region49: #{discriminator_forward.8} parent=5 // pred_check_branch
        %216 = sbr.rel (%p213) target = $region51
      $region50: #{discriminator_forward.8} parent=5 // pred_region
        %s217 = ssub.s32 %s9, 1
        %s218 = sand.u32 %s45, 1
        %s219 = sand.u32 %s45, 1
        %s220 = smul.addr %s219, 64
        %s221 = scalar_lea.vmem [#allocation3], %s220
        // Predicated region
        $region52: #{discriminator_forward.8} parent=50 // pred_check
          %p222 = pneg %p58
        $region53: #{discriminator_forward.8} parent=50 // pred_check_branch
          %224 = sbr.rel (%p222) target = $region55
        $region54: #{discriminator_forward.8} parent=50 // pred_region
          _
        $region55: #{discriminator_forward.8} parent=50 // pred_fallthru
          _
        %s225 = sand.u32 %s45, 1
        %s226 = sand.u32 %s45, 1
        %s227 = smul.addr %s226, 64
        %s228 = scalar_lea.vmem [#allocation3], %s227
        %p229 = pneg %p58
        %p230 = pneg %p55
        %s231 = smul.u32 128, %s21
        %p232 = scmp.lt.s32.totalorder %s231, 511
        %s233 = scalar_select %p232, %s231, 511
        %s234 = smul.addr %s233, 4
        %s235 = smul.addr %s234, 4
        %s236 = scalar_lea.vmem %s1, %s235
        %p237 = pneg %p84
        %p238 = pneg %p81
        %p239 = pneg %p105
        %p240 = pneg %p102
        %p241 = pneg %p133
        %p242 = pneg %p130
        %s243 = smul.u32 2, %s20
        %p244 = scmp.lt.s32.totalorder %s19, 1
        %s245 = scalar_select %p244, %s19, 1
        %p246 = scmp.lt.s32.totalorder %s243, 1
        %s247 = scalar_select %p246, %s243, 1
        %s248 = smul.addr %s247, 4
        %s249 = smul.addr %s245, 8
        %s250 = sadd.s32 %s248, %s249
        %s251 = smul.addr %s250, 4
        %s252 = scalar_lea.vmem %s3, %s251
        %s253 = smul.u32 2, %s20
        %s254 = smul.u32 8, %s21
        %s255 = smul.u32 128, %s21
        %p256 = scmp.lt.s32.totalorder %s255, 511
        %s257 = scalar_select %p256, %s255, 511
        %s258 = smul.addr %s257, 4
        %s259 = smul.addr %s258, 4
        %s260 = scalar_lea.vmem %s1, %s259
        %s261 = smul.u32 128, %s21
        %s262 = smul.u32 2, %s20
        %p263 = scmp.lt.s32.totalorder %s19, 1
        %s264 = scalar_select %p263, %s19, 1
        %p265 = scmp.lt.s32.totalorder %s262, 1
        %s266 = scalar_select %p265, %s262, 1
        %s267 = smul.addr %s266, 4
        %s268 = smul.addr %s264, 8
        %s269 = sadd.s32 %s267, %s268
        %s270 = smul.addr %s269, 4
        %s271 = scalar_lea.vmem %s3, %s270
        %s272 = smul.u32 2, %s20
        %p273 = scmp.eq.s32.totalorder %s21, 0
        // Predicated region
        $region56: #{discriminator_forward.8} parent=50 // pred_check
          %p274 = pneg %p273
        $region57: #{discriminator_forward.8} parent=50 // pred_check_branch
          %276 = sbr.rel (%p274) target = $region59
        $region58: #{discriminator_forward.8} parent=50 // pred_region
          %277 = vst [vmem:[#allocation2] sm:$0xff] 0.0
          %278 = vst [vmem:[#allocation2 + $0x8] sm:$0xff] 0.0
          %279 = vst [vmem:[#allocation2 + $0x10] sm:$0xff] 0.0
          %280 = vst [vmem:[#allocation2 + $0x18] sm:$0xff] 0.0
          %281 = vst [vmem:[#allocation2 + $0x20] sm:$0x1] 0.0
          %282 = vst [vmem:[#allocation2 + $0x28] sm:$0x1] 0.0
          %283 = vst [vmem:[#allocation2 + $0x30] sm:$0x1] 0.0
          %284 = vst [vmem:[#allocation2 + $0x38] sm:$0x1] 0.0
        $region59: #{discriminator_forward.8} parent=50 // pred_fallthru
          _
        %v285 = vld [vmem:[#allocation2] sm:$0xff]
        %v286 = vld [vmem:[#allocation2 + $0x8] sm:$0xff]
        %v287 = vld [vmem:[#allocation2 + $0x10] sm:$0xff]
        %v288 = vld [vmem:[#allocation2 + $0x18] sm:$0xff]
        %v289 = vld [vmem:[#allocation2 + $0x20] sm:$0x1]
        %v290 = vld [vmem:[#allocation2 + $0x28] sm:$0x1]
        %v291 = vld [vmem:[#allocation2 + $0x30] sm:$0x1]
        %v292 = vld [vmem:[#allocation2 + $0x38] sm:$0x1]
        %v293 = vld [vmem:[%s221] sm:$0xff]
        %v294 = vld [vmem:[%s221 + $0x8] sm:$0xff]
        %v295 = vld [vmem:[%s221 + $0x10] sm:$0xff]
        %v296 = vld [vmem:[%s221 + $0x18] sm:$0xff]
        %v297 = vld [vmem:[%s221 + $0x20] sm:$0x11]
        %v298 = vld [vmem:[%s221 + $0x28] sm:$0x11]
        %v299 = vld [vmem:[%s221 + $0x30] sm:$0x11]
        %v300 = vld [vmem:[%s221 + $0x38] sm:$0x11]
        %v301 = vld [vmem:[%s260] sm:$0xff]
        %v302 = vld [vmem:[%s260 + $0x8] sm:$0xff]
        %v303 = vld [vmem:[%s260 + $0x10] sm:$0xff]
        %v304 = vld [vmem:[%s260 + $0x18] sm:$0xff]
        %v305 = vld [vmem:[%s260 + $0x20] sm:$0xff]
        %v306 = vld [vmem:[%s260 + $0x28] sm:$0xff]
        %v307 = vld [vmem:[%s260 + $0x30] sm:$0xff]
        %v308 = vld [vmem:[%s260 + $0x38] sm:$0xff]
        %v309 = vld [vmem:[%s260 + $0x40] sm:$0xff]
        %v310 = vld [vmem:[%s260 + $0x48] sm:$0xff]
        %v311 = vld [vmem:[%s260 + $0x50] sm:$0xff]
        %v312 = vld [vmem:[%s260 + $0x58] sm:$0xff]
        %v313 = vld [vmem:[%s260 + $0x60] sm:$0xff]
        %v314 = vld [vmem:[%s260 + $0x68] sm:$0xff]
        %v315 = vld [vmem:[%s260 + $0x70] sm:$0xff]
        %v316 = vld [vmem:[%s260 + $0x78] sm:$0xff]
        %v317 = vld [vmem:[%s260 + $0x80] sm:$0xff]
        %v318 = vld [vmem:[%s260 + $0x88] sm:$0xff]
        %v319 = vld [vmem:[%s260 + $0x90] sm:$0xff]
        %v320 = vld [vmem:[%s260 + $0x98] sm:$0xff]
        %v321 = vld [vmem:[%s260 + $0xa0] sm:$0xff]
        %v322 = vld [vmem:[%s260 + $0xa8] sm:$0xff]
        %v323 = vld [vmem:[%s260 + $0xb0] sm:$0xff]
        %v324 = vld [vmem:[%s260 + $0xb8] sm:$0xff]
        %v325 = vld [vmem:[%s260 + $0xc0] sm:$0xff]
        %v326 = vld [vmem:[%s260 + $0xc8] sm:$0xff]
        %v327 = vld [vmem:[%s260 + $0xd0] sm:$0xff]
        %v328 = vld [vmem:[%s260 + $0xd8] sm:$0xff]
        %v329 = vld [vmem:[%s260 + $0xe0] sm:$0xff]
        %v330 = vld [vmem:[%s260 + $0xe8] sm:$0xff]
        %v331 = vld [vmem:[%s260 + $0xf0] sm:$0xff]
        %v332 = vld [vmem:[%s260 + $0xf8] sm:$0xff]
        %v333 = vld [vmem:[%s260 + $0x100] sm:$0xff]
        %v334 = vld [vmem:[%s260 + $0x108] sm:$0xff]
        %v335 = vld [vmem:[%s260 + $0x110] sm:$0xff]
        %v336 = vld [vmem:[%s260 + $0x118] sm:$0xff]
        %v337 = vld [vmem:[%s260 + $0x120] sm:$0xff]
        %v338 = vld [vmem:[%s260 + $0x128] sm:$0xff]
        %v339 = vld [vmem:[%s260 + $0x130] sm:$0xff]
        %v340 = vld [vmem:[%s260 + $0x138] sm:$0xff]
        %v341 = vld [vmem:[%s260 + $0x140] sm:$0xff]
        %v342 = vld [vmem:[%s260 + $0x148] sm:$0xff]
        %v343 = vld [vmem:[%s260 + $0x150] sm:$0xff]
        %v344 = vld [vmem:[%s260 + $0x158] sm:$0xff]
        %v345 = vld [vmem:[%s260 + $0x160] sm:$0xff]
        %v346 = vld [vmem:[%s260 + $0x168] sm:$0xff]
        %v347 = vld [vmem:[%s260 + $0x170] sm:$0xff]
        %v348 = vld [vmem:[%s260 + $0x178] sm:$0xff]
        %v349 = vld [vmem:[%s260 + $0x180] sm:$0xff]
        %v350 = vld [vmem:[%s260 + $0x188] sm:$0xff]
        %v351 = vld [vmem:[%s260 + $0x190] sm:$0xff]
        %v352 = vld [vmem:[%s260 + $0x198] sm:$0xff]
        %v353 = vld [vmem:[%s260 + $0x1a0] sm:$0xff]
        %v354 = vld [vmem:[%s260 + $0x1a8] sm:$0xff]
        %v355 = vld [vmem:[%s260 + $0x1b0] sm:$0xff]
        %v356 = vld [vmem:[%s260 + $0x1b8] sm:$0xff]
        %v357 = vld [vmem:[%s260 + $0x1c0] sm:$0xff]
        %v358 = vld [vmem:[%s260 + $0x1c8] sm:$0xff]
        %v359 = vld [vmem:[%s260 + $0x1d0] sm:$0xff]
        %v360 = vld [vmem:[%s260 + $0x1d8] sm:$0xff]
        %v361 = vld [vmem:[%s260 + $0x1e0] sm:$0xff]
        %v362 = vld [vmem:[%s260 + $0x1e8] sm:$0xff]
        %v363 = vld [vmem:[%s260 + $0x1f0] sm:$0xff]
        %v364 = vld [vmem:[%s260 + $0x1f8] sm:$0xff]
        %v365 = vld [vmem:[%s260 + $0x200] sm:$0xff]
        %v366 = vld [vmem:[%s260 + $0x208] sm:$0xff]
        %v367 = vld [vmem:[%s260 + $0x210] sm:$0xff]
        %v368 = vld [vmem:[%s260 + $0x218] sm:$0xff]
        %v369 = vld [vmem:[%s260 + $0x220] sm:$0xff]
        %v370 = vld [vmem:[%s260 + $0x228] sm:$0xff]
        %v371 = vld [vmem:[%s260 + $0x230] sm:$0xff]
        %v372 = vld [vmem:[%s260 + $0x238] sm:$0xff]
        %v373 = vld [vmem:[%s260 + $0x240] sm:$0xff]
        %v374 = vld [vmem:[%s260 + $0x248] sm:$0xff]
        %v375 = vld [vmem:[%s260 + $0x250] sm:$0xff]
        %v376 = vld [vmem:[%s260 + $0x258] sm:$0xff]
        %v377 = vld [vmem:[%s260 + $0x260] sm:$0xff]
        %v378 = vld [vmem:[%s260 + $0x268] sm:$0xff]
        %v379 = vld [vmem:[%s260 + $0x270] sm:$0xff]
        %v380 = vld [vmem:[%s260 + $0x278] sm:$0xff]
        %v381 = vld [vmem:[%s260 + $0x280] sm:$0xff]
        %v382 = vld [vmem:[%s260 + $0x288] sm:$0xff]
        %v383 = vld [vmem:[%s260 + $0x290] sm:$0xff]
        %v384 = vld [vmem:[%s260 + $0x298] sm:$0xff]
        %v385 = vld [vmem:[%s260 + $0x2a0] sm:$0xff]
        %v386 = vld [vmem:[%s260 + $0x2a8] sm:$0xff]
        %v387 = vld [vmem:[%s260 + $0x2b0] sm:$0xff]
        %v388 = vld [vmem:[%s260 + $0x2b8] sm:$0xff]
        %v389 = vld [vmem:[%s260 + $0x2c0] sm:$0xff]
        %v390 = vld [vmem:[%s260 + $0x2c8] sm:$0xff]
        %v391 = vld [vmem:[%s260 + $0x2d0] sm:$0xff]
        %v392 = vld [vmem:[%s260 + $0x2d8] sm:$0xff]
        %v393 = vld [vmem:[%s260 + $0x2e0] sm:$0xff]
        %v394 = vld [vmem:[%s260 + $0x2e8] sm:$0xff]
        %v395 = vld [vmem:[%s260 + $0x2f0] sm:$0xff]
        %v396 = vld [vmem:[%s260 + $0x2f8] sm:$0xff]
        %v397 = vld [vmem:[%s260 + $0x300] sm:$0xff]
        %v398 = vld [vmem:[%s260 + $0x308] sm:$0xff]
        %v399 = vld [vmem:[%s260 + $0x310] sm:$0xff]
        %v400 = vld [vmem:[%s260 + $0x318] sm:$0xff]
        %v401 = vld [vmem:[%s260 + $0x320] sm:$0xff]
        %v402 = vld [vmem:[%s260 + $0x328] sm:$0xff]
        %v403 = vld [vmem:[%s260 + $0x330] sm:$0xff]
        %v404 = vld [vmem:[%s260 + $0x338] sm:$0xff]
        %v405 = vld [vmem:[%s260 + $0x340] sm:$0xff]
        %v406 = vld [vmem:[%s260 + $0x348] sm:$0xff]
        %v407 = vld [vmem:[%s260 + $0x350] sm:$0xff]
        %v408 = vld [vmem:[%s260 + $0x358] sm:$0xff]
        %v409 = vld [vmem:[%s260 + $0x360] sm:$0xff]
        %v410 = vld [vmem:[%s260 + $0x368] sm:$0xff]
        %v411 = vld [vmem:[%s260 + $0x370] sm:$0xff]
        %v412 = vld [vmem:[%s260 + $0x378] sm:$0xff]
        %v413 = vld [vmem:[%s260 + $0x380] sm:$0xff]
        %v414 = vld [vmem:[%s260 + $0x388] sm:$0xff]
        %v415 = vld [vmem:[%s260 + $0x390] sm:$0xff]
        %v416 = vld [vmem:[%s260 + $0x398] sm:$0xff]
        %v417 = vld [vmem:[%s260 + $0x3a0] sm:$0xff]
        %v418 = vld [vmem:[%s260 + $0x3a8] sm:$0xff]
        %v419 = vld [vmem:[%s260 + $0x3b0] sm:$0xff]
        %v420 = vld [vmem:[%s260 + $0x3b8] sm:$0xff]
        %v421 = vld [vmem:[%s260 + $0x3c0] sm:$0xff]
        %v422 = vld [vmem:[%s260 + $0x3c8] sm:$0xff]
        %v423 = vld [vmem:[%s260 + $0x3d0] sm:$0xff]
        %v424 = vld [vmem:[%s260 + $0x3d8] sm:$0xff]
        %v425 = vld [vmem:[%s260 + $0x3e0] sm:$0xff]
        %v426 = vld [vmem:[%s260 + $0x3e8] sm:$0xff]
        %v427 = vld [vmem:[%s260 + $0x3f0] sm:$0xff]
        %v428 = vld [vmem:[%s260 + $0x3f8] sm:$0xff]
        %v429 = vld [vmem:[%s260 + $0x400] sm:$0xff]
        %v430 = vld [vmem:[%s260 + $0x408] sm:$0xff]
        %v431 = vld [vmem:[%s260 + $0x410] sm:$0xff]
        %v432 = vld [vmem:[%s260 + $0x418] sm:$0xff]
        %v433 = vld [vmem:[%s260 + $0x420] sm:$0xff]
        %v434 = vld [vmem:[%s260 + $0x428] sm:$0xff]
        %v435 = vld [vmem:[%s260 + $0x430] sm:$0xff]
        %v436 = vld [vmem:[%s260 + $0x438] sm:$0xff]
        %v437 = vld [vmem:[%s260 + $0x440] sm:$0xff]
        %v438 = vld [vmem:[%s260 + $0x448] sm:$0xff]
        %v439 = vld [vmem:[%s260 + $0x450] sm:$0xff]
        %v440 = vld [vmem:[%s260 + $0x458] sm:$0xff]
        %v441 = vld [vmem:[%s260 + $0x460] sm:$0xff]
        %v442 = vld [vmem:[%s260 + $0x468] sm:$0xff]
        %v443 = vld [vmem:[%s260 + $0x470] sm:$0xff]
        %v444 = vld [vmem:[%s260 + $0x478] sm:$0xff]
        %v445 = vld [vmem:[%s260 + $0x480] sm:$0xff]
        %v446 = vld [vmem:[%s260 + $0x488] sm:$0xff]
        %v447 = vld [vmem:[%s260 + $0x490] sm:$0xff]
        %v448 = vld [vmem:[%s260 + $0x498] sm:$0xff]
        %v449 = vld [vmem:[%s260 + $0x4a0] sm:$0xff]
        %v450 = vld [vmem:[%s260 + $0x4a8] sm:$0xff]
        %v451 = vld [vmem:[%s260 + $0x4b0] sm:$0xff]
        %v452 = vld [vmem:[%s260 + $0x4b8] sm:$0xff]
        %v453 = vld [vmem:[%s260 + $0x4c0] sm:$0xff]
        %v454 = vld [vmem:[%s260 + $0x4c8] sm:$0xff]
        %v455 = vld [vmem:[%s260 + $0x4d0] sm:$0xff]
        %v456 = vld [vmem:[%s260 + $0x4d8] sm:$0xff]
        %v457 = vld [vmem:[%s260 + $0x4e0] sm:$0xff]
        %v458 = vld [vmem:[%s260 + $0x4e8] sm:$0xff]
        %v459 = vld [vmem:[%s260 + $0x4f0] sm:$0xff]
        %v460 = vld [vmem:[%s260 + $0x4f8] sm:$0xff]
        %v461 = vld [vmem:[%s260 + $0x500] sm:$0xff]
        %v462 = vld [vmem:[%s260 + $0x508] sm:$0xff]
        %v463 = vld [vmem:[%s260 + $0x510] sm:$0xff]
        %v464 = vld [vmem:[%s260 + $0x518] sm:$0xff]
        %v465 = vld [vmem:[%s260 + $0x520] sm:$0xff]
        %v466 = vld [vmem:[%s260 + $0x528] sm:$0xff]
        %v467 = vld [vmem:[%s260 + $0x530] sm:$0xff]
        %v468 = vld [vmem:[%s260 + $0x538] sm:$0xff]
        %v469 = vld [vmem:[%s260 + $0x540] sm:$0xff]
        %v470 = vld [vmem:[%s260 + $0x548] sm:$0xff]
        %v471 = vld [vmem:[%s260 + $0x550] sm:$0xff]
        %v472 = vld [vmem:[%s260 + $0x558] sm:$0xff]
        %v473 = vld [vmem:[%s260 + $0x560] sm:$0xff]
        %v474 = vld [vmem:[%s260 + $0x568] sm:$0xff]
        %v475 = vld [vmem:[%s260 + $0x570] sm:$0xff]
        %v476 = vld [vmem:[%s260 + $0x578] sm:$0xff]
        %v477 = vld [vmem:[%s260 + $0x580] sm:$0xff]
        %v478 = vld [vmem:[%s260 + $0x588] sm:$0xff]
        %v479 = vld [vmem:[%s260 + $0x590] sm:$0xff]
        %v480 = vld [vmem:[%s260 + $0x598] sm:$0xff]
        %v481 = vld [vmem:[%s260 + $0x5a0] sm:$0xff]
        %v482 = vld [vmem:[%s260 + $0x5a8] sm:$0xff]
        %v483 = vld [vmem:[%s260 + $0x5b0] sm:$0xff]
        %v484 = vld [vmem:[%s260 + $0x5b8] sm:$0xff]
        %v485 = vld [vmem:[%s260 + $0x5c0] sm:$0xff]
        %v486 = vld [vmem:[%s260 + $0x5c8] sm:$0xff]
        %v487 = vld [vmem:[%s260 + $0x5d0] sm:$0xff]
        %v488 = vld [vmem:[%s260 + $0x5d8] sm:$0xff]
        %v489 = vld [vmem:[%s260 + $0x5e0] sm:$0xff]
        %v490 = vld [vmem:[%s260 + $0x5e8] sm:$0xff]
        %v491 = vld [vmem:[%s260 + $0x5f0] sm:$0xff]
        %v492 = vld [vmem:[%s260 + $0x5f8] sm:$0xff]
        %v493 = vld [vmem:[%s260 + $0x600] sm:$0xff]
        %v494 = vld [vmem:[%s260 + $0x608] sm:$0xff]
        %v495 = vld [vmem:[%s260 + $0x610] sm:$0xff]
        %v496 = vld [vmem:[%s260 + $0x618] sm:$0xff]
        %v497 = vld [vmem:[%s260 + $0x620] sm:$0xff]
        %v498 = vld [vmem:[%s260 + $0x628] sm:$0xff]
        %v499 = vld [vmem:[%s260 + $0x630] sm:$0xff]
        %v500 = vld [vmem:[%s260 + $0x638] sm:$0xff]
        %v501 = vld [vmem:[%s260 + $0x640] sm:$0xff]
        %v502 = vld [vmem:[%s260 + $0x648] sm:$0xff]
        %v503 = vld [vmem:[%s260 + $0x650] sm:$0xff]
        %v504 = vld [vmem:[%s260 + $0x658] sm:$0xff]
        %v505 = vld [vmem:[%s260 + $0x660] sm:$0xff]
        %v506 = vld [vmem:[%s260 + $0x668] sm:$0xff]
        %v507 = vld [vmem:[%s260 + $0x670] sm:$0xff]
        %v508 = vld [vmem:[%s260 + $0x678] sm:$0xff]
        %v509 = vld [vmem:[%s260 + $0x680] sm:$0xff]
        %v510 = vld [vmem:[%s260 + $0x688] sm:$0xff]
        %v511 = vld [vmem:[%s260 + $0x690] sm:$0xff]
        %v512 = vld [vmem:[%s260 + $0x698] sm:$0xff]
        %v513 = vld [vmem:[%s260 + $0x6a0] sm:$0xff]
        %v514 = vld [vmem:[%s260 + $0x6a8] sm:$0xff]
        %v515 = vld [vmem:[%s260 + $0x6b0] sm:$0xff]
        %v516 = vld [vmem:[%s260 + $0x6b8] sm:$0xff]
        %v517 = vld [vmem:[%s260 + $0x6c0] sm:$0xff]
        %v518 = vld [vmem:[%s260 + $0x6c8] sm:$0xff]
        %v519 = vld [vmem:[%s260 + $0x6d0] sm:$0xff]
        %v520 = vld [vmem:[%s260 + $0x6d8] sm:$0xff]
        %v521 = vld [vmem:[%s260 + $0x6e0] sm:$0xff]
        %v522 = vld [vmem:[%s260 + $0x6e8] sm:$0xff]
        %v523 = vld [vmem:[%s260 + $0x6f0] sm:$0xff]
        %v524 = vld [vmem:[%s260 + $0x6f8] sm:$0xff]
        %v525 = vld [vmem:[%s260 + $0x700] sm:$0xff]
        %v526 = vld [vmem:[%s260 + $0x708] sm:$0xff]
        %v527 = vld [vmem:[%s260 + $0x710] sm:$0xff]
        %v528 = vld [vmem:[%s260 + $0x718] sm:$0xff]
        %v529 = vld [vmem:[%s260 + $0x720] sm:$0xff]
        %v530 = vld [vmem:[%s260 + $0x728] sm:$0xff]
        %v531 = vld [vmem:[%s260 + $0x730] sm:$0xff]
        %v532 = vld [vmem:[%s260 + $0x738] sm:$0xff]
        %v533 = vld [vmem:[%s260 + $0x740] sm:$0xff]
        %v534 = vld [vmem:[%s260 + $0x748] sm:$0xff]
        %v535 = vld [vmem:[%s260 + $0x750] sm:$0xff]
        %v536 = vld [vmem:[%s260 + $0x758] sm:$0xff]
        %v537 = vld [vmem:[%s260 + $0x760] sm:$0xff]
        %v538 = vld [vmem:[%s260 + $0x768] sm:$0xff]
        %v539 = vld [vmem:[%s260 + $0x770] sm:$0xff]
        %v540 = vld [vmem:[%s260 + $0x778] sm:$0xff]
        %v541 = vld [vmem:[%s260 + $0x780] sm:$0xff]
        %v542 = vld [vmem:[%s260 + $0x788] sm:$0xff]
        %v543 = vld [vmem:[%s260 + $0x790] sm:$0xff]
        %v544 = vld [vmem:[%s260 + $0x798] sm:$0xff]
        %v545 = vld [vmem:[%s260 + $0x7a0] sm:$0xff]
        %v546 = vld [vmem:[%s260 + $0x7a8] sm:$0xff]
        %v547 = vld [vmem:[%s260 + $0x7b0] sm:$0xff]
        %v548 = vld [vmem:[%s260 + $0x7b8] sm:$0xff]
        %v549 = vld [vmem:[%s260 + $0x7c0] sm:$0xff]
        %v550 = vld [vmem:[%s260 + $0x7c8] sm:$0xff]
        %v551 = vld [vmem:[%s260 + $0x7d0] sm:$0xff]
        %v552 = vld [vmem:[%s260 + $0x7d8] sm:$0xff]
        %v553 = vld [vmem:[%s260 + $0x7e0] sm:$0xff]
        %v554 = vld [vmem:[%s260 + $0x7e8] sm:$0xff]
        %v555 = vld [vmem:[%s260 + $0x7f0] sm:$0xff]
        %v556 = vld [vmem:[%s260 + $0x7f8] sm:$0xff]
        %v565 = vunpack.c.l.b16 %v293
        %v566 = vunpack.c.h.b16 %v293
        %v567 = vunpack.c.l.b16 %v294
        %v568 = vunpack.c.h.b16 %v294
        %v569 = vunpack.c.l.b16 %v295
        %v570 = vunpack.c.h.b16 %v295
        %v571 = vunpack.c.l.b16 %v296
        %v572 = vunpack.c.h.b16 %v296
        %v573 = vunpack.c.l.b16 %v297
        %v574 = vunpack.c.h.b16 %v297
        %v575 = vunpack.c.l.b16 %v298
        %v576 = vunpack.c.h.b16 %v298
        %v577 = vunpack.c.l.b16 %v299
        %v578 = vunpack.c.h.b16 %v299
        %v579 = vunpack.c.l.b16 %v300
        %v580 = vunpack.c.h.b16 %v300
        %v581 = vpack.c.b16 %v573, %v565
        %v582 = vpack.c.b16 %v574, %v566
        %v583 = vpack.c.b16 %v575, %v567
        %v584 = vpack.c.b16 %v576, %v568
        %v585 = vpack.c.b16 %v577, %v569
        %v586 = vpack.c.b16 %v578, %v570
        %v587 = vpack.c.b16 %v579, %v571
        %v588 = vpack.c.b16 %v580, %v572
        %v853 = vunpack.c.l.b16 %v301
        %v854 = vunpack.c.h.b16 %v301
        %v855 = vunpack.c.l.b16 %v302
        %v856 = vunpack.c.h.b16 %v302
        %v857 = vunpack.c.l.b16 %v303
        %v858 = vunpack.c.h.b16 %v303
        %v859 = vunpack.c.l.b16 %v304
        %v860 = vunpack.c.h.b16 %v304
        %v861 = vunpack.c.l.b16 %v305
        %v862 = vunpack.c.h.b16 %v305
        %v863 = vunpack.c.l.b16 %v306
        %v864 = vunpack.c.h.b16 %v306
        %v865 = vunpack.c.l.b16 %v307
        %v866 = vunpack.c.h.b16 %v307
        %v867 = vunpack.c.l.b16 %v308
        %v868 = vunpack.c.h.b16 %v308
        %v869 = vunpack.c.l.b16 %v309
        %v870 = vunpack.c.h.b16 %v309
        %v871 = vunpack.c.l.b16 %v310
        %v872 = vunpack.c.h.b16 %v310
        %v873 = vunpack.c.l.b16 %v311
        %v874 = vunpack.c.h.b16 %v311
        %v875 = vunpack.c.l.b16 %v312
        %v876 = vunpack.c.h.b16 %v312
        %v877 = vunpack.c.l.b16 %v313
        %v878 = vunpack.c.h.b16 %v313
        %v879 = vunpack.c.l.b16 %v314
        %v880 = vunpack.c.h.b16 %v314
        %v881 = vunpack.c.l.b16 %v315
        %v882 = vunpack.c.h.b16 %v315
        %v883 = vunpack.c.l.b16 %v316
        %v884 = vunpack.c.h.b16 %v316
        %v885 = vunpack.c.l.b16 %v317
        %v886 = vunpack.c.h.b16 %v317
        %v887 = vunpack.c.l.b16 %v318
        %v888 = vunpack.c.h.b16 %v318
        %v889 = vunpack.c.l.b16 %v319
        %v890 = vunpack.c.h.b16 %v319
        %v891 = vunpack.c.l.b16 %v320
        %v892 = vunpack.c.h.b16 %v320
        %v893 = vunpack.c.l.b16 %v321
        %v894 = vunpack.c.h.b16 %v321
        %v895 = vunpack.c.l.b16 %v322
        %v896 = vunpack.c.h.b16 %v322
        %v897 = vunpack.c.l.b16 %v323
        %v898 = vunpack.c.h.b16 %v323
        %v899 = vunpack.c.l.b16 %v324
        %v900 = vunpack.c.h.b16 %v324
        %v901 = vunpack.c.l.b16 %v325
        %v902 = vunpack.c.h.b16 %v325
        %v903 = vunpack.c.l.b16 %v326
        %v904 = vunpack.c.h.b16 %v326
        %v905 = vunpack.c.l.b16 %v327
        %v906 = vunpack.c.h.b16 %v327
        %v907 = vunpack.c.l.b16 %v328
        %v908 = vunpack.c.h.b16 %v328
        %v909 = vunpack.c.l.b16 %v329
        %v910 = vunpack.c.h.b16 %v329
        %v911 = vunpack.c.l.b16 %v330
        %v912 = vunpack.c.h.b16 %v330
        %v913 = vunpack.c.l.b16 %v331
        %v914 = vunpack.c.h.b16 %v331
        %v915 = vunpack.c.l.b16 %v332
        %v916 = vunpack.c.h.b16 %v332
        %v917 = vunpack.c.l.b16 %v333
        %v918 = vunpack.c.h.b16 %v333
        %v919 = vunpack.c.l.b16 %v334
        %v920 = vunpack.c.h.b16 %v334
        %v921 = vunpack.c.l.b16 %v335
        %v922 = vunpack.c.h.b16 %v335
        %v923 = vunpack.c.l.b16 %v336
        %v924 = vunpack.c.h.b16 %v336
        %v925 = vunpack.c.l.b16 %v337
        %v926 = vunpack.c.h.b16 %v337
        %v927 = vunpack.c.l.b16 %v338
        %v928 = vunpack.c.h.b16 %v338
        %v929 = vunpack.c.l.b16 %v339
        %v930 = vunpack.c.h.b16 %v339
        %v931 = vunpack.c.l.b16 %v340
        %v932 = vunpack.c.h.b16 %v340
        %v933 = vunpack.c.l.b16 %v341
        %v934 = vunpack.c.h.b16 %v341
        %v935 = vunpack.c.l.b16 %v342
        %v936 = vunpack.c.h.b16 %v342
        %v937 = vunpack.c.l.b16 %v343
        %v938 = vunpack.c.h.b16 %v343
        %v939 = vunpack.c.l.b16 %v344
        %v940 = vunpack.c.h.b16 %v344
        %v941 = vunpack.c.l.b16 %v345
        %v942 = vunpack.c.h.b16 %v345
        %v943 = vunpack.c.l.b16 %v346
        %v944 = vunpack.c.h.b16 %v346
        %v945 = vunpack.c.l.b16 %v347
        %v946 = vunpack.c.h.b16 %v347
        %v947 = vunpack.c.l.b16 %v348
        %v948 = vunpack.c.h.b16 %v348
        %v949 = vunpack.c.l.b16 %v349
        %v950 = vunpack.c.h.b16 %v349
        %v951 = vunpack.c.l.b16 %v350
        %v952 = vunpack.c.h.b16 %v350
        %v953 = vunpack.c.l.b16 %v351
        %v954 = vunpack.c.h.b16 %v351
        %v955 = vunpack.c.l.b16 %v352
        %v956 = vunpack.c.h.b16 %v352
        %v957 = vunpack.c.l.b16 %v353
        %v958 = vunpack.c.h.b16 %v353
        %v959 = vunpack.c.l.b16 %v354
        %v960 = vunpack.c.h.b16 %v354
        %v961 = vunpack.c.l.b16 %v355
        %v962 = vunpack.c.h.b16 %v355
        %v963 = vunpack.c.l.b16 %v356
        %v964 = vunpack.c.h.b16 %v356
        %v965 = vunpack.c.l.b16 %v357
        %v966 = vunpack.c.h.b16 %v357
        %v967 = vunpack.c.l.b16 %v358
        %v968 = vunpack.c.h.b16 %v358
        %v969 = vunpack.c.l.b16 %v359
        %v970 = vunpack.c.h.b16 %v359
        %v971 = vunpack.c.l.b16 %v360
        %v972 = vunpack.c.h.b16 %v360
        %v973 = vunpack.c.l.b16 %v361
        %v974 = vunpack.c.h.b16 %v361
        %v975 = vunpack.c.l.b16 %v362
        %v976 = vunpack.c.h.b16 %v362
        %v977 = vunpack.c.l.b16 %v363
        %v978 = vunpack.c.h.b16 %v363
        %v979 = vunpack.c.l.b16 %v364
        %v980 = vunpack.c.h.b16 %v364
        %v981 = vunpack.c.l.b16 %v365
        %v982 = vunpack.c.h.b16 %v365
        %v983 = vunpack.c.l.b16 %v366
        %v984 = vunpack.c.h.b16 %v366
        %v985 = vunpack.c.l.b16 %v367
        %v986 = vunpack.c.h.b16 %v367
        %v987 = vunpack.c.l.b16 %v368
        %v988 = vunpack.c.h.b16 %v368
        %v989 = vunpack.c.l.b16 %v369
        %v990 = vunpack.c.h.b16 %v369
        %v991 = vunpack.c.l.b16 %v370
        %v992 = vunpack.c.h.b16 %v370
        %v993 = vunpack.c.l.b16 %v371
        %v994 = vunpack.c.h.b16 %v371
        %v995 = vunpack.c.l.b16 %v372
        %v996 = vunpack.c.h.b16 %v372
        %v997 = vunpack.c.l.b16 %v373
        %v998 = vunpack.c.h.b16 %v373
        %v999 = vunpack.c.l.b16 %v374
        %v1000 = vunpack.c.h.b16 %v374
        %v1001 = vunpack.c.l.b16 %v375
        %v1002 = vunpack.c.h.b16 %v375
        %v1003 = vunpack.c.l.b16 %v376
        %v1004 = vunpack.c.h.b16 %v376
        %v1005 = vunpack.c.l.b16 %v377
        %v1006 = vunpack.c.h.b16 %v377
        %v1007 = vunpack.c.l.b16 %v378
        %v1008 = vunpack.c.h.b16 %v378
        %v1009 = vunpack.c.l.b16 %v379
        %v1010 = vunpack.c.h.b16 %v379
        %v1011 = vunpack.c.l.b16 %v380
        %v1012 = vunpack.c.h.b16 %v380
        %v1013 = vunpack.c.l.b16 %v381
        %v1014 = vunpack.c.h.b16 %v381
        %v1015 = vunpack.c.l.b16 %v382
        %v1016 = vunpack.c.h.b16 %v382
        %v1017 = vunpack.c.l.b16 %v383
        %v1018 = vunpack.c.h.b16 %v383
        %v1019 = vunpack.c.l.b16 %v384
        %v1020 = vunpack.c.h.b16 %v384
        %v1021 = vunpack.c.l.b16 %v385
        %v1022 = vunpack.c.h.b16 %v385
        %v1023 = vunpack.c.l.b16 %v386
        %v1024 = vunpack.c.h.b16 %v386
        %v1025 = vunpack.c.l.b16 %v387
        %v1026 = vunpack.c.h.b16 %v387
        %v1027 = vunpack.c.l.b16 %v388
        %v1028 = vunpack.c.h.b16 %v388
        %v1029 = vunpack.c.l.b16 %v389
        %v1030 = vunpack.c.h.b16 %v389
        %v1031 = vunpack.c.l.b16 %v390
        %v1032 = vunpack.c.h.b16 %v390
        %v1033 = vunpack.c.l.b16 %v391
        %v1034 = vunpack.c.h.b16 %v391
        %v1035 = vunpack.c.l.b16 %v392
        %v1036 = vunpack.c.h.b16 %v392
        %v1037 = vunpack.c.l.b16 %v393
        %v1038 = vunpack.c.h.b16 %v393
        %v1039 = vunpack.c.l.b16 %v394
        %v1040 = vunpack.c.h.b16 %v394
        %v1041 = vunpack.c.l.b16 %v395
        %v1042 = vunpack.c.h.b16 %v395
        %v1043 = vunpack.c.l.b16 %v396
        %v1044 = vunpack.c.h.b16 %v396
        %v1045 = vunpack.c.l.b16 %v397
        %v1046 = vunpack.c.h.b16 %v397
        %v1047 = vunpack.c.l.b16 %v398
        %v1048 = vunpack.c.h.b16 %v398
        %v1049 = vunpack.c.l.b16 %v399
        %v1050 = vunpack.c.h.b16 %v399
        %v1051 = vunpack.c.l.b16 %v400
        %v1052 = vunpack.c.h.b16 %v400
        %v1053 = vunpack.c.l.b16 %v401
        %v1054 = vunpack.c.h.b16 %v401
        %v1055 = vunpack.c.l.b16 %v402
        %v1056 = vunpack.c.h.b16 %v402
        %v1057 = vunpack.c.l.b16 %v403
        %v1058 = vunpack.c.h.b16 %v403
        %v1059 = vunpack.c.l.b16 %v404
        %v1060 = vunpack.c.h.b16 %v404
        %v1061 = vunpack.c.l.b16 %v405
        %v1062 = vunpack.c.h.b16 %v405
        %v1063 = vunpack.c.l.b16 %v406
        %v1064 = vunpack.c.h.b16 %v406
        %v1065 = vunpack.c.l.b16 %v407
        %v1066 = vunpack.c.h.b16 %v407
        %v1067 = vunpack.c.l.b16 %v408
        %v1068 = vunpack.c.h.b16 %v408
        %v1069 = vunpack.c.l.b16 %v409
        %v1070 = vunpack.c.h.b16 %v409
        %v1071 = vunpack.c.l.b16 %v410
        %v1072 = vunpack.c.h.b16 %v410
        %v1073 = vunpack.c.l.b16 %v411
        %v1074 = vunpack.c.h.b16 %v411
        %v1075 = vunpack.c.l.b16 %v412
        %v1076 = vunpack.c.h.b16 %v412
        %v1077 = vunpack.c.l.b16 %v413
        %v1078 = vunpack.c.h.b16 %v413
        %v1079 = vunpack.c.l.b16 %v414
        %v1080 = vunpack.c.h.b16 %v414
        %v1081 = vunpack.c.l.b16 %v415
        %v1082 = vunpack.c.h.b16 %v415
        %v1083 = vunpack.c.l.b16 %v416
        %v1084 = vunpack.c.h.b16 %v416
        %v1085 = vunpack.c.l.b16 %v417
        %v1086 = vunpack.c.h.b16 %v417
        %v1087 = vunpack.c.l.b16 %v418
        %v1088 = vunpack.c.h.b16 %v418
        %v1089 = vunpack.c.l.b16 %v419
        %v1090 = vunpack.c.h.b16 %v419
        %v1091 = vunpack.c.l.b16 %v420
        %v1092 = vunpack.c.h.b16 %v420
        %v1093 = vunpack.c.l.b16 %v421
        %v1094 = vunpack.c.h.b16 %v421
        %v1095 = vunpack.c.l.b16 %v422
        %v1096 = vunpack.c.h.b16 %v422
        %v1097 = vunpack.c.l.b16 %v423
        %v1098 = vunpack.c.h.b16 %v423
        %v1099 = vunpack.c.l.b16 %v424
        %v1100 = vunpack.c.h.b16 %v424
        %v1101 = vunpack.c.l.b16 %v425
        %v1102 = vunpack.c.h.b16 %v425
        %v1103 = vunpack.c.l.b16 %v426
        %v1104 = vunpack.c.h.b16 %v426
        %v1105 = vunpack.c.l.b16 %v427
        %v1106 = vunpack.c.h.b16 %v427
        %v1107 = vunpack.c.l.b16 %v428
        %v1108 = vunpack.c.h.b16 %v428
        %v1109 = vunpack.c.l.b16 %v429
        %v1110 = vunpack.c.h.b16 %v429
        %v1111 = vunpack.c.l.b16 %v430
        %v1112 = vunpack.c.h.b16 %v430
        %v1113 = vunpack.c.l.b16 %v431
        %v1114 = vunpack.c.h.b16 %v431
        %v1115 = vunpack.c.l.b16 %v432
        %v1116 = vunpack.c.h.b16 %v432
        %v1117 = vunpack.c.l.b16 %v433
        %v1118 = vunpack.c.h.b16 %v433
        %v1119 = vunpack.c.l.b16 %v434
        %v1120 = vunpack.c.h.b16 %v434
        %v1121 = vunpack.c.l.b16 %v435
        %v1122 = vunpack.c.h.b16 %v435
        %v1123 = vunpack.c.l.b16 %v436
        %v1124 = vunpack.c.h.b16 %v436
        %v1125 = vunpack.c.l.b16 %v437
        %v1126 = vunpack.c.h.b16 %v437
        %v1127 = vunpack.c.l.b16 %v438
        %v1128 = vunpack.c.h.b16 %v438
        %v1129 = vunpack.c.l.b16 %v439
        %v1130 = vunpack.c.h.b16 %v439
        %v1131 = vunpack.c.l.b16 %v440
        %v1132 = vunpack.c.h.b16 %v440
        %v1133 = vunpack.c.l.b16 %v441
        %v1134 = vunpack.c.h.b16 %v441
        %v1135 = vunpack.c.l.b16 %v442
        %v1136 = vunpack.c.h.b16 %v442
        %v1137 = vunpack.c.l.b16 %v443
        %v1138 = vunpack.c.h.b16 %v443
        %v1139 = vunpack.c.l.b16 %v444
        %v1140 = vunpack.c.h.b16 %v444
        %v1141 = vunpack.c.l.b16 %v445
        %v1142 = vunpack.c.h.b16 %v445
        %v1143 = vunpack.c.l.b16 %v446
        %v1144 = vunpack.c.h.b16 %v446
        %v1145 = vunpack.c.l.b16 %v447
        %v1146 = vunpack.c.h.b16 %v447
        %v1147 = vunpack.c.l.b16 %v448
        %v1148 = vunpack.c.h.b16 %v448
        %v1149 = vunpack.c.l.b16 %v449
        %v1150 = vunpack.c.h.b16 %v449
        %v1151 = vunpack.c.l.b16 %v450
        %v1152 = vunpack.c.h.b16 %v450
        %v1153 = vunpack.c.l.b16 %v451
        %v1154 = vunpack.c.h.b16 %v451
        %v1155 = vunpack.c.l.b16 %v452
        %v1156 = vunpack.c.h.b16 %v452
        %v1157 = vunpack.c.l.b16 %v453
        %v1158 = vunpack.c.h.b16 %v453
        %v1159 = vunpack.c.l.b16 %v454
        %v1160 = vunpack.c.h.b16 %v454
        %v1161 = vunpack.c.l.b16 %v455
        %v1162 = vunpack.c.h.b16 %v455
        %v1163 = vunpack.c.l.b16 %v456
        %v1164 = vunpack.c.h.b16 %v456
        %v1165 = vunpack.c.l.b16 %v457
        %v1166 = vunpack.c.h.b16 %v457
        %v1167 = vunpack.c.l.b16 %v458
        %v1168 = vunpack.c.h.b16 %v458
        %v1169 = vunpack.c.l.b16 %v459
        %v1170 = vunpack.c.h.b16 %v459
        %v1171 = vunpack.c.l.b16 %v460
        %v1172 = vunpack.c.h.b16 %v460
        %v1173 = vunpack.c.l.b16 %v461
        %v1174 = vunpack.c.h.b16 %v461
        %v1175 = vunpack.c.l.b16 %v462
        %v1176 = vunpack.c.h.b16 %v462
        %v1177 = vunpack.c.l.b16 %v463
        %v1178 = vunpack.c.h.b16 %v463
        %v1179 = vunpack.c.l.b16 %v464
        %v1180 = vunpack.c.h.b16 %v464
        %v1181 = vunpack.c.l.b16 %v465
        %v1182 = vunpack.c.h.b16 %v465
        %v1183 = vunpack.c.l.b16 %v466
        %v1184 = vunpack.c.h.b16 %v466
        %v1185 = vunpack.c.l.b16 %v467
        %v1186 = vunpack.c.h.b16 %v467
        %v1187 = vunpack.c.l.b16 %v468
        %v1188 = vunpack.c.h.b16 %v468
        %v1189 = vunpack.c.l.b16 %v469
        %v1190 = vunpack.c.h.b16 %v469
        %v1191 = vunpack.c.l.b16 %v470
        %v1192 = vunpack.c.h.b16 %v470
        %v1193 = vunpack.c.l.b16 %v471
        %v1194 = vunpack.c.h.b16 %v471
        %v1195 = vunpack.c.l.b16 %v472
        %v1196 = vunpack.c.h.b16 %v472
        %v1197 = vunpack.c.l.b16 %v473
        %v1198 = vunpack.c.h.b16 %v473
        %v1199 = vunpack.c.l.b16 %v474
        %v1200 = vunpack.c.h.b16 %v474
        %v1201 = vunpack.c.l.b16 %v475
        %v1202 = vunpack.c.h.b16 %v475
        %v1203 = vunpack.c.l.b16 %v476
        %v1204 = vunpack.c.h.b16 %v476
        %v1205 = vunpack.c.l.b16 %v477
        %v1206 = vunpack.c.h.b16 %v477
        %v1207 = vunpack.c.l.b16 %v478
        %v1208 = vunpack.c.h.b16 %v478
        %v1209 = vunpack.c.l.b16 %v479
        %v1210 = vunpack.c.h.b16 %v479
        %v1211 = vunpack.c.l.b16 %v480
        %v1212 = vunpack.c.h.b16 %v480
        %v1213 = vunpack.c.l.b16 %v481
        %v1214 = vunpack.c.h.b16 %v481
        %v1215 = vunpack.c.l.b16 %v482
        %v1216 = vunpack.c.h.b16 %v482
        %v1217 = vunpack.c.l.b16 %v483
        %v1218 = vunpack.c.h.b16 %v483
        %v1219 = vunpack.c.l.b16 %v484
        %v1220 = vunpack.c.h.b16 %v484
        %v1221 = vunpack.c.l.b16 %v485
        %v1222 = vunpack.c.h.b16 %v485
        %v1223 = vunpack.c.l.b16 %v486
        %v1224 = vunpack.c.h.b16 %v486
        %v1225 = vunpack.c.l.b16 %v487
        %v1226 = vunpack.c.h.b16 %v487
        %v1227 = vunpack.c.l.b16 %v488
        %v1228 = vunpack.c.h.b16 %v488
        %v1229 = vunpack.c.l.b16 %v489
        %v1230 = vunpack.c.h.b16 %v489
        %v1231 = vunpack.c.l.b16 %v490
        %v1232 = vunpack.c.h.b16 %v490
        %v1233 = vunpack.c.l.b16 %v491
        %v1234 = vunpack.c.h.b16 %v491
        %v1235 = vunpack.c.l.b16 %v492
        %v1236 = vunpack.c.h.b16 %v492
        %v1237 = vunpack.c.l.b16 %v493
        %v1238 = vunpack.c.h.b16 %v493
        %v1239 = vunpack.c.l.b16 %v494
        %v1240 = vunpack.c.h.b16 %v494
        %v1241 = vunpack.c.l.b16 %v495
        %v1242 = vunpack.c.h.b16 %v495
        %v1243 = vunpack.c.l.b16 %v496
        %v1244 = vunpack.c.h.b16 %v496
        %v1245 = vunpack.c.l.b16 %v497
        %v1246 = vunpack.c.h.b16 %v497
        %v1247 = vunpack.c.l.b16 %v498
        %v1248 = vunpack.c.h.b16 %v498
        %v1249 = vunpack.c.l.b16 %v499
        %v1250 = vunpack.c.h.b16 %v499
        %v1251 = vunpack.c.l.b16 %v500
        %v1252 = vunpack.c.h.b16 %v500
        %v1253 = vunpack.c.l.b16 %v501
        %v1254 = vunpack.c.h.b16 %v501
        %v1255 = vunpack.c.l.b16 %v502
        %v1256 = vunpack.c.h.b16 %v502
        %v1257 = vunpack.c.l.b16 %v503
        %v1258 = vunpack.c.h.b16 %v503
        %v1259 = vunpack.c.l.b16 %v504
        %v1260 = vunpack.c.h.b16 %v504
        %v1261 = vunpack.c.l.b16 %v505
        %v1262 = vunpack.c.h.b16 %v505
        %v1263 = vunpack.c.l.b16 %v506
        %v1264 = vunpack.c.h.b16 %v506
        %v1265 = vunpack.c.l.b16 %v507
        %v1266 = vunpack.c.h.b16 %v507
        %v1267 = vunpack.c.l.b16 %v508
        %v1268 = vunpack.c.h.b16 %v508
        %v1269 = vunpack.c.l.b16 %v509
        %v1270 = vunpack.c.h.b16 %v509
        %v1271 = vunpack.c.l.b16 %v510
        %v1272 = vunpack.c.h.b16 %v510
        %v1273 = vunpack.c.l.b16 %v511
        %v1274 = vunpack.c.h.b16 %v511
        %v1275 = vunpack.c.l.b16 %v512
        %v1276 = vunpack.c.h.b16 %v512
        %v1277 = vunpack.c.l.b16 %v513
        %v1278 = vunpack.c.h.b16 %v513
        %v1279 = vunpack.c.l.b16 %v514
        %v1280 = vunpack.c.h.b16 %v514
        %v1281 = vunpack.c.l.b16 %v515
        %v1282 = vunpack.c.h.b16 %v515
        %v1283 = vunpack.c.l.b16 %v516
        %v1284 = vunpack.c.h.b16 %v516
        %v1285 = vunpack.c.l.b16 %v517
        %v1286 = vunpack.c.h.b16 %v517
        %v1287 = vunpack.c.l.b16 %v518
        %v1288 = vunpack.c.h.b16 %v518
        %v1289 = vunpack.c.l.b16 %v519
        %v1290 = vunpack.c.h.b16 %v519
        %v1291 = vunpack.c.l.b16 %v520
        %v1292 = vunpack.c.h.b16 %v520
        %v1293 = vunpack.c.l.b16 %v521
        %v1294 = vunpack.c.h.b16 %v521
        %v1295 = vunpack.c.l.b16 %v522
        %v1296 = vunpack.c.h.b16 %v522
        %v1297 = vunpack.c.l.b16 %v523
        %v1298 = vunpack.c.h.b16 %v523
        %v1299 = vunpack.c.l.b16 %v524
        %v1300 = vunpack.c.h.b16 %v524
        %v1301 = vunpack.c.l.b16 %v525
        %v1302 = vunpack.c.h.b16 %v525
        %v1303 = vunpack.c.l.b16 %v526
        %v1304 = vunpack.c.h.b16 %v526
        %v1305 = vunpack.c.l.b16 %v527
        %v1306 = vunpack.c.h.b16 %v527
        %v1307 = vunpack.c.l.b16 %v528
        %v1308 = vunpack.c.h.b16 %v528
        %v1309 = vunpack.c.l.b16 %v529
        %v1310 = vunpack.c.h.b16 %v529
        %v1311 = vunpack.c.l.b16 %v530
        %v1312 = vunpack.c.h.b16 %v530
        %v1313 = vunpack.c.l.b16 %v531
        %v1314 = vunpack.c.h.b16 %v531
        %v1315 = vunpack.c.l.b16 %v532
        %v1316 = vunpack.c.h.b16 %v532
        %v1317 = vunpack.c.l.b16 %v533
        %v1318 = vunpack.c.h.b16 %v533
        %v1319 = vunpack.c.l.b16 %v534
        %v1320 = vunpack.c.h.b16 %v534
        %v1321 = vunpack.c.l.b16 %v535
        %v1322 = vunpack.c.h.b16 %v535
        %v1323 = vunpack.c.l.b16 %v536
        %v1324 = vunpack.c.h.b16 %v536
        %v1325 = vunpack.c.l.b16 %v537
        %v1326 = vunpack.c.h.b16 %v537
        %v1327 = vunpack.c.l.b16 %v538
        %v1328 = vunpack.c.h.b16 %v538
        %v1329 = vunpack.c.l.b16 %v539
        %v1330 = vunpack.c.h.b16 %v539
        %v1331 = vunpack.c.l.b16 %v540
        %v1332 = vunpack.c.h.b16 %v540
        %v1333 = vunpack.c.l.b16 %v541
        %v1334 = vunpack.c.h.b16 %v541
        %v1335 = vunpack.c.l.b16 %v542
        %v1336 = vunpack.c.h.b16 %v542
        %v1337 = vunpack.c.l.b16 %v543
        %v1338 = vunpack.c.h.b16 %v543
        %v1339 = vunpack.c.l.b16 %v544
        %v1340 = vunpack.c.h.b16 %v544
        %v1341 = vunpack.c.l.b16 %v545
        %v1342 = vunpack.c.h.b16 %v545
        %v1343 = vunpack.c.l.b16 %v546
        %v1344 = vunpack.c.h.b16 %v546
        %v1345 = vunpack.c.l.b16 %v547
        %v1346 = vunpack.c.h.b16 %v547
        %v1347 = vunpack.c.l.b16 %v548
        %v1348 = vunpack.c.h.b16 %v548
        %v1349 = vunpack.c.l.b16 %v549
        %v1350 = vunpack.c.h.b16 %v549
        %v1351 = vunpack.c.l.b16 %v550
        %v1352 = vunpack.c.h.b16 %v550
        %v1353 = vunpack.c.l.b16 %v551
        %v1354 = vunpack.c.h.b16 %v551
        %v1355 = vunpack.c.l.b16 %v552
        %v1356 = vunpack.c.h.b16 %v552
        %v1357 = vunpack.c.l.b16 %v553
        %v1358 = vunpack.c.h.b16 %v553
        %v1359 = vunpack.c.l.b16 %v554
        %v1360 = vunpack.c.h.b16 %v554
        %v1361 = vunpack.c.l.b16 %v555
        %v1362 = vunpack.c.h.b16 %v555
        %v1363 = vunpack.c.l.b16 %v556
        %v1364 = vunpack.c.h.b16 %v556
        %v1365 = vpack.c.b16 %v857, %v853
        %v1366 = vpack.c.b16 %v858, %v854
        %v1367 = vpack.c.b16 %v859, %v855
        %v1368 = vpack.c.b16 %v860, %v856
        %v1369 = vpack.c.b16 %v865, %v861
        %v1370 = vpack.c.b16 %v866, %v862
        %v1371 = vpack.c.b16 %v867, %v863
        %v1372 = vpack.c.b16 %v868, %v864
        %v1373 = vpack.c.b16 %v873, %v869
        %v1374 = vpack.c.b16 %v874, %v870
        %v1375 = vpack.c.b16 %v875, %v871
        %v1376 = vpack.c.b16 %v876, %v872
        %v1377 = vpack.c.b16 %v881, %v877
        %v1378 = vpack.c.b16 %v882, %v878
        %v1379 = vpack.c.b16 %v883, %v879
        %v1380 = vpack.c.b16 %v884, %v880
        %v1381 = vpack.c.b16 %v889, %v885
        %v1382 = vpack.c.b16 %v890, %v886
        %v1383 = vpack.c.b16 %v891, %v887
        %v1384 = vpack.c.b16 %v892, %v888
        %v1385 = vpack.c.b16 %v897, %v893
        %v1386 = vpack.c.b16 %v898, %v894
        %v1387 = vpack.c.b16 %v899, %v895
        %v1388 = vpack.c.b16 %v900, %v896
        %v1389 = vpack.c.b16 %v905, %v901
        %v1390 = vpack.c.b16 %v906, %v902
        %v1391 = vpack.c.b16 %v907, %v903
        %v1392 = vpack.c.b16 %v908, %v904
        %v1393 = vpack.c.b16 %v913, %v909
        %v1394 = vpack.c.b16 %v914, %v910
        %v1395 = vpack.c.b16 %v915, %v911
        %v1396 = vpack.c.b16 %v916, %v912
        %v1397 = vpack.c.b16 %v921, %v917
        %v1398 = vpack.c.b16 %v922, %v918
        %v1399 = vpack.c.b16 %v923, %v919
        %v1400 = vpack.c.b16 %v924, %v920
        %v1401 = vpack.c.b16 %v929, %v925
        %v1402 = vpack.c.b16 %v930, %v926
        %v1403 = vpack.c.b16 %v931, %v927
        %v1404 = vpack.c.b16 %v932, %v928
        %v1405 = vpack.c.b16 %v937, %v933
        %v1406 = vpack.c.b16 %v938, %v934
        %v1407 = vpack.c.b16 %v939, %v935
        %v1408 = vpack.c.b16 %v940, %v936
        %v1409 = vpack.c.b16 %v945, %v941
        %v1410 = vpack.c.b16 %v946, %v942
        %v1411 = vpack.c.b16 %v947, %v943
        %v1412 = vpack.c.b16 %v948, %v944
        %v1413 = vpack.c.b16 %v953, %v949
        %v1414 = vpack.c.b16 %v954, %v950
        %v1415 = vpack.c.b16 %v955, %v951
        %v1416 = vpack.c.b16 %v956, %v952
        %v1417 = vpack.c.b16 %v961, %v957
        %v1418 = vpack.c.b16 %v962, %v958
        %v1419 = vpack.c.b16 %v963, %v959
        %v1420 = vpack.c.b16 %v964, %v960
        %v1421 = vpack.c.b16 %v969, %v965
        %v1422 = vpack.c.b16 %v970, %v966
        %v1423 = vpack.c.b16 %v971, %v967
        %v1424 = vpack.c.b16 %v972, %v968
        %v1425 = vpack.c.b16 %v977, %v973
        %v1426 = vpack.c.b16 %v978, %v974
        %v1427 = vpack.c.b16 %v979, %v975
        %v1428 = vpack.c.b16 %v980, %v976
        %v1429 = vpack.c.b16 %v985, %v981
        %v1430 = vpack.c.b16 %v986, %v982
        %v1431 = vpack.c.b16 %v987, %v983
        %v1432 = vpack.c.b16 %v988, %v984
        %v1433 = vpack.c.b16 %v993, %v989
        %v1434 = vpack.c.b16 %v994, %v990
        %v1435 = vpack.c.b16 %v995, %v991
        %v1436 = vpack.c.b16 %v996, %v992
        %v1437 = vpack.c.b16 %v1001, %v997
        %v1438 = vpack.c.b16 %v1002, %v998
        %v1439 = vpack.c.b16 %v1003, %v999
        %v1440 = vpack.c.b16 %v1004, %v1000
        %v1441 = vpack.c.b16 %v1009, %v1005
        %v1442 = vpack.c.b16 %v1010, %v1006
        %v1443 = vpack.c.b16 %v1011, %v1007
        %v1444 = vpack.c.b16 %v1012, %v1008
        %v1445 = vpack.c.b16 %v1017, %v1013
        %v1446 = vpack.c.b16 %v1018, %v1014
        %v1447 = vpack.c.b16 %v1019, %v1015
        %v1448 = vpack.c.b16 %v1020, %v1016
        %v1449 = vpack.c.b16 %v1025, %v1021
        %v1450 = vpack.c.b16 %v1026, %v1022
        %v1451 = vpack.c.b16 %v1027, %v1023
        %v1452 = vpack.c.b16 %v1028, %v1024
        %v1453 = vpack.c.b16 %v1033, %v1029
        %v1454 = vpack.c.b16 %v1034, %v1030
        %v1455 = vpack.c.b16 %v1035, %v1031
        %v1456 = vpack.c.b16 %v1036, %v1032
        %v1457 = vpack.c.b16 %v1041, %v1037
        %v1458 = vpack.c.b16 %v1042, %v1038
        %v1459 = vpack.c.b16 %v1043, %v1039
        %v1460 = vpack.c.b16 %v1044, %v1040
        %v1461 = vpack.c.b16 %v1049, %v1045
        %v1462 = vpack.c.b16 %v1050, %v1046
        %v1463 = vpack.c.b16 %v1051, %v1047
        %v1464 = vpack.c.b16 %v1052, %v1048
        %v1465 = vpack.c.b16 %v1057, %v1053
        %v1466 = vpack.c.b16 %v1058, %v1054
        %v1467 = vpack.c.b16 %v1059, %v1055
        %v1468 = vpack.c.b16 %v1060, %v1056
        %v1469 = vpack.c.b16 %v1065, %v1061
        %v1470 = vpack.c.b16 %v1066, %v1062
        %v1471 = vpack.c.b16 %v1067, %v1063
        %v1472 = vpack.c.b16 %v1068, %v1064
        %v1473 = vpack.c.b16 %v1073, %v1069
        %v1474 = vpack.c.b16 %v1074, %v1070
        %v1475 = vpack.c.b16 %v1075, %v1071
        %v1476 = vpack.c.b16 %v1076, %v1072
        %v1477 = vpack.c.b16 %v1081, %v1077
        %v1478 = vpack.c.b16 %v1082, %v1078
        %v1479 = vpack.c.b16 %v1083, %v1079
        %v1480 = vpack.c.b16 %v1084, %v1080
        %v1481 = vpack.c.b16 %v1089, %v1085
        %v1482 = vpack.c.b16 %v1090, %v1086
        %v1483 = vpack.c.b16 %v1091, %v1087
        %v1484 = vpack.c.b16 %v1092, %v1088
        %v1485 = vpack.c.b16 %v1097, %v1093
        %v1486 = vpack.c.b16 %v1098, %v1094
        %v1487 = vpack.c.b16 %v1099, %v1095
        %v1488 = vpack.c.b16 %v1100, %v1096
        %v1489 = vpack.c.b16 %v1105, %v1101
        %v1490 = vpack.c.b16 %v1106, %v1102
        %v1491 = vpack.c.b16 %v1107, %v1103
        %v1492 = vpack.c.b16 %v1108, %v1104
        %v1493 = vpack.c.b16 %v1113, %v1109
        %v1494 = vpack.c.b16 %v1114, %v1110
        %v1495 = vpack.c.b16 %v1115, %v1111
        %v1496 = vpack.c.b16 %v1116, %v1112
        %v1497 = vpack.c.b16 %v1121, %v1117
        %v1498 = vpack.c.b16 %v1122, %v1118
        %v1499 = vpack.c.b16 %v1123, %v1119
        %v1500 = vpack.c.b16 %v1124, %v1120
        %v1501 = vpack.c.b16 %v1129, %v1125
        %v1502 = vpack.c.b16 %v1130, %v1126
        %v1503 = vpack.c.b16 %v1131, %v1127
        %v1504 = vpack.c.b16 %v1132, %v1128
        %v1505 = vpack.c.b16 %v1137, %v1133
        %v1506 = vpack.c.b16 %v1138, %v1134
        %v1507 = vpack.c.b16 %v1139, %v1135
        %v1508 = vpack.c.b16 %v1140, %v1136
        %v1509 = vpack.c.b16 %v1145, %v1141
        %v1510 = vpack.c.b16 %v1146, %v1142
        %v1511 = vpack.c.b16 %v1147, %v1143
        %v1512 = vpack.c.b16 %v1148, %v1144
        %v1513 = vpack.c.b16 %v1153, %v1149
        %v1514 = vpack.c.b16 %v1154, %v1150
        %v1515 = vpack.c.b16 %v1155, %v1151
        %v1516 = vpack.c.b16 %v1156, %v1152
        %v1517 = vpack.c.b16 %v1161, %v1157
        %v1518 = vpack.c.b16 %v1162, %v1158
        %v1519 = vpack.c.b16 %v1163, %v1159
        %v1520 = vpack.c.b16 %v1164, %v1160
        %v1521 = vpack.c.b16 %v1169, %v1165
        %v1522 = vpack.c.b16 %v1170, %v1166
        %v1523 = vpack.c.b16 %v1171, %v1167
        %v1524 = vpack.c.b16 %v1172, %v1168
        %v1525 = vpack.c.b16 %v1177, %v1173
        %v1526 = vpack.c.b16 %v1178, %v1174
        %v1527 = vpack.c.b16 %v1179, %v1175
        %v1528 = vpack.c.b16 %v1180, %v1176
        %v1529 = vpack.c.b16 %v1185, %v1181
        %v1530 = vpack.c.b16 %v1186, %v1182
        %v1531 = vpack.c.b16 %v1187, %v1183
        %v1532 = vpack.c.b16 %v1188, %v1184
        %v1533 = vpack.c.b16 %v1193, %v1189
        %v1534 = vpack.c.b16 %v1194, %v1190
        %v1535 = vpack.c.b16 %v1195, %v1191
        %v1536 = vpack.c.b16 %v1196, %v1192
        %v1537 = vpack.c.b16 %v1201, %v1197
        %v1538 = vpack.c.b16 %v1202, %v1198
        %v1539 = vpack.c.b16 %v1203, %v1199
        %v1540 = vpack.c.b16 %v1204, %v1200
        %v1541 = vpack.c.b16 %v1209, %v1205
        %v1542 = vpack.c.b16 %v1210, %v1206
        %v1543 = vpack.c.b16 %v1211, %v1207
        %v1544 = vpack.c.b16 %v1212, %v1208
        %v1545 = vpack.c.b16 %v1217, %v1213
        %v1546 = vpack.c.b16 %v1218, %v1214
        %v1547 = vpack.c.b16 %v1219, %v1215
        %v1548 = vpack.c.b16 %v1220, %v1216
        %v1549 = vpack.c.b16 %v1225, %v1221
        %v1550 = vpack.c.b16 %v1226, %v1222
        %v1551 = vpack.c.b16 %v1227, %v1223
        %v1552 = vpack.c.b16 %v1228, %v1224
        %v1553 = vpack.c.b16 %v1233, %v1229
        %v1554 = vpack.c.b16 %v1234, %v1230
        %v1555 = vpack.c.b16 %v1235, %v1231
        %v1556 = vpack.c.b16 %v1236, %v1232
        %v1557 = vpack.c.b16 %v1241, %v1237
        %v1558 = vpack.c.b16 %v1242, %v1238
        %v1559 = vpack.c.b16 %v1243, %v1239
        %v1560 = vpack.c.b16 %v1244, %v1240
        %v1561 = vpack.c.b16 %v1249, %v1245
        %v1562 = vpack.c.b16 %v1250, %v1246
        %v1563 = vpack.c.b16 %v1251, %v1247
        %v1564 = vpack.c.b16 %v1252, %v1248
        %v1565 = vpack.c.b16 %v1257, %v1253
        %v1566 = vpack.c.b16 %v1258, %v1254
        %v1567 = vpack.c.b16 %v1259, %v1255
        %v1568 = vpack.c.b16 %v1260, %v1256
        %v1569 = vpack.c.b16 %v1265, %v1261
        %v1570 = vpack.c.b16 %v1266, %v1262
        %v1571 = vpack.c.b16 %v1267, %v1263
        %v1572 = vpack.c.b16 %v1268, %v1264
        %v1573 = vpack.c.b16 %v1273, %v1269
        %v1574 = vpack.c.b16 %v1274, %v1270
        %v1575 = vpack.c.b16 %v1275, %v1271
        %v1576 = vpack.c.b16 %v1276, %v1272
        %v1577 = vpack.c.b16 %v1281, %v1277
        %v1578 = vpack.c.b16 %v1282, %v1278
        %v1579 = vpack.c.b16 %v1283, %v1279
        %v1580 = vpack.c.b16 %v1284, %v1280
        %v1581 = vpack.c.b16 %v1289, %v1285
        %v1582 = vpack.c.b16 %v1290, %v1286
        %v1583 = vpack.c.b16 %v1291, %v1287
        %v1584 = vpack.c.b16 %v1292, %v1288
        %v1585 = vpack.c.b16 %v1297, %v1293
        %v1586 = vpack.c.b16 %v1298, %v1294
        %v1587 = vpack.c.b16 %v1299, %v1295
        %v1588 = vpack.c.b16 %v1300, %v1296
        %v1589 = vpack.c.b16 %v1305, %v1301
        %v1590 = vpack.c.b16 %v1306, %v1302
        %v1591 = vpack.c.b16 %v1307, %v1303
        %v1592 = vpack.c.b16 %v1308, %v1304
        %v1593 = vpack.c.b16 %v1313, %v1309
        %v1594 = vpack.c.b16 %v1314, %v1310
        %v1595 = vpack.c.b16 %v1315, %v1311
        %v1596 = vpack.c.b16 %v1316, %v1312
        %v1597 = vpack.c.b16 %v1321, %v1317
        %v1598 = vpack.c.b16 %v1322, %v1318
        %v1599 = vpack.c.b16 %v1323, %v1319
        %v1600 = vpack.c.b16 %v1324, %v1320
        %v1601 = vpack.c.b16 %v1329, %v1325
        %v1602 = vpack.c.b16 %v1330, %v1326
        %v1603 = vpack.c.b16 %v1331, %v1327
        %v1604 = vpack.c.b16 %v1332, %v1328
        %v1605 = vpack.c.b16 %v1337, %v1333
        %v1606 = vpack.c.b16 %v1338, %v1334
        %v1607 = vpack.c.b16 %v1339, %v1335
        %v1608 = vpack.c.b16 %v1340, %v1336
        %v1609 = vpack.c.b16 %v1345, %v1341
        %v1610 = vpack.c.b16 %v1346, %v1342
        %v1611 = vpack.c.b16 %v1347, %v1343
        %v1612 = vpack.c.b16 %v1348, %v1344
        %v1613 = vpack.c.b16 %v1353, %v1349
        %v1614 = vpack.c.b16 %v1354, %v1350
        %v1615 = vpack.c.b16 %v1355, %v1351
        %v1616 = vpack.c.b16 %v1356, %v1352
        %v1617 = vpack.c.b16 %v1361, %v1357
        %v1618 = vpack.c.b16 %v1362, %v1358
        %v1619 = vpack.c.b16 %v1363, %v1359
        %v1620 = vpack.c.b16 %v1364, %v1360
        %1877 = vmatprep.subr.bf16.mxu0 %v1366
        %1878 = vmatpush1.bf16.msra.mxu0 %v1365
        %1879 = vmatprep.subr.bf16.mxu0 %v1370
        %1880 = vmatpush1.bf16.msra.mxu0 %v1369
        %1881 = vmatprep.subr.bf16.mxu0 %v1374
        %1882 = vmatpush1.bf16.msra.mxu0 %v1373
        %1883 = vmatprep.subr.bf16.mxu0 %v1378
        %1884 = vmatpush1.bf16.msra.mxu0 %v1377
        %1885 = vmatprep.subr.bf16.mxu0 %v1382
        %1886 = vmatpush1.bf16.msra.mxu0 %v1381
        %1887 = vmatprep.subr.bf16.mxu0 %v1386
        %1888 = vmatpush1.bf16.msra.mxu0 %v1385
        %1889 = vmatprep.subr.bf16.mxu0 %v1390
        %1890 = vmatpush1.bf16.msra.mxu0 %v1389
        %1891 = vmatprep.subr.bf16.mxu0 %v1394
        %1892 = vmatpush1.bf16.msra.mxu0 %v1393
        %1893 = vmatprep.subr.bf16.mxu0 %v1398
        %1894 = vmatpush1.bf16.msra.mxu0 %v1397
        %1895 = vmatprep.subr.bf16.mxu0 %v1402
        %1896 = vmatpush1.bf16.msra.mxu0 %v1401
        %1897 = vmatprep.subr.bf16.mxu0 %v1406
        %1898 = vmatpush1.bf16.msra.mxu0 %v1405
        %1899 = vmatprep.subr.bf16.mxu0 %v1410
        %1900 = vmatpush1.bf16.msra.mxu0 %v1409
        %1901 = vmatprep.subr.bf16.mxu0 %v1414
        %1902 = vmatpush1.bf16.msra.mxu0 %v1413
        %1903 = vmatprep.subr.bf16.mxu0 %v1418
        %1904 = vmatpush1.bf16.msra.mxu0 %v1417
        %1905 = vmatprep.subr.bf16.mxu0 %v1422
        %1906 = vmatpush1.bf16.msra.mxu0 %v1421
        %1907 = vmatprep.subr.bf16.mxu0 %v1426
        %1908 = vmatpush1.bf16.msra.mxu0 %v1425
        %1909 = vmatprep.mubr.bf16.mxu0 %v582
        %1910 = vmatmul.mubr.bf16.gmra.mrb[0].mxu0 %v581
        %v1911 = vpop.f32.mrb[0].mxu0
        %v1912 = vadd.f32 0.0, %v1911
        %v1913 = vpop.f32.mrb[0].mxu0
        %v1914 = vadd.f32 0.0, %v1913
        %v1915 = vpop.f32.mrb[0].mxu0
        %v1916 = vadd.f32 0.0, %v1915
        %v1917 = vpop.f32.mrb[0].mxu0
        %v1918 = vadd.f32 0.0, %v1917
        %1919 = vdwg.mxu0
        %1920 = vmatprep.subr.bf16.mxu0 %v1430
        %1921 = vmatpush1.bf16.msra.mxu0 %v1429
        %1922 = vmatprep.subr.bf16.mxu0 %v1434
        %1923 = vmatpush1.bf16.msra.mxu0 %v1433
        %1924 = vmatprep.subr.bf16.mxu0 %v1438
        %1925 = vmatpush1.bf16.msra.mxu0 %v1437
        %1926 = vmatprep.subr.bf16.mxu0 %v1442
        %1927 = vmatpush1.bf16.msra.mxu0 %v1441
        %1928 = vmatprep.subr.bf16.mxu0 %v1446
        %1929 = vmatpush1.bf16.msra.mxu0 %v1445
        %1930 = vmatprep.subr.bf16.mxu0 %v1450
        %1931 = vmatpush1.bf16.msra.mxu0 %v1449
        %1932 = vmatprep.subr.bf16.mxu0 %v1454
        %1933 = vmatpush1.bf16.msra.mxu0 %v1453
        %1934 = vmatprep.subr.bf16.mxu0 %v1458
        %1935 = vmatpush1.bf16.msra.mxu0 %v1457
        %1936 = vmatprep.subr.bf16.mxu0 %v1462
        %1937 = vmatpush1.bf16.msra.mxu0 %v1461
        %1938 = vmatprep.subr.bf16.mxu0 %v1466
        %1939 = vmatpush1.bf16.msra.mxu0 %v1465
        %1940 = vmatprep.subr.bf16.mxu0 %v1470
        %1941 = vmatpush1.bf16.msra.mxu0 %v1469
        %1942 = vmatprep.subr.bf16.mxu0 %v1474
        %1943 = vmatpush1.bf16.msra.mxu0 %v1473
        %1944 = vmatprep.subr.bf16.mxu0 %v1478
        %1945 = vmatpush1.bf16.msra.mxu0 %v1477
        %1946 = vmatprep.subr.bf16.mxu0 %v1482
        %1947 = vmatpush1.bf16.msra.mxu0 %v1481
        %1948 = vmatprep.subr.bf16.mxu0 %v1486
        %1949 = vmatpush1.bf16.msra.mxu0 %v1485
        %1950 = vmatprep.subr.bf16.mxu0 %v1490
        %1951 = vmatpush1.bf16.msra.mxu0 %v1489
        %1952 = vmatprep.mubr.bf16.mxu0 %v584
        %1953 = vmatmul.mubr.bf16.gmra.mrb[0].mxu0 %v583
        %v1954 = vpop.f32.mrb[0].mxu0
        %v1955 = vadd.f32 %v1912, %v1954
        %v1956 = vpop.f32.mrb[0].mxu0
        %v1957 = vadd.f32 %v1914, %v1956
        %v1958 = vpop.f32.mrb[0].mxu0
        %v1959 = vadd.f32 %v1916, %v1958
        %v1960 = vpop.f32.mrb[0].mxu0
        %v1961 = vadd.f32 %v1918, %v1960
        %1962 = vdwg.mxu0
        %1963 = vmatprep.subr.bf16.mxu0 %v1494
        %1964 = vmatpush1.bf16.msra.mxu0 %v1493
        %1965 = vmatprep.subr.bf16.mxu0 %v1498
        %1966 = vmatpush1.bf16.msra.mxu0 %v1497
        %1967 = vmatprep.subr.bf16.mxu0 %v1502
        %1968 = vmatpush1.bf16.msra.mxu0 %v1501
        %1969 = vmatprep.subr.bf16.mxu0 %v1506
        %1970 = vmatpush1.bf16.msra.mxu0 %v1505
        %1971 = vmatprep.subr.bf16.mxu0 %v1510
        %1972 = vmatpush1.bf16.msra.mxu0 %v1509
        %1973 = vmatprep.subr.bf16.mxu0 %v1514
        %1974 = vmatpush1.bf16.msra.mxu0 %v1513
        %1975 = vmatprep.subr.bf16.mxu0 %v1518
        %1976 = vmatpush1.bf16.msra.mxu0 %v1517
        %1977 = vmatprep.subr.bf16.mxu0 %v1522
        %1978 = vmatpush1.bf16.msra.mxu0 %v1521
        %1979 = vmatprep.subr.bf16.mxu0 %v1526
        %1980 = vmatpush1.bf16.msra.mxu0 %v1525
        %1981 = vmatprep.subr.bf16.mxu0 %v1530
        %1982 = vmatpush1.bf16.msra.mxu0 %v1529
        %1983 = vmatprep.subr.bf16.mxu0 %v1534
        %1984 = vmatpush1.bf16.msra.mxu0 %v1533
        %1985 = vmatprep.subr.bf16.mxu0 %v1538
        %1986 = vmatpush1.bf16.msra.mxu0 %v1537
        %1987 = vmatprep.subr.bf16.mxu0 %v1542
        %1988 = vmatpush1.bf16.msra.mxu0 %v1541
        %1989 = vmatprep.subr.bf16.mxu0 %v1546
        %1990 = vmatpush1.bf16.msra.mxu0 %v1545
        %1991 = vmatprep.subr.bf16.mxu0 %v1550
        %1992 = vmatpush1.bf16.msra.mxu0 %v1549
        %1993 = vmatprep.subr.bf16.mxu0 %v1554
        %1994 = vmatpush1.bf16.msra.mxu0 %v1553
        %1995 = vmatprep.mubr.bf16.mxu0 %v586
        %1996 = vmatmul.mubr.bf16.gmra.mrb[0].mxu0 %v585
        %v1997 = vpop.f32.mrb[0].mxu0
        %v1998 = vadd.f32 %v1955, %v1997
        %v1999 = vpop.f32.mrb[0].mxu0
        %v2000 = vadd.f32 %v1957, %v1999
        %v2001 = vpop.f32.mrb[0].mxu0
        %v2002 = vadd.f32 %v1959, %v2001
        %v2003 = vpop.f32.mrb[0].mxu0
        %v2004 = vadd.f32 %v1961, %v2003
        %2005 = vdwg.mxu0
        %2006 = vmatprep.subr.bf16.mxu0 %v1558
        %2007 = vmatpush1.bf16.msra.mxu0 %v1557
        %2008 = vmatprep.subr.bf16.mxu0 %v1562
        %2009 = vmatpush1.bf16.msra.mxu0 %v1561
        %2010 = vmatprep.subr.bf16.mxu0 %v1566
        %2011 = vmatpush1.bf16.msra.mxu0 %v1565
        %2012 = vmatprep.subr.bf16.mxu0 %v1570
        %2013 = vmatpush1.bf16.msra.mxu0 %v1569
        %2014 = vmatprep.subr.bf16.mxu0 %v1574
        %2015 = vmatpush1.bf16.msra.mxu0 %v1573
        %2016 = vmatprep.subr.bf16.mxu0 %v1578
        %2017 = vmatpush1.bf16.msra.mxu0 %v1577
        %2018 = vmatprep.subr.bf16.mxu0 %v1582
        %2019 = vmatpush1.bf16.msra.mxu0 %v1581
        %2020 = vmatprep.subr.bf16.mxu0 %v1586
        %2021 = vmatpush1.bf16.msra.mxu0 %v1585
        %2022 = vmatprep.subr.bf16.mxu0 %v1590
        %2023 = vmatpush1.bf16.msra.mxu0 %v1589
        %2024 = vmatprep.subr.bf16.mxu0 %v1594
        %2025 = vmatpush1.bf16.msra.mxu0 %v1593
        %2026 = vmatprep.subr.bf16.mxu0 %v1598
        %2027 = vmatpush1.bf16.msra.mxu0 %v1597
        %2028 = vmatprep.subr.bf16.mxu0 %v1602
        %2029 = vmatpush1.bf16.msra.mxu0 %v1601
        %2030 = vmatprep.subr.bf16.mxu0 %v1606
        %2031 = vmatpush1.bf16.msra.mxu0 %v1605
        %2032 = vmatprep.subr.bf16.mxu0 %v1610
        %2033 = vmatpush1.bf16.msra.mxu0 %v1609
        %2034 = vmatprep.subr.bf16.mxu0 %v1614
        %2035 = vmatpush1.bf16.msra.mxu0 %v1613
        %2036 = vmatprep.subr.bf16.mxu0 %v1618
        %2037 = vmatpush1.bf16.msra.mxu0 %v1617
        %2038 = vmatprep.mubr.bf16.mxu0 %v588
        %2039 = vmatmul.mubr.bf16.gmra.mrb[0].mxu0 %v587
        %v2040 = vpop.f32.mrb[0].mxu0
        %v2041 = vadd.f32 %v1998, %v2040
        %v2042 = vpop.f32.mrb[0].mxu0
        %v2043 = vadd.f32 %v2000, %v2042
        %v2044 = vpop.f32.mrb[0].mxu0
        %v2045 = vadd.f32 %v2002, %v2044
        %v2046 = vpop.f32.mrb[0].mxu0
        %v2047 = vadd.f32 %v2004, %v2046
        %2048 = vdwg.mxu0
        %2049 = vmatprep.subr.bf16.mxu0 %v1368
        %2050 = vmatpush1.bf16.msra.mxu0 %v1367
        %2051 = vmatprep.subr.bf16.mxu0 %v1372
        %2052 = vmatpush1.bf16.msra.mxu0 %v1371
        %2053 = vmatprep.subr.bf16.mxu0 %v1376
        %2054 = vmatpush1.bf16.msra.mxu0 %v1375
        %2055 = vmatprep.subr.bf16.mxu0 %v1380
        %2056 = vmatpush1.bf16.msra.mxu0 %v1379
        %2057 = vmatprep.subr.bf16.mxu0 %v1384
        %2058 = vmatpush1.bf16.msra.mxu0 %v1383
        %2059 = vmatprep.subr.bf16.mxu0 %v1388
        %2060 = vmatpush1.bf16.msra.mxu0 %v1387
        %2061 = vmatprep.subr.bf16.mxu0 %v1392
        %2062 = vmatpush1.bf16.msra.mxu0 %v1391
        %2063 = vmatprep.subr.bf16.mxu0 %v1396
        %2064 = vmatpush1.bf16.msra.mxu0 %v1395
        %2065 = vmatprep.subr.bf16.mxu0 %v1400
        %2066 = vmatpush1.bf16.msra.mxu0 %v1399
        %2067 = vmatprep.subr.bf16.mxu0 %v1404
        %2068 = vmatpush1.bf16.msra.mxu0 %v1403
        %2069 = vmatprep.subr.bf16.mxu0 %v1408
        %2070 = vmatpush1.bf16.msra.mxu0 %v1407
        %2071 = vmatprep.subr.bf16.mxu0 %v1412
        %2072 = vmatpush1.bf16.msra.mxu0 %v1411
        %2073 = vmatprep.subr.bf16.mxu0 %v1416
        %2074 = vmatpush1.bf16.msra.mxu0 %v1415
        %2075 = vmatprep.subr.bf16.mxu0 %v1420
        %2076 = vmatpush1.bf16.msra.mxu0 %v1419
        %2077 = vmatprep.subr.bf16.mxu0 %v1424
        %2078 = vmatpush1.bf16.msra.mxu0 %v1423
        %2079 = vmatprep.subr.bf16.mxu0 %v1428
        %2080 = vmatpush1.bf16.msra.mxu0 %v1427
        %2081 = vmatprep.mubr.bf16.mxu0 %v582
        %2082 = vmatmul.mubr.bf16.gmra.mrb[0].mxu0 %v581
        %v2083 = vpop.f32.mrb[0].mxu0
        %v2084 = vadd.f32 0.0, %v2083
        %v2085 = vpop.f32.mrb[0].mxu0
        %v2086 = vadd.f32 0.0, %v2085
        %v2087 = vpop.f32.mrb[0].mxu0
        %v2088 = vadd.f32 0.0, %v2087
        %v2089 = vpop.f32.mrb[0].mxu0
        %v2090 = vadd.f32 0.0, %v2089
        %2091 = vdwg.mxu0
        %2092 = vmatprep.subr.bf16.mxu0 %v1432
        %2093 = vmatpush1.bf16.msra.mxu0 %v1431
        %2094 = vmatprep.subr.bf16.mxu0 %v1436
        %2095 = vmatpush1.bf16.msra.mxu0 %v1435
        %2096 = vmatprep.subr.bf16.mxu0 %v1440
        %2097 = vmatpush1.bf16.msra.mxu0 %v1439
        %2098 = vmatprep.subr.bf16.mxu0 %v1444
        %2099 = vmatpush1.bf16.msra.mxu0 %v1443
        %2100 = vmatprep.subr.bf16.mxu0 %v1448
        %2101 = vmatpush1.bf16.msra.mxu0 %v1447
        %2102 = vmatprep.subr.bf16.mxu0 %v1452
        %2103 = vmatpush1.bf16.msra.mxu0 %v1451
        %2104 = vmatprep.subr.bf16.mxu0 %v1456
        %2105 = vmatpush1.bf16.msra.mxu0 %v1455
        %2106 = vmatprep.subr.bf16.mxu0 %v1460
        %2107 = vmatpush1.bf16.msra.mxu0 %v1459
        %2108 = vmatprep.subr.bf16.mxu0 %v1464
        %2109 = vmatpush1.bf16.msra.mxu0 %v1463
        %2110 = vmatprep.subr.bf16.mxu0 %v1468
        %2111 = vmatpush1.bf16.msra.mxu0 %v1467
        %2112 = vmatprep.subr.bf16.mxu0 %v1472
        %2113 = vmatpush1.bf16.msra.mxu0 %v1471
        %2114 = vmatprep.subr.bf16.mxu0 %v1476
        %2115 = vmatpush1.bf16.msra.mxu0 %v1475
        %2116 = vmatprep.subr.bf16.mxu0 %v1480
        %2117 = vmatpush1.bf16.msra.mxu0 %v1479
        %2118 = vmatprep.subr.bf16.mxu0 %v1484
        %2119 = vmatpush1.bf16.msra.mxu0 %v1483
        %2120 = vmatprep.subr.bf16.mxu0 %v1488
        %2121 = vmatpush1.bf16.msra.mxu0 %v1487
        %2122 = vmatprep.subr.bf16.mxu0 %v1492
        %2123 = vmatpush1.bf16.msra.mxu0 %v1491
        %2124 = vmatprep.mubr.bf16.mxu0 %v584
        %2125 = vmatmul.mubr.bf16.gmra.mrb[0].mxu0 %v583
        %v2126 = vpop.f32.mrb[0].mxu0
        %v2127 = vadd.f32 %v2084, %v2126
        %v2128 = vpop.f32.mrb[0].mxu0
        %v2129 = vadd.f32 %v2086, %v2128
        %v2130 = vpop.f32.mrb[0].mxu0
        %v2131 = vadd.f32 %v2088, %v2130
        %v2132 = vpop.f32.mrb[0].mxu0
        %v2133 = vadd.f32 %v2090, %v2132
        %2134 = vdwg.mxu0
        %2135 = vmatprep.subr.bf16.mxu0 %v1496
        %2136 = vmatpush1.bf16.msra.mxu0 %v1495
        %2137 = vmatprep.subr.bf16.mxu0 %v1500
        %2138 = vmatpush1.bf16.msra.mxu0 %v1499
        %2139 = vmatprep.subr.bf16.mxu0 %v1504
        %2140 = vmatpush1.bf16.msra.mxu0 %v1503
        %2141 = vmatprep.subr.bf16.mxu0 %v1508
        %2142 = vmatpush1.bf16.msra.mxu0 %v1507
        %2143 = vmatprep.subr.bf16.mxu0 %v1512
        %2144 = vmatpush1.bf16.msra.mxu0 %v1511
        %2145 = vmatprep.subr.bf16.mxu0 %v1516
        %2146 = vmatpush1.bf16.msra.mxu0 %v1515
        %2147 = vmatprep.subr.bf16.mxu0 %v1520
        %2148 = vmatpush1.bf16.msra.mxu0 %v1519
        %2149 = vmatprep.subr.bf16.mxu0 %v1524
        %2150 = vmatpush1.bf16.msra.mxu0 %v1523
        %2151 = vmatprep.subr.bf16.mxu0 %v1528
        %2152 = vmatpush1.bf16.msra.mxu0 %v1527
        %2153 = vmatprep.subr.bf16.mxu0 %v1532
        %2154 = vmatpush1.bf16.msra.mxu0 %v1531
        %2155 = vmatprep.subr.bf16.mxu0 %v1536
        %2156 = vmatpush1.bf16.msra.mxu0 %v1535
        %2157 = vmatprep.subr.bf16.mxu0 %v1540
        %2158 = vmatpush1.bf16.msra.mxu0 %v1539
        %2159 = vmatprep.subr.bf16.mxu0 %v1544
        %2160 = vmatpush1.bf16.msra.mxu0 %v1543
        %2161 = vmatprep.subr.bf16.mxu0 %v1548
        %2162 = vmatpush1.bf16.msra.mxu0 %v1547
        %2163 = vmatprep.subr.bf16.mxu0 %v1552
        %2164 = vmatpush1.bf16.msra.mxu0 %v1551
        %2165 = vmatprep.subr.bf16.mxu0 %v1556
        %2166 = vmatpush1.bf16.msra.mxu0 %v1555
        %2167 = vmatprep.mubr.bf16.mxu0 %v586
        %2168 = vmatmul.mubr.bf16.gmra.mrb[0].mxu0 %v585
        %v2169 = vpop.f32.mrb[0].mxu0
        %v2170 = vadd.f32 %v2127, %v2169
        %v2171 = vpop.f32.mrb[0].mxu0
        %v2172 = vadd.f32 %v2129, %v2171
        %v2173 = vpop.f32.mrb[0].mxu0
        %v2174 = vadd.f32 %v2131, %v2173
        %v2175 = vpop.f32.mrb[0].mxu0
        %v2176 = vadd.f32 %v2133, %v2175
        %2177 = vdwg.mxu0
        %2178 = vmatprep.subr.bf16.mxu0 %v1560
        %2179 = vmatpush1.bf16.msra.mxu0 %v1559
        %2180 = vmatprep.subr.bf16.mxu0 %v1564
        %2181 = vmatpush1.bf16.msra.mxu0 %v1563
        %2182 = vmatprep.subr.bf16.mxu0 %v1568
        %2183 = vmatpush1.bf16.msra.mxu0 %v1567
        %2184 = vmatprep.subr.bf16.mxu0 %v1572
        %2185 = vmatpush1.bf16.msra.mxu0 %v1571
        %2186 = vmatprep.subr.bf16.mxu0 %v1576
        %2187 = vmatpush1.bf16.msra.mxu0 %v1575
        %2188 = vmatprep.subr.bf16.mxu0 %v1580
        %2189 = vmatpush1.bf16.msra.mxu0 %v1579
        %2190 = vmatprep.subr.bf16.mxu0 %v1584
        %2191 = vmatpush1.bf16.msra.mxu0 %v1583
        %2192 = vmatprep.subr.bf16.mxu0 %v1588
        %2193 = vmatpush1.bf16.msra.mxu0 %v1587
        %2194 = vmatprep.subr.bf16.mxu0 %v1592
        %2195 = vmatpush1.bf16.msra.mxu0 %v1591
        %2196 = vmatprep.subr.bf16.mxu0 %v1596
        %2197 = vmatpush1.bf16.msra.mxu0 %v1595
        %2198 = vmatprep.subr.bf16.mxu0 %v1600
        %2199 = vmatpush1.bf16.msra.mxu0 %v1599
        %2200 = vmatprep.subr.bf16.mxu0 %v1604
        %2201 = vmatpush1.bf16.msra.mxu0 %v1603
        %2202 = vmatprep.subr.bf16.mxu0 %v1608
        %2203 = vmatpush1.bf16.msra.mxu0 %v1607
        %2204 = vmatprep.subr.bf16.mxu0 %v1612
        %2205 = vmatpush1.bf16.msra.mxu0 %v1611
        %2206 = vmatprep.subr.bf16.mxu0 %v1616
        %2207 = vmatpush1.bf16.msra.mxu0 %v1615
        %2208 = vmatprep.subr.bf16.mxu0 %v1620
        %2209 = vmatpush1.bf16.msra.mxu0 %v1619
        %2210 = vmatprep.mubr.bf16.mxu0 %v588
        %2211 = vmatmul.mubr.bf16.gmra.mrb[0].mxu0 %v587
        %v2212 = vpop.f32.mrb[0].mxu0
        %v2213 = vadd.f32 %v2170, %v2212
        %v2214 = vpop.f32.mrb[0].mxu0
        %v2215 = vadd.f32 %v2172, %v2214
        %v2216 = vpop.f32.mrb[0].mxu0
        %v2217 = vadd.f32 %v2174, %v2216
        %v2218 = vpop.f32.mrb[0].mxu0
        %v2219 = vadd.f32 %v2176, %v2218
        %2220 = vdwg.mxu0
        %v2221 = vadd.f32 %v285, %v2041
        %v2222 = vadd.f32 %v286, %v2043
        %v2223 = vadd.f32 %v287, %v2213
        %v2224 = vadd.f32 %v288, %v2215
        %v2225 = vadd.f32 %v289, %v2045
        %v2226 = vadd.f32 %v290, %v2047
        %v2227 = vadd.f32 %v291, %v2217
        %v2228 = vadd.f32 %v292, %v2219
        %2229 = vst [vmem:[#allocation2] sm:$0xff] %v2221
        %2230 = vst [vmem:[#allocation2 + $0x8] sm:$0xff] %v2222
        %2231 = vst [vmem:[#allocation2 + $0x10] sm:$0xff] %v2223
        %2232 = vst [vmem:[#allocation2 + $0x18] sm:$0xff] %v2224
        %2233 = vst [vmem:[#allocation2 + $0x20] sm:$0x1] %v2225
        %2234 = vst [vmem:[#allocation2 + $0x28] sm:$0x1] %v2226
        %2235 = vst [vmem:[#allocation2 + $0x30] sm:$0x1] %v2227
        %2236 = vst [vmem:[#allocation2 + $0x38] sm:$0x1] %v2228
        %p2237 = scmp.eq.s32.totalorder %s21, 3
        // Predicated region
        $region60: #{discriminator_forward.8} parent=50 // pred_check
          %p2238 = pneg %p2237
        $region61: #{discriminator_forward.8} parent=50 // pred_check_branch
          %2240 = sbr.rel (%p2238) target = $region63
        $region62: #{discriminator_forward.8} parent=50 // pred_region
          %v2241 = vld [vmem:[#allocation2] sm:$0xff]
          %v2242 = vld [vmem:[#allocation2 + $0x8] sm:$0xff]
          %v2243 = vld [vmem:[#allocation2 + $0x10] sm:$0xff]
          %v2244 = vld [vmem:[#allocation2 + $0x18] sm:$0xff]
          %v2245 = vld [vmem:[#allocation2 + $0x20] sm:$0x1]
          %v2246 = vld [vmem:[#allocation2 + $0x28] sm:$0x1]
          %v2247 = vld [vmem:[#allocation2 + $0x30] sm:$0x1]
          %v2248 = vld [vmem:[#allocation2 + $0x38] sm:$0x1]
          %v2249 = vld [vmem:[%s2] sm:$0xf]
          %v2251 = vlaneseq
          %v2252 = vshrl.u32 %v2251, 7
          %v2253 = vsub.s32 0, %v2252
          %v2254 = vrot.slane %v2249, %v2253
          %v2255 = vlaneseq
          %v2256 = vshrl.u32 %v2255, 7
          %v2257 = vsub.s32 1, %v2256
          %v2258 = vrot.slane %v2249, %v2257
          %v2259 = vlaneseq
          %v2260 = vshrl.u32 %v2259, 7
          %v2261 = vsub.s32 2, %v2260
          %v2262 = vrot.slane %v2249, %v2261
          %v2263 = vlaneseq
          %v2264 = vshrl.u32 %v2263, 7
          %v2265 = vsub.s32 3, %v2264
          %v2266 = vrot.slane %v2249, %v2265
          %v2271 = vadd.f32 %v2241, %v2254
          %v2272 = vadd.f32 %v2242, %v2258
          %v2273 = vadd.f32 %v2243, %v2262
          %v2274 = vadd.f32 %v2244, %v2266
          %v2275 = vadd.f32 %v2245, %v2254
          %v2276 = vadd.f32 %v2246, %v2258
          %v2277 = vadd.f32 %v2247, %v2262
          %v2278 = vadd.f32 %v2248, %v2266
          %vm2279 = vcmask 1040384
          %v2280 = vsel %vm2279, %v2275, 0.0
          %v2281 = vadd.f32 %v2271, %v2280
          %v2282 = vrot.slane %v2281, 4
          %v2283 = vadd.f32 %v2281, %v2282
          %v2284 = vrot.slane %v2283, 2
          %v2285 = vadd.f32 %v2283, %v2284
          %v2286 = vrot.slane %v2285, 1
          %v2287 = vadd.f32 %v2285, %v2286
          %v2288 = vsel %vm2279, %v2276, 0.0
          %v2289 = vadd.f32 %v2272, %v2288
          %v2290 = vrot.slane %v2289, 4
          %v2291 = vadd.f32 %v2289, %v2290
          %v2292 = vrot.slane %v2291, 2
          %v2293 = vadd.f32 %v2291, %v2292
          %v2294 = vrot.slane %v2293, 1
          %v2295 = vadd.f32 %v2293, %v2294
          %v2296 = vsel %vm2279, %v2277, 0.0
          %v2297 = vadd.f32 %v2273, %v2296
          %v2298 = vrot.slane %v2297, 4
          %v2299 = vadd.f32 %v2297, %v2298
          %v2300 = vrot.slane %v2299, 2
          %v2301 = vadd.f32 %v2299, %v2300
          %v2302 = vrot.slane %v2301, 1
          %v2303 = vadd.f32 %v2301, %v2302
          %v2304 = vsel %vm2279, %v2278, 0.0
          %v2305 = vadd.f32 %v2274, %v2304
          %v2306 = vrot.slane %v2305, 4
          %v2307 = vadd.f32 %v2305, %v2306
          %v2308 = vrot.slane %v2307, 2
          %v2309 = vadd.f32 %v2307, %v2308
          %v2310 = vrot.slane %v2309, 1
          %v2311 = vadd.f32 %v2309, %v2310
          %v2312 = vrcp.pop 9.0
          %v2313 = vmul.f32 %v2287, %v2312
          %v2314 = vmul.f32 %v2295, %v2312
          %v2315 = vmul.f32 %v2303, %v2312
          %v2316 = vmul.f32 %v2311, %v2312
          %v2317 = vsub.f32 %v2271, %v2313
          %v2318 = vsub.f32 %v2272, %v2314
          %v2319 = vsub.f32 %v2273, %v2315
          %v2320 = vsub.f32 %v2274, %v2316
          %v2321 = vsub.f32 %v2275, %v2313
          %v2322 = vsub.f32 %v2276, %v2314
          %v2323 = vsub.f32 %v2277, %v2315
          %v2324 = vsub.f32 %v2278, %v2316
          %v2325 = vmul.f32 %v2317, %v2317
          %v2326 = vmul.f32 %v2318, %v2318
          %v2327 = vmul.f32 %v2319, %v2319
          %v2328 = vmul.f32 %v2320, %v2320
          %v2329 = vmul.f32 %v2321, %v2321
          %v2330 = vmul.f32 %v2322, %v2322
          %v2331 = vmul.f32 %v2323, %v2323
          %v2332 = vmul.f32 %v2324, %v2324
          %v2333 = vsel %vm2279, %v2329, 0.0
          %v2334 = vadd.f32 %v2325, %v2333
          %v2335 = vrot.slane %v2334, 4
          %v2336 = vadd.f32 %v2334, %v2335
          %v2337 = vrot.slane %v2336, 2
          %v2338 = vadd.f32 %v2336, %v2337
          %v2339 = vrot.slane %v2338, 1
          %v2340 = vadd.f32 %v2338, %v2339
          %v2341 = vsel %vm2279, %v2330, 0.0
          %v2342 = vadd.f32 %v2326, %v2341
          %v2343 = vrot.slane %v2342, 4
          %v2344 = vadd.f32 %v2342, %v2343
          %v2345 = vrot.slane %v2344, 2
          %v2346 = vadd.f32 %v2344, %v2345
          %v2347 = vrot.slane %v2346, 1
          %v2348 = vadd.f32 %v2346, %v2347
          %v2349 = vsel %vm2279, %v2331, 0.0
          %v2350 = vadd.f32 %v2327, %v2349
          %v2351 = vrot.slane %v2350, 4
          %v2352 = vadd.f32 %v2350, %v2351
          %v2353 = vrot.slane %v2352, 2
          %v2354 = vadd.f32 %v2352, %v2353
          %v2355 = vrot.slane %v2354, 1
          %v2356 = vadd.f32 %v2354, %v2355
          %v2357 = vsel %vm2279, %v2332, 0.0
          %v2358 = vadd.f32 %v2328, %v2357
          %v2359 = vrot.slane %v2358, 4
          %v2360 = vadd.f32 %v2358, %v2359
          %v2361 = vrot.slane %v2360, 2
          %v2362 = vadd.f32 %v2360, %v2361
          %v2363 = vrot.slane %v2362, 1
          %v2364 = vadd.f32 %v2362, %v2363
          %v2365 = vmul.f32 %v2340, %v2312
          %v2366 = vmul.f32 %v2348, %v2312
          %v2367 = vmul.f32 %v2356, %v2312
          %v2368 = vmul.f32 %v2364, %v2312
          %v2369 = vadd.f32 %v2365, 1e-05
          %v2370 = vadd.f32 %v2366, 1e-05
          %v2371 = vadd.f32 %v2367, 1e-05
          %v2372 = vadd.f32 %v2368, 1e-05
          %v2373 = vrsqrt.pop %v2369
          %v2374 = vrsqrt.pop %v2370
          %v2375 = vrsqrt.pop %v2371
          %v2376 = vrsqrt.pop %v2372
          %v2377 = vmul.f32 %v2317, %v2373
          %v2378 = vmul.f32 %v2318, %v2374
          %v2379 = vmul.f32 %v2319, %v2375
          %v2380 = vmul.f32 %v2320, %v2376
          %v2381 = vmul.f32 %v2321, %v2373
          %v2382 = vmul.f32 %v2322, %v2374
          %v2383 = vmul.f32 %v2323, %v2375
          %v2384 = vmul.f32 %v2324, %v2376
          %v2385 = vmul.f32 %v2377, 0.2
          %v2386 = vmul.f32 %v2378, 0.2
          %v2387 = vmul.f32 %v2379, 0.2
          %v2388 = vmul.f32 %v2380, 0.2
          %v2389 = vmul.f32 %v2381, 0.2
          %v2390 = vmul.f32 %v2382, 0.2
          %v2391 = vmul.f32 %v2383, 0.2
          %v2392 = vmul.f32 %v2384, 0.2
          %v2393 = vmax.f32 %v2377, %v2385
          %v2394 = vmax.f32 %v2378, %v2386
          %v2395 = vmax.f32 %v2379, %v2387
          %v2396 = vmax.f32 %v2380, %v2388
          %v2397 = vmax.f32 %v2381, %v2389
          %v2398 = vmax.f32 %v2382, %v2390
          %v2399 = vmax.f32 %v2383, %v2391
          %v2400 = vmax.f32 %v2384, %v2392
          %v2401 = vpack.c.bf16 %v2397, %v2393
          %v2402 = vpack.c.bf16 %v2398, %v2394
          %v2403 = vpack.c.bf16 %v2399, %v2395
          %v2404 = vpack.c.bf16 %v2400, %v2396
          %v2409 = vunpack.c.l.b16 %v2401
          %v2410 = vunpack.c.l.b16 %v2402
          %v2411 = vunpack.c.l.b16 %v2403
          %v2412 = vunpack.c.l.b16 %v2404
          %v2413 = vunpack.c.h.b16 %v2401
          %v2414 = vunpack.c.h.b16 %v2402
          %v2415 = vunpack.c.h.b16 %v2403
          %v2416 = vunpack.c.h.b16 %v2404
          %v2417 = vpack.c.b16 %v2410, %v2409
          %v2418 = vpack.c.b16 %v2412, %v2411
          %v2419 = vpack.c.b16 %v2414, %v2413
          %v2420 = vpack.c.b16 %v2416, %v2415
          %2425 = vst [vmem:[%s271] sm:$0xff] %v2417
          %2426 = vst [vmem:[%s271 + $0x8] sm:$0xff] %v2418
          %vm2427 = vcmask 1040384
          %vm2428 = vsmask.f32 256
          %vm2429 = vmand %vm2427, %vm2428
          %vm2430 = vcmask 1044484
          %vm2431 = vsmask.f32 4352
          %vm2432 = vmand %vm2430, %vm2431
          %vm2433 = vmor %vm2432, %vm2429
          %v2434 = vld [vmem:[%s271 + $0x10] sm:$0x11]
          %v2435 = vsel %vm2433, %v2419, %v2434
          %2436 = vst [vmem:[%s271 + $0x10] sm:$0x11] %v2435
          %v2437 = vld [vmem:[%s271 + $0x18] sm:$0x11]
          %v2438 = vsel %vm2433, %v2420, %v2437
          %2439 = vst [vmem:[%s271 + $0x18] sm:$0x11] %v2438
        $region63: #{discriminator_forward.8} parent=50 // pred_fallthru
          _
        %s2440 = smul.u32 2, %s20
        %p2441 = scmp.lt.s32.totalorder %s19, 1
        %s2442 = scalar_select %p2441, %s19, 1
        %p2443 = scmp.lt.s32.totalorder %s2440, 1
        %s2444 = scalar_select %p2443, %s2440, 1
        %s2445 = smul.addr %s2444, 4
        %s2446 = smul.addr %s2442, 8
        %s2447 = sadd.s32 %s2445, %s2446
        %s2448 = smul.addr %s2447, 4
        %s2449 = scalar_lea.vmem %s3, %s2448
        // Predicated region
        $region64: #{discriminator_forward.8} parent=50 // pred_check
          %p2450 = pneg %p130
        $region65: #{discriminator_forward.8} parent=50 // pred_check_branch
          %2452 = sbr.rel (%p2450) target = $region67
        $region66: #{discriminator_forward.8} parent=50 // pred_region
          %s2453 = smul.u32 2, %s20
        $region67: #{discriminator_forward.8} parent=50 // pred_fallthru
          _
      $region51: #{discriminator_forward.8} parent=5 // pred_fallthru
        _
      %p2454 = scmp.le.s32.totalorder 2, %s9
      // Predicated region
      $region68: #{discriminator_forward.8} parent=5 // pred_check
        %p2455 = pneg %p2454
      $region69: #{discriminator_forward.8} parent=5 // pred_check_branch
        %2457 = sbr.rel (%p2455) target = $region71
      $region70: #{discriminator_forward.8} parent=5 // pred_region
        %s2458 = ssub.s32 %s9, 2
        // Predicated region
        $region72: #{discriminator_forward.8} parent=70 // pred_check
          %p2459 = pneg %p136
        $region73: #{discriminator_forward.8} parent=70 // pred_check_branch
          %2461 = sbr.rel (%p2459) target = $region75
        $region74: #{discriminator_forward.8} parent=70 // pred_region
          %s2462 = smul.u32 2, %s23
          %p2463 = scmp.lt.s32.totalorder %s22, 1
          %s2464 = scalar_select %p2463, %s22, 1
          %p2465 = scmp.lt.s32.totalorder %s2462, 1
          %s2466 = scalar_select %p2465, %s2462, 1
          %s2467 = smul.addr %s2466, 4
          %s2468 = smul.addr %s2464, 8
          %s2469 = sadd.s32 %s2467, %s2468
          %s2470 = smul.addr %s2469, 4
          %s2471 = scalar_lea.vmem %s3, %s2470
        $region75: #{discriminator_forward.8} parent=70 // pred_fallthru
          _
      $region71: #{discriminator_forward.8} parent=5 // pred_fallthru
        _
    $region6: #{discriminator_forward.8} parent=1 // loop_footer
      %s13 = sadd.s32 1, %s9
    $region7: #{discriminator_forward.8} parent=1 // loop_footer_branch
      %8 = sbr.rel target = $region3
    $region8: #{discriminator_forward.8} parent=1 // loop_exit
      _

// kernel: discriminator_forward.9
$region0: #{discriminator_forward.9}
  #allocation0 [shape = 'u32[]', space=smem, size = 0x4, offset = 0x4, fixed_abs, tag = 'smem constant byte address 0x4 - core index']
  #allocation1 [shape = 'u32[144,128]{1,0:T(1,128)}', space=vmem, size = 0x12000, scoped, tag = 'internal scratch']
  #allocation2 [shape = 'f32[4,128]{1,0:T(4,128)}', space=vmem, size = 0x800, scoped, tag = 'scratch operand']
  %s0 = inlined_call_operand.vmem [shape: bf16[2,4,8192], index: 0, kind: input, shape index: {}]
  %s1 = inlined_call_operand.vmem [shape: bf16[8192,128], index: 1, kind: input, shape index: {}]
  %s2 = inlined_call_operand.vmem [shape: f32[1,128], index: 2, kind: input, shape index: {}]
  %s3 = inlined_call_operand.vmem [shape: f32[2,4,128], index: 3, kind: output, shape index: {}]
  %s4 = sld [smem:[#allocation0]]
  $region53: #{discriminator_forward.9} parent=0
    _
  %s6 = ssub.s32 1, %s4
  %s7 = scalar_select 0, %s6, %s4
  loop: start=0, step=1, limit=18
  $region2: #{discriminator_forward.9} parent=0 // loop_pre_header
    _
  $region3: #{discriminator_forward.9} parent=0 // loop_header
    %s9 = sphi 0, %s13
    %p10 = scmp.ge.s32.totalorder %s9, 18
    %s16 = sphi 0, %s35
    %s17 = sphi 0, %s31
    %s18 = sphi 0, %s27
    %s19 = sphi 0, %s16
    %s20 = sphi 0, %s17
    %s21 = sphi 0, %s18
    %s22 = sphi 0, %s19
    %s23 = sphi 0, %s20
    %s24 = sphi 0, %s21
    %s42 = sphi 0, %s44
    %s45 = sphi 0, %s42
    %s46 = sphi 0, %s45
    %s62 = sphi 0, %s46
    %s68 = sphi 0, %s70
    %s71 = sphi 0, %s68
    %s72 = sphi 0, %s71
    %s88 = sphi 0, %s72
    %s92 = sphi 0, %s92
    %s94 = sphi 0, %s92
    %s95 = sphi 0, %s94
    %s109 = sphi 0, %s95
    %s117 = sphi 0, %s119
    %s120 = sphi 0, %s117
    %s121 = sphi 0, %s120
    %s137 = sphi 0, %s121
  $region4: #{discriminator_forward.9} parent=0 // loop_header_branch
    %12 = sbr.rel (%p10) target = $region8
  $region5: #{discriminator_forward.9} parent=0 // loop_body
    %s14 = ssub.s32 %s9, 1
    %s15 = ssub.s32 %s9, 2
    %s25 = sadd.s32 1, %s18
    %p26 = scmp.ge.s32.totalorder %s25, 8
    %s27 = scalar_select %p26, 0, %s25
    %s28 = sadd.s32 1, %s17
    %s29 = scalar_select %p26, %s28, %s17
    %p30 = scmp.ge.s32.totalorder %s29, 1
    %s31 = scalar_select %p30, 0, %s29
    %s32 = sadd.s32 1, %s16
    %s33 = scalar_select %p30, %s32, %s16
    %p34 = scmp.ge.s32.totalorder %s33, 2
    %s35 = scalar_select %p34, 0, %s33
    %s36 = ssub.s32 %s16, %s35
    %s37 = ssub.s32 %s17, %s31
    %s38 = sor.u32 %s36, %s37
    %s39 = ssub.s32 %s18, %s27
    %s40 = sor.u32 %s38, %s39
    %p41 = scmp.eq.s32.totalorder %s40, 0
    %s43 = sadd.s32 %s42, 1
    %s44 = scalar_select %p41, %s42, %s43
    %p47 = pneg %p41
    %p48 = scmp.eq.s32.totalorder %s9, 15
    %p49 = por %p47, %p48
    %p50 = scmp.ne.s32.totalorder %s42, %s45
    %p51 = scmp.eq.s32.totalorder %s9, 0
    %p52 = por %p50, %p51
    %p53 = scmp.ne.s32.totalorder %s42, %s45
    %p54 = scmp.eq.s32.totalorder %s14, 15
    %p55 = por %p53, %p54
    %p56 = scmp.ne.s32.totalorder %s45, %s46
    %p57 = scmp.eq.s32.totalorder %s14, 0
    %p58 = por %p56, %p57
    %p59 = scmp.ne.s32.totalorder %s45, %s46
    %p60 = scmp.eq.s32.totalorder %s15, 15
    %p61 = por %p59, %p60
    %p63 = scmp.ne.s32.totalorder %s46, %s62
    %p64 = scmp.eq.s32.totalorder %s15, 0
    %p65 = por %p63, %p64
    %s66 = ssub.s32 %s18, %s27
    %p67 = scmp.eq.s32.totalorder %s66, 0
    %s69 = sadd.s32 %s68, 1
    %s70 = scalar_select %p67, %s68, %s69
    %p73 = pneg %p67
    %p74 = scmp.eq.s32.totalorder %s9, 15
    %p75 = por %p73, %p74
    %p76 = scmp.ne.s32.totalorder %s68, %s71
    %p77 = scmp.eq.s32.totalorder %s9, 0
    %p78 = por %p76, %p77
    %p79 = scmp.ne.s32.totalorder %s68, %s71
    %p80 = scmp.eq.s32.totalorder %s14, 15
    %p81 = por %p79, %p80
    %p82 = scmp.ne.s32.totalorder %s71, %s72
    %p83 = scmp.eq.s32.totalorder %s14, 0
    %p84 = por %p82, %p83
    %p85 = scmp.ne.s32.totalorder %s71, %s72
    %p86 = scmp.eq.s32.totalorder %s15, 15
    %p87 = por %p85, %p86
    %p89 = scmp.ne.s32.totalorder %s72, %s88
    %p90 = scmp.eq.s32.totalorder %s15, 0
    %p91 = por %p89, %p90
    %s93 = sadd.s32 %s92, 1
    %p96 = scmp.eq.s32.totalorder %s9, 15
    %p97 = scmp.ne.s32.totalorder %s92, %s94
    %p98 = scmp.eq.s32.totalorder %s9, 0
    %p99 = por %p97, %p98
    %p100 = scmp.ne.s32.totalorder %s92, %s94
    %p101 = scmp.eq.s32.totalorder %s14, 15
    %p102 = por %p100, %p101
    %p103 = scmp.ne.s32.totalorder %s94, %s95
    %p104 = scmp.eq.s32.totalorder %s14, 0
    %p105 = por %p103, %p104
    %p106 = scmp.ne.s32.totalorder %s94, %s95
    %p107 = scmp.eq.s32.totalorder %s15, 15
    %p108 = por %p106, %p107
    %p110 = scmp.ne.s32.totalorder %s95, %s109
    %p111 = scmp.eq.s32.totalorder %s15, 0
    %p112 = por %p110, %p111
    %s113 = ssub.s32 %s16, %s35
    %s114 = ssub.s32 %s17, %s31
    %s115 = sor.u32 %s113, %s114
    %p116 = scmp.eq.s32.totalorder %s115, 0
    %s118 = sadd.s32 %s117, 1
    %s119 = scalar_select %p116, %s117, %s118
    %p122 = pneg %p116
    %p123 = scmp.eq.s32.totalorder %s9, 15
    %p124 = por %p122, %p123
    %p125 = scmp.ne.s32.totalorder %s117, %s120
    %p126 = scmp.eq.s32.totalorder %s9, 0
    %p127 = por %p125, %p126
    %p128 = scmp.ne.s32.totalorder %s117, %s120
    %p129 = scmp.eq.s32.totalorder %s14, 15
    %p130 = por %p128, %p129
    %p131 = scmp.ne.s32.totalorder %s120, %s121
    %p132 = scmp.eq.s32.totalorder %s14, 0
    %p133 = por %p131, %p132
    %p134 = scmp.ne.s32.totalorder %s120, %s121
    %p135 = scmp.eq.s32.totalorder %s15, 15
    %p136 = por %p134, %p135
    %p138 = scmp.ne.s32.totalorder %s121, %s137
    %p139 = scmp.eq.s32.totalorder %s15, 0
    %p140 = por %p138, %p139
    %p141 = scmp.le.s32.totalorder 1, %s9
    %p142 = scmp.lt.s32.totalorder %s9, 17
    %p143 = pnand %p141, %p142
    %p144 = pneg %p143
    // Predicated region
    $region9: #{discriminator_forward.9} parent=5 // pred_check
      _
    $region10: #{discriminator_forward.9} parent=5 // pred_check_branch
      %146 = sbr.rel (%p143) target = $region12
    $region11: #{discriminator_forward.9} parent=5 // pred_region
      %s147 = ssub.s32 %s9, 1
      // Predicated region
      $region13: #{discriminator_forward.9} parent=11 // pred_check
        %p148 = pneg %p105
      $region14: #{discriminator_forward.9} parent=11 // pred_check_branch
        %150 = sbr.rel (%p148) target = $region16
      $region15: #{discriminator_forward.9} parent=11 // pred_region
        _
      $region16: #{discriminator_forward.9} parent=11 // pred_fallthru
        _
    $region12: #{discriminator_forward.9} parent=5 // pred_fallthru
      _
    %p151 = scmp.lt.s32.totalorder %s9, 16
    // Predicated region
    $region17: #{discriminator_forward.9} parent=5 // pred_check
      %p152 = pneg %p151
    $region18: #{discriminator_forward.9} parent=5 // pred_check_branch
      %154 = sbr.rel (%p152) target = $region20
    $region19: #{discriminator_forward.9} parent=5 // pred_region
      // Predicated region
      $region21: #{discriminator_forward.9} parent=19 // pred_check
        %p155 = pneg %p52
      $region22: #{discriminator_forward.9} parent=19 // pred_check_branch
        %157 = sbr.rel (%p155) target = $region24
      $region23: #{discriminator_forward.9} parent=19 // pred_region
        %s158 = smul.u32 8, %s18
        %p159 = scmp.lt.s32.totalorder %s16, 1
        %s160 = scalar_select %p159, %s16, 1
        %p161 = scmp.lt.s32.totalorder %s17, 0
        %s162 = scalar_select %p161, %s17, 0
        %p163 = scmp.lt.s32.totalorder %s158, 63
        %s164 = scalar_select %p163, %s158, 63
        %s165 = smul.addr %s162, 64
        %s166 = sadd.s32 %s164, %s165
        %s167 = smul.addr %s160, 64
        %s168 = sadd.s32 %s166, %s167
        %s169 = smul.addr %s168, 2
        %s170 = scalar_lea.vmem %s0, %s169
        %s171 = smul.u32 8, %s18
      $region24: #{discriminator_forward.9} parent=19 // pred_fallthru
        _
      // Predicated region
      $region25: #{discriminator_forward.9} parent=19 // pred_check
        %p172 = pneg %p78
      $region26: #{discriminator_forward.9} parent=19 // pred_check_branch
        %174 = sbr.rel (%p172) target = $region28
      $region27: #{discriminator_forward.9} parent=19 // pred_region
        %s175 = smul.u32 128, %s18
        %p176 = scmp.lt.s32.totalorder %s175, 1023
        %s177 = scalar_select %p176, %s175, 1023
        %s178 = smul.addr %s177, 4
        %s179 = scalar_lea.vmem %s1, %s178
        %s180 = smul.u32 128, %s18
      $region28: #{discriminator_forward.9} parent=19 // pred_fallthru
        _
    $region20: #{discriminator_forward.9} parent=5 // pred_fallthru
      _
    %p181 = scmp.le.s32.totalorder 1, %s9
    %p182 = scmp.lt.s32.totalorder %s9, 17
    %p183 = pnand %p181, %p182
    %p184 = pneg %p183
    // Predicated region
    $region29: #{discriminator_forward.9} parent=5 // pred_check
      _
    $region30: #{discriminator_forward.9} parent=5 // pred_check_branch
      %186 = sbr.rel (%p183) target = $region32
    $region31: #{discriminator_forward.9} parent=5 // pred_region
      %s187 = ssub.s32 %s9, 1
      %s188 = smul.u32 8, %s21
      %p189 = scmp.lt.s32.totalorder %s19, 1
      %s190 = scalar_select %p189, %s19, 1
      %p191 = scmp.lt.s32.totalorder %s20, 0
      %s192 = scalar_select %p191, %s20, 0
      %p193 = scmp.lt.s32.totalorder %s188, 63
      %s194 = scalar_select %p193, %s188, 63
      %s195 = smul.addr %s192, 64
      %s196 = sadd.s32 %s194, %s195
      %s197 = smul.addr %s190, 64
      %s198 = sadd.s32 %s196, %s197
      %s199 = smul.addr %s198, 2
      %s200 = scalar_lea.vmem %s0, %s199
      %p201 = pneg %p58
      %p202 = pneg %p55
      %s203 = smul.u32 128, %s21
      %p204 = scmp.lt.s32.totalorder %s203, 1023
      %s205 = scalar_select %p204, %s203, 1023
      %s206 = smul.addr %s205, 4
      %s207 = scalar_lea.vmem %s1, %s206
      %p208 = pneg %p84
      %p209 = pneg %p81
      %p210 = pneg %p105
      %p211 = pneg %p102
      %p212 = pneg %p133
      %p213 = pneg %p130
      %p214 = scmp.lt.s32.totalorder %s19, 1
      %s215 = scalar_select %p214, %s19, 1
      %p216 = scmp.lt.s32.totalorder %s20, 0
      %s217 = scalar_select %p216, %s20, 0
      %s218 = sadd.s32 %s217, %s215
      %s219 = smul.addr %s218, 4
      %s220 = scalar_lea.vmem %s3, %s219
      %s221 = smul.u32 8, %s21
      %p222 = scmp.lt.s32.totalorder %s19, 1
      %s223 = scalar_select %p222, %s19, 1
      %p224 = scmp.lt.s32.totalorder %s20, 0
      %s225 = scalar_select %p224, %s20, 0
      %p226 = scmp.lt.s32.totalorder %s221, 63
      %s227 = scalar_select %p226, %s221, 63
      %s228 = smul.addr %s225, 64
      %s229 = sadd.s32 %s227, %s228
      %s230 = smul.addr %s223, 64
      %s231 = sadd.s32 %s229, %s230
      %s232 = smul.addr %s231, 2
      %s233 = scalar_lea.vmem %s0, %s232
      %s234 = smul.u32 8, %s21
      %s235 = smul.u32 128, %s21
      %p236 = scmp.lt.s32.totalorder %s235, 1023
      %s237 = scalar_select %p236, %s235, 1023
      %s238 = smul.addr %s237, 4
      %s239 = scalar_lea.vmem %s1, %s238
      %s240 = smul.u32 128, %s21
      %p241 = scmp.lt.s32.totalorder %s19, 1
      %s242 = scalar_select %p241, %s19, 1
      %p243 = scmp.lt.s32.totalorder %s20, 0
      %s244 = scalar_select %p243, %s20, 0
      %s245 = sadd.s32 %s244, %s242
      %s246 = smul.addr %s245, 4
      %s247 = scalar_lea.vmem %s3, %s246
      %p249 = scmp.eq.s32.totalorder %s21, 0
      // Predicated region
      $region33: #{discriminator_forward.9} parent=31 // pred_check
        %p250 = pneg %p249
      $region34: #{discriminator_forward.9} parent=31 // pred_check_branch
        %252 = sbr.rel (%p250) target = $region36
      $region35: #{discriminator_forward.9} parent=31 // pred_region
        %253 = vst [vmem:[#allocation2] sm:$0xf] 0.0
      $region36: #{discriminator_forward.9} parent=31 // pred_fallthru
        _
      %v254 = vld [vmem:[#allocation2] sm:$0xf]
      %v255 = vld [vmem:[%s233] sm:$0xff]
      %v256 = vld [vmem:[%s233 + $0x8] sm:$0xff]
      %v257 = vld [vmem:[%s239] sm:$0xf]
      %v258 = vld [vmem:[%s239 + $0x4] sm:$0xf]
      %v259 = vld [vmem:[%s239 + $0x8] sm:$0xf]
      %v260 = vld [vmem:[%s239 + $0xc] sm:$0xf]
      %v261 = vld [vmem:[%s239 + $0x10] sm:$0xf]
      %v262 = vld [vmem:[%s239 + $0x14] sm:$0xf]
      %v263 = vld [vmem:[%s239 + $0x18] sm:$0xf]
      %v264 = vld [vmem:[%s239 + $0x1c] sm:$0xf]
      %v265 = vld [vmem:[%s239 + $0x20] sm:$0xf]
      %v266 = vld [vmem:[%s239 + $0x24] sm:$0xf]
      %v267 = vld [vmem:[%s239 + $0x28] sm:$0xf]
      %v268 = vld [vmem:[%s239 + $0x2c] sm:$0xf]
      %v269 = vld [vmem:[%s239 + $0x30] sm:$0xf]
      %v270 = vld [vmem:[%s239 + $0x34] sm:$0xf]
      %v271 = vld [vmem:[%s239 + $0x38] sm:$0xf]
      %v272 = vld [vmem:[%s239 + $0x3c] sm:$0xf]
      %v273 = vld [vmem:[%s239 + $0x40] sm:$0xf]
      %v274 = vld [vmem:[%s239 + $0x44] sm:$0xf]
      %v275 = vld [vmem:[%s239 + $0x48] sm:$0xf]
      %v276 = vld [vmem:[%s239 + $0x4c] sm:$0xf]
      %v277 = vld [vmem:[%s239 + $0x50] sm:$0xf]
      %v278 = vld [vmem:[%s239 + $0x54] sm:$0xf]
      %v279 = vld [vmem:[%s239 + $0x58] sm:$0xf]
      %v280 = vld [vmem:[%s239 + $0x5c] sm:$0xf]
      %v281 = vld [vmem:[%s239 + $0x60] sm:$0xf]
      %v282 = vld [vmem:[%s239 + $0x64] sm:$0xf]
      %v283 = vld [vmem:[%s239 + $0x68] sm:$0xf]
      %v284 = vld [vmem:[%s239 + $0x6c] sm:$0xf]
      %v285 = vld [vmem:[%s239 + $0x70] sm:$0xf]
      %v286 = vld [vmem:[%s239 + $0x74] sm:$0xf]
      %v287 = vld [vmem:[%s239 + $0x78] sm:$0xf]
      %v288 = vld [vmem:[%s239 + $0x7c] sm:$0xf]
      %v289 = vld [vmem:[%s239 + $0x80] sm:$0xf]
      %v290 = vld [vmem:[%s239 + $0x84] sm:$0xf]
      %v291 = vld [vmem:[%s239 + $0x88] sm:$0xf]
      %v292 = vld [vmem:[%s239 + $0x8c] sm:$0xf]
      %v293 = vld [vmem:[%s239 + $0x90] sm:$0xf]
      %v294 = vld [vmem:[%s239 + $0x94] sm:$0xf]
      %v295 = vld [vmem:[%s239 + $0x98] sm:$0xf]
      %v296 = vld [vmem:[%s239 + $0x9c] sm:$0xf]
      %v297 = vld [vmem:[%s239 + $0xa0] sm:$0xf]
      %v298 = vld [vmem:[%s239 + $0xa4] sm:$0xf]
      %v299 = vld [vmem:[%s239 + $0xa8] sm:$0xf]
      %v300 = vld [vmem:[%s239 + $0xac] sm:$0xf]
      %v301 = vld [vmem:[%s239 + $0xb0] sm:$0xf]
      %v302 = vld [vmem:[%s239 + $0xb4] sm:$0xf]
      %v303 = vld [vmem:[%s239 + $0xb8] sm:$0xf]
      %v304 = vld [vmem:[%s239 + $0xbc] sm:$0xf]
      %v305 = vld [vmem:[%s239 + $0xc0] sm:$0xf]
      %v306 = vld [vmem:[%s239 + $0xc4] sm:$0xf]
      %v307 = vld [vmem:[%s239 + $0xc8] sm:$0xf]
      %v308 = vld [vmem:[%s239 + $0xcc] sm:$0xf]
      %v309 = vld [vmem:[%s239 + $0xd0] sm:$0xf]
      %v310 = vld [vmem:[%s239 + $0xd4] sm:$0xf]
      %v311 = vld [vmem:[%s239 + $0xd8] sm:$0xf]
      %v312 = vld [vmem:[%s239 + $0xdc] sm:$0xf]
      %v313 = vld [vmem:[%s239 + $0xe0] sm:$0xf]
      %v314 = vld [vmem:[%s239 + $0xe4] sm:$0xf]
      %v315 = vld [vmem:[%s239 + $0xe8] sm:$0xf]
      %v316 = vld [vmem:[%s239 + $0xec] sm:$0xf]
      %v317 = vld [vmem:[%s239 + $0xf0] sm:$0xf]
      %v318 = vld [vmem:[%s239 + $0xf4] sm:$0xf]
      %v319 = vld [vmem:[%s239 + $0xf8] sm:$0xf]
      %v320 = vld [vmem:[%s239 + $0xfc] sm:$0xf]
      %v321 = vld [vmem:[%s239 + $0x100] sm:$0xf]
      %v322 = vld [vmem:[%s239 + $0x104] sm:$0xf]
      %v323 = vld [vmem:[%s239 + $0x108] sm:$0xf]
      %v324 = vld [vmem:[%s239 + $0x10c] sm:$0xf]
      %v325 = vld [vmem:[%s239 + $0x110] sm:$0xf]
      %v326 = vld [vmem:[%s239 + $0x114] sm:$0xf]
      %v327 = vld [vmem:[%s239 + $0x118] sm:$0xf]
      %v328 = vld [vmem:[%s239 + $0x11c] sm:$0xf]
      %v329 = vld [vmem:[%s239 + $0x120] sm:$0xf]
      %v330 = vld [vmem:[%s239 + $0x124] sm:$0xf]
      %v331 = vld [vmem:[%s239 + $0x128] sm:$0xf]
      %v332 = vld [vmem:[%s239 + $0x12c] sm:$0xf]
      %v333 = vld [vmem:[%s239 + $0x130] sm:$0xf]
      %v334 = vld [vmem:[%s239 + $0x134] sm:$0xf]
      %v335 = vld [vmem:[%s239 + $0x138] sm:$0xf]
      %v336 = vld [vmem:[%s239 + $0x13c] sm:$0xf]
      %v337 = vld [vmem:[%s239 + $0x140] sm:$0xf]
      %v338 = vld [vmem:[%s239 + $0x144] sm:$0xf]
      %v339 = vld [vmem:[%s239 + $0x148] sm:$0xf]
      %v340 = vld [vmem:[%s239 + $0x14c] sm:$0xf]
      %v341 = vld [vmem:[%s239 + $0x150] sm:$0xf]
      %v342 = vld [vmem:[%s239 + $0x154] sm:$0xf]
      %v343 = vld [vmem:[%s239 + $0x158] sm:$0xf]
      %v344 = vld [vmem:[%s239 + $0x15c] sm:$0xf]
      %v345 = vld [vmem:[%s239 + $0x160] sm:$0xf]
      %v346 = vld [vmem:[%s239 + $0x164] sm:$0xf]
      %v347 = vld [vmem:[%s239 + $0x168] sm:$0xf]
      %v348 = vld [vmem:[%s239 + $0x16c] sm:$0xf]
      %v349 = vld [vmem:[%s239 + $0x170] sm:$0xf]
      %v350 = vld [vmem:[%s239 + $0x174] sm:$0xf]
      %v351 = vld [vmem:[%s239 + $0x178] sm:$0xf]
      %v352 = vld [vmem:[%s239 + $0x17c] sm:$0xf]
      %v353 = vld [vmem:[%s239 + $0x180] sm:$0xf]
      %v354 = vld [vmem:[%s239 + $0x184] sm:$0xf]
      %v355 = vld [vmem:[%s239 + $0x188] sm:$0xf]
      %v356 = vld [vmem:[%s239 + $0x18c] sm:$0xf]
      %v357 = vld [vmem:[%s239 + $0x190] sm:$0xf]
      %v358 = vld [vmem:[%s239 + $0x194] sm:$0xf]
      %v359 = vld [vmem:[%s239 + $0x198] sm:$0xf]
      %v360 = vld [vmem:[%s239 + $0x19c] sm:$0xf]
      %v361 = vld [vmem:[%s239 + $0x1a0] sm:$0xf]
      %v362 = vld [vmem:[%s239 + $0x1a4] sm:$0xf]
      %v363 = vld [vmem:[%s239 + $0x1a8] sm:$0xf]
      %v364 = vld [vmem:[%s239 + $0x1ac] sm:$0xf]
      %v365 = vld [vmem:[%s239 + $0x1b0] sm:$0xf]
      %v366 = vld [vmem:[%s239 + $0x1b4] sm:$0xf]
      %v367 = vld [vmem:[%s239 + $0x1b8] sm:$0xf]
      %v368 = vld [vmem:[%s239 + $0x1bc] sm:$0xf]
      %v369 = vld [vmem:[%s239 + $0x1c0] sm:$0xf]
      %v370 = vld [vmem:[%s239 + $0x1c4] sm:$0xf]
      %v371 = vld [vmem:[%s239 + $0x1c8] sm:$0xf]
      %v372 = vld [vmem:[%s239 + $0x1cc] sm:$0xf]
      %v373 = vld [vmem:[%s239 + $0x1d0] sm:$0xf]
      %v374 = vld [vmem:[%s239 + $0x1d4] sm:$0xf]
      %v375 = vld [vmem:[%s239 + $0x1d8] sm:$0xf]
      %v376 = vld [vmem:[%s239 + $0x1dc] sm:$0xf]
      %v377 = vld [vmem:[%s239 + $0x1e0] sm:$0xf]
      %v378 = vld [vmem:[%s239 + $0x1e4] sm:$0xf]
      %v379 = vld [vmem:[%s239 + $0x1e8] sm:$0xf]
      %v380 = vld [vmem:[%s239 + $0x1ec] sm:$0xf]
      %v381 = vld [vmem:[%s239 + $0x1f0] sm:$0xf]
      %v382 = vld [vmem:[%s239 + $0x1f4] sm:$0xf]
      %v383 = vld [vmem:[%s239 + $0x1f8] sm:$0xf]
      %v384 = vld [vmem:[%s239 + $0x1fc] sm:$0xf]
      %v387 = vcombine.high %v255, %v255
      %v389 = vunpack.c.l.s4 1983009808
      %v390 = vunpack.c.0.s8 %v389
      %v391 = vlaneseq
      %v392 = vshrl.u32 %v391, 7
      %v393 = vsub.s32 %v390, %v392
      %v394 = vrot.slane %v255, %v393
      %v396 = vunpack.c.l.s4 1983009808
      %v397 = vunpack.c.0.s8 %v396
      %v398 = vlaneseq
      %v399 = vshrl.u32 %v398, 7
      %v400 = vsub.s32 %v397, %v399
      %v401 = vrot.slane %v387, %v400
      %v402 = vcombine.high %v394, %v394
      %v403 = vcombine.high %v401, %v401
      %v404 = vcombine.high %v256, %v256
      %v406 = vunpack.c.l.s4 1983009808
      %v407 = vunpack.c.0.s8 %v406
      %v408 = vlaneseq
      %v409 = vshrl.u32 %v408, 7
      %v410 = vsub.s32 %v407, %v409
      %v411 = vrot.slane %v256, %v410
      %v413 = vunpack.c.l.s4 1983009808
      %v414 = vunpack.c.0.s8 %v413
      %v415 = vlaneseq
      %v416 = vshrl.u32 %v415, 7
      %v417 = vsub.s32 %v414, %v416
      %v418 = vrot.slane %v404, %v417
      %v419 = vcombine.high %v411, %v411
      %v420 = vcombine.high %v418, %v418
      %v557 = vunpack.c.l.b16 %v257
      %v558 = vunpack.c.l.b16 %v258
      %v559 = vunpack.c.l.b16 %v259
      %v560 = vunpack.c.l.b16 %v260
      %v561 = vunpack.c.l.b16 %v261
      %v562 = vunpack.c.l.b16 %v262
      %v563 = vunpack.c.l.b16 %v263
      %v564 = vunpack.c.l.b16 %v264
      %v565 = vunpack.c.l.b16 %v265
      %v566 = vunpack.c.l.b16 %v266
      %v567 = vunpack.c.l.b16 %v267
      %v568 = vunpack.c.l.b16 %v268
      %v569 = vunpack.c.l.b16 %v269
      %v570 = vunpack.c.l.b16 %v270
      %v571 = vunpack.c.l.b16 %v271
      %v572 = vunpack.c.l.b16 %v272
      %v573 = vunpack.c.l.b16 %v273
      %v574 = vunpack.c.l.b16 %v274
      %v575 = vunpack.c.l.b16 %v275
      %v576 = vunpack.c.l.b16 %v276
      %v577 = vunpack.c.l.b16 %v277
      %v578 = vunpack.c.l.b16 %v278
      %v579 = vunpack.c.l.b16 %v279
      %v580 = vunpack.c.l.b16 %v280
      %v581 = vunpack.c.l.b16 %v281
      %v582 = vunpack.c.l.b16 %v282
      %v583 = vunpack.c.l.b16 %v283
      %v584 = vunpack.c.l.b16 %v284
      %v585 = vunpack.c.l.b16 %v285
      %v586 = vunpack.c.l.b16 %v286
      %v587 = vunpack.c.l.b16 %v287
      %v588 = vunpack.c.l.b16 %v288
      %v589 = vunpack.c.l.b16 %v289
      %v590 = vunpack.c.l.b16 %v290
      %v591 = vunpack.c.l.b16 %v291
      %v592 = vunpack.c.l.b16 %v292
      %v593 = vunpack.c.l.b16 %v293
      %v594 = vunpack.c.l.b16 %v294
      %v595 = vunpack.c.l.b16 %v295
      %v596 = vunpack.c.l.b16 %v296
      %v597 = vunpack.c.l.b16 %v297
      %v598 = vunpack.c.l.b16 %v298
      %v599 = vunpack.c.l.b16 %v299
      %v600 = vunpack.c.l.b16 %v300
      %v601 = vunpack.c.l.b16 %v301
      %v602 = vunpack.c.l.b16 %v302
      %v603 = vunpack.c.l.b16 %v303
      %v604 = vunpack.c.l.b16 %v304
      %v605 = vunpack.c.l.b16 %v305
      %v606 = vunpack.c.l.b16 %v306
      %v607 = vunpack.c.l.b16 %v307
      %v608 = vunpack.c.l.b16 %v308
      %v609 = vunpack.c.l.b16 %v309
      %v610 = vunpack.c.l.b16 %v310
      %v611 = vunpack.c.l.b16 %v311
      %v612 = vunpack.c.l.b16 %v312
      %v613 = vunpack.c.l.b16 %v313
      %v614 = vunpack.c.l.b16 %v314
      %v615 = vunpack.c.l.b16 %v315
      %v616 = vunpack.c.l.b16 %v316
      %v617 = vunpack.c.l.b16 %v317
      %v618 = vunpack.c.l.b16 %v318
      %v619 = vunpack.c.l.b16 %v319
      %v620 = vunpack.c.l.b16 %v320
      %v621 = vunpack.c.l.b16 %v321
      %v622 = vunpack.c.l.b16 %v322
      %v623 = vunpack.c.l.b16 %v323
      %v624 = vunpack.c.l.b16 %v324
      %v625 = vunpack.c.l.b16 %v325
      %v626 = vunpack.c.l.b16 %v326
      %v627 = vunpack.c.l.b16 %v327
      %v628 = vunpack.c.l.b16 %v328
      %v629 = vunpack.c.l.b16 %v329
      %v630 = vunpack.c.l.b16 %v330
      %v631 = vunpack.c.l.b16 %v331
      %v632 = vunpack.c.l.b16 %v332
      %v633 = vunpack.c.l.b16 %v333
      %v634 = vunpack.c.l.b16 %v334
      %v635 = vunpack.c.l.b16 %v335
      %v636 = vunpack.c.l.b16 %v336
      %v637 = vunpack.c.l.b16 %v337
      %v638 = vunpack.c.l.b16 %v338
      %v639 = vunpack.c.l.b16 %v339
      %v640 = vunpack.c.l.b16 %v340
      %v641 = vunpack.c.l.b16 %v341
      %v642 = vunpack.c.l.b16 %v342
      %v643 = vunpack.c.l.b16 %v343
      %v644 = vunpack.c.l.b16 %v344
      %v645 = vunpack.c.l.b16 %v345
      %v646 = vunpack.c.l.b16 %v346
      %v647 = vunpack.c.l.b16 %v347
      %v648 = vunpack.c.l.b16 %v348
      %v649 = vunpack.c.l.b16 %v349
      %v650 = vunpack.c.l.b16 %v350
      %v651 = vunpack.c.l.b16 %v351
      %v652 = vunpack.c.l.b16 %v352
      %v653 = vunpack.c.l.b16 %v353
      %v654 = vunpack.c.l.b16 %v354
      %v655 = vunpack.c.l.b16 %v355
      %v656 = vunpack.c.l.b16 %v356
      %v657 = vunpack.c.l.b16 %v357
      %v658 = vunpack.c.l.b16 %v358
      %v659 = vunpack.c.l.b16 %v359
      %v660 = vunpack.c.l.b16 %v360
      %v661 = vunpack.c.l.b16 %v361
      %v662 = vunpack.c.l.b16 %v362
      %v663 = vunpack.c.l.b16 %v363
      %v664 = vunpack.c.l.b16 %v364
      %v665 = vunpack.c.l.b16 %v365
      %v666 = vunpack.c.l.b16 %v366
      %v667 = vunpack.c.l.b16 %v367
      %v668 = vunpack.c.l.b16 %v368
      %v669 = vunpack.c.l.b16 %v369
      %v670 = vunpack.c.l.b16 %v370
      %v671 = vunpack.c.l.b16 %v371
      %v672 = vunpack.c.l.b16 %v372
      %v673 = vunpack.c.l.b16 %v373
      %v674 = vunpack.c.l.b16 %v374
      %v675 = vunpack.c.l.b16 %v375
      %v676 = vunpack.c.l.b16 %v376
      %v677 = vunpack.c.l.b16 %v377
      %v678 = vunpack.c.l.b16 %v378
      %v679 = vunpack.c.l.b16 %v379
      %v680 = vunpack.c.l.b16 %v380
      %v681 = vunpack.c.l.b16 %v381
      %v682 = vunpack.c.l.b16 %v382
      %v683 = vunpack.c.l.b16 %v383
      %v684 = vunpack.c.l.b16 %v384
      %v685 = vpack.c.b16 %v558, %v557
      %v686 = vpack.c.b16 %v560, %v559
      %v687 = vpack.c.b16 %v562, %v561
      %v688 = vpack.c.b16 %v564, %v563
      %v689 = vpack.c.b16 %v566, %v565
      %v690 = vpack.c.b16 %v568, %v567
      %v691 = vpack.c.b16 %v570, %v569
      %v692 = vpack.c.b16 %v572, %v571
      %v693 = vpack.c.b16 %v574, %v573
      %v694 = vpack.c.b16 %v576, %v575
      %v695 = vpack.c.b16 %v578, %v577
      %v696 = vpack.c.b16 %v580, %v579
      %v697 = vpack.c.b16 %v582, %v581
      %v698 = vpack.c.b16 %v584, %v583
      %v699 = vpack.c.b16 %v586, %v585
      %v700 = vpack.c.b16 %v588, %v587
      %v701 = vpack.c.b16 %v590, %v589
      %v702 = vpack.c.b16 %v592, %v591
      %v703 = vpack.c.b16 %v594, %v593
      %v704 = vpack.c.b16 %v596, %v595
      %v705 = vpack.c.b16 %v598, %v597
      %v706 = vpack.c.b16 %v600, %v599
      %v707 = vpack.c.b16 %v602, %v601
      %v708 = vpack.c.b16 %v604, %v603
      %v709 = vpack.c.b16 %v606, %v605
      %v710 = vpack.c.b16 %v608, %v607
      %v711 = vpack.c.b16 %v610, %v609
      %v712 = vpack.c.b16 %v612, %v611
      %v713 = vpack.c.b16 %v614, %v613
      %v714 = vpack.c.b16 %v616, %v615
      %v715 = vpack.c.b16 %v618, %v617
      %v716 = vpack.c.b16 %v620, %v619
      %v717 = vpack.c.b16 %v622, %v621
      %v718 = vpack.c.b16 %v624, %v623
      %v719 = vpack.c.b16 %v626, %v625
      %v720 = vpack.c.b16 %v628, %v627
      %v721 = vpack.c.b16 %v630, %v629
      %v722 = vpack.c.b16 %v632, %v631
      %v723 = vpack.c.b16 %v634, %v633
      %v724 = vpack.c.b16 %v636, %v635
      %v725 = vpack.c.b16 %v638, %v637
      %v726 = vpack.c.b16 %v640, %v639
      %v727 = vpack.c.b16 %v642, %v641
      %v728 = vpack.c.b16 %v644, %v643
      %v729 = vpack.c.b16 %v646, %v645
      %v730 = vpack.c.b16 %v648, %v647
      %v731 = vpack.c.b16 %v650, %v649
      %v732 = vpack.c.b16 %v652, %v651
      %v733 = vpack.c.b16 %v654, %v653
      %v734 = vpack.c.b16 %v656, %v655
      %v735 = vpack.c.b16 %v658, %v657
      %v736 = vpack.c.b16 %v660, %v659
      %v737 = vpack.c.b16 %v662, %v661
      %v738 = vpack.c.b16 %v664, %v663
      %v739 = vpack.c.b16 %v666, %v665
      %v740 = vpack.c.b16 %v668, %v667
      %v741 = vpack.c.b16 %v670, %v669
      %v742 = vpack.c.b16 %v672, %v671
      %v743 = vpack.c.b16 %v674, %v673
      %v744 = vpack.c.b16 %v676, %v675
      %v745 = vpack.c.b16 %v678, %v677
      %v746 = vpack.c.b16 %v680, %v679
      %v747 = vpack.c.b16 %v682, %v681
      %v748 = vpack.c.b16 %v684, %v683
      %813 = vmatprep.subr.bf16.mxu0 0
      %814 = vmatpush1.bf16.msra.mxu0 %v685
      %815 = vmatprep.subr.bf16.mxu0 0
      %816 = vmatpush1.bf16.msra.mxu0 %v686
      %817 = vmatprep.subr.bf16.mxu0 0
      %818 = vmatpush1.bf16.msra.mxu0 %v687
      %819 = vmatprep.subr.bf16.mxu0 0
      %820 = vmatpush1.bf16.msra.mxu0 %v688
      %821 = vmatprep.subr.bf16.mxu0 0
      %822 = vmatpush1.bf16.msra.mxu0 %v689
      %823 = vmatprep.subr.bf16.mxu0 0
      %824 = vmatpush1.bf16.msra.mxu0 %v690
      %825 = vmatprep.subr.bf16.mxu0 0
      %826 = vmatpush1.bf16.msra.mxu0 %v691
      %827 = vmatprep.subr.bf16.mxu0 0
      %828 = vmatpush1.bf16.msra.mxu0 %v692
      %829 = vmatprep.subr.bf16.mxu0 0
      %830 = vmatpush1.bf16.msra.mxu0 %v693
      %831 = vmatprep.subr.bf16.mxu0 0
      %832 = vmatpush1.bf16.msra.mxu0 %v694
      %833 = vmatprep.subr.bf16.mxu0 0
      %834 = vmatpush1.bf16.msra.mxu0 %v695
      %835 = vmatprep.subr.bf16.mxu0 0
      %836 = vmatpush1.bf16.msra.mxu0 %v696
      %837 = vmatprep.subr.bf16.mxu0 0
      %838 = vmatpush1.bf16.msra.mxu0 %v697
      %839 = vmatprep.subr.bf16.mxu0 0
      %840 = vmatpush1.bf16.msra.mxu0 %v698
      %841 = vmatprep.subr.bf16.mxu0 0
      %842 = vmatpush1.bf16.msra.mxu0 %v699
      %843 = vmatprep.subr.bf16.mxu0 0
      %844 = vmatpush1.bf16.msra.mxu0 %v700
      %845 = vmatprep.mubr.bf16.mxu0 %v402
      %846 = vmatmul.mubr.bf16.gmra.mrb[0].mxu0 %v394
      %v847 = vpop.f32.mrb[0].mxu0
      %v848 = vadd.f32 0.0, %v847
      %v849 = vpop.f32.mrb[0].mxu0
      %v850 = vpop.f32.mrb[0].mxu0
      %v851 = vpop.f32.mrb[0].mxu0
      %852 = vdwg.mxu0
      %853 = vmatprep.subr.bf16.mxu0 0
      %854 = vmatpush1.bf16.msra.mxu0 %v701
      %855 = vmatprep.subr.bf16.mxu0 0
      %856 = vmatpush1.bf16.msra.mxu0 %v702
      %857 = vmatprep.subr.bf16.mxu0 0
      %858 = vmatpush1.bf16.msra.mxu0 %v703
      %859 = vmatprep.subr.bf16.mxu0 0
      %860 = vmatpush1.bf16.msra.mxu0 %v704
      %861 = vmatprep.subr.bf16.mxu0 0
      %862 = vmatpush1.bf16.msra.mxu0 %v705
      %863 = vmatprep.subr.bf16.mxu0 0
      %864 = vmatpush1.bf16.msra.mxu0 %v706
      %865 = vmatprep.subr.bf16.mxu0 0
      %866 = vmatpush1.bf16.msra.mxu0 %v707
      %867 = vmatprep.subr.bf16.mxu0 0
      %868 = vmatpush1.bf16.msra.mxu0 %v708
      %869 = vmatprep.subr.bf16.mxu0 0
      %870 = vmatpush1.bf16.msra.mxu0 %v709
      %871 = vmatprep.subr.bf16.mxu0 0
      %872 = vmatpush1.bf16.msra.mxu0 %v710
      %873 = vmatprep.subr.bf16.mxu0 0
      %874 = vmatpush1.bf16.msra.mxu0 %v711
      %875 = vmatprep.subr.bf16.mxu0 0
      %876 = vmatpush1.bf16.msra.mxu0 %v712
      %877 = vmatprep.subr.bf16.mxu0 0
      %878 = vmatpush1.bf16.msra.mxu0 %v713
      %879 = vmatprep.subr.bf16.mxu0 0
      %880 = vmatpush1.bf16.msra.mxu0 %v714
      %881 = vmatprep.subr.bf16.mxu0 0
      %882 = vmatpush1.bf16.msra.mxu0 %v715
      %883 = vmatprep.subr.bf16.mxu0 0
      %884 = vmatpush1.bf16.msra.mxu0 %v716
      %885 = vmatprep.mubr.bf16.mxu0 %v403
      %886 = vmatmul.mubr.bf16.gmra.mrb[0].mxu0 %v401
      %v887 = vpop.f32.mrb[0].mxu0
      %v888 = vadd.f32 %v848, %v887
      %v889 = vpop.f32.mrb[0].mxu0
      %v890 = vpop.f32.mrb[0].mxu0
      %v891 = vpop.f32.mrb[0].mxu0
      %892 = vdwg.mxu0
      %893 = vmatprep.subr.bf16.mxu0 0
      %894 = vmatpush1.bf16.msra.mxu0 %v717
      %895 = vmatprep.subr.bf16.mxu0 0
      %896 = vmatpush1.bf16.msra.mxu0 %v718
      %897 = vmatprep.subr.bf16.mxu0 0
      %898 = vmatpush1.bf16.msra.mxu0 %v719
      %899 = vmatprep.subr.bf16.mxu0 0
      %900 = vmatpush1.bf16.msra.mxu0 %v720
      %901 = vmatprep.subr.bf16.mxu0 0
      %902 = vmatpush1.bf16.msra.mxu0 %v721
      %903 = vmatprep.subr.bf16.mxu0 0
      %904 = vmatpush1.bf16.msra.mxu0 %v722
      %905 = vmatprep.subr.bf16.mxu0 0
      %906 = vmatpush1.bf16.msra.mxu0 %v723
      %907 = vmatprep.subr.bf16.mxu0 0
      %908 = vmatpush1.bf16.msra.mxu0 %v724
      %909 = vmatprep.subr.bf16.mxu0 0
      %910 = vmatpush1.bf16.msra.mxu0 %v725
      %911 = vmatprep.subr.bf16.mxu0 0
      %912 = vmatpush1.bf16.msra.mxu0 %v726
      %913 = vmatprep.subr.bf16.mxu0 0
      %914 = vmatpush1.bf16.msra.mxu0 %v727
      %915 = vmatprep.subr.bf16.mxu0 0
      %916 = vmatpush1.bf16.msra.mxu0 %v728
      %917 = vmatprep.subr.bf16.mxu0 0
      %918 = vmatpush1.bf16.msra.mxu0 %v729
      %919 = vmatprep.subr.bf16.mxu0 0
      %920 = vmatpush1.bf16.msra.mxu0 %v730
      %921 = vmatprep.subr.bf16.mxu0 0
      %922 = vmatpush1.bf16.msra.mxu0 %v731
      %923 = vmatprep.subr.bf16.mxu0 0
      %924 = vmatpush1.bf16.msra.mxu0 %v732
      %925 = vmatprep.mubr.bf16.mxu0 %v419
      %926 = vmatmul.mubr.bf16.gmra.mrb[0].mxu0 %v411
      %v927 = vpop.f32.mrb[0].mxu0
      %v928 = vadd.f32 %v888, %v927
      %v929 = vpop.f32.mrb[0].mxu0
      %v930 = vpop.f32.mrb[0].mxu0
      %v931 = vpop.f32.mrb[0].mxu0
      %932 = vdwg.mxu0
      %933 = vmatprep.subr.bf16.mxu0 0
      %934 = vmatpush1.bf16.msra.mxu0 %v733
      %935 = vmatprep.subr.bf16.mxu0 0
      %936 = vmatpush1.bf16.msra.mxu0 %v734
      %937 = vmatprep.subr.bf16.mxu0 0
      %938 = vmatpush1.bf16.msra.mxu0 %v735
      %939 = vmatprep.subr.bf16.mxu0 0
      %940 = vmatpush1.bf16.msra.mxu0 %v736
      %941 = vmatprep.subr.bf16.mxu0 0
      %942 = vmatpush1.bf16.msra.mxu0 %v737
      %943 = vmatprep.subr.bf16.mxu0 0
      %944 = vmatpush1.bf16.msra.mxu0 %v738
      %945 = vmatprep.subr.bf16.mxu0 0
      %946 = vmatpush1.bf16.msra.mxu0 %v739
      %947 = vmatprep.subr.bf16.mxu0 0
      %948 = vmatpush1.bf16.msra.mxu0 %v740
      %949 = vmatprep.subr.bf16.mxu0 0
      %950 = vmatpush1.bf16.msra.mxu0 %v741
      %951 = vmatprep.subr.bf16.mxu0 0
      %952 = vmatpush1.bf16.msra.mxu0 %v742
      %953 = vmatprep.subr.bf16.mxu0 0
      %954 = vmatpush1.bf16.msra.mxu0 %v743
      %955 = vmatprep.subr.bf16.mxu0 0
      %956 = vmatpush1.bf16.msra.mxu0 %v744
      %957 = vmatprep.subr.bf16.mxu0 0
      %958 = vmatpush1.bf16.msra.mxu0 %v745
      %959 = vmatprep.subr.bf16.mxu0 0
      %960 = vmatpush1.bf16.msra.mxu0 %v746
      %961 = vmatprep.subr.bf16.mxu0 0
      %962 = vmatpush1.bf16.msra.mxu0 %v747
      %963 = vmatprep.subr.bf16.mxu0 0
      %964 = vmatpush1.bf16.msra.mxu0 %v748
      %965 = vmatprep.mubr.bf16.mxu0 %v420
      %966 = vmatmul.mubr.bf16.gmra.mrb[0].mxu0 %v418
      %v967 = vpop.f32.mrb[0].mxu0
      %v968 = vadd.f32 %v928, %v967
      %v969 = vpop.f32.mrb[0].mxu0
      %v970 = vpop.f32.mrb[0].mxu0
      %v971 = vpop.f32.mrb[0].mxu0
      %972 = vdwg.mxu0
      %v973 = vadd.f32 %v254, %v968
      %974 = vst [vmem:[#allocation2] sm:$0xf] %v973
      %p975 = scmp.eq.s32.totalorder %s21, 7
      // Predicated region
      $region37: #{discriminator_forward.9} parent=31 // pred_check
        %p976 = pneg %p975
      $region38: #{discriminator_forward.9} parent=31 // pred_check_branch
        %978 = sbr.rel (%p976) target = $region40
      $region39: #{discriminator_forward.9} parent=31 // pred_region
        %v979 = vld [vmem:[#allocation2] sm:$0xf]
        %v980 = vld [vmem:[%s2] sm:$0x1]
        %v982 = vlaneseq
        %v983 = vshrl.u32 %v982, 7
        %v984 = vsub.s32 0, %v983
        %v985 = vrot.slane %v980, %v984
        %v987 = vadd.f32 %v979, %v985
        %988 = vst [vmem:[%s247] sm:$0xf] %v987
      $region40: #{discriminator_forward.9} parent=31 // pred_fallthru
        _
      %p989 = scmp.lt.s32.totalorder %s19, 1
      %s990 = scalar_select %p989, %s19, 1
      %p991 = scmp.lt.s32.totalorder %s20, 0
      %s992 = scalar_select %p991, %s20, 0
      %s993 = sadd.s32 %s992, %s990
      %s994 = smul.addr %s993, 4
      %s995 = scalar_lea.vmem %s3, %s994
      // Predicated region
      $region41: #{discriminator_forward.9} parent=31 // pred_check
        %p996 = pneg %p130
      $region42: #{discriminator_forward.9} parent=31 // pred_check_branch
        %998 = sbr.rel (%p996) target = $region44
      $region43: #{discriminator_forward.9} parent=31 // pred_region
        _
      $region44: #{discriminator_forward.9} parent=31 // pred_fallthru
        _
    $region32: #{discriminator_forward.9} parent=5 // pred_fallthru
      _
    %p999 = scmp.le.s32.totalorder 2, %s9
    // Predicated region
    $region45: #{discriminator_forward.9} parent=5 // pred_check
      %p1000 = pneg %p999
    $region46: #{discriminator_forward.9} parent=5 // pred_check_branch
      %1002 = sbr.rel (%p1000) target = $region48
    $region47: #{discriminator_forward.9} parent=5 // pred_region
      %s1003 = ssub.s32 %s9, 2
      // Predicated region
      $region49: #{discriminator_forward.9} parent=47 // pred_check
        %p1004 = pneg %p136
      $region50: #{discriminator_forward.9} parent=47 // pred_check_branch
        %1006 = sbr.rel (%p1004) target = $region52
      $region51: #{discriminator_forward.9} parent=47 // pred_region
        %p1007 = scmp.lt.s32.totalorder %s22, 1
        %s1008 = scalar_select %p1007, %s22, 1
        %p1009 = scmp.lt.s32.totalorder %s23, 0
        %s1010 = scalar_select %p1009, %s23, 0
        %s1011 = sadd.s32 %s1010, %s1008
        %s1012 = smul.addr %s1011, 4
        %s1013 = scalar_lea.vmem %s3, %s1012
      $region52: #{discriminator_forward.9} parent=47 // pred_fallthru
        _
    $region48: #{discriminator_forward.9} parent=5 // pred_fallthru
      _
  $region6: #{discriminator_forward.9} parent=0 // loop_footer
    %s13 = sadd.s32 1, %s9
  $region7: #{discriminator_forward.9} parent=0 // loop_footer_branch
    %8 = sbr.rel target = $region3
  $region8: #{discriminator_forward.9} parent=0 // loop_exit
    _

</llo_original>
